<compile_context>
chip_gen: v7x
topology: tpu7x:2x2x1
jax: 0.10.0
libtpu: 0.0.40
codegen_flags: <defaults>
</compile_context>

<pallas_src>
import functools

import jax
import jax.numpy as jnp
from jax import lax
from jax.experimental import pallas as pl
from jax.experimental.pallas import tpu as pltpu


def _round_up(x, m):
    return (x + m - 1) // m * m


# ---------------------------------------------------------------------------
# Fused kernel: [conv3x3 + folded BN + ReLU] x 2 for one image, all in VMEM.
#
# The image is presented as a flattened, zero-padded spatial slab
#   xflat[(i)*Wp + j, c] = x[i-1, j-1, c]   (Wp = W+2, rows 0..H+2 padded)
# Computing the conv on the padded-width output grid (H x Wp positions) makes
# every 3x3 tap a *contiguous* row-slice of the slab, so no in-kernel gather or
# reshape is needed.  The two extra columns per row are garbage; they are
# zeroed with a mask before feeding stage 2 and sliced off on the host.
# ---------------------------------------------------------------------------
def _fused_conv_block_kernel(x_ref, w1_ref, w2_ref, s1_ref, s2_ref, mask_ref,
                             o_ref, mid_ref, *, h, w):
    wp = w + 2                  # padded row width (flat layout)
    m1 = h * wp                 # rows of the padded-width output slab
    c_pad = w1_ref.shape[-1]    # lane-padded channel count (multiple of 128)
    f32 = jnp.float32
    bf16 = jnp.bfloat16

    # ---- stage 1: 3x3 conv as 9 shifted-slab matmuls (K = Cin) ----
    acc1 = jnp.zeros((m1, c_pad), f32)
    for dy in range(3):
        for dx in range(3):
            lhs = x_ref[0, pl.ds(dy * wp + dx, m1), :].astype(bf16)
            acc1 = acc1 + jnp.dot(lhs, w1_ref[dy * 3 + dx],
                                  preferred_element_type=f32)
    # Folded bias + BN shift, ReLU (f32 epilogue), zero the wrap columns.
    y1 = jnp.maximum(acc1 + s1_ref[...], 0.0) * mask_ref[...]

    # ---- re-pad the stage-1 activation inside VMEM (never hits HBM) ----
    mid_ref[...] = jnp.zeros_like(mid_ref)
    mid_ref[pl.ds(wp + 1, m1), :] = y1

    # ---- stage 2: same structure, lane-dense K = c_pad ----
    acc2 = jnp.zeros((m1, c_pad), f32)
    for dy in range(3):
        for dx in range(3):
            lhs = mid_ref[pl.ds(dy * wp + dx, m1), :].astype(bf16)
            acc2 = acc2 + jnp.dot(lhs, w2_ref[dy * 3 + dx],
                                  preferred_element_type=f32)
    o_ref[0, :, :] = jnp.maximum(acc2 + s2_ref[...], 0.0).astype(o_ref.dtype)


def _fold_conv_bn(w, b, gamma, beta, mean, var, eps, cin_pad, cout_pad):
    """Fold eval-mode BN (and the conv bias) into the conv weight / shift."""
    cout, cin = w.shape[0], w.shape[1]
    scale = gamma / jnp.sqrt(var + eps)                 # (cout,)
    shift = (b - mean) * scale + beta                   # (cout,)
    # Tap-major layout (tap=dy*3+dx, cin, cout) with BN scale folded into cols.
    wt = jnp.transpose(w, (2, 3, 1, 0)).reshape(9, cin, cout) * scale[None, None, :]
    wt = jnp.pad(wt, ((0, 0), (0, cin_pad - cin), (0, cout_pad - cout)))
    shift = jnp.pad(shift, (0, cout_pad - cout)).reshape(1, cout_pad)
    return wt.astype(jnp.bfloat16), shift.astype(jnp.float32)


def conv_block_forward_nhwc(x_nhwc, params, *, eps=1e-5):
    n, h, w, cin = x_nhwc.shape
    cout = params["w1"].shape[0]
    c_pad = _round_up(cout, 128)       # lane-dense output / mid channels
    wp, hp = w + 2, h + 3              # pad W by (1,1); H by (1,2) for read slack
    pf = hp * wp                       # flattened padded spatial extent
    m1 = h * wp                        # padded-width output rows per image

    w1t, s1 = _fold_conv_bn(params["w1"], params["b1"], params["g1"],
                            params["beta1"], params["mean1"], params["var1"],
                            eps, cin, c_pad)
    w2t, s2 = _fold_conv_bn(params["w2"], params["b2"], params["g2"],
                            params["beta2"], params["mean2"], params["var2"],
                            eps, c_pad, c_pad)

    xflat = jnp.pad(x_nhwc, ((0, 0), (1, 2), (1, 1), (0, 0))) \
               .reshape(n, pf, cin).astype(jnp.float32)
    # 1.0 on real output columns, 0.0 on the two wrap columns of each row.
    mask = ((jnp.arange(m1) % wp) < w).astype(jnp.float32).reshape(m1, 1)

    flops = 2 * n * m1 * 9 * (cin * c_pad + c_pad * c_pad)
    bytes_accessed = (xflat.size * 4 + w1t.size * 2 + w2t.size * 2
                      + (s1.size + s2.size + mask.size) * 4
                      + n * m1 * c_pad * 4)

    out = pl.pallas_call(
        functools.partial(_fused_conv_block_kernel, h=h, w=w),
        out_shape=jax.ShapeDtypeStruct((n, m1, c_pad), jnp.float32),
        grid_spec=pltpu.PrefetchScalarGridSpec(
            num_scalar_prefetch=0,
            grid=(n,),                                               # one image / step
            in_specs=[
                pl.BlockSpec((1, pf, cin), lambda b: (b, 0, 0)),     # padded image
                pl.BlockSpec((9, cin, c_pad), lambda b: (0, 0, 0)),  # folded w1
                pl.BlockSpec((9, c_pad, c_pad), lambda b: (0, 0, 0)),# folded w2
                pl.BlockSpec((1, c_pad), lambda b: (0, 0)),          # shift1
                pl.BlockSpec((1, c_pad), lambda b: (0, 0)),          # shift2
                pl.BlockSpec((m1, 1), lambda b: (0, 0)),             # wrap mask
            ],
            out_specs=pl.BlockSpec((1, m1, c_pad), lambda b: (b, 0, 0)),
            scratch_shapes=[pltpu.VMEM((pf, c_pad), jnp.float32)],   # padded stage-1 act
        ),
        compiler_params=pltpu.CompilerParams(
            dimension_semantics=("parallel",),       # batch shards across TCs (v7x)
            vmem_limit_bytes=32 * 1024 * 1024),
        cost_estimate=pl.CostEstimate(flops=flops, transcendentals=0,
                                      bytes_accessed=bytes_accessed),
    )(xflat, w1t, w2t, s1, s2, mask)

    # (n, h*wp, c_pad) -> (n, h, w, cout): drop wrap columns + channel padding.
    return out.reshape(n, h, wp, c_pad)[:, :, :w, :cout]


def conv_module_forward(x_nchw, params):
    """Equivalent of Conv(in_channels, out_channels).forward(x) (eval-mode BN)."""
    x = jnp.transpose(x_nchw, (0, 2, 3, 1))           # NCHW -> NHWC (C on lanes)
    y = conv_block_forward_nhwc(x, params)
    return jnp.transpose(y, (0, 3, 1, 2))             # NHWC -> NCHW


# ---------------------------------------------------------------------------
# Pure-JAX reference (f32) for a numerical sanity check.
# ---------------------------------------------------------------------------
def reference_forward(x_nchw, params, eps=1e-5):
    def block(x, w, b, g, beta, mean, var):
        y = lax.conv_general_dilated(
            x, w, window_strides=(1, 1), padding=((1, 1), (1, 1)),
            dimension_numbers=("NCHW", "OIHW", "NCHW"))
        y = y + b[None, :, None, None]
        scale = (g / jnp.sqrt(var + eps))[None, :, None, None]
        y = (y - mean[None, :, None, None]) * scale + beta[None, :, None, None]
        return jnp.maximum(y, 0.0)

    y = block(x_nchw, params["w1"], params["b1"], params["g1"],
              params["beta1"], params["mean1"], params["var1"])
    y = block(y, params["w2"], params["b2"], params["g2"],
              params["beta2"], params["mean2"], params["var2"])
    return y


def init_params(key, in_channels, out_channels):
    ks = jax.random.split(key, 12)
    f32 = jnp.float32

    def bn(k_g, k_b, k_m, k_v, c):
        return (1.0 + 0.1 * jax.random.normal(k_g, (c,), f32),
                0.1 * jax.random.normal(k_b, (c,), f32),
                0.05 * jax.random.normal(k_m, (c,), f32),
                1.0 + 0.1 * jax.nn.softplus(jax.random.normal(k_v, (c,), f32)))

    g1, beta1, mean1, var1 = bn(ks[2], ks[3], ks[4], ks[5], out_channels)
    g2, beta2, mean2, var2 = bn(ks[8], ks[9], ks[10], ks[11], out_channels)
    return {
        # conv1: Conv2d(in_channels, out_channels, 3, padding=1, bias=True)
        "w1": 0.1 * jax.random.normal(ks[0], (out_channels, in_channels, 3, 3), f32),
        "b1": 0.05 * jax.random.normal(ks[1], (out_channels,), f32),
        "g1": g1, "beta1": beta1, "mean1": mean1, "var1": var1,
        # conv2: Conv2d(out_channels, out_channels, 3, padding=1, bias=True)
        "w2": 0.1 * jax.random.normal(ks[6], (out_channels, out_channels, 3, 3), f32),
        "b2": 0.05 * jax.random.normal(ks[7], (out_channels,), f32),
        "g2": g2, "beta2": beta2, "mean2": mean2, "var2": var2,
    }


if __name__ == "__main__":
    key = jax.random.PRNGKey(0)
    k_x, k_p = jax.random.split(key)

    in_channels, out_channels = 4, 8
    N, H, W = 2, 16, 16

    x = jax.random.normal(k_x, (N, in_channels, H, W), jnp.float32)  # NCHW
    params = init_params(k_p, in_channels, out_channels)

    fwd = jax.jit(conv_module_forward)
    out = fwd(x, params)
    jax.block_until_ready(out)

    assert out.shape == (N, out_channels, H, W), out.shape
    assert out.dtype == jnp.float32
    assert bool(jnp.all(out >= 0.0))                  # ReLU output

    ref = reference_forward(x, params)
    max_err = float(jnp.max(jnp.abs(out - ref)))
    assert max_err < 0.15, f"max abs err vs f32 reference: {max_err}"

    print("KERNEL_OK")
</pallas_src>

<mosaic_0001>
module attributes {stable_mosaic.version = 11 : i64} {
  func.func @_fused_conv_block_kernel(%arg0: i32, %arg1: memref<1x342x4xf32, #tpu.memory_space<vmem>>, %arg2: memref<9x4x128xbf16, #tpu.memory_space<vmem>>, %arg3: memref<9x128x128xbf16, #tpu.memory_space<vmem>>, %arg4: memref<1x128xf32, #tpu.memory_space<vmem>>, %arg5: memref<1x128xf32, #tpu.memory_space<vmem>>, %arg6: memref<288x1xf32, #tpu.memory_space<vmem>>, %arg7: memref<1x288x128xf32, #tpu.memory_space<vmem>>, %arg8: memref<342x128xf32, #tpu.memory_space<vmem>>) attributes {dimension_semantics = [#tpu.dimension_semantics<parallel>], iteration_bounds = array<i64: 2>, scalar_prefetch = 0 : i64, scratch_operands = 1 : i64, tpu.core_type = #tpu.core_type<tc>, window_params = [{transform_indices = @transform_0, window_bounds = array<i64: 1, 342, 4>}, {pipeline_mode = #tpu.pipeline_mode<synchronous>, transform_indices = @transform_1, window_bounds = array<i64: 9, 4, 128>}, {pipeline_mode = #tpu.pipeline_mode<synchronous>, transform_indices = @transform_2, window_bounds = array<i64: 9, 128, 128>}, {pipeline_mode = #tpu.pipeline_mode<synchronous>, transform_indices = @transform_3, window_bounds = array<i64: 1, 128>}, {pipeline_mode = #tpu.pipeline_mode<synchronous>, transform_indices = @transform_4, window_bounds = array<i64: 1, 128>}, {pipeline_mode = #tpu.pipeline_mode<synchronous>, transform_indices = @transform_5, window_bounds = array<i64: 288, 1>}, {transform_indices = @transform_6, window_bounds = array<i64: 1, 288, 128>}]} {
    %cst = arith.constant 0.000000e+00 : f32
    %0 = vector.broadcast %cst : f32 to vector<288x128xf32>
    %c0 = arith.constant 0 : index
    %c0_0 = arith.constant 0 : index
    %c0_1 = arith.constant 0 : index
    %1 = vector.load %arg1[%c0, %c0_0, %c0_1] : memref<1x342x4xf32, #tpu.memory_space<vmem>>, vector<1x288x4xf32>
    %2 = vector.shape_cast %1 : vector<1x288x4xf32> to vector<288x4xf32>
    %3 = arith.truncf %2 : vector<288x4xf32> to vector<288x4xbf16>
    %c0_2 = arith.constant 0 : index
    %c0_3 = arith.constant 0 : index
    %c0_4 = arith.constant 0 : index
    %4 = vector.load %arg2[%c0_2, %c0_3, %c0_4] : memref<9x4x128xbf16, #tpu.memory_space<vmem>>, vector<1x4x128xbf16>
    %5 = vector.shape_cast %4 : vector<1x4x128xbf16> to vector<4x128xbf16>
    %cst_5 = arith.constant dense<0.000000e+00> : vector<288x128xf32>
    %6 = tpu.matmul %3, %5, %cst_5 {dimension_numbers = #tpu.dot_dimension_numbers<[1], [0], [0], [1], [0, 0, 1, 1], [], []>} : vector<288x4xbf16>, vector<4x128xbf16>, vector<288x128xf32> -> vector<288x128xf32>
    %7 = arith.addf %0, %6 : vector<288x128xf32>
    %c0_6 = arith.constant 0 : index
    %c1 = arith.constant 1 : index
    %c0_7 = arith.constant 0 : index
    %8 = vector.load %arg1[%c0_6, %c1, %c0_7] : memref<1x342x4xf32, #tpu.memory_space<vmem>>, vector<1x288x4xf32>
    %9 = vector.shape_cast %8 : vector<1x288x4xf32> to vector<288x4xf32>
    %10 = arith.truncf %9 : vector<288x4xf32> to vector<288x4xbf16>
    %c1_8 = arith.constant 1 : index
    %c0_9 = arith.constant 0 : index
    %c0_10 = arith.constant 0 : index
    %11 = vector.load %arg2[%c1_8, %c0_9, %c0_10] : memref<9x4x128xbf16, #tpu.memory_space<vmem>>, vector<1x4x128xbf16>
    %12 = vector.shape_cast %11 : vector<1x4x128xbf16> to vector<4x128xbf16>
    %cst_11 = arith.constant dense<0.000000e+00> : vector<288x128xf32>
    %13 = tpu.matmul %10, %12, %cst_11 {dimension_numbers = #tpu.dot_dimension_numbers<[1], [0], [0], [1], [0, 0, 1, 1], [], []>} : vector<288x4xbf16>, vector<4x128xbf16>, vector<288x128xf32> -> vector<288x128xf32>
    %14 = arith.addf %7, %13 : vector<288x128xf32>
    %c0_12 = arith.constant 0 : index
    %c2 = arith.constant 2 : index
    %c0_13 = arith.constant 0 : index
    %15 = vector.load %arg1[%c0_12, %c2, %c0_13] : memref<1x342x4xf32, #tpu.memory_space<vmem>>, vector<1x288x4xf32>
    %16 = vector.shape_cast %15 : vector<1x288x4xf32> to vector<288x4xf32>
    %17 = arith.truncf %16 : vector<288x4xf32> to vector<288x4xbf16>
    %c2_14 = arith.constant 2 : index
    %c0_15 = arith.constant 0 : index
    %c0_16 = arith.constant 0 : index
    %18 = vector.load %arg2[%c2_14, %c0_15, %c0_16] : memref<9x4x128xbf16, #tpu.memory_space<vmem>>, vector<1x4x128xbf16>
    %19 = vector.shape_cast %18 : vector<1x4x128xbf16> to vector<4x128xbf16>
    %cst_17 = arith.constant dense<0.000000e+00> : vector<288x128xf32>
    %20 = tpu.matmul %17, %19, %cst_17 {dimension_numbers = #tpu.dot_dimension_numbers<[1], [0], [0], [1], [0, 0, 1, 1], [], []>} : vector<288x4xbf16>, vector<4x128xbf16>, vector<288x128xf32> -> vector<288x128xf32>
    %21 = arith.addf %14, %20 : vector<288x128xf32>
    %c0_18 = arith.constant 0 : index
    %c18 = arith.constant 18 : index
    %c0_19 = arith.constant 0 : index
    %22 = vector.load %arg1[%c0_18, %c18, %c0_19] : memref<1x342x4xf32, #tpu.memory_space<vmem>>, vector<1x288x4xf32>
    %23 = vector.shape_cast %22 : vector<1x288x4xf32> to vector<288x4xf32>
    %24 = arith.truncf %23 : vector<288x4xf32> to vector<288x4xbf16>
    %c3 = arith.constant 3 : index
    %c0_20 = arith.constant 0 : index
    %c0_21 = arith.constant 0 : index
    %25 = vector.load %arg2[%c3, %c0_20, %c0_21] : memref<9x4x128xbf16, #tpu.memory_space<vmem>>, vector<1x4x128xbf16>
    %26 = vector.shape_cast %25 : vector<1x4x128xbf16> to vector<4x128xbf16>
    %cst_22 = arith.constant dense<0.000000e+00> : vector<288x128xf32>
    %27 = tpu.matmul %24, %26, %cst_22 {dimension_numbers = #tpu.dot_dimension_numbers<[1], [0], [0], [1], [0, 0, 1, 1], [], []>} : vector<288x4xbf16>, vector<4x128xbf16>, vector<288x128xf32> -> vector<288x128xf32>
    %28 = arith.addf %21, %27 : vector<288x128xf32>
    %c0_23 = arith.constant 0 : index
    %c19 = arith.constant 19 : index
    %c0_24 = arith.constant 0 : index
    %29 = vector.load %arg1[%c0_23, %c19, %c0_24] : memref<1x342x4xf32, #tpu.memory_space<vmem>>, vector<1x288x4xf32>
    %30 = vector.shape_cast %29 : vector<1x288x4xf32> to vector<288x4xf32>
    %31 = arith.truncf %30 : vector<288x4xf32> to vector<288x4xbf16>
    %c4 = arith.constant 4 : index
    %c0_25 = arith.constant 0 : index
    %c0_26 = arith.constant 0 : index
    %32 = vector.load %arg2[%c4, %c0_25, %c0_26] : memref<9x4x128xbf16, #tpu.memory_space<vmem>>, vector<1x4x128xbf16>
    %33 = vector.shape_cast %32 : vector<1x4x128xbf16> to vector<4x128xbf16>
    %cst_27 = arith.constant dense<0.000000e+00> : vector<288x128xf32>
    %34 = tpu.matmul %31, %33, %cst_27 {dimension_numbers = #tpu.dot_dimension_numbers<[1], [0], [0], [1], [0, 0, 1, 1], [], []>} : vector<288x4xbf16>, vector<4x128xbf16>, vector<288x128xf32> -> vector<288x128xf32>
    %35 = arith.addf %28, %34 : vector<288x128xf32>
    %c0_28 = arith.constant 0 : index
    %c20 = arith.constant 20 : index
    %c0_29 = arith.constant 0 : index
    %36 = vector.load %arg1[%c0_28, %c20, %c0_29] : memref<1x342x4xf32, #tpu.memory_space<vmem>>, vector<1x288x4xf32>
    %37 = vector.shape_cast %36 : vector<1x288x4xf32> to vector<288x4xf32>
    %38 = arith.truncf %37 : vector<288x4xf32> to vector<288x4xbf16>
    %c5 = arith.constant 5 : index
    %c0_30 = arith.constant 0 : index
    %c0_31 = arith.constant 0 : index
    %39 = vector.load %arg2[%c5, %c0_30, %c0_31] : memref<9x4x128xbf16, #tpu.memory_space<vmem>>, vector<1x4x128xbf16>
    %40 = vector.shape_cast %39 : vector<1x4x128xbf16> to vector<4x128xbf16>
    %cst_32 = arith.constant dense<0.000000e+00> : vector<288x128xf32>
    %41 = tpu.matmul %38, %40, %cst_32 {dimension_numbers = #tpu.dot_dimension_numbers<[1], [0], [0], [1], [0, 0, 1, 1], [], []>} : vector<288x4xbf16>, vector<4x128xbf16>, vector<288x128xf32> -> vector<288x128xf32>
    %42 = arith.addf %35, %41 : vector<288x128xf32>
    %c0_33 = arith.constant 0 : index
    %c36 = arith.constant 36 : index
    %c0_34 = arith.constant 0 : index
    %43 = vector.load %arg1[%c0_33, %c36, %c0_34] : memref<1x342x4xf32, #tpu.memory_space<vmem>>, vector<1x288x4xf32>
    %44 = vector.shape_cast %43 : vector<1x288x4xf32> to vector<288x4xf32>
    %45 = arith.truncf %44 : vector<288x4xf32> to vector<288x4xbf16>
    %c6 = arith.constant 6 : index
    %c0_35 = arith.constant 0 : index
    %c0_36 = arith.constant 0 : index
    %46 = vector.load %arg2[%c6, %c0_35, %c0_36] : memref<9x4x128xbf16, #tpu.memory_space<vmem>>, vector<1x4x128xbf16>
    %47 = vector.shape_cast %46 : vector<1x4x128xbf16> to vector<4x128xbf16>
    %cst_37 = arith.constant dense<0.000000e+00> : vector<288x128xf32>
    %48 = tpu.matmul %45, %47, %cst_37 {dimension_numbers = #tpu.dot_dimension_numbers<[1], [0], [0], [1], [0, 0, 1, 1], [], []>} : vector<288x4xbf16>, vector<4x128xbf16>, vector<288x128xf32> -> vector<288x128xf32>
    %49 = arith.addf %42, %48 : vector<288x128xf32>
    %c0_38 = arith.constant 0 : index
    %c37 = arith.constant 37 : index
    %c0_39 = arith.constant 0 : index
    %50 = vector.load %arg1[%c0_38, %c37, %c0_39] : memref<1x342x4xf32, #tpu.memory_space<vmem>>, vector<1x288x4xf32>
    %51 = vector.shape_cast %50 : vector<1x288x4xf32> to vector<288x4xf32>
    %52 = arith.truncf %51 : vector<288x4xf32> to vector<288x4xbf16>
    %c7 = arith.constant 7 : index
    %c0_40 = arith.constant 0 : index
    %c0_41 = arith.constant 0 : index
    %53 = vector.load %arg2[%c7, %c0_40, %c0_41] : memref<9x4x128xbf16, #tpu.memory_space<vmem>>, vector<1x4x128xbf16>
    %54 = vector.shape_cast %53 : vector<1x4x128xbf16> to vector<4x128xbf16>
    %cst_42 = arith.constant dense<0.000000e+00> : vector<288x128xf32>
    %55 = tpu.matmul %52, %54, %cst_42 {dimension_numbers = #tpu.dot_dimension_numbers<[1], [0], [0], [1], [0, 0, 1, 1], [], []>} : vector<288x4xbf16>, vector<4x128xbf16>, vector<288x128xf32> -> vector<288x128xf32>
    %56 = arith.addf %49, %55 : vector<288x128xf32>
    %c0_43 = arith.constant 0 : index
    %c38 = arith.constant 38 : index
    %c0_44 = arith.constant 0 : index
    %57 = vector.load %arg1[%c0_43, %c38, %c0_44] : memref<1x342x4xf32, #tpu.memory_space<vmem>>, vector<1x288x4xf32>
    %58 = vector.shape_cast %57 : vector<1x288x4xf32> to vector<288x4xf32>
    %59 = arith.truncf %58 : vector<288x4xf32> to vector<288x4xbf16>
    %c8 = arith.constant 8 : index
    %c0_45 = arith.constant 0 : index
    %c0_46 = arith.constant 0 : index
    %60 = vector.load %arg2[%c8, %c0_45, %c0_46] : memref<9x4x128xbf16, #tpu.memory_space<vmem>>, vector<1x4x128xbf16>
    %61 = vector.shape_cast %60 : vector<1x4x128xbf16> to vector<4x128xbf16>
    %cst_47 = arith.constant dense<0.000000e+00> : vector<288x128xf32>
    %62 = tpu.matmul %59, %61, %cst_47 {dimension_numbers = #tpu.dot_dimension_numbers<[1], [0], [0], [1], [0, 0, 1, 1], [], []>} : vector<288x4xbf16>, vector<4x128xbf16>, vector<288x128xf32> -> vector<288x128xf32>
    %63 = arith.addf %56, %62 : vector<288x128xf32>
    %c0_48 = arith.constant 0 : index
    %c0_49 = arith.constant 0 : index
    %64 = vector.load %arg4[%c0_48, %c0_49] : memref<1x128xf32, #tpu.memory_space<vmem>>, vector<1x128xf32>
    %65 = vector.broadcast %64 : vector<1x128xf32> to vector<288x128xf32>
    %66 = arith.addf %63, %65 : vector<288x128xf32>
    %cst_50 = arith.constant 0.000000e+00 : f32
    %67 = vector.broadcast %cst_50 : f32 to vector<288x128xf32>
    %68 = arith.maximumf %66, %67 : vector<288x128xf32>
    %c0_51 = arith.constant 0 : index
    %c0_52 = arith.constant 0 : index
    %69 = vector.load %arg6[%c0_51, %c0_52] : memref<288x1xf32, #tpu.memory_space<vmem>>, vector<288x1xf32>
    %70 = vector.broadcast %69 : vector<288x1xf32> to vector<288x128xf32>
    %71 = arith.mulf %68, %70 : vector<288x128xf32>
    %cst_53 = arith.constant 0.000000e+00 : f32
    %72 = vector.broadcast %cst_53 : f32 to vector<342x128xf32>
    %c0_54 = arith.constant 0 : index
    %c0_55 = arith.constant 0 : index
    %73 = vector.load %arg8[%c0_54, %c0_55] : memref<342x128xf32, #tpu.memory_space<vmem>>, vector<342x128xf32>
    tpu.vector_store %arg8[%c0_54, %c0_55], %72 {strides = array<i32>} : memref<342x128xf32, #tpu.memory_space<vmem>>, vector<342x128xf32>,
    %c19_56 = arith.constant 19 : index
    %c0_57 = arith.constant 0 : index
    %74 = vector.load %arg8[%c19_56, %c0_57] : memref<342x128xf32, #tpu.memory_space<vmem>>, vector<288x128xf32>
    tpu.vector_store %arg8[%c19_56, %c0_57], %71 {strides = array<i32>} : memref<342x128xf32, #tpu.memory_space<vmem>>, vector<288x128xf32>,
    %cst_58 = arith.constant 0.000000e+00 : f32
    %75 = vector.broadcast %cst_58 : f32 to vector<288x128xf32>
    %c0_59 = arith.constant 0 : index
    %c0_60 = arith.constant 0 : index
    %76 = vector.load %arg8[%c0_59, %c0_60] : memref<342x128xf32, #tpu.memory_space<vmem>>, vector<288x128xf32>
    %77 = arith.truncf %76 : vector<288x128xf32> to vector<288x128xbf16>
    %c0_61 = arith.constant 0 : index
    %c0_62 = arith.constant 0 : index
    %c0_63 = arith.constant 0 : index
    %78 = vector.load %arg3[%c0_61, %c0_62, %c0_63] : memref<9x128x128xbf16, #tpu.memory_space<vmem>>, vector<1x128x128xbf16>
    %79 = vector.shape_cast %78 : vector<1x128x128xbf16> to vector<128x128xbf16>
    %cst_64 = arith.constant dense<0.000000e+00> : vector<288x128xf32>
    %80 = tpu.matmul %77, %79, %cst_64 {dimension_numbers = #tpu.dot_dimension_numbers<[1], [0], [0], [1], [0, 0, 1, 1], [], []>} : vector<288x128xbf16>, vector<128x128xbf16>, vector<288x128xf32> -> vector<288x128xf32>
    %81 = arith.addf %75, %80 : vector<288x128xf32>
    %c1_65 = arith.constant 1 : index
    %c0_66 = arith.constant 0 : index
    %82 = vector.load %arg8[%c1_65, %c0_66] : memref<342x128xf32, #tpu.memory_space<vmem>>, vector<288x128xf32>
    %83 = arith.truncf %82 : vector<288x128xf32> to vector<288x128xbf16>
    %c1_67 = arith.constant 1 : index
    %c0_68 = arith.constant 0 : index
    %c0_69 = arith.constant 0 : index
    %84 = vector.load %arg3[%c1_67, %c0_68, %c0_69] : memref<9x128x128xbf16, #tpu.memory_space<vmem>>, vector<1x128x128xbf16>
    %85 = vector.shape_cast %84 : vector<1x128x128xbf16> to vector<128x128xbf16>
    %cst_70 = arith.constant dense<0.000000e+00> : vector<288x128xf32>
    %86 = tpu.matmul %83, %85, %cst_70 {dimension_numbers = #tpu.dot_dimension_numbers<[1], [0], [0], [1], [0, 0, 1, 1], [], []>} : vector<288x128xbf16>, vector<128x128xbf16>, vector<288x128xf32> -> vector<288x128xf32>
    %87 = arith.addf %81, %86 : vector<288x128xf32>
    %c2_71 = arith.constant 2 : index
    %c0_72 = arith.constant 0 : index
    %88 = vector.load %arg8[%c2_71, %c0_72] : memref<342x128xf32, #tpu.memory_space<vmem>>, vector<288x128xf32>
    %89 = arith.truncf %88 : vector<288x128xf32> to vector<288x128xbf16>
    %c2_73 = arith.constant 2 : index
    %c0_74 = arith.constant 0 : index
    %c0_75 = arith.constant 0 : index
    %90 = vector.load %arg3[%c2_73, %c0_74, %c0_75] : memref<9x128x128xbf16, #tpu.memory_space<vmem>>, vector<1x128x128xbf16>
    %91 = vector.shape_cast %90 : vector<1x128x128xbf16> to vector<128x128xbf16>
    %cst_76 = arith.constant dense<0.000000e+00> : vector<288x128xf32>
    %92 = tpu.matmul %89, %91, %cst_76 {dimension_numbers = #tpu.dot_dimension_numbers<[1], [0], [0], [1], [0, 0, 1, 1], [], []>} : vector<288x128xbf16>, vector<128x128xbf16>, vector<288x128xf32> -> vector<288x128xf32>
    %93 = arith.addf %87, %92 : vector<288x128xf32>
    %c18_77 = arith.constant 18 : index
    %c0_78 = arith.constant 0 : index
    %94 = vector.load %arg8[%c18_77, %c0_78] : memref<342x128xf32, #tpu.memory_space<vmem>>, vector<288x128xf32>
    %95 = arith.truncf %94 : vector<288x128xf32> to vector<288x128xbf16>
    %c3_79 = arith.constant 3 : index
    %c0_80 = arith.constant 0 : index
    %c0_81 = arith.constant 0 : index
    %96 = vector.load %arg3[%c3_79, %c0_80, %c0_81] : memref<9x128x128xbf16, #tpu.memory_space<vmem>>, vector<1x128x128xbf16>
    %97 = vector.shape_cast %96 : vector<1x128x128xbf16> to vector<128x128xbf16>
    %cst_82 = arith.constant dense<0.000000e+00> : vector<288x128xf32>
    %98 = tpu.matmul %95, %97, %cst_82 {dimension_numbers = #tpu.dot_dimension_numbers<[1], [0], [0], [1], [0, 0, 1, 1], [], []>} : vector<288x128xbf16>, vector<128x128xbf16>, vector<288x128xf32> -> vector<288x128xf32>
    %99 = arith.addf %93, %98 : vector<288x128xf32>
    %c19_83 = arith.constant 19 : index
    %c0_84 = arith.constant 0 : index
    %100 = vector.load %arg8[%c19_83, %c0_84] : memref<342x128xf32, #tpu.memory_space<vmem>>, vector<288x128xf32>
    %101 = arith.truncf %100 : vector<288x128xf32> to vector<288x128xbf16>
    %c4_85 = arith.constant 4 : index
    %c0_86 = arith.constant 0 : index
    %c0_87 = arith.constant 0 : index
    %102 = vector.load %arg3[%c4_85, %c0_86, %c0_87] : memref<9x128x128xbf16, #tpu.memory_space<vmem>>, vector<1x128x128xbf16>
    %103 = vector.shape_cast %102 : vector<1x128x128xbf16> to vector<128x128xbf16>
    %cst_88 = arith.constant dense<0.000000e+00> : vector<288x128xf32>
    %104 = tpu.matmul %101, %103, %cst_88 {dimension_numbers = #tpu.dot_dimension_numbers<[1], [0], [0], [1], [0, 0, 1, 1], [], []>} : vector<288x128xbf16>, vector<128x128xbf16>, vector<288x128xf32> -> vector<288x128xf32>
    %105 = arith.addf %99, %104 : vector<288x128xf32>
    %c20_89 = arith.constant 20 : index
    %c0_90 = arith.constant 0 : index
    %106 = vector.load %arg8[%c20_89, %c0_90] : memref<342x128xf32, #tpu.memory_space<vmem>>, vector<288x128xf32>
    %107 = arith.truncf %106 : vector<288x128xf32> to vector<288x128xbf16>
    %c5_91 = arith.constant 5 : index
    %c0_92 = arith.constant 0 : index
    %c0_93 = arith.constant 0 : index
    %108 = vector.load %arg3[%c5_91, %c0_92, %c0_93] : memref<9x128x128xbf16, #tpu.memory_space<vmem>>, vector<1x128x128xbf16>
    %109 = vector.shape_cast %108 : vector<1x128x128xbf16> to vector<128x128xbf16>
    %cst_94 = arith.constant dense<0.000000e+00> : vector<288x128xf32>
    %110 = tpu.matmul %107, %109, %cst_94 {dimension_numbers = #tpu.dot_dimension_numbers<[1], [0], [0], [1], [0, 0, 1, 1], [], []>} : vector<288x128xbf16>, vector<128x128xbf16>, vector<288x128xf32> -> vector<288x128xf32>
    %111 = arith.addf %105, %110 : vector<288x128xf32>
    %c36_95 = arith.constant 36 : index
    %c0_96 = arith.constant 0 : index
    %112 = vector.load %arg8[%c36_95, %c0_96] : memref<342x128xf32, #tpu.memory_space<vmem>>, vector<288x128xf32>
    %113 = arith.truncf %112 : vector<288x128xf32> to vector<288x128xbf16>
    %c6_97 = arith.constant 6 : index
    %c0_98 = arith.constant 0 : index
    %c0_99 = arith.constant 0 : index
    %114 = vector.load %arg3[%c6_97, %c0_98, %c0_99] : memref<9x128x128xbf16, #tpu.memory_space<vmem>>, vector<1x128x128xbf16>
    %115 = vector.shape_cast %114 : vector<1x128x128xbf16> to vector<128x128xbf16>
    %cst_100 = arith.constant dense<0.000000e+00> : vector<288x128xf32>
    %116 = tpu.matmul %113, %115, %cst_100 {dimension_numbers = #tpu.dot_dimension_numbers<[1], [0], [0], [1], [0, 0, 1, 1], [], []>} : vector<288x128xbf16>, vector<128x128xbf16>, vector<288x128xf32> -> vector<288x128xf32>
    %117 = arith.addf %111, %116 : vector<288x128xf32>
    %c37_101 = arith.constant 37 : index
    %c0_102 = arith.constant 0 : index
    %118 = vector.load %arg8[%c37_101, %c0_102] : memref<342x128xf32, #tpu.memory_space<vmem>>, vector<288x128xf32>
    %119 = arith.truncf %118 : vector<288x128xf32> to vector<288x128xbf16>
    %c7_103 = arith.constant 7 : index
    %c0_104 = arith.constant 0 : index
    %c0_105 = arith.constant 0 : index
    %120 = vector.load %arg3[%c7_103, %c0_104, %c0_105] : memref<9x128x128xbf16, #tpu.memory_space<vmem>>, vector<1x128x128xbf16>
    %121 = vector.shape_cast %120 : vector<1x128x128xbf16> to vector<128x128xbf16>
    %cst_106 = arith.constant dense<0.000000e+00> : vector<288x128xf32>
    %122 = tpu.matmul %119, %121, %cst_106 {dimension_numbers = #tpu.dot_dimension_numbers<[1], [0], [0], [1], [0, 0, 1, 1], [], []>} : vector<288x128xbf16>, vector<128x128xbf16>, vector<288x128xf32> -> vector<288x128xf32>
    %123 = arith.addf %117, %122 : vector<288x128xf32>
    %c38_107 = arith.constant 38 : index
    %c0_108 = arith.constant 0 : index
    %124 = vector.load %arg8[%c38_107, %c0_108] : memref<342x128xf32, #tpu.memory_space<vmem>>, vector<288x128xf32>
    %125 = arith.truncf %124 : vector<288x128xf32> to vector<288x128xbf16>
    %c8_109 = arith.constant 8 : index
    %c0_110 = arith.constant 0 : index
    %c0_111 = arith.constant 0 : index
    %126 = vector.load %arg3[%c8_109, %c0_110, %c0_111] : memref<9x128x128xbf16, #tpu.memory_space<vmem>>, vector<1x128x128xbf16>
    %127 = vector.shape_cast %126 : vector<1x128x128xbf16> to vector<128x128xbf16>
    %cst_112 = arith.constant dense<0.000000e+00> : vector<288x128xf32>
    %128 = tpu.matmul %125, %127, %cst_112 {dimension_numbers = #tpu.dot_dimension_numbers<[1], [0], [0], [1], [0, 0, 1, 1], [], []>} : vector<288x128xbf16>, vector<128x128xbf16>, vector<288x128xf32> -> vector<288x128xf32>
    %129 = arith.addf %123, %128 : vector<288x128xf32>
    %c0_113 = arith.constant 0 : index
    %c0_114 = arith.constant 0 : index
    %130 = vector.load %arg5[%c0_113, %c0_114] : memref<1x128xf32, #tpu.memory_space<vmem>>, vector<1x128xf32>
    %131 = vector.broadcast %130 : vector<1x128xf32> to vector<288x128xf32>
    %132 = arith.addf %129, %131 : vector<288x128xf32>
    %cst_115 = arith.constant 0.000000e+00 : f32
    %133 = vector.broadcast %cst_115 : f32 to vector<288x128xf32>
    %134 = arith.maximumf %132, %133 : vector<288x128xf32>
    %c0_116 = arith.constant 0 : index
    %c0_117 = arith.constant 0 : index
    %c0_118 = arith.constant 0 : index
    %135 = vector.load %arg7[%c0_116, %c0_117, %c0_118] : memref<1x288x128xf32, #tpu.memory_space<vmem>>, vector<1x288x128xf32>
    %136 = vector.shape_cast %135 : vector<1x288x128xf32> to vector<288x128xf32>
    %137 = vector.shape_cast %134 : vector<288x128xf32> to vector<1x288x128xf32>
    tpu.vector_store %arg7[%c0_116, %c0_117, %c0_118], %137 {strides = array<i32>} : memref<1x288x128xf32, #tpu.memory_space<vmem>>, vector<1x288x128xf32>,
    return
  }
  func.func @transform_0(%arg0: i32) -> (i32, i32, i32) {
    %c0_i32 = arith.constant 0 : i32
    %c0_i32_0 = arith.constant 0 : i32
    %c0_i32_1 = arith.constant 0 : i32
    return %arg0, %c0_i32, %c0_i32_0 : i32, i32, i32
  }
  func.func @transform_1(%arg0: i32) -> (i32, i32, i32) {
    %c0_i32 = arith.constant 0 : i32
    %c0_i32_0 = arith.constant 0 : i32
    %c0_i32_1 = arith.constant 0 : i32
    %c0_i32_2 = arith.constant 0 : i32
    return %c0_i32, %c0_i32_0, %c0_i32_1 : i32, i32, i32
  }
  func.func @transform_2(%arg0: i32) -> (i32, i32, i32) {
    %c0_i32 = arith.constant 0 : i32
    %c0_i32_0 = arith.constant 0 : i32
    %c0_i32_1 = arith.constant 0 : i32
    %c0_i32_2 = arith.constant 0 : i32
    return %c0_i32, %c0_i32_0, %c0_i32_1 : i32, i32, i32
  }
  func.func @transform_3(%arg0: i32) -> (i32, i32) {
    %c0_i32 = arith.constant 0 : i32
    %c0_i32_0 = arith.constant 0 : i32
    %c0_i32_1 = arith.constant 0 : i32
    return %c0_i32, %c0_i32_0 : i32, i32
  }
  func.func @transform_4(%arg0: i32) -> (i32, i32) {
    %c0_i32 = arith.constant 0 : i32
    %c0_i32_0 = arith.constant 0 : i32
    %c0_i32_1 = arith.constant 0 : i32
    return %c0_i32, %c0_i32_0 : i32, i32
  }
  func.func @transform_5(%arg0: i32) -> (i32, i32) {
    %c0_i32 = arith.constant 0 : i32
    %c0_i32_0 = arith.constant 0 : i32
    %c0_i32_1 = arith.constant 0 : i32
    return %c0_i32, %c0_i32_0 : i32, i32
  }
  func.func @transform_6(%arg0: i32) -> (i32, i32, i32) {
    %c0_i32 = arith.constant 0 : i32
    %c0_i32_0 = arith.constant 0 : i32
    %c0_i32_1 = arith.constant 0 : i32
    return %arg0, %c0_i32, %c0_i32_0 : i32, i32, i32
  }
}

</mosaic_0001>

<llo_original>
// kernel: conv_module_forward.1
$region0: #{conv_module_forward.1}
  #allocation0 [shape = 'u32[]', space=smem, size = 0x4, offset = 0x4, fixed_abs, tag = 'smem constant byte address 0x4 - core index']
  #allocation1 [shape = 'u32[144,128]{1,0:T(1,128)}', space=vmem, size = 0x12000, scoped, tag = 'internal scratch']
  #allocation2 [shape = 'f32[342,128]{1,0:T(8,128)}', space=vmem, size = 0x2b000, scoped, tag = 'scratch operand']
  %s0 = inlined_call_operand.vmem [shape: f32[2,342,4], index: 0, kind: input, shape index: {}]
  %s1 = inlined_call_operand.vmem [shape: bf16[9,4,128], index: 1, kind: input, shape index: {}]
  %s2 = inlined_call_operand.vmem [shape: bf16[9,128,128], index: 2, kind: input, shape index: {}]
  %s3 = inlined_call_operand.vmem [shape: f32[1,128], index: 3, kind: input, shape index: {}]
  %s4 = inlined_call_operand.vmem [shape: f32[1,128], index: 4, kind: input, shape index: {}]
  %s5 = inlined_call_operand.vmem [shape: f32[288,1], index: 5, kind: input, shape index: {}]
  %s6 = inlined_call_operand.vmem [shape: f32[2,288,128], index: 6, kind: output, shape index: {}]
  %s7 = sld [smem:[#allocation0]]
  $region57: #{conv_module_forward.1} parent=0
    _
  %s9 = ssub.s32 1, %s7
  %s10 = scalar_select 0, %s9, %s7
  loop: start=0, step=1, limit=4
  $region2: #{conv_module_forward.1} parent=0 // loop_pre_header
    _
  $region3: #{conv_module_forward.1} parent=0 // loop_header
    %s12 = sphi 0, %s16
    %p13 = scmp.ge.s32.totalorder %s12, 4
    %s22 = sphi 0, %s24
    %s25 = sphi 0, %s22
    %s26 = sphi 0, %s25
    %s42 = sphi 0, %s26
    %s46 = sphi 0, %s46
    %s48 = sphi 0, %s46
    %s49 = sphi 0, %s48
    %s63 = sphi 0, %s49
    %s67 = sphi 0, %s67
    %s69 = sphi 0, %s67
    %s70 = sphi 0, %s69
    %s84 = sphi 0, %s70
    %s88 = sphi 0, %s88
    %s90 = sphi 0, %s88
    %s91 = sphi 0, %s90
    %s105 = sphi 0, %s91
    %s109 = sphi 0, %s109
    %s111 = sphi 0, %s109
    %s112 = sphi 0, %s111
    %s126 = sphi 0, %s112
    %s130 = sphi 0, %s130
    %s132 = sphi 0, %s130
    %s133 = sphi 0, %s132
    %s147 = sphi 0, %s133
    %s153 = sphi 0, %s155
    %s156 = sphi 0, %s153
    %s157 = sphi 0, %s156
    %s173 = sphi 0, %s157
  $region4: #{conv_module_forward.1} parent=0 // loop_header_branch
    %15 = sbr.rel (%p13) target = $region8
  $region5: #{conv_module_forward.1} parent=0 // loop_body
    %s17 = ssub.s32 %s12, 1
    %s18 = ssub.s32 %s12, 2
    %s19 = sadd.s32 %s12, 1
    %s20 = ssub.s32 %s12, %s19
    %p21 = scmp.eq.s32.totalorder %s20, 0
    %s23 = sadd.s32 %s22, 1
    %s24 = scalar_select %p21, %s22, %s23
    %p27 = pneg %p21
    %p28 = scmp.eq.s32.totalorder %s12, 1
    %p29 = por %p27, %p28
    %p30 = scmp.ne.s32.totalorder %s22, %s25
    %p31 = scmp.eq.s32.totalorder %s12, 0
    %p32 = por %p30, %p31
    %p33 = scmp.ne.s32.totalorder %s22, %s25
    %p34 = scmp.eq.s32.totalorder %s17, 1
    %p35 = por %p33, %p34
    %p36 = scmp.ne.s32.totalorder %s25, %s26
    %p37 = scmp.eq.s32.totalorder %s17, 0
    %p38 = por %p36, %p37
    %p39 = scmp.ne.s32.totalorder %s25, %s26
    %p40 = scmp.eq.s32.totalorder %s18, 1
    %p41 = por %p39, %p40
    %p43 = scmp.ne.s32.totalorder %s26, %s42
    %p44 = scmp.eq.s32.totalorder %s18, 0
    %p45 = por %p43, %p44
    %s47 = sadd.s32 %s46, 1
    %p50 = scmp.eq.s32.totalorder %s12, 1
    %p51 = scmp.ne.s32.totalorder %s46, %s48
    %p52 = scmp.eq.s32.totalorder %s12, 0
    %p53 = por %p51, %p52
    %p54 = scmp.ne.s32.totalorder %s46, %s48
    %p55 = scmp.eq.s32.totalorder %s17, 1
    %p56 = por %p54, %p55
    %p57 = scmp.ne.s32.totalorder %s48, %s49
    %p58 = scmp.eq.s32.totalorder %s17, 0
    %p59 = por %p57, %p58
    %p60 = scmp.ne.s32.totalorder %s48, %s49
    %p61 = scmp.eq.s32.totalorder %s18, 1
    %p62 = por %p60, %p61
    %p64 = scmp.ne.s32.totalorder %s49, %s63
    %p65 = scmp.eq.s32.totalorder %s18, 0
    %p66 = por %p64, %p65
    %s68 = sadd.s32 %s67, 1
    %p71 = scmp.eq.s32.totalorder %s12, 1
    %p72 = scmp.ne.s32.totalorder %s67, %s69
    %p73 = scmp.eq.s32.totalorder %s12, 0
    %p74 = por %p72, %p73
    %p75 = scmp.ne.s32.totalorder %s67, %s69
    %p76 = scmp.eq.s32.totalorder %s17, 1
    %p77 = por %p75, %p76
    %p78 = scmp.ne.s32.totalorder %s69, %s70
    %p79 = scmp.eq.s32.totalorder %s17, 0
    %p80 = por %p78, %p79
    %p81 = scmp.ne.s32.totalorder %s69, %s70
    %p82 = scmp.eq.s32.totalorder %s18, 1
    %p83 = por %p81, %p82
    %p85 = scmp.ne.s32.totalorder %s70, %s84
    %p86 = scmp.eq.s32.totalorder %s18, 0
    %p87 = por %p85, %p86
    %s89 = sadd.s32 %s88, 1
    %p92 = scmp.eq.s32.totalorder %s12, 1
    %p93 = scmp.ne.s32.totalorder %s88, %s90
    %p94 = scmp.eq.s32.totalorder %s12, 0
    %p95 = por %p93, %p94
    %p96 = scmp.ne.s32.totalorder %s88, %s90
    %p97 = scmp.eq.s32.totalorder %s17, 1
    %p98 = por %p96, %p97
    %p99 = scmp.ne.s32.totalorder %s90, %s91
    %p100 = scmp.eq.s32.totalorder %s17, 0
    %p101 = por %p99, %p100
    %p102 = scmp.ne.s32.totalorder %s90, %s91
    %p103 = scmp.eq.s32.totalorder %s18, 1
    %p104 = por %p102, %p103
    %p106 = scmp.ne.s32.totalorder %s91, %s105
    %p107 = scmp.eq.s32.totalorder %s18, 0
    %p108 = por %p106, %p107
    %s110 = sadd.s32 %s109, 1
    %p113 = scmp.eq.s32.totalorder %s12, 1
    %p114 = scmp.ne.s32.totalorder %s109, %s111
    %p115 = scmp.eq.s32.totalorder %s12, 0
    %p116 = por %p114, %p115
    %p117 = scmp.ne.s32.totalorder %s109, %s111
    %p118 = scmp.eq.s32.totalorder %s17, 1
    %p119 = por %p117, %p118
    %p120 = scmp.ne.s32.totalorder %s111, %s112
    %p121 = scmp.eq.s32.totalorder %s17, 0
    %p122 = por %p120, %p121
    %p123 = scmp.ne.s32.totalorder %s111, %s112
    %p124 = scmp.eq.s32.totalorder %s18, 1
    %p125 = por %p123, %p124
    %p127 = scmp.ne.s32.totalorder %s112, %s126
    %p128 = scmp.eq.s32.totalorder %s18, 0
    %p129 = por %p127, %p128
    %s131 = sadd.s32 %s130, 1
    %p134 = scmp.eq.s32.totalorder %s12, 1
    %p135 = scmp.ne.s32.totalorder %s130, %s132
    %p136 = scmp.eq.s32.totalorder %s12, 0
    %p137 = por %p135, %p136
    %p138 = scmp.ne.s32.totalorder %s130, %s132
    %p139 = scmp.eq.s32.totalorder %s17, 1
    %p140 = por %p138, %p139
    %p141 = scmp.ne.s32.totalorder %s132, %s133
    %p142 = scmp.eq.s32.totalorder %s17, 0
    %p143 = por %p141, %p142
    %p144 = scmp.ne.s32.totalorder %s132, %s133
    %p145 = scmp.eq.s32.totalorder %s18, 1
    %p146 = por %p144, %p145
    %p148 = scmp.ne.s32.totalorder %s133, %s147
    %p149 = scmp.eq.s32.totalorder %s18, 0
    %p150 = por %p148, %p149
    %s151 = ssub.s32 %s12, %s19
    %p152 = scmp.eq.s32.totalorder %s151, 0
    %s154 = sadd.s32 %s153, 1
    %s155 = scalar_select %p152, %s153, %s154
    %p158 = pneg %p152
    %p159 = scmp.eq.s32.totalorder %s12, 1
    %p160 = por %p158, %p159
    %p161 = scmp.ne.s32.totalorder %s153, %s156
    %p162 = scmp.eq.s32.totalorder %s12, 0
    %p163 = por %p161, %p162
    %p164 = scmp.ne.s32.totalorder %s153, %s156
    %p165 = scmp.eq.s32.totalorder %s17, 1
    %p166 = por %p164, %p165
    %p167 = scmp.ne.s32.totalorder %s156, %s157
    %p168 = scmp.eq.s32.totalorder %s17, 0
    %p169 = por %p167, %p168
    %p170 = scmp.ne.s32.totalorder %s156, %s157
    %p171 = scmp.eq.s32.totalorder %s18, 1
    %p172 = por %p170, %p171
    %p174 = scmp.ne.s32.totalorder %s157, %s173
    %p175 = scmp.eq.s32.totalorder %s18, 0
    %p176 = por %p174, %p175
    %p177 = scmp.le.s32.totalorder 1, %s12
    %p178 = scmp.lt.s32.totalorder %s12, 3
    %p179 = pnand %p177, %p178
    %p180 = pneg %p179
    // Predicated region
    $region9: #{conv_module_forward.1} parent=5 // pred_check
      _
    $region10: #{conv_module_forward.1} parent=5 // pred_check_branch
      %182 = sbr.rel (%p179) target = $region12
    $region11: #{conv_module_forward.1} parent=5 // pred_region
      %s183 = ssub.s32 %s12, 1
      // Predicated region
      $region13: #{conv_module_forward.1} parent=11 // pred_check
        %p184 = pneg %p59
      $region14: #{conv_module_forward.1} parent=11 // pred_check_branch
        %186 = sbr.rel (%p184) target = $region16
      $region15: #{conv_module_forward.1} parent=11 // pred_region
        _
      $region16: #{conv_module_forward.1} parent=11 // pred_fallthru
        _
      // Predicated region
      $region17: #{conv_module_forward.1} parent=11 // pred_check
        %p187 = pneg %p80
      $region18: #{conv_module_forward.1} parent=11 // pred_check_branch
        %189 = sbr.rel (%p187) target = $region20
      $region19: #{conv_module_forward.1} parent=11 // pred_region
        _
      $region20: #{conv_module_forward.1} parent=11 // pred_fallthru
        _
      // Predicated region
      $region21: #{conv_module_forward.1} parent=11 // pred_check
        %p190 = pneg %p101
      $region22: #{conv_module_forward.1} parent=11 // pred_check_branch
        %192 = sbr.rel (%p190) target = $region24
      $region23: #{conv_module_forward.1} parent=11 // pred_region
        _
      $region24: #{conv_module_forward.1} parent=11 // pred_fallthru
        _
      // Predicated region
      $region25: #{conv_module_forward.1} parent=11 // pred_check
        %p193 = pneg %p122
      $region26: #{conv_module_forward.1} parent=11 // pred_check_branch
        %195 = sbr.rel (%p193) target = $region28
      $region27: #{conv_module_forward.1} parent=11 // pred_region
        _
      $region28: #{conv_module_forward.1} parent=11 // pred_fallthru
        _
      // Predicated region
      $region29: #{conv_module_forward.1} parent=11 // pred_check
        %p196 = pneg %p143
      $region30: #{conv_module_forward.1} parent=11 // pred_check_branch
        %198 = sbr.rel (%p196) target = $region32
      $region31: #{conv_module_forward.1} parent=11 // pred_region
        _
      $region32: #{conv_module_forward.1} parent=11 // pred_fallthru
        _
    $region12: #{conv_module_forward.1} parent=5 // pred_fallthru
      _
    %p199 = scmp.lt.s32.totalorder %s12, 2
    // Predicated region
    $region33: #{conv_module_forward.1} parent=5 // pred_check
      %p200 = pneg %p199
    $region34: #{conv_module_forward.1} parent=5 // pred_check_branch
      %202 = sbr.rel (%p200) target = $region36
    $region35: #{conv_module_forward.1} parent=5 // pred_region
      // Predicated region
      $region37: #{conv_module_forward.1} parent=35 // pred_check
        %p203 = pneg %p32
      $region38: #{conv_module_forward.1} parent=35 // pred_check_branch
        %205 = sbr.rel (%p203) target = $region40
      $region39: #{conv_module_forward.1} parent=35 // pred_region
        %p206 = scmp.lt.s32.totalorder %s12, 1
        %s207 = scalar_select %p206, %s12, 1
        %s208 = smul.addr %s207, 43
        %s209 = smul.addr %s208, 8
        %s210 = scalar_lea.vmem %s0, %s209
      $region40: #{conv_module_forward.1} parent=35 // pred_fallthru
        _
    $region36: #{conv_module_forward.1} parent=5 // pred_fallthru
      _
    %p211 = scmp.le.s32.totalorder 1, %s12
    %p212 = scmp.lt.s32.totalorder %s12, 3
    %p213 = pnand %p211, %p212
    %p214 = pneg %p213
    // Predicated region
    $region41: #{conv_module_forward.1} parent=5 // pred_check
      _
    $region42: #{conv_module_forward.1} parent=5 // pred_check_branch
      %216 = sbr.rel (%p213) target = $region44
    $region43: #{conv_module_forward.1} parent=5 // pred_region
      %s217 = ssub.s32 %s12, 1
      %p218 = scmp.lt.s32.totalorder %s17, 1
      %s219 = scalar_select %p218, %s17, 1
      %s220 = smul.addr %s219, 43
      %s221 = smul.addr %s220, 8
      %s222 = scalar_lea.vmem %s0, %s221
      %p223 = pneg %p38
      %p224 = pneg %p35
      %p225 = pneg %p59
      %p226 = pneg %p56
      %p227 = pneg %p80
      %p228 = pneg %p77
      %p229 = pneg %p101
      %p230 = pneg %p98
      %p231 = pneg %p122
      %p232 = pneg %p119
      %p233 = pneg %p143
      %p234 = pneg %p140
      %p235 = pneg %p169
      %p236 = pneg %p166
      %p237 = scmp.lt.s32.totalorder %s17, 1
      %s238 = scalar_select %p237, %s17, 1
      %s239 = smul.addr %s238, 36
      %s240 = smul.addr %s239, 8
      %s241 = scalar_lea.vmem %s6, %s240
      %p242 = scmp.lt.s32.totalorder %s17, 1
      %s243 = scalar_select %p242, %s17, 1
      %s244 = smul.addr %s243, 43
      %s245 = smul.addr %s244, 8
      %s246 = scalar_lea.vmem %s0, %s245
      %p247 = scmp.lt.s32.totalorder %s17, 1
      %s248 = scalar_select %p247, %s17, 1
      %s249 = smul.addr %s248, 36
      %s250 = smul.addr %s249, 8
      %s251 = scalar_lea.vmem %s6, %s250
      %v253 = vld [vmem:[%s246] sm:$0xff]
      %v254 = vld [vmem:[%s246 + $0x8] sm:$0xff]
      %v255 = vld [vmem:[%s246 + $0x10] sm:$0xff]
      %v256 = vld [vmem:[%s246 + $0x18] sm:$0xff]
      %v257 = vld [vmem:[%s246 + $0x20] sm:$0xff]
      %v258 = vld [vmem:[%s246 + $0x28] sm:$0xff]
      %v259 = vld [vmem:[%s246 + $0x30] sm:$0xff]
      %v260 = vld [vmem:[%s246 + $0x38] sm:$0xff]
      %v261 = vld [vmem:[%s246 + $0x40] sm:$0xff]
      %v262 = vld [vmem:[%s246 + $0x48] sm:$0xff]
      %v263 = vld [vmem:[%s246 + $0x50] sm:$0xff]
      %v264 = vld [vmem:[%s246 + $0x58] sm:$0xff]
      %v265 = vld [vmem:[%s246 + $0x60] sm:$0xff]
      %v266 = vld [vmem:[%s246 + $0x68] sm:$0xff]
      %v267 = vld [vmem:[%s246 + $0x70] sm:$0xff]
      %v268 = vld [vmem:[%s246 + $0x78] sm:$0xff]
      %v269 = vld [vmem:[%s246 + $0x80] sm:$0xff]
      %v270 = vld [vmem:[%s246 + $0x88] sm:$0xff]
      %v271 = vld [vmem:[%s246 + $0x90] sm:$0xff]
      %v272 = vld [vmem:[%s246 + $0x98] sm:$0xff]
      %v273 = vld [vmem:[%s246 + $0xa0] sm:$0xff]
      %v274 = vld [vmem:[%s246 + $0xa8] sm:$0xff]
      %v275 = vld [vmem:[%s246 + $0xb0] sm:$0xff]
      %v276 = vld [vmem:[%s246 + $0xb8] sm:$0xff]
      %v277 = vld [vmem:[%s246 + $0xc0] sm:$0xff]
      %v278 = vld [vmem:[%s246 + $0xc8] sm:$0xff]
      %v279 = vld [vmem:[%s246 + $0xd0] sm:$0xff]
      %v280 = vld [vmem:[%s246 + $0xd8] sm:$0xff]
      %v281 = vld [vmem:[%s246 + $0xe0] sm:$0xff]
      %v282 = vld [vmem:[%s246 + $0xe8] sm:$0xff]
      %v283 = vld [vmem:[%s246 + $0xf0] sm:$0xff]
      %v284 = vld [vmem:[%s246 + $0xf8] sm:$0xff]
      %v285 = vld [vmem:[%s246 + $0x100] sm:$0xff]
      %v286 = vld [vmem:[%s246 + $0x108] sm:$0xff]
      %v287 = vld [vmem:[%s246 + $0x110] sm:$0xff]
      %v288 = vld [vmem:[%s246 + $0x118] sm:$0xff]
      %v289 = vpack.c.bf16 %v254, %v253
      %v290 = vpack.c.bf16 %v256, %v255
      %v291 = vpack.c.bf16 %v258, %v257
      %v292 = vpack.c.bf16 %v260, %v259
      %v293 = vpack.c.bf16 %v262, %v261
      %v294 = vpack.c.bf16 %v264, %v263
      %v295 = vpack.c.bf16 %v266, %v265
      %v296 = vpack.c.bf16 %v268, %v267
      %v297 = vpack.c.bf16 %v270, %v269
      %v298 = vpack.c.bf16 %v272, %v271
      %v299 = vpack.c.bf16 %v274, %v273
      %v300 = vpack.c.bf16 %v276, %v275
      %v301 = vpack.c.bf16 %v278, %v277
      %v302 = vpack.c.bf16 %v280, %v279
      %v303 = vpack.c.bf16 %v282, %v281
      %v304 = vpack.c.bf16 %v284, %v283
      %v305 = vpack.c.bf16 %v286, %v285
      %v306 = vpack.c.bf16 %v288, %v287
      %v307 = vld [vmem:[%s1] sm:$0x3]
      %v308 = vld [vmem:[%s246 + $0x1] sm:$0xff]
      %v309 = vld [vmem:[%s246 + $0x9] sm:$0xff]
      %v310 = vld [vmem:[%s246 + $0x11] sm:$0xff]
      %v311 = vld [vmem:[%s246 + $0x19] sm:$0xff]
      %v312 = vld [vmem:[%s246 + $0x21] sm:$0xff]
      %v313 = vld [vmem:[%s246 + $0x29] sm:$0xff]
      %v314 = vld [vmem:[%s246 + $0x31] sm:$0xff]
      %v315 = vld [vmem:[%s246 + $0x39] sm:$0xff]
      %v316 = vld [vmem:[%s246 + $0x41] sm:$0xff]
      %v317 = vld [vmem:[%s246 + $0x49] sm:$0xff]
      %v318 = vld [vmem:[%s246 + $0x51] sm:$0xff]
      %v319 = vld [vmem:[%s246 + $0x59] sm:$0xff]
      %v320 = vld [vmem:[%s246 + $0x61] sm:$0xff]
      %v321 = vld [vmem:[%s246 + $0x69] sm:$0xff]
      %v322 = vld [vmem:[%s246 + $0x71] sm:$0xff]
      %v323 = vld [vmem:[%s246 + $0x79] sm:$0xff]
      %v324 = vld [vmem:[%s246 + $0x81] sm:$0xff]
      %v325 = vld [vmem:[%s246 + $0x89] sm:$0xff]
      %v326 = vld [vmem:[%s246 + $0x91] sm:$0xff]
      %v327 = vld [vmem:[%s246 + $0x99] sm:$0xff]
      %v328 = vld [vmem:[%s246 + $0xa1] sm:$0xff]
      %v329 = vld [vmem:[%s246 + $0xa9] sm:$0xff]
      %v330 = vld [vmem:[%s246 + $0xb1] sm:$0xff]
      %v331 = vld [vmem:[%s246 + $0xb9] sm:$0xff]
      %v332 = vld [vmem:[%s246 + $0xc1] sm:$0xff]
      %v333 = vld [vmem:[%s246 + $0xc9] sm:$0xff]
      %v334 = vld [vmem:[%s246 + $0xd1] sm:$0xff]
      %v335 = vld [vmem:[%s246 + $0xd9] sm:$0xff]
      %v336 = vld [vmem:[%s246 + $0xe1] sm:$0xff]
      %v337 = vld [vmem:[%s246 + $0xe9] sm:$0xff]
      %v338 = vld [vmem:[%s246 + $0xf1] sm:$0xff]
      %v339 = vld [vmem:[%s246 + $0xf9] sm:$0xff]
      %v340 = vld [vmem:[%s246 + $0x101] sm:$0xff]
      %v341 = vld [vmem:[%s246 + $0x109] sm:$0xff]
      %v342 = vld [vmem:[%s246 + $0x111] sm:$0xff]
      %v343 = vld [vmem:[%s246 + $0x119] sm:$0xff]
      %v344 = vpack.c.bf16 %v309, %v308
      %v345 = vpack.c.bf16 %v311, %v310
      %v346 = vpack.c.bf16 %v313, %v312
      %v347 = vpack.c.bf16 %v315, %v314
      %v348 = vpack.c.bf16 %v317, %v316
      %v349 = vpack.c.bf16 %v319, %v318
      %v350 = vpack.c.bf16 %v321, %v320
      %v351 = vpack.c.bf16 %v323, %v322
      %v352 = vpack.c.bf16 %v325, %v324
      %v353 = vpack.c.bf16 %v327, %v326
      %v354 = vpack.c.bf16 %v329, %v328
      %v355 = vpack.c.bf16 %v331, %v330
      %v356 = vpack.c.bf16 %v333, %v332
      %v357 = vpack.c.bf16 %v335, %v334
      %v358 = vpack.c.bf16 %v337, %v336
      %v359 = vpack.c.bf16 %v339, %v338
      %v360 = vpack.c.bf16 %v341, %v340
      %v361 = vpack.c.bf16 %v343, %v342
      %s362 = scalar_lea.vmem %s1, 2
      %v363 = vld [vmem:[%s362] sm:$0x3]
      %vm364 = vcmask 31744
      %v366 = vsel %vm364, %v344, 0
      %v369 = vsel %vm364, %v345, 0
      %v372 = vsel %vm364, %v346, 0
      %v375 = vsel %vm364, %v347, 0
      %v378 = vsel %vm364, %v348, 0
      %v381 = vsel %vm364, %v349, 0
      %v384 = vsel %vm364, %v350, 0
      %v387 = vsel %vm364, %v351, 0
      %v390 = vsel %vm364, %v352, 0
      %v393 = vsel %vm364, %v353, 0
      %v396 = vsel %vm364, %v354, 0
      %v399 = vsel %vm364, %v355, 0
      %v402 = vsel %vm364, %v356, 0
      %v405 = vsel %vm364, %v357, 0
      %v408 = vsel %vm364, %v358, 0
      %v411 = vsel %vm364, %v359, 0
      %v414 = vsel %vm364, %v360, 0
      %v417 = vsel %vm364, %v361, 0
      %vm419 = vcmask 1041408
      %v421 = vsel %vm419, %v363, 0
      %423 = vmatprep.subr.bf16.mxu0 0
      %424 = vmatpush1.bf16.msra.mxu0 %v421
      %425 = vmatprep.subr.bf16.mxu0 0
      %426 = vmatpush1.bf16.msra.mxu0 0
      %427 = vmatprep.subr.bf16.mxu0 0
      %428 = vmatpush1.bf16.msra.mxu0 0
      %429 = vmatprep.subr.bf16.mxu0 0
      %430 = vmatpush1.bf16.msra.mxu0 0
      %431 = vmatprep.subr.bf16.mxu0 0
      %432 = vmatpush1.bf16.msra.mxu0 0
      %433 = vmatprep.subr.bf16.mxu0 0
      %434 = vmatpush1.bf16.msra.mxu0 0
      %435 = vmatprep.subr.bf16.mxu0 0
      %436 = vmatpush1.bf16.msra.mxu0 0
      %437 = vmatprep.subr.bf16.mxu0 0
      %438 = vmatpush1.bf16.msra.mxu0 0
      %439 = vmatprep.subr.bf16.mxu0 0
      %440 = vmatpush1.bf16.msra.mxu0 0
      %441 = vmatprep.subr.bf16.mxu0 0
      %442 = vmatpush1.bf16.msra.mxu0 0
      %443 = vmatprep.subr.bf16.mxu0 0
      %444 = vmatpush1.bf16.msra.mxu0 0
      %445 = vmatprep.subr.bf16.mxu0 0
      %446 = vmatpush1.bf16.msra.mxu0 0
      %447 = vmatprep.subr.bf16.mxu0 0
      %448 = vmatpush1.bf16.msra.mxu0 0
      %449 = vmatprep.subr.bf16.mxu0 0
      %450 = vmatpush1.bf16.msra.mxu0 0
      %451 = vmatprep.subr.bf16.mxu0 0
      %452 = vmatpush1.bf16.msra.mxu0 0
      %453 = vmatprep.subr.bf16.mxu0 0
      %454 = vmatpush1.bf16.msra.mxu0 0
      %455 = vmatprep.mubr.bf16.mxu0 0
      %456 = vmatmul.mubr.bf16.gmra.mrb[0].mxu0 %v366
      %v457 = vpop.f32.mrb[0].mxu0
      %v458 = vadd.f32 0.0, %v457
      %v459 = vpop.f32.mrb[0].mxu0
      %v460 = vpop.f32.mrb[0].mxu0
      %v461 = vadd.f32 0.0, %v460
      %v462 = vpop.f32.mrb[0].mxu0
      %463 = vmatprep.mubr.bf16.mxu0 0
      %464 = vmatmul.mubr.bf16.gmra.mrb[0].mxu0 %v369
      %v465 = vpop.f32.mrb[0].mxu0
      %v466 = vadd.f32 0.0, %v465
      %v467 = vpop.f32.mrb[0].mxu0
      %v468 = vpop.f32.mrb[0].mxu0
      %v469 = vadd.f32 0.0, %v468
      %v470 = vpop.f32.mrb[0].mxu0
      %471 = vmatprep.mubr.bf16.mxu0 0
      %472 = vmatmul.mubr.bf16.gmra.mrb[0].mxu0 %v372
      %v473 = vpop.f32.mrb[0].mxu0
      %v474 = vadd.f32 0.0, %v473
      %v475 = vpop.f32.mrb[0].mxu0
      %v476 = vpop.f32.mrb[0].mxu0
      %v477 = vadd.f32 0.0, %v476
      %v478 = vpop.f32.mrb[0].mxu0
      %479 = vmatprep.mubr.bf16.mxu0 0
      %480 = vmatmul.mubr.bf16.gmra.mrb[0].mxu0 %v375
      %v481 = vpop.f32.mrb[0].mxu0
      %v482 = vadd.f32 0.0, %v481
      %v483 = vpop.f32.mrb[0].mxu0
      %v484 = vpop.f32.mrb[0].mxu0
      %v485 = vadd.f32 0.0, %v484
      %v486 = vpop.f32.mrb[0].mxu0
      %487 = vmatprep.mubr.bf16.mxu0 0
      %488 = vmatmul.mubr.bf16.gmra.mrb[0].mxu0 %v378
      %v489 = vpop.f32.mrb[0].mxu0
      %v490 = vadd.f32 0.0, %v489
      %v491 = vpop.f32.mrb[0].mxu0
      %v492 = vpop.f32.mrb[0].mxu0
      %v493 = vadd.f32 0.0, %v492
      %v494 = vpop.f32.mrb[0].mxu0
      %495 = vmatprep.mubr.bf16.mxu0 0
      %496 = vmatmul.mubr.bf16.gmra.mrb[0].mxu0 %v381
      %v497 = vpop.f32.mrb[0].mxu0
      %v498 = vadd.f32 0.0, %v497
      %v499 = vpop.f32.mrb[0].mxu0
      %v500 = vpop.f32.mrb[0].mxu0
      %v501 = vadd.f32 0.0, %v500
      %v502 = vpop.f32.mrb[0].mxu0
      %503 = vmatprep.mubr.bf16.mxu0 0
      %504 = vmatmul.mubr.bf16.gmra.mrb[0].mxu0 %v384
      %v505 = vpop.f32.mrb[0].mxu0
      %v506 = vadd.f32 0.0, %v505
      %v507 = vpop.f32.mrb[0].mxu0
      %v508 = vpop.f32.mrb[0].mxu0
      %v509 = vadd.f32 0.0, %v508
      %v510 = vpop.f32.mrb[0].mxu0
      %511 = vmatprep.mubr.bf16.mxu0 0
      %512 = vmatmul.mubr.bf16.gmra.mrb[0].mxu0 %v387
      %v513 = vpop.f32.mrb[0].mxu0
      %v514 = vadd.f32 0.0, %v513
      %v515 = vpop.f32.mrb[0].mxu0
      %v516 = vpop.f32.mrb[0].mxu0
      %v517 = vadd.f32 0.0, %v516
      %v518 = vpop.f32.mrb[0].mxu0
      %519 = vmatprep.mubr.bf16.mxu0 0
      %520 = vmatmul.mubr.bf16.gmra.mrb[0].mxu0 %v390
      %v521 = vpop.f32.mrb[0].mxu0
      %v522 = vadd.f32 0.0, %v521
      %v523 = vpop.f32.mrb[0].mxu0
      %v524 = vpop.f32.mrb[0].mxu0
      %v525 = vadd.f32 0.0, %v524
      %v526 = vpop.f32.mrb[0].mxu0
      %527 = vmatprep.mubr.bf16.mxu0 0
      %528 = vmatmul.mubr.bf16.gmra.mrb[0].mxu0 %v393
      %v529 = vpop.f32.mrb[0].mxu0
      %v530 = vadd.f32 0.0, %v529
      %v531 = vpop.f32.mrb[0].mxu0
      %v532 = vpop.f32.mrb[0].mxu0
      %v533 = vadd.f32 0.0, %v532
      %v534 = vpop.f32.mrb[0].mxu0
      %535 = vmatprep.mubr.bf16.mxu0 0
      %536 = vmatmul.mubr.bf16.gmra.mrb[0].mxu0 %v396
      %v537 = vpop.f32.mrb[0].mxu0
      %v538 = vadd.f32 0.0, %v537
      %v539 = vpop.f32.mrb[0].mxu0
      %v540 = vpop.f32.mrb[0].mxu0
      %v541 = vadd.f32 0.0, %v540
      %v542 = vpop.f32.mrb[0].mxu0
      %543 = vmatprep.mubr.bf16.mxu0 0
      %544 = vmatmul.mubr.bf16.gmra.mrb[0].mxu0 %v399
      %v545 = vpop.f32.mrb[0].mxu0
      %v546 = vadd.f32 0.0, %v545
      %v547 = vpop.f32.mrb[0].mxu0
      %v548 = vpop.f32.mrb[0].mxu0
      %v549 = vadd.f32 0.0, %v548
      %v550 = vpop.f32.mrb[0].mxu0
      %551 = vmatprep.mubr.bf16.mxu0 0
      %552 = vmatmul.mubr.bf16.gmra.mrb[0].mxu0 %v402
      %v553 = vpop.f32.mrb[0].mxu0
      %v554 = vadd.f32 0.0, %v553
      %v555 = vpop.f32.mrb[0].mxu0
      %v556 = vpop.f32.mrb[0].mxu0
      %v557 = vadd.f32 0.0, %v556
      %v558 = vpop.f32.mrb[0].mxu0
      %559 = vmatprep.mubr.bf16.mxu0 0
      %560 = vmatmul.mubr.bf16.gmra.mrb[0].mxu0 %v405
      %v561 = vpop.f32.mrb[0].mxu0
      %v562 = vadd.f32 0.0, %v561
      %v563 = vpop.f32.mrb[0].mxu0
      %v564 = vpop.f32.mrb[0].mxu0
      %v565 = vadd.f32 0.0, %v564
      %v566 = vpop.f32.mrb[0].mxu0
      %567 = vmatprep.mubr.bf16.mxu0 0
      %568 = vmatmul.mubr.bf16.gmra.mrb[0].mxu0 %v408
      %v569 = vpop.f32.mrb[0].mxu0
      %v570 = vadd.f32 0.0, %v569
      %v571 = vpop.f32.mrb[0].mxu0
      %v572 = vpop.f32.mrb[0].mxu0
      %v573 = vadd.f32 0.0, %v572
      %v574 = vpop.f32.mrb[0].mxu0
      %575 = vmatprep.mubr.bf16.mxu0 0
      %576 = vmatmul.mubr.bf16.gmra.mrb[0].mxu0 %v411
      %v577 = vpop.f32.mrb[0].mxu0
      %v578 = vadd.f32 0.0, %v577
      %v579 = vpop.f32.mrb[0].mxu0
      %v580 = vpop.f32.mrb[0].mxu0
      %v581 = vadd.f32 0.0, %v580
      %v582 = vpop.f32.mrb[0].mxu0
      %583 = vmatprep.mubr.bf16.mxu0 0
      %584 = vmatmul.mubr.bf16.gmra.mrb[0].mxu0 %v414
      %v585 = vpop.f32.mrb[0].mxu0
      %v586 = vadd.f32 0.0, %v585
      %v587 = vpop.f32.mrb[0].mxu0
      %v588 = vpop.f32.mrb[0].mxu0
      %v589 = vadd.f32 0.0, %v588
      %v590 = vpop.f32.mrb[0].mxu0
      %591 = vmatprep.mubr.bf16.mxu0 0
      %592 = vmatmul.mubr.bf16.gmra.mrb[0].mxu0 %v417
      %v593 = vpop.f32.mrb[0].mxu0
      %v594 = vadd.f32 0.0, %v593
      %v595 = vpop.f32.mrb[0].mxu0
      %v596 = vpop.f32.mrb[0].mxu0
      %v597 = vadd.f32 0.0, %v596
      %v598 = vpop.f32.mrb[0].mxu0
      %599 = vdwg.mxu0
      %v601 = vsel %vm364, %v289, 0
      %v604 = vsel %vm364, %v290, 0
      %v607 = vsel %vm364, %v291, 0
      %v610 = vsel %vm364, %v292, 0
      %v613 = vsel %vm364, %v293, 0
      %v616 = vsel %vm364, %v294, 0
      %v619 = vsel %vm364, %v295, 0
      %v622 = vsel %vm364, %v296, 0
      %v625 = vsel %vm364, %v297, 0
      %v628 = vsel %vm364, %v298, 0
      %v631 = vsel %vm364, %v299, 0
      %v634 = vsel %vm364, %v300, 0
      %v637 = vsel %vm364, %v301, 0
      %v640 = vsel %vm364, %v302, 0
      %v643 = vsel %vm364, %v303, 0
      %v646 = vsel %vm364, %v304, 0
      %v649 = vsel %vm364, %v305, 0
      %v652 = vsel %vm364, %v306, 0
      %v655 = vsel %vm419, %v307, 0
      %657 = vmatprep.subr.bf16.mxu0 0
      %658 = vmatpush1.bf16.msra.mxu0 %v655
      %659 = vmatprep.subr.bf16.mxu0 0
      %660 = vmatpush1.bf16.msra.mxu0 0
      %661 = vmatprep.subr.bf16.mxu0 0
      %662 = vmatpush1.bf16.msra.mxu0 0
      %663 = vmatprep.subr.bf16.mxu0 0
      %664 = vmatpush1.bf16.msra.mxu0 0
      %665 = vmatprep.subr.bf16.mxu0 0
      %666 = vmatpush1.bf16.msra.mxu0 0
      %667 = vmatprep.subr.bf16.mxu0 0
      %668 = vmatpush1.bf16.msra.mxu0 0
      %669 = vmatprep.subr.bf16.mxu0 0
      %670 = vmatpush1.bf16.msra.mxu0 0
      %671 = vmatprep.subr.bf16.mxu0 0
      %672 = vmatpush1.bf16.msra.mxu0 0
      %673 = vmatprep.subr.bf16.mxu0 0
      %674 = vmatpush1.bf16.msra.mxu0 0
      %675 = vmatprep.subr.bf16.mxu0 0
      %676 = vmatpush1.bf16.msra.mxu0 0
      %677 = vmatprep.subr.bf16.mxu0 0
      %678 = vmatpush1.bf16.msra.mxu0 0
      %679 = vmatprep.subr.bf16.mxu0 0
      %680 = vmatpush1.bf16.msra.mxu0 0
      %681 = vmatprep.subr.bf16.mxu0 0
      %682 = vmatpush1.bf16.msra.mxu0 0
      %683 = vmatprep.subr.bf16.mxu0 0
      %684 = vmatpush1.bf16.msra.mxu0 0
      %685 = vmatprep.subr.bf16.mxu0 0
      %686 = vmatpush1.bf16.msra.mxu0 0
      %687 = vmatprep.subr.bf16.mxu0 0
      %688 = vmatpush1.bf16.msra.mxu0 0
      %689 = vmatprep.mubr.bf16.mxu0 0
      %690 = vmatmul.mubr.bf16.gmra.mrb[0].mxu0 %v601
      %v691 = vpop.f32.mrb[0].mxu0
      %v692 = vadd.f32 %v458, %v691
      %v693 = vpop.f32.mrb[0].mxu0
      %v694 = vpop.f32.mrb[0].mxu0
      %v695 = vadd.f32 %v461, %v694
      %v696 = vpop.f32.mrb[0].mxu0
      %697 = vmatprep.mubr.bf16.mxu0 0
      %698 = vmatmul.mubr.bf16.gmra.mrb[0].mxu0 %v604
      %v699 = vpop.f32.mrb[0].mxu0
      %v700 = vadd.f32 %v466, %v699
      %v701 = vpop.f32.mrb[0].mxu0
      %v702 = vpop.f32.mrb[0].mxu0
      %v703 = vadd.f32 %v469, %v702
      %v704 = vpop.f32.mrb[0].mxu0
      %705 = vmatprep.mubr.bf16.mxu0 0
      %706 = vmatmul.mubr.bf16.gmra.mrb[0].mxu0 %v607
      %v707 = vpop.f32.mrb[0].mxu0
      %v708 = vadd.f32 %v474, %v707
      %v709 = vpop.f32.mrb[0].mxu0
      %v710 = vpop.f32.mrb[0].mxu0
      %v711 = vadd.f32 %v477, %v710
      %v712 = vpop.f32.mrb[0].mxu0
      %713 = vmatprep.mubr.bf16.mxu0 0
      %714 = vmatmul.mubr.bf16.gmra.mrb[0].mxu0 %v610
      %v715 = vpop.f32.mrb[0].mxu0
      %v716 = vadd.f32 %v482, %v715
      %v717 = vpop.f32.mrb[0].mxu0
      %v718 = vpop.f32.mrb[0].mxu0
      %v719 = vadd.f32 %v485, %v718
      %v720 = vpop.f32.mrb[0].mxu0
      %721 = vmatprep.mubr.bf16.mxu0 0
      %722 = vmatmul.mubr.bf16.gmra.mrb[0].mxu0 %v613
      %v723 = vpop.f32.mrb[0].mxu0
      %v724 = vadd.f32 %v490, %v723
      %v725 = vpop.f32.mrb[0].mxu0
      %v726 = vpop.f32.mrb[0].mxu0
      %v727 = vadd.f32 %v493, %v726
      %v728 = vpop.f32.mrb[0].mxu0
      %729 = vmatprep.mubr.bf16.mxu0 0
      %730 = vmatmul.mubr.bf16.gmra.mrb[0].mxu0 %v616
      %v731 = vpop.f32.mrb[0].mxu0
      %v732 = vadd.f32 %v498, %v731
      %v733 = vpop.f32.mrb[0].mxu0
      %v734 = vpop.f32.mrb[0].mxu0
      %v735 = vadd.f32 %v501, %v734
      %v736 = vpop.f32.mrb[0].mxu0
      %737 = vmatprep.mubr.bf16.mxu0 0
      %738 = vmatmul.mubr.bf16.gmra.mrb[0].mxu0 %v619
      %v739 = vpop.f32.mrb[0].mxu0
      %v740 = vadd.f32 %v506, %v739
      %v741 = vpop.f32.mrb[0].mxu0
      %v742 = vpop.f32.mrb[0].mxu0
      %v743 = vadd.f32 %v509, %v742
      %v744 = vpop.f32.mrb[0].mxu0
      %745 = vmatprep.mubr.bf16.mxu0 0
      %746 = vmatmul.mubr.bf16.gmra.mrb[0].mxu0 %v622
      %v747 = vpop.f32.mrb[0].mxu0
      %v748 = vadd.f32 %v514, %v747
      %v749 = vpop.f32.mrb[0].mxu0
      %v750 = vpop.f32.mrb[0].mxu0
      %v751 = vadd.f32 %v517, %v750
      %v752 = vpop.f32.mrb[0].mxu0
      %753 = vmatprep.mubr.bf16.mxu0 0
      %754 = vmatmul.mubr.bf16.gmra.mrb[0].mxu0 %v625
      %v755 = vpop.f32.mrb[0].mxu0
      %v756 = vadd.f32 %v522, %v755
      %v757 = vpop.f32.mrb[0].mxu0
      %v758 = vpop.f32.mrb[0].mxu0
      %v759 = vadd.f32 %v525, %v758
      %v760 = vpop.f32.mrb[0].mxu0
      %761 = vmatprep.mubr.bf16.mxu0 0
      %762 = vmatmul.mubr.bf16.gmra.mrb[0].mxu0 %v628
      %v763 = vpop.f32.mrb[0].mxu0
      %v764 = vadd.f32 %v530, %v763
      %v765 = vpop.f32.mrb[0].mxu0
      %v766 = vpop.f32.mrb[0].mxu0
      %v767 = vadd.f32 %v533, %v766
      %v768 = vpop.f32.mrb[0].mxu0
      %769 = vmatprep.mubr.bf16.mxu0 0
      %770 = vmatmul.mubr.bf16.gmra.mrb[0].mxu0 %v631
      %v771 = vpop.f32.mrb[0].mxu0
      %v772 = vadd.f32 %v538, %v771
      %v773 = vpop.f32.mrb[0].mxu0
      %v774 = vpop.f32.mrb[0].mxu0
      %v775 = vadd.f32 %v541, %v774
      %v776 = vpop.f32.mrb[0].mxu0
      %777 = vmatprep.mubr.bf16.mxu0 0
      %778 = vmatmul.mubr.bf16.gmra.mrb[0].mxu0 %v634
      %v779 = vpop.f32.mrb[0].mxu0
      %v780 = vadd.f32 %v546, %v779
      %v781 = vpop.f32.mrb[0].mxu0
      %v782 = vpop.f32.mrb[0].mxu0
      %v783 = vadd.f32 %v549, %v782
      %v784 = vpop.f32.mrb[0].mxu0
      %785 = vmatprep.mubr.bf16.mxu0 0
      %786 = vmatmul.mubr.bf16.gmra.mrb[0].mxu0 %v637
      %v787 = vpop.f32.mrb[0].mxu0
      %v788 = vadd.f32 %v554, %v787
      %v789 = vpop.f32.mrb[0].mxu0
      %v790 = vpop.f32.mrb[0].mxu0
      %v791 = vadd.f32 %v557, %v790
      %v792 = vpop.f32.mrb[0].mxu0
      %793 = vmatprep.mubr.bf16.mxu0 0
      %794 = vmatmul.mubr.bf16.gmra.mrb[0].mxu0 %v640
      %v795 = vpop.f32.mrb[0].mxu0
      %v796 = vadd.f32 %v562, %v795
      %v797 = vpop.f32.mrb[0].mxu0
      %v798 = vpop.f32.mrb[0].mxu0
      %v799 = vadd.f32 %v565, %v798
      %v800 = vpop.f32.mrb[0].mxu0
      %801 = vmatprep.mubr.bf16.mxu0 0
      %802 = vmatmul.mubr.bf16.gmra.mrb[0].mxu0 %v643
      %v803 = vpop.f32.mrb[0].mxu0
      %v804 = vadd.f32 %v570, %v803
      %v805 = vpop.f32.mrb[0].mxu0
      %v806 = vpop.f32.mrb[0].mxu0
      %v807 = vadd.f32 %v573, %v806
      %v808 = vpop.f32.mrb[0].mxu0
      %809 = vmatprep.mubr.bf16.mxu0 0
      %810 = vmatmul.mubr.bf16.gmra.mrb[0].mxu0 %v646
      %v811 = vpop.f32.mrb[0].mxu0
      %v812 = vadd.f32 %v578, %v811
      %v813 = vpop.f32.mrb[0].mxu0
      %v814 = vpop.f32.mrb[0].mxu0
      %v815 = vadd.f32 %v581, %v814
      %v816 = vpop.f32.mrb[0].mxu0
      %817 = vmatprep.mubr.bf16.mxu0 0
      %818 = vmatmul.mubr.bf16.gmra.mrb[0].mxu0 %v649
      %v819 = vpop.f32.mrb[0].mxu0
      %v820 = vadd.f32 %v586, %v819
      %v821 = vpop.f32.mrb[0].mxu0
      %v822 = vpop.f32.mrb[0].mxu0
      %v823 = vadd.f32 %v589, %v822
      %v824 = vpop.f32.mrb[0].mxu0
      %825 = vmatprep.mubr.bf16.mxu0 0
      %826 = vmatmul.mubr.bf16.gmra.mrb[0].mxu0 %v652
      %v827 = vpop.f32.mrb[0].mxu0
      %v828 = vadd.f32 %v594, %v827
      %v829 = vpop.f32.mrb[0].mxu0
      %v830 = vpop.f32.mrb[0].mxu0
      %v831 = vadd.f32 %v597, %v830
      %v832 = vpop.f32.mrb[0].mxu0
      %833 = vdwg.mxu0
      %v834 = vld [vmem:[%s246 + $0x2] sm:$0xff]
      %v835 = vld [vmem:[%s246 + $0xa] sm:$0xff]
      %v836 = vld [vmem:[%s246 + $0x12] sm:$0xff]
      %v837 = vld [vmem:[%s246 + $0x1a] sm:$0xff]
      %v838 = vld [vmem:[%s246 + $0x22] sm:$0xff]
      %v839 = vld [vmem:[%s246 + $0x2a] sm:$0xff]
      %v840 = vld [vmem:[%s246 + $0x32] sm:$0xff]
      %v841 = vld [vmem:[%s246 + $0x3a] sm:$0xff]
      %v842 = vld [vmem:[%s246 + $0x42] sm:$0xff]
      %v843 = vld [vmem:[%s246 + $0x4a] sm:$0xff]
      %v844 = vld [vmem:[%s246 + $0x52] sm:$0xff]
      %v845 = vld [vmem:[%s246 + $0x5a] sm:$0xff]
      %v846 = vld [vmem:[%s246 + $0x62] sm:$0xff]
      %v847 = vld [vmem:[%s246 + $0x6a] sm:$0xff]
      %v848 = vld [vmem:[%s246 + $0x72] sm:$0xff]
      %v849 = vld [vmem:[%s246 + $0x7a] sm:$0xff]
      %v850 = vld [vmem:[%s246 + $0x82] sm:$0xff]
      %v851 = vld [vmem:[%s246 + $0x8a] sm:$0xff]
      %v852 = vld [vmem:[%s246 + $0x92] sm:$0xff]
      %v853 = vld [vmem:[%s246 + $0x9a] sm:$0xff]
      %v854 = vld [vmem:[%s246 + $0xa2] sm:$0xff]
      %v855 = vld [vmem:[%s246 + $0xaa] sm:$0xff]
      %v856 = vld [vmem:[%s246 + $0xb2] sm:$0xff]
      %v857 = vld [vmem:[%s246 + $0xba] sm:$0xff]
      %v858 = vld [vmem:[%s246 + $0xc2] sm:$0xff]
      %v859 = vld [vmem:[%s246 + $0xca] sm:$0xff]
      %v860 = vld [vmem:[%s246 + $0xd2] sm:$0xff]
      %v861 = vld [vmem:[%s246 + $0xda] sm:$0xff]
      %v862 = vld [vmem:[%s246 + $0xe2] sm:$0xff]
      %v863 = vld [vmem:[%s246 + $0xea] sm:$0xff]
      %v864 = vld [vmem:[%s246 + $0xf2] sm:$0xff]
      %v865 = vld [vmem:[%s246 + $0xfa] sm:$0xff]
      %v866 = vld [vmem:[%s246 + $0x102] sm:$0xff]
      %v867 = vld [vmem:[%s246 + $0x10a] sm:$0xff]
      %v868 = vld [vmem:[%s246 + $0x112] sm:$0xff]
      %v869 = vld [vmem:[%s246 + $0x11a] sm:$0xff]
      %v870 = vpack.c.bf16 %v835, %v834
      %v871 = vpack.c.bf16 %v837, %v836
      %v872 = vpack.c.bf16 %v839, %v838
      %v873 = vpack.c.bf16 %v841, %v840
      %v874 = vpack.c.bf16 %v843, %v842
      %v875 = vpack.c.bf16 %v845, %v844
      %v876 = vpack.c.bf16 %v847, %v846
      %v877 = vpack.c.bf16 %v849, %v848
      %v878 = vpack.c.bf16 %v851, %v850
      %v879 = vpack.c.bf16 %v853, %v852
      %v880 = vpack.c.bf16 %v855, %v854
      %v881 = vpack.c.bf16 %v857, %v856
      %v882 = vpack.c.bf16 %v859, %v858
      %v883 = vpack.c.bf16 %v861, %v860
      %v884 = vpack.c.bf16 %v863, %v862
      %v885 = vpack.c.bf16 %v865, %v864
      %v886 = vpack.c.bf16 %v867, %v866
      %v887 = vpack.c.bf16 %v869, %v868
      %s888 = scalar_lea.vmem %s1, 4
      %v889 = vld [vmem:[%s888] sm:$0x3]
      %v891 = vsel %vm364, %v870, 0
      %v894 = vsel %vm364, %v871, 0
      %v897 = vsel %vm364, %v872, 0
      %v900 = vsel %vm364, %v873, 0
      %v903 = vsel %vm364, %v874, 0
      %v906 = vsel %vm364, %v875, 0
      %v909 = vsel %vm364, %v876, 0
      %v912 = vsel %vm364, %v877, 0
      %v915 = vsel %vm364, %v878, 0
      %v918 = vsel %vm364, %v879, 0
      %v921 = vsel %vm364, %v880, 0
      %v924 = vsel %vm364, %v881, 0
      %v927 = vsel %vm364, %v882, 0
      %v930 = vsel %vm364, %v883, 0
      %v933 = vsel %vm364, %v884, 0
      %v936 = vsel %vm364, %v885, 0
      %v939 = vsel %vm364, %v886, 0
      %v942 = vsel %vm364, %v887, 0
      %v945 = vsel %vm419, %v889, 0
      %947 = vmatprep.subr.bf16.mxu0 0
      %948 = vmatpush1.bf16.msra.mxu0 %v945
      %949 = vmatprep.subr.bf16.mxu0 0
      %950 = vmatpush1.bf16.msra.mxu0 0
      %951 = vmatprep.subr.bf16.mxu0 0
      %952 = vmatpush1.bf16.msra.mxu0 0
      %953 = vmatprep.subr.bf16.mxu0 0
      %954 = vmatpush1.bf16.msra.mxu0 0
      %955 = vmatprep.subr.bf16.mxu0 0
      %956 = vmatpush1.bf16.msra.mxu0 0
      %957 = vmatprep.subr.bf16.mxu0 0
      %958 = vmatpush1.bf16.msra.mxu0 0
      %959 = vmatprep.subr.bf16.mxu0 0
      %960 = vmatpush1.bf16.msra.mxu0 0
      %961 = vmatprep.subr.bf16.mxu0 0
      %962 = vmatpush1.bf16.msra.mxu0 0
      %963 = vmatprep.subr.bf16.mxu0 0
      %964 = vmatpush1.bf16.msra.mxu0 0
      %965 = vmatprep.subr.bf16.mxu0 0
      %966 = vmatpush1.bf16.msra.mxu0 0
      %967 = vmatprep.subr.bf16.mxu0 0
      %968 = vmatpush1.bf16.msra.mxu0 0
      %969 = vmatprep.subr.bf16.mxu0 0
      %970 = vmatpush1.bf16.msra.mxu0 0
      %971 = vmatprep.subr.bf16.mxu0 0
      %972 = vmatpush1.bf16.msra.mxu0 0
      %973 = vmatprep.subr.bf16.mxu0 0
      %974 = vmatpush1.bf16.msra.mxu0 0
      %975 = vmatprep.subr.bf16.mxu0 0
      %976 = vmatpush1.bf16.msra.mxu0 0
      %977 = vmatprep.subr.bf16.mxu0 0
      %978 = vmatpush1.bf16.msra.mxu0 0
      %979 = vmatprep.mubr.bf16.mxu0 0
      %980 = vmatmul.mubr.bf16.gmra.mrb[0].mxu0 %v891
      %v981 = vpop.f32.mrb[0].mxu0
      %v982 = vadd.f32 0.0, %v981
      %v983 = vpop.f32.mrb[0].mxu0
      %v984 = vpop.f32.mrb[0].mxu0
      %v985 = vadd.f32 0.0, %v984
      %v986 = vpop.f32.mrb[0].mxu0
      %987 = vmatprep.mubr.bf16.mxu0 0
      %988 = vmatmul.mubr.bf16.gmra.mrb[0].mxu0 %v894
      %v989 = vpop.f32.mrb[0].mxu0
      %v990 = vadd.f32 0.0, %v989
      %v991 = vpop.f32.mrb[0].mxu0
      %v992 = vpop.f32.mrb[0].mxu0
      %v993 = vadd.f32 0.0, %v992
      %v994 = vpop.f32.mrb[0].mxu0
      %995 = vmatprep.mubr.bf16.mxu0 0
      %996 = vmatmul.mubr.bf16.gmra.mrb[0].mxu0 %v897
      %v997 = vpop.f32.mrb[0].mxu0
      %v998 = vadd.f32 0.0, %v997
      %v999 = vpop.f32.mrb[0].mxu0
      %v1000 = vpop.f32.mrb[0].mxu0
      %v1001 = vadd.f32 0.0, %v1000
      %v1002 = vpop.f32.mrb[0].mxu0
      %1003 = vmatprep.mubr.bf16.mxu0 0
      %1004 = vmatmul.mubr.bf16.gmra.mrb[0].mxu0 %v900
      %v1005 = vpop.f32.mrb[0].mxu0
      %v1006 = vadd.f32 0.0, %v1005
      %v1007 = vpop.f32.mrb[0].mxu0
      %v1008 = vpop.f32.mrb[0].mxu0
      %v1009 = vadd.f32 0.0, %v1008
      %v1010 = vpop.f32.mrb[0].mxu0
      %1011 = vmatprep.mubr.bf16.mxu0 0
      %1012 = vmatmul.mubr.bf16.gmra.mrb[0].mxu0 %v903
      %v1013 = vpop.f32.mrb[0].mxu0
      %v1014 = vadd.f32 0.0, %v1013
      %v1015 = vpop.f32.mrb[0].mxu0
      %v1016 = vpop.f32.mrb[0].mxu0
      %v1017 = vadd.f32 0.0, %v1016
      %v1018 = vpop.f32.mrb[0].mxu0
      %1019 = vmatprep.mubr.bf16.mxu0 0
      %1020 = vmatmul.mubr.bf16.gmra.mrb[0].mxu0 %v906
      %v1021 = vpop.f32.mrb[0].mxu0
      %v1022 = vadd.f32 0.0, %v1021
      %v1023 = vpop.f32.mrb[0].mxu0
      %v1024 = vpop.f32.mrb[0].mxu0
      %v1025 = vadd.f32 0.0, %v1024
      %v1026 = vpop.f32.mrb[0].mxu0
      %1027 = vmatprep.mubr.bf16.mxu0 0
      %1028 = vmatmul.mubr.bf16.gmra.mrb[0].mxu0 %v909
      %v1029 = vpop.f32.mrb[0].mxu0
      %v1030 = vadd.f32 0.0, %v1029
      %v1031 = vpop.f32.mrb[0].mxu0
      %v1032 = vpop.f32.mrb[0].mxu0
      %v1033 = vadd.f32 0.0, %v1032
      %v1034 = vpop.f32.mrb[0].mxu0
      %1035 = vmatprep.mubr.bf16.mxu0 0
      %1036 = vmatmul.mubr.bf16.gmra.mrb[0].mxu0 %v912
      %v1037 = vpop.f32.mrb[0].mxu0
      %v1038 = vadd.f32 0.0, %v1037
      %v1039 = vpop.f32.mrb[0].mxu0
      %v1040 = vpop.f32.mrb[0].mxu0
      %v1041 = vadd.f32 0.0, %v1040
      %v1042 = vpop.f32.mrb[0].mxu0
      %1043 = vmatprep.mubr.bf16.mxu0 0
      %1044 = vmatmul.mubr.bf16.gmra.mrb[0].mxu0 %v915
      %v1045 = vpop.f32.mrb[0].mxu0
      %v1046 = vadd.f32 0.0, %v1045
      %v1047 = vpop.f32.mrb[0].mxu0
      %v1048 = vpop.f32.mrb[0].mxu0
      %v1049 = vadd.f32 0.0, %v1048
      %v1050 = vpop.f32.mrb[0].mxu0
      %1051 = vmatprep.mubr.bf16.mxu0 0
      %1052 = vmatmul.mubr.bf16.gmra.mrb[0].mxu0 %v918
      %v1053 = vpop.f32.mrb[0].mxu0
      %v1054 = vadd.f32 0.0, %v1053
      %v1055 = vpop.f32.mrb[0].mxu0
      %v1056 = vpop.f32.mrb[0].mxu0
      %v1057 = vadd.f32 0.0, %v1056
      %v1058 = vpop.f32.mrb[0].mxu0
      %1059 = vmatprep.mubr.bf16.mxu0 0
      %1060 = vmatmul.mubr.bf16.gmra.mrb[0].mxu0 %v921
      %v1061 = vpop.f32.mrb[0].mxu0
      %v1062 = vadd.f32 0.0, %v1061
      %v1063 = vpop.f32.mrb[0].mxu0
      %v1064 = vpop.f32.mrb[0].mxu0
      %v1065 = vadd.f32 0.0, %v1064
      %v1066 = vpop.f32.mrb[0].mxu0
      %1067 = vmatprep.mubr.bf16.mxu0 0
      %1068 = vmatmul.mubr.bf16.gmra.mrb[0].mxu0 %v924
      %v1069 = vpop.f32.mrb[0].mxu0
      %v1070 = vadd.f32 0.0, %v1069
      %v1071 = vpop.f32.mrb[0].mxu0
      %v1072 = vpop.f32.mrb[0].mxu0
      %v1073 = vadd.f32 0.0, %v1072
      %v1074 = vpop.f32.mrb[0].mxu0
      %1075 = vmatprep.mubr.bf16.mxu0 0
      %1076 = vmatmul.mubr.bf16.gmra.mrb[0].mxu0 %v927
      %v1077 = vpop.f32.mrb[0].mxu0
      %v1078 = vadd.f32 0.0, %v1077
      %v1079 = vpop.f32.mrb[0].mxu0
      %v1080 = vpop.f32.mrb[0].mxu0
      %v1081 = vadd.f32 0.0, %v1080
      %v1082 = vpop.f32.mrb[0].mxu0
      %1083 = vmatprep.mubr.bf16.mxu0 0
      %1084 = vmatmul.mubr.bf16.gmra.mrb[0].mxu0 %v930
      %v1085 = vpop.f32.mrb[0].mxu0
      %v1086 = vadd.f32 0.0, %v1085
      %v1087 = vpop.f32.mrb[0].mxu0
      %v1088 = vpop.f32.mrb[0].mxu0
      %v1089 = vadd.f32 0.0, %v1088
      %v1090 = vpop.f32.mrb[0].mxu0
      %1091 = vmatprep.mubr.bf16.mxu0 0
      %1092 = vmatmul.mubr.bf16.gmra.mrb[0].mxu0 %v933
      %v1093 = vpop.f32.mrb[0].mxu0
      %v1094 = vadd.f32 0.0, %v1093
      %v1095 = vpop.f32.mrb[0].mxu0
      %v1096 = vpop.f32.mrb[0].mxu0
      %v1097 = vadd.f32 0.0, %v1096
      %v1098 = vpop.f32.mrb[0].mxu0
      %1099 = vmatprep.mubr.bf16.mxu0 0
      %1100 = vmatmul.mubr.bf16.gmra.mrb[0].mxu0 %v936
      %v1101 = vpop.f32.mrb[0].mxu0
      %v1102 = vadd.f32 0.0, %v1101
      %v1103 = vpop.f32.mrb[0].mxu0
      %v1104 = vpop.f32.mrb[0].mxu0
      %v1105 = vadd.f32 0.0, %v1104
      %v1106 = vpop.f32.mrb[0].mxu0
      %1107 = vmatprep.mubr.bf16.mxu0 0
      %1108 = vmatmul.mubr.bf16.gmra.mrb[0].mxu0 %v939
      %v1109 = vpop.f32.mrb[0].mxu0
      %v1110 = vadd.f32 0.0, %v1109
      %v1111 = vpop.f32.mrb[0].mxu0
      %v1112 = vpop.f32.mrb[0].mxu0
      %v1113 = vadd.f32 0.0, %v1112
      %v1114 = vpop.f32.mrb[0].mxu0
      %1115 = vmatprep.mubr.bf16.mxu0 0
      %1116 = vmatmul.mubr.bf16.gmra.mrb[0].mxu0 %v942
      %v1117 = vpop.f32.mrb[0].mxu0
      %v1118 = vadd.f32 0.0, %v1117
      %v1119 = vpop.f32.mrb[0].mxu0
      %v1120 = vpop.f32.mrb[0].mxu0
      %v1121 = vadd.f32 0.0, %v1120
      %v1122 = vpop.f32.mrb[0].mxu0
      %1123 = vdwg.mxu0
      %v1124 = vadd.f32 %v692, %v982
      %v1125 = vadd.f32 %v695, %v985
      %v1126 = vadd.f32 %v700, %v990
      %v1127 = vadd.f32 %v703, %v993
      %v1128 = vadd.f32 %v708, %v998
      %v1129 = vadd.f32 %v711, %v1001
      %v1130 = vadd.f32 %v716, %v1006
      %v1131 = vadd.f32 %v719, %v1009
      %v1132 = vadd.f32 %v724, %v1014
      %v1133 = vadd.f32 %v727, %v1017
      %v1134 = vadd.f32 %v732, %v1022
      %v1135 = vadd.f32 %v735, %v1025
      %v1136 = vadd.f32 %v740, %v1030
      %v1137 = vadd.f32 %v743, %v1033
      %v1138 = vadd.f32 %v748, %v1038
      %v1139 = vadd.f32 %v751, %v1041
      %v1140 = vadd.f32 %v756, %v1046
      %v1141 = vadd.f32 %v759, %v1049
      %v1142 = vadd.f32 %v764, %v1054
      %v1143 = vadd.f32 %v767, %v1057
      %v1144 = vadd.f32 %v772, %v1062
      %v1145 = vadd.f32 %v775, %v1065
      %v1146 = vadd.f32 %v780, %v1070
      %v1147 = vadd.f32 %v783, %v1073
      %v1148 = vadd.f32 %v788, %v1078
      %v1149 = vadd.f32 %v791, %v1081
      %v1150 = vadd.f32 %v796, %v1086
      %v1151 = vadd.f32 %v799, %v1089
      %v1152 = vadd.f32 %v804, %v1094
      %v1153 = vadd.f32 %v807, %v1097
      %v1154 = vadd.f32 %v812, %v1102
      %v1155 = vadd.f32 %v815, %v1105
      %v1156 = vadd.f32 %v820, %v1110
      %v1157 = vadd.f32 %v823, %v1113
      %v1158 = vadd.f32 %v828, %v1118
      %v1159 = vadd.f32 %v831, %v1121
      %v1160 = vld [vmem:[%s246 + $0x12] sm:$0xff]
      %v1161 = vld [vmem:[%s246 + $0x1a] sm:$0xff]
      %v1162 = vld [vmem:[%s246 + $0x22] sm:$0xff]
      %v1163 = vld [vmem:[%s246 + $0x2a] sm:$0xff]
      %v1164 = vld [vmem:[%s246 + $0x32] sm:$0xff]
      %v1165 = vld [vmem:[%s246 + $0x3a] sm:$0xff]
      %v1166 = vld [vmem:[%s246 + $0x42] sm:$0xff]
      %v1167 = vld [vmem:[%s246 + $0x4a] sm:$0xff]
      %v1168 = vld [vmem:[%s246 + $0x52] sm:$0xff]
      %v1169 = vld [vmem:[%s246 + $0x5a] sm:$0xff]
      %v1170 = vld [vmem:[%s246 + $0x62] sm:$0xff]
      %v1171 = vld [vmem:[%s246 + $0x6a] sm:$0xff]
      %v1172 = vld [vmem:[%s246 + $0x72] sm:$0xff]
      %v1173 = vld [vmem:[%s246 + $0x7a] sm:$0xff]
      %v1174 = vld [vmem:[%s246 + $0x82] sm:$0xff]
      %v1175 = vld [vmem:[%s246 + $0x8a] sm:$0xff]
      %v1176 = vld [vmem:[%s246 + $0x92] sm:$0xff]
      %v1177 = vld [vmem:[%s246 + $0x9a] sm:$0xff]
      %v1178 = vld [vmem:[%s246 + $0xa2] sm:$0xff]
      %v1179 = vld [vmem:[%s246 + $0xaa] sm:$0xff]
      %v1180 = vld [vmem:[%s246 + $0xb2] sm:$0xff]
      %v1181 = vld [vmem:[%s246 + $0xba] sm:$0xff]
      %v1182 = vld [vmem:[%s246 + $0xc2] sm:$0xff]
      %v1183 = vld [vmem:[%s246 + $0xca] sm:$0xff]
      %v1184 = vld [vmem:[%s246 + $0xd2] sm:$0xff]
      %v1185 = vld [vmem:[%s246 + $0xda] sm:$0xff]
      %v1186 = vld [vmem:[%s246 + $0xe2] sm:$0xff]
      %v1187 = vld [vmem:[%s246 + $0xea] sm:$0xff]
      %v1188 = vld [vmem:[%s246 + $0xf2] sm:$0xff]
      %v1189 = vld [vmem:[%s246 + $0xfa] sm:$0xff]
      %v1190 = vld [vmem:[%s246 + $0x102] sm:$0xff]
      %v1191 = vld [vmem:[%s246 + $0x10a] sm:$0xff]
      %v1192 = vld [vmem:[%s246 + $0x112] sm:$0xff]
      %v1193 = vld [vmem:[%s246 + $0x11a] sm:$0xff]
      %v1194 = vld [vmem:[%s246 + $0x122] sm:$0xff]
      %v1195 = vld [vmem:[%s246 + $0x12a] sm:$0xff]
      %v1196 = vpack.c.bf16 %v1161, %v1160
      %v1197 = vpack.c.bf16 %v1163, %v1162
      %v1198 = vpack.c.bf16 %v1165, %v1164
      %v1199 = vpack.c.bf16 %v1167, %v1166
      %v1200 = vpack.c.bf16 %v1169, %v1168
      %v1201 = vpack.c.bf16 %v1171, %v1170
      %v1202 = vpack.c.bf16 %v1173, %v1172
      %v1203 = vpack.c.bf16 %v1175, %v1174
      %v1204 = vpack.c.bf16 %v1177, %v1176
      %v1205 = vpack.c.bf16 %v1179, %v1178
      %v1206 = vpack.c.bf16 %v1181, %v1180
      %v1207 = vpack.c.bf16 %v1183, %v1182
      %v1208 = vpack.c.bf16 %v1185, %v1184
      %v1209 = vpack.c.bf16 %v1187, %v1186
      %v1210 = vpack.c.bf16 %v1189, %v1188
      %v1211 = vpack.c.bf16 %v1191, %v1190
      %v1212 = vpack.c.bf16 %v1193, %v1192
      %v1213 = vpack.c.bf16 %v1195, %v1194
      %s1214 = scalar_lea.vmem %s1, 6
      %v1215 = vld [vmem:[%s1214] sm:$0x3]
      %v1217 = vsel %vm364, %v1196, 0
      %v1220 = vsel %vm364, %v1197, 0
      %v1223 = vsel %vm364, %v1198, 0
      %v1226 = vsel %vm364, %v1199, 0
      %v1229 = vsel %vm364, %v1200, 0
      %v1232 = vsel %vm364, %v1201, 0
      %v1235 = vsel %vm364, %v1202, 0
      %v1238 = vsel %vm364, %v1203, 0
      %v1241 = vsel %vm364, %v1204, 0
      %v1244 = vsel %vm364, %v1205, 0
      %v1247 = vsel %vm364, %v1206, 0
      %v1250 = vsel %vm364, %v1207, 0
      %v1253 = vsel %vm364, %v1208, 0
      %v1256 = vsel %vm364, %v1209, 0
      %v1259 = vsel %vm364, %v1210, 0
      %v1262 = vsel %vm364, %v1211, 0
      %v1265 = vsel %vm364, %v1212, 0
      %v1268 = vsel %vm364, %v1213, 0
      %v1271 = vsel %vm419, %v1215, 0
      %1273 = vmatprep.subr.bf16.mxu0 0
      %1274 = vmatpush1.bf16.msra.mxu0 %v1271
      %1275 = vmatprep.subr.bf16.mxu0 0
      %1276 = vmatpush1.bf16.msra.mxu0 0
      %1277 = vmatprep.subr.bf16.mxu0 0
      %1278 = vmatpush1.bf16.msra.mxu0 0
      %1279 = vmatprep.subr.bf16.mxu0 0
      %1280 = vmatpush1.bf16.msra.mxu0 0
      %1281 = vmatprep.subr.bf16.mxu0 0
      %1282 = vmatpush1.bf16.msra.mxu0 0
      %1283 = vmatprep.subr.bf16.mxu0 0
      %1284 = vmatpush1.bf16.msra.mxu0 0
      %1285 = vmatprep.subr.bf16.mxu0 0
      %1286 = vmatpush1.bf16.msra.mxu0 0
      %1287 = vmatprep.subr.bf16.mxu0 0
      %1288 = vmatpush1.bf16.msra.mxu0 0
      %1289 = vmatprep.subr.bf16.mxu0 0
      %1290 = vmatpush1.bf16.msra.mxu0 0
      %1291 = vmatprep.subr.bf16.mxu0 0
      %1292 = vmatpush1.bf16.msra.mxu0 0
      %1293 = vmatprep.subr.bf16.mxu0 0
      %1294 = vmatpush1.bf16.msra.mxu0 0
      %1295 = vmatprep.subr.bf16.mxu0 0
      %1296 = vmatpush1.bf16.msra.mxu0 0
      %1297 = vmatprep.subr.bf16.mxu0 0
      %1298 = vmatpush1.bf16.msra.mxu0 0
      %1299 = vmatprep.subr.bf16.mxu0 0
      %1300 = vmatpush1.bf16.msra.mxu0 0
      %1301 = vmatprep.subr.bf16.mxu0 0
      %1302 = vmatpush1.bf16.msra.mxu0 0
      %1303 = vmatprep.subr.bf16.mxu0 0
      %1304 = vmatpush1.bf16.msra.mxu0 0
      %1305 = vmatprep.mubr.bf16.mxu0 0
      %1306 = vmatmul.mubr.bf16.gmra.mrb[0].mxu0 %v1217
      %v1307 = vpop.f32.mrb[0].mxu0
      %v1308 = vadd.f32 0.0, %v1307
      %v1309 = vpop.f32.mrb[0].mxu0
      %v1310 = vpop.f32.mrb[0].mxu0
      %v1311 = vadd.f32 0.0, %v1310
      %v1312 = vpop.f32.mrb[0].mxu0
      %1313 = vmatprep.mubr.bf16.mxu0 0
      %1314 = vmatmul.mubr.bf16.gmra.mrb[0].mxu0 %v1220
      %v1315 = vpop.f32.mrb[0].mxu0
      %v1316 = vadd.f32 0.0, %v1315
      %v1317 = vpop.f32.mrb[0].mxu0
      %v1318 = vpop.f32.mrb[0].mxu0
      %v1319 = vadd.f32 0.0, %v1318
      %v1320 = vpop.f32.mrb[0].mxu0
      %1321 = vmatprep.mubr.bf16.mxu0 0
      %1322 = vmatmul.mubr.bf16.gmra.mrb[0].mxu0 %v1223
      %v1323 = vpop.f32.mrb[0].mxu0
      %v1324 = vadd.f32 0.0, %v1323
      %v1325 = vpop.f32.mrb[0].mxu0
      %v1326 = vpop.f32.mrb[0].mxu0
      %v1327 = vadd.f32 0.0, %v1326
      %v1328 = vpop.f32.mrb[0].mxu0
      %1329 = vmatprep.mubr.bf16.mxu0 0
      %1330 = vmatmul.mubr.bf16.gmra.mrb[0].mxu0 %v1226
      %v1331 = vpop.f32.mrb[0].mxu0
      %v1332 = vadd.f32 0.0, %v1331
      %v1333 = vpop.f32.mrb[0].mxu0
      %v1334 = vpop.f32.mrb[0].mxu0
      %v1335 = vadd.f32 0.0, %v1334
      %v1336 = vpop.f32.mrb[0].mxu0
      %1337 = vmatprep.mubr.bf16.mxu0 0
      %1338 = vmatmul.mubr.bf16.gmra.mrb[0].mxu0 %v1229
      %v1339 = vpop.f32.mrb[0].mxu0
      %v1340 = vadd.f32 0.0, %v1339
      %v1341 = vpop.f32.mrb[0].mxu0
      %v1342 = vpop.f32.mrb[0].mxu0
      %v1343 = vadd.f32 0.0, %v1342
      %v1344 = vpop.f32.mrb[0].mxu0
      %1345 = vmatprep.mubr.bf16.mxu0 0
      %1346 = vmatmul.mubr.bf16.gmra.mrb[0].mxu0 %v1232
      %v1347 = vpop.f32.mrb[0].mxu0
      %v1348 = vadd.f32 0.0, %v1347
      %v1349 = vpop.f32.mrb[0].mxu0
      %v1350 = vpop.f32.mrb[0].mxu0
      %v1351 = vadd.f32 0.0, %v1350
      %v1352 = vpop.f32.mrb[0].mxu0
      %1353 = vmatprep.mubr.bf16.mxu0 0
      %1354 = vmatmul.mubr.bf16.gmra.mrb[0].mxu0 %v1235
      %v1355 = vpop.f32.mrb[0].mxu0
      %v1356 = vadd.f32 0.0, %v1355
      %v1357 = vpop.f32.mrb[0].mxu0
      %v1358 = vpop.f32.mrb[0].mxu0
      %v1359 = vadd.f32 0.0, %v1358
      %v1360 = vpop.f32.mrb[0].mxu0
      %1361 = vmatprep.mubr.bf16.mxu0 0
      %1362 = vmatmul.mubr.bf16.gmra.mrb[0].mxu0 %v1238
      %v1363 = vpop.f32.mrb[0].mxu0
      %v1364 = vadd.f32 0.0, %v1363
      %v1365 = vpop.f32.mrb[0].mxu0
      %v1366 = vpop.f32.mrb[0].mxu0
      %v1367 = vadd.f32 0.0, %v1366
      %v1368 = vpop.f32.mrb[0].mxu0
      %1369 = vmatprep.mubr.bf16.mxu0 0
      %1370 = vmatmul.mubr.bf16.gmra.mrb[0].mxu0 %v1241
      %v1371 = vpop.f32.mrb[0].mxu0
      %v1372 = vadd.f32 0.0, %v1371
      %v1373 = vpop.f32.mrb[0].mxu0
      %v1374 = vpop.f32.mrb[0].mxu0
      %v1375 = vadd.f32 0.0, %v1374
      %v1376 = vpop.f32.mrb[0].mxu0
      %1377 = vmatprep.mubr.bf16.mxu0 0
      %1378 = vmatmul.mubr.bf16.gmra.mrb[0].mxu0 %v1244
      %v1379 = vpop.f32.mrb[0].mxu0
      %v1380 = vadd.f32 0.0, %v1379
      %v1381 = vpop.f32.mrb[0].mxu0
      %v1382 = vpop.f32.mrb[0].mxu0
      %v1383 = vadd.f32 0.0, %v1382
      %v1384 = vpop.f32.mrb[0].mxu0
      %1385 = vmatprep.mubr.bf16.mxu0 0
      %1386 = vmatmul.mubr.bf16.gmra.mrb[0].mxu0 %v1247
      %v1387 = vpop.f32.mrb[0].mxu0
      %v1388 = vadd.f32 0.0, %v1387
      %v1389 = vpop.f32.mrb[0].mxu0
      %v1390 = vpop.f32.mrb[0].mxu0
      %v1391 = vadd.f32 0.0, %v1390
      %v1392 = vpop.f32.mrb[0].mxu0
      %1393 = vmatprep.mubr.bf16.mxu0 0
      %1394 = vmatmul.mubr.bf16.gmra.mrb[0].mxu0 %v1250
      %v1395 = vpop.f32.mrb[0].mxu0
      %v1396 = vadd.f32 0.0, %v1395
      %v1397 = vpop.f32.mrb[0].mxu0
      %v1398 = vpop.f32.mrb[0].mxu0
      %v1399 = vadd.f32 0.0, %v1398
      %v1400 = vpop.f32.mrb[0].mxu0
      %1401 = vmatprep.mubr.bf16.mxu0 0
      %1402 = vmatmul.mubr.bf16.gmra.mrb[0].mxu0 %v1253
      %v1403 = vpop.f32.mrb[0].mxu0
      %v1404 = vadd.f32 0.0, %v1403
      %v1405 = vpop.f32.mrb[0].mxu0
      %v1406 = vpop.f32.mrb[0].mxu0
      %v1407 = vadd.f32 0.0, %v1406
      %v1408 = vpop.f32.mrb[0].mxu0
      %1409 = vmatprep.mubr.bf16.mxu0 0
      %1410 = vmatmul.mubr.bf16.gmra.mrb[0].mxu0 %v1256
      %v1411 = vpop.f32.mrb[0].mxu0
      %v1412 = vadd.f32 0.0, %v1411
      %v1413 = vpop.f32.mrb[0].mxu0
      %v1414 = vpop.f32.mrb[0].mxu0
      %v1415 = vadd.f32 0.0, %v1414
      %v1416 = vpop.f32.mrb[0].mxu0
      %1417 = vmatprep.mubr.bf16.mxu0 0
      %1418 = vmatmul.mubr.bf16.gmra.mrb[0].mxu0 %v1259
      %v1419 = vpop.f32.mrb[0].mxu0
      %v1420 = vadd.f32 0.0, %v1419
      %v1421 = vpop.f32.mrb[0].mxu0
      %v1422 = vpop.f32.mrb[0].mxu0
      %v1423 = vadd.f32 0.0, %v1422
      %v1424 = vpop.f32.mrb[0].mxu0
      %1425 = vmatprep.mubr.bf16.mxu0 0
      %1426 = vmatmul.mubr.bf16.gmra.mrb[0].mxu0 %v1262
      %v1427 = vpop.f32.mrb[0].mxu0
      %v1428 = vadd.f32 0.0, %v1427
      %v1429 = vpop.f32.mrb[0].mxu0
      %v1430 = vpop.f32.mrb[0].mxu0
      %v1431 = vadd.f32 0.0, %v1430
      %v1432 = vpop.f32.mrb[0].mxu0
      %1433 = vmatprep.mubr.bf16.mxu0 0
      %1434 = vmatmul.mubr.bf16.gmra.mrb[0].mxu0 %v1265
      %v1435 = vpop.f32.mrb[0].mxu0
      %v1436 = vadd.f32 0.0, %v1435
      %v1437 = vpop.f32.mrb[0].mxu0
      %v1438 = vpop.f32.mrb[0].mxu0
      %v1439 = vadd.f32 0.0, %v1438
      %v1440 = vpop.f32.mrb[0].mxu0
      %1441 = vmatprep.mubr.bf16.mxu0 0
      %1442 = vmatmul.mubr.bf16.gmra.mrb[0].mxu0 %v1268
      %v1443 = vpop.f32.mrb[0].mxu0
      %v1444 = vadd.f32 0.0, %v1443
      %v1445 = vpop.f32.mrb[0].mxu0
      %v1446 = vpop.f32.mrb[0].mxu0
      %v1447 = vadd.f32 0.0, %v1446
      %v1448 = vpop.f32.mrb[0].mxu0
      %1449 = vdwg.mxu0
      %v1450 = vadd.f32 %v1124, %v1308
      %v1451 = vadd.f32 %v1125, %v1311
      %v1452 = vadd.f32 %v1126, %v1316
      %v1453 = vadd.f32 %v1127, %v1319
      %v1454 = vadd.f32 %v1128, %v1324
      %v1455 = vadd.f32 %v1129, %v1327
      %v1456 = vadd.f32 %v1130, %v1332
      %v1457 = vadd.f32 %v1131, %v1335
      %v1458 = vadd.f32 %v1132, %v1340
      %v1459 = vadd.f32 %v1133, %v1343
      %v1460 = vadd.f32 %v1134, %v1348
      %v1461 = vadd.f32 %v1135, %v1351
      %v1462 = vadd.f32 %v1136, %v1356
      %v1463 = vadd.f32 %v1137, %v1359
      %v1464 = vadd.f32 %v1138, %v1364
      %v1465 = vadd.f32 %v1139, %v1367
      %v1466 = vadd.f32 %v1140, %v1372
      %v1467 = vadd.f32 %v1141, %v1375
      %v1468 = vadd.f32 %v1142, %v1380
      %v1469 = vadd.f32 %v1143, %v1383
      %v1470 = vadd.f32 %v1144, %v1388
      %v1471 = vadd.f32 %v1145, %v1391
      %v1472 = vadd.f32 %v1146, %v1396
      %v1473 = vadd.f32 %v1147, %v1399
      %v1474 = vadd.f32 %v1148, %v1404
      %v1475 = vadd.f32 %v1149, %v1407
      %v1476 = vadd.f32 %v1150, %v1412
      %v1477 = vadd.f32 %v1151, %v1415
      %v1478 = vadd.f32 %v1152, %v1420
      %v1479 = vadd.f32 %v1153, %v1423
      %v1480 = vadd.f32 %v1154, %v1428
      %v1481 = vadd.f32 %v1155, %v1431
      %v1482 = vadd.f32 %v1156, %v1436
      %v1483 = vadd.f32 %v1157, %v1439
      %v1484 = vadd.f32 %v1158, %v1444
      %v1485 = vadd.f32 %v1159, %v1447
      %v1486 = vld [vmem:[%s246 + $0x13] sm:$0xff]
      %v1487 = vld [vmem:[%s246 + $0x1b] sm:$0xff]
      %v1488 = vld [vmem:[%s246 + $0x23] sm:$0xff]
      %v1489 = vld [vmem:[%s246 + $0x2b] sm:$0xff]
      %v1490 = vld [vmem:[%s246 + $0x33] sm:$0xff]
      %v1491 = vld [vmem:[%s246 + $0x3b] sm:$0xff]
      %v1492 = vld [vmem:[%s246 + $0x43] sm:$0xff]
      %v1493 = vld [vmem:[%s246 + $0x4b] sm:$0xff]
      %v1494 = vld [vmem:[%s246 + $0x53] sm:$0xff]
      %v1495 = vld [vmem:[%s246 + $0x5b] sm:$0xff]
      %v1496 = vld [vmem:[%s246 + $0x63] sm:$0xff]
      %v1497 = vld [vmem:[%s246 + $0x6b] sm:$0xff]
      %v1498 = vld [vmem:[%s246 + $0x73] sm:$0xff]
      %v1499 = vld [vmem:[%s246 + $0x7b] sm:$0xff]
      %v1500 = vld [vmem:[%s246 + $0x83] sm:$0xff]
      %v1501 = vld [vmem:[%s246 + $0x8b] sm:$0xff]
      %v1502 = vld [vmem:[%s246 + $0x93] sm:$0xff]
      %v1503 = vld [vmem:[%s246 + $0x9b] sm:$0xff]
      %v1504 = vld [vmem:[%s246 + $0xa3] sm:$0xff]
      %v1505 = vld [vmem:[%s246 + $0xab] sm:$0xff]
      %v1506 = vld [vmem:[%s246 + $0xb3] sm:$0xff]
      %v1507 = vld [vmem:[%s246 + $0xbb] sm:$0xff]
      %v1508 = vld [vmem:[%s246 + $0xc3] sm:$0xff]
      %v1509 = vld [vmem:[%s246 + $0xcb] sm:$0xff]
      %v1510 = vld [vmem:[%s246 + $0xd3] sm:$0xff]
      %v1511 = vld [vmem:[%s246 + $0xdb] sm:$0xff]
      %v1512 = vld [vmem:[%s246 + $0xe3] sm:$0xff]
      %v1513 = vld [vmem:[%s246 + $0xeb] sm:$0xff]
      %v1514 = vld [vmem:[%s246 + $0xf3] sm:$0xff]
      %v1515 = vld [vmem:[%s246 + $0xfb] sm:$0xff]
      %v1516 = vld [vmem:[%s246 + $0x103] sm:$0xff]
      %v1517 = vld [vmem:[%s246 + $0x10b] sm:$0xff]
      %v1518 = vld [vmem:[%s246 + $0x113] sm:$0xff]
      %v1519 = vld [vmem:[%s246 + $0x11b] sm:$0xff]
      %v1520 = vld [vmem:[%s246 + $0x123] sm:$0xff]
      %v1521 = vld [vmem:[%s246 + $0x12b] sm:$0xff]
      %v1522 = vpack.c.bf16 %v1487, %v1486
      %v1523 = vpack.c.bf16 %v1489, %v1488
      %v1524 = vpack.c.bf16 %v1491, %v1490
      %v1525 = vpack.c.bf16 %v1493, %v1492
      %v1526 = vpack.c.bf16 %v1495, %v1494
      %v1527 = vpack.c.bf16 %v1497, %v1496
      %v1528 = vpack.c.bf16 %v1499, %v1498
      %v1529 = vpack.c.bf16 %v1501, %v1500
      %v1530 = vpack.c.bf16 %v1503, %v1502
      %v1531 = vpack.c.bf16 %v1505, %v1504
      %v1532 = vpack.c.bf16 %v1507, %v1506
      %v1533 = vpack.c.bf16 %v1509, %v1508
      %v1534 = vpack.c.bf16 %v1511, %v1510
      %v1535 = vpack.c.bf16 %v1513, %v1512
      %v1536 = vpack.c.bf16 %v1515, %v1514
      %v1537 = vpack.c.bf16 %v1517, %v1516
      %v1538 = vpack.c.bf16 %v1519, %v1518
      %v1539 = vpack.c.bf16 %v1521, %v1520
      %s1540 = scalar_lea.vmem %s1, 8
      %v1541 = vld [vmem:[%s1540] sm:$0x3]
      %v1543 = vsel %vm364, %v1522, 0
      %v1546 = vsel %vm364, %v1523, 0
      %v1549 = vsel %vm364, %v1524, 0
      %v1552 = vsel %vm364, %v1525, 0
      %v1555 = vsel %vm364, %v1526, 0
      %v1558 = vsel %vm364, %v1527, 0
      %v1561 = vsel %vm364, %v1528, 0
      %v1564 = vsel %vm364, %v1529, 0
      %v1567 = vsel %vm364, %v1530, 0
      %v1570 = vsel %vm364, %v1531, 0
      %v1573 = vsel %vm364, %v1532, 0
      %v1576 = vsel %vm364, %v1533, 0
      %v1579 = vsel %vm364, %v1534, 0
      %v1582 = vsel %vm364, %v1535, 0
      %v1585 = vsel %vm364, %v1536, 0
      %v1588 = vsel %vm364, %v1537, 0
      %v1591 = vsel %vm364, %v1538, 0
      %v1594 = vsel %vm364, %v1539, 0
      %v1597 = vsel %vm419, %v1541, 0
      %1599 = vmatprep.subr.bf16.mxu0 0
      %1600 = vmatpush1.bf16.msra.mxu0 %v1597
      %1601 = vmatprep.subr.bf16.mxu0 0
      %1602 = vmatpush1.bf16.msra.mxu0 0
      %1603 = vmatprep.subr.bf16.mxu0 0
      %1604 = vmatpush1.bf16.msra.mxu0 0
      %1605 = vmatprep.subr.bf16.mxu0 0
      %1606 = vmatpush1.bf16.msra.mxu0 0
      %1607 = vmatprep.subr.bf16.mxu0 0
      %1608 = vmatpush1.bf16.msra.mxu0 0
      %1609 = vmatprep.subr.bf16.mxu0 0
      %1610 = vmatpush1.bf16.msra.mxu0 0
      %1611 = vmatprep.subr.bf16.mxu0 0
      %1612 = vmatpush1.bf16.msra.mxu0 0
      %1613 = vmatprep.subr.bf16.mxu0 0
      %1614 = vmatpush1.bf16.msra.mxu0 0
      %1615 = vmatprep.subr.bf16.mxu0 0
      %1616 = vmatpush1.bf16.msra.mxu0 0
      %1617 = vmatprep.subr.bf16.mxu0 0
      %1618 = vmatpush1.bf16.msra.mxu0 0
      %1619 = vmatprep.subr.bf16.mxu0 0
      %1620 = vmatpush1.bf16.msra.mxu0 0
      %1621 = vmatprep.subr.bf16.mxu0 0
      %1622 = vmatpush1.bf16.msra.mxu0 0
      %1623 = vmatprep.subr.bf16.mxu0 0
      %1624 = vmatpush1.bf16.msra.mxu0 0
      %1625 = vmatprep.subr.bf16.mxu0 0
      %1626 = vmatpush1.bf16.msra.mxu0 0
      %1627 = vmatprep.subr.bf16.mxu0 0
      %1628 = vmatpush1.bf16.msra.mxu0 0
      %1629 = vmatprep.subr.bf16.mxu0 0
      %1630 = vmatpush1.bf16.msra.mxu0 0
      %1631 = vmatprep.mubr.bf16.mxu0 0
      %1632 = vmatmul.mubr.bf16.gmra.mrb[0].mxu0 %v1543
      %v1633 = vpop.f32.mrb[0].mxu0
      %v1634 = vadd.f32 0.0, %v1633
      %v1635 = vpop.f32.mrb[0].mxu0
      %v1636 = vpop.f32.mrb[0].mxu0
      %v1637 = vadd.f32 0.0, %v1636
      %v1638 = vpop.f32.mrb[0].mxu0
      %1639 = vmatprep.mubr.bf16.mxu0 0
      %1640 = vmatmul.mubr.bf16.gmra.mrb[0].mxu0 %v1546
      %v1641 = vpop.f32.mrb[0].mxu0
      %v1642 = vadd.f32 0.0, %v1641
      %v1643 = vpop.f32.mrb[0].mxu0
      %v1644 = vpop.f32.mrb[0].mxu0
      %v1645 = vadd.f32 0.0, %v1644
      %v1646 = vpop.f32.mrb[0].mxu0
      %1647 = vmatprep.mubr.bf16.mxu0 0
      %1648 = vmatmul.mubr.bf16.gmra.mrb[0].mxu0 %v1549
      %v1649 = vpop.f32.mrb[0].mxu0
      %v1650 = vadd.f32 0.0, %v1649
      %v1651 = vpop.f32.mrb[0].mxu0
      %v1652 = vpop.f32.mrb[0].mxu0
      %v1653 = vadd.f32 0.0, %v1652
      %v1654 = vpop.f32.mrb[0].mxu0
      %1655 = vmatprep.mubr.bf16.mxu0 0
      %1656 = vmatmul.mubr.bf16.gmra.mrb[0].mxu0 %v1552
      %v1657 = vpop.f32.mrb[0].mxu0
      %v1658 = vadd.f32 0.0, %v1657
      %v1659 = vpop.f32.mrb[0].mxu0
      %v1660 = vpop.f32.mrb[0].mxu0
      %v1661 = vadd.f32 0.0, %v1660
      %v1662 = vpop.f32.mrb[0].mxu0
      %1663 = vmatprep.mubr.bf16.mxu0 0
      %1664 = vmatmul.mubr.bf16.gmra.mrb[0].mxu0 %v1555
      %v1665 = vpop.f32.mrb[0].mxu0
      %v1666 = vadd.f32 0.0, %v1665
      %v1667 = vpop.f32.mrb[0].mxu0
      %v1668 = vpop.f32.mrb[0].mxu0
      %v1669 = vadd.f32 0.0, %v1668
      %v1670 = vpop.f32.mrb[0].mxu0
      %1671 = vmatprep.mubr.bf16.mxu0 0
      %1672 = vmatmul.mubr.bf16.gmra.mrb[0].mxu0 %v1558
      %v1673 = vpop.f32.mrb[0].mxu0
      %v1674 = vadd.f32 0.0, %v1673
      %v1675 = vpop.f32.mrb[0].mxu0
      %v1676 = vpop.f32.mrb[0].mxu0
      %v1677 = vadd.f32 0.0, %v1676
      %v1678 = vpop.f32.mrb[0].mxu0
      %1679 = vmatprep.mubr.bf16.mxu0 0
      %1680 = vmatmul.mubr.bf16.gmra.mrb[0].mxu0 %v1561
      %v1681 = vpop.f32.mrb[0].mxu0
      %v1682 = vadd.f32 0.0, %v1681
      %v1683 = vpop.f32.mrb[0].mxu0
      %v1684 = vpop.f32.mrb[0].mxu0
      %v1685 = vadd.f32 0.0, %v1684
      %v1686 = vpop.f32.mrb[0].mxu0
      %1687 = vmatprep.mubr.bf16.mxu0 0
      %1688 = vmatmul.mubr.bf16.gmra.mrb[0].mxu0 %v1564
      %v1689 = vpop.f32.mrb[0].mxu0
      %v1690 = vadd.f32 0.0, %v1689
      %v1691 = vpop.f32.mrb[0].mxu0
      %v1692 = vpop.f32.mrb[0].mxu0
      %v1693 = vadd.f32 0.0, %v1692
      %v1694 = vpop.f32.mrb[0].mxu0
      %1695 = vmatprep.mubr.bf16.mxu0 0
      %1696 = vmatmul.mubr.bf16.gmra.mrb[0].mxu0 %v1567
      %v1697 = vpop.f32.mrb[0].mxu0
      %v1698 = vadd.f32 0.0, %v1697
      %v1699 = vpop.f32.mrb[0].mxu0
      %v1700 = vpop.f32.mrb[0].mxu0
      %v1701 = vadd.f32 0.0, %v1700
      %v1702 = vpop.f32.mrb[0].mxu0
      %1703 = vmatprep.mubr.bf16.mxu0 0
      %1704 = vmatmul.mubr.bf16.gmra.mrb[0].mxu0 %v1570
      %v1705 = vpop.f32.mrb[0].mxu0
      %v1706 = vadd.f32 0.0, %v1705
      %v1707 = vpop.f32.mrb[0].mxu0
      %v1708 = vpop.f32.mrb[0].mxu0
      %v1709 = vadd.f32 0.0, %v1708
      %v1710 = vpop.f32.mrb[0].mxu0
      %1711 = vmatprep.mubr.bf16.mxu0 0
      %1712 = vmatmul.mubr.bf16.gmra.mrb[0].mxu0 %v1573
      %v1713 = vpop.f32.mrb[0].mxu0
      %v1714 = vadd.f32 0.0, %v1713
      %v1715 = vpop.f32.mrb[0].mxu0
      %v1716 = vpop.f32.mrb[0].mxu0
      %v1717 = vadd.f32 0.0, %v1716
      %v1718 = vpop.f32.mrb[0].mxu0
      %1719 = vmatprep.mubr.bf16.mxu0 0
      %1720 = vmatmul.mubr.bf16.gmra.mrb[0].mxu0 %v1576
      %v1721 = vpop.f32.mrb[0].mxu0
      %v1722 = vadd.f32 0.0, %v1721
      %v1723 = vpop.f32.mrb[0].mxu0
      %v1724 = vpop.f32.mrb[0].mxu0
      %v1725 = vadd.f32 0.0, %v1724
      %v1726 = vpop.f32.mrb[0].mxu0
      %1727 = vmatprep.mubr.bf16.mxu0 0
      %1728 = vmatmul.mubr.bf16.gmra.mrb[0].mxu0 %v1579
      %v1729 = vpop.f32.mrb[0].mxu0
      %v1730 = vadd.f32 0.0, %v1729
      %v1731 = vpop.f32.mrb[0].mxu0
      %v1732 = vpop.f32.mrb[0].mxu0
      %v1733 = vadd.f32 0.0, %v1732
      %v1734 = vpop.f32.mrb[0].mxu0
      %1735 = vmatprep.mubr.bf16.mxu0 0
      %1736 = vmatmul.mubr.bf16.gmra.mrb[0].mxu0 %v1582
      %v1737 = vpop.f32.mrb[0].mxu0
      %v1738 = vadd.f32 0.0, %v1737
      %v1739 = vpop.f32.mrb[0].mxu0
      %v1740 = vpop.f32.mrb[0].mxu0
      %v1741 = vadd.f32 0.0, %v1740
      %v1742 = vpop.f32.mrb[0].mxu0
      %1743 = vmatprep.mubr.bf16.mxu0 0
      %1744 = vmatmul.mubr.bf16.gmra.mrb[0].mxu0 %v1585
      %v1745 = vpop.f32.mrb[0].mxu0
      %v1746 = vadd.f32 0.0, %v1745
      %v1747 = vpop.f32.mrb[0].mxu0
      %v1748 = vpop.f32.mrb[0].mxu0
      %v1749 = vadd.f32 0.0, %v1748
      %v1750 = vpop.f32.mrb[0].mxu0
      %1751 = vmatprep.mubr.bf16.mxu0 0
      %1752 = vmatmul.mubr.bf16.gmra.mrb[0].mxu0 %v1588
      %v1753 = vpop.f32.mrb[0].mxu0
      %v1754 = vadd.f32 0.0, %v1753
      %v1755 = vpop.f32.mrb[0].mxu0
      %v1756 = vpop.f32.mrb[0].mxu0
      %v1757 = vadd.f32 0.0, %v1756
      %v1758 = vpop.f32.mrb[0].mxu0
      %1759 = vmatprep.mubr.bf16.mxu0 0
      %1760 = vmatmul.mubr.bf16.gmra.mrb[0].mxu0 %v1591
      %v1761 = vpop.f32.mrb[0].mxu0
      %v1762 = vadd.f32 0.0, %v1761
      %v1763 = vpop.f32.mrb[0].mxu0
      %v1764 = vpop.f32.mrb[0].mxu0
      %v1765 = vadd.f32 0.0, %v1764
      %v1766 = vpop.f32.mrb[0].mxu0
      %1767 = vmatprep.mubr.bf16.mxu0 0
      %1768 = vmatmul.mubr.bf16.gmra.mrb[0].mxu0 %v1594
      %v1769 = vpop.f32.mrb[0].mxu0
      %v1770 = vadd.f32 0.0, %v1769
      %v1771 = vpop.f32.mrb[0].mxu0
      %v1772 = vpop.f32.mrb[0].mxu0
      %v1773 = vadd.f32 0.0, %v1772
      %v1774 = vpop.f32.mrb[0].mxu0
      %1775 = vdwg.mxu0
      %v1776 = vadd.f32 %v1450, %v1634
      %v1777 = vadd.f32 %v1451, %v1637
      %v1778 = vadd.f32 %v1452, %v1642
      %v1779 = vadd.f32 %v1453, %v1645
      %v1780 = vadd.f32 %v1454, %v1650
      %v1781 = vadd.f32 %v1455, %v1653
      %v1782 = vadd.f32 %v1456, %v1658
      %v1783 = vadd.f32 %v1457, %v1661
      %v1784 = vadd.f32 %v1458, %v1666
      %v1785 = vadd.f32 %v1459, %v1669
      %v1786 = vadd.f32 %v1460, %v1674
      %v1787 = vadd.f32 %v1461, %v1677
      %v1788 = vadd.f32 %v1462, %v1682
      %v1789 = vadd.f32 %v1463, %v1685
      %v1790 = vadd.f32 %v1464, %v1690
      %v1791 = vadd.f32 %v1465, %v1693
      %v1792 = vadd.f32 %v1466, %v1698
      %v1793 = vadd.f32 %v1467, %v1701
      %v1794 = vadd.f32 %v1468, %v1706
      %v1795 = vadd.f32 %v1469, %v1709
      %v1796 = vadd.f32 %v1470, %v1714
      %v1797 = vadd.f32 %v1471, %v1717
      %v1798 = vadd.f32 %v1472, %v1722
      %v1799 = vadd.f32 %v1473, %v1725
      %v1800 = vadd.f32 %v1474, %v1730
      %v1801 = vadd.f32 %v1475, %v1733
      %v1802 = vadd.f32 %v1476, %v1738
      %v1803 = vadd.f32 %v1477, %v1741
      %v1804 = vadd.f32 %v1478, %v1746
      %v1805 = vadd.f32 %v1479, %v1749
      %v1806 = vadd.f32 %v1480, %v1754
      %v1807 = vadd.f32 %v1481, %v1757
      %v1808 = vadd.f32 %v1482, %v1762
      %v1809 = vadd.f32 %v1483, %v1765
      %v1810 = vadd.f32 %v1484, %v1770
      %v1811 = vadd.f32 %v1485, %v1773
      %v1812 = vld [vmem:[%s246 + $0x14] sm:$0xff]
      %v1813 = vld [vmem:[%s246 + $0x1c] sm:$0xff]
      %v1814 = vld [vmem:[%s246 + $0x24] sm:$0xff]
      %v1815 = vld [vmem:[%s246 + $0x2c] sm:$0xff]
      %v1816 = vld [vmem:[%s246 + $0x34] sm:$0xff]
      %v1817 = vld [vmem:[%s246 + $0x3c] sm:$0xff]
      %v1818 = vld [vmem:[%s246 + $0x44] sm:$0xff]
      %v1819 = vld [vmem:[%s246 + $0x4c] sm:$0xff]
      %v1820 = vld [vmem:[%s246 + $0x54] sm:$0xff]
      %v1821 = vld [vmem:[%s246 + $0x5c] sm:$0xff]
      %v1822 = vld [vmem:[%s246 + $0x64] sm:$0xff]
      %v1823 = vld [vmem:[%s246 + $0x6c] sm:$0xff]
      %v1824 = vld [vmem:[%s246 + $0x74] sm:$0xff]
      %v1825 = vld [vmem:[%s246 + $0x7c] sm:$0xff]
      %v1826 = vld [vmem:[%s246 + $0x84] sm:$0xff]
      %v1827 = vld [vmem:[%s246 + $0x8c] sm:$0xff]
      %v1828 = vld [vmem:[%s246 + $0x94] sm:$0xff]
      %v1829 = vld [vmem:[%s246 + $0x9c] sm:$0xff]
      %v1830 = vld [vmem:[%s246 + $0xa4] sm:$0xff]
      %v1831 = vld [vmem:[%s246 + $0xac] sm:$0xff]
      %v1832 = vld [vmem:[%s246 + $0xb4] sm:$0xff]
      %v1833 = vld [vmem:[%s246 + $0xbc] sm:$0xff]
      %v1834 = vld [vmem:[%s246 + $0xc4] sm:$0xff]
      %v1835 = vld [vmem:[%s246 + $0xcc] sm:$0xff]
      %v1836 = vld [vmem:[%s246 + $0xd4] sm:$0xff]
      %v1837 = vld [vmem:[%s246 + $0xdc] sm:$0xff]
      %v1838 = vld [vmem:[%s246 + $0xe4] sm:$0xff]
      %v1839 = vld [vmem:[%s246 + $0xec] sm:$0xff]
      %v1840 = vld [vmem:[%s246 + $0xf4] sm:$0xff]
      %v1841 = vld [vmem:[%s246 + $0xfc] sm:$0xff]
      %v1842 = vld [vmem:[%s246 + $0x104] sm:$0xff]
      %v1843 = vld [vmem:[%s246 + $0x10c] sm:$0xff]
      %v1844 = vld [vmem:[%s246 + $0x114] sm:$0xff]
      %v1845 = vld [vmem:[%s246 + $0x11c] sm:$0xff]
      %v1846 = vld [vmem:[%s246 + $0x124] sm:$0xff]
      %v1847 = vld [vmem:[%s246 + $0x12c] sm:$0xff]
      %v1848 = vpack.c.bf16 %v1813, %v1812
      %v1849 = vpack.c.bf16 %v1815, %v1814
      %v1850 = vpack.c.bf16 %v1817, %v1816
      %v1851 = vpack.c.bf16 %v1819, %v1818
      %v1852 = vpack.c.bf16 %v1821, %v1820
      %v1853 = vpack.c.bf16 %v1823, %v1822
      %v1854 = vpack.c.bf16 %v1825, %v1824
      %v1855 = vpack.c.bf16 %v1827, %v1826
      %v1856 = vpack.c.bf16 %v1829, %v1828
      %v1857 = vpack.c.bf16 %v1831, %v1830
      %v1858 = vpack.c.bf16 %v1833, %v1832
      %v1859 = vpack.c.bf16 %v1835, %v1834
      %v1860 = vpack.c.bf16 %v1837, %v1836
      %v1861 = vpack.c.bf16 %v1839, %v1838
      %v1862 = vpack.c.bf16 %v1841, %v1840
      %v1863 = vpack.c.bf16 %v1843, %v1842
      %v1864 = vpack.c.bf16 %v1845, %v1844
      %v1865 = vpack.c.bf16 %v1847, %v1846
      %s1866 = scalar_lea.vmem %s1, 10
      %v1867 = vld [vmem:[%s1866] sm:$0x3]
      %v1869 = vsel %vm364, %v1848, 0
      %v1872 = vsel %vm364, %v1849, 0
      %v1875 = vsel %vm364, %v1850, 0
      %v1878 = vsel %vm364, %v1851, 0
      %v1881 = vsel %vm364, %v1852, 0
      %v1884 = vsel %vm364, %v1853, 0
      %v1887 = vsel %vm364, %v1854, 0
      %v1890 = vsel %vm364, %v1855, 0
      %v1893 = vsel %vm364, %v1856, 0
      %v1896 = vsel %vm364, %v1857, 0
      %v1899 = vsel %vm364, %v1858, 0
      %v1902 = vsel %vm364, %v1859, 0
      %v1905 = vsel %vm364, %v1860, 0
      %v1908 = vsel %vm364, %v1861, 0
      %v1911 = vsel %vm364, %v1862, 0
      %v1914 = vsel %vm364, %v1863, 0
      %v1917 = vsel %vm364, %v1864, 0
      %v1920 = vsel %vm364, %v1865, 0
      %v1923 = vsel %vm419, %v1867, 0
      %1925 = vmatprep.subr.bf16.mxu0 0
      %1926 = vmatpush1.bf16.msra.mxu0 %v1923
      %1927 = vmatprep.subr.bf16.mxu0 0
      %1928 = vmatpush1.bf16.msra.mxu0 0
      %1929 = vmatprep.subr.bf16.mxu0 0
      %1930 = vmatpush1.bf16.msra.mxu0 0
      %1931 = vmatprep.subr.bf16.mxu0 0
      %1932 = vmatpush1.bf16.msra.mxu0 0
      %1933 = vmatprep.subr.bf16.mxu0 0
      %1934 = vmatpush1.bf16.msra.mxu0 0
      %1935 = vmatprep.subr.bf16.mxu0 0
      %1936 = vmatpush1.bf16.msra.mxu0 0
      %1937 = vmatprep.subr.bf16.mxu0 0
      %1938 = vmatpush1.bf16.msra.mxu0 0
      %1939 = vmatprep.subr.bf16.mxu0 0
      %1940 = vmatpush1.bf16.msra.mxu0 0
      %1941 = vmatprep.subr.bf16.mxu0 0
      %1942 = vmatpush1.bf16.msra.mxu0 0
      %1943 = vmatprep.subr.bf16.mxu0 0
      %1944 = vmatpush1.bf16.msra.mxu0 0
      %1945 = vmatprep.subr.bf16.mxu0 0
      %1946 = vmatpush1.bf16.msra.mxu0 0
      %1947 = vmatprep.subr.bf16.mxu0 0
      %1948 = vmatpush1.bf16.msra.mxu0 0
      %1949 = vmatprep.subr.bf16.mxu0 0
      %1950 = vmatpush1.bf16.msra.mxu0 0
      %1951 = vmatprep.subr.bf16.mxu0 0
      %1952 = vmatpush1.bf16.msra.mxu0 0
      %1953 = vmatprep.subr.bf16.mxu0 0
      %1954 = vmatpush1.bf16.msra.mxu0 0
      %1955 = vmatprep.subr.bf16.mxu0 0
      %1956 = vmatpush1.bf16.msra.mxu0 0
      %1957 = vmatprep.mubr.bf16.mxu0 0
      %1958 = vmatmul.mubr.bf16.gmra.mrb[0].mxu0 %v1869
      %v1959 = vpop.f32.mrb[0].mxu0
      %v1960 = vadd.f32 0.0, %v1959
      %v1961 = vpop.f32.mrb[0].mxu0
      %v1962 = vpop.f32.mrb[0].mxu0
      %v1963 = vadd.f32 0.0, %v1962
      %v1964 = vpop.f32.mrb[0].mxu0
      %1965 = vmatprep.mubr.bf16.mxu0 0
      %1966 = vmatmul.mubr.bf16.gmra.mrb[0].mxu0 %v1872
      %v1967 = vpop.f32.mrb[0].mxu0
      %v1968 = vadd.f32 0.0, %v1967
      %v1969 = vpop.f32.mrb[0].mxu0
      %v1970 = vpop.f32.mrb[0].mxu0
      %v1971 = vadd.f32 0.0, %v1970
      %v1972 = vpop.f32.mrb[0].mxu0
      %1973 = vmatprep.mubr.bf16.mxu0 0
      %1974 = vmatmul.mubr.bf16.gmra.mrb[0].mxu0 %v1875
      %v1975 = vpop.f32.mrb[0].mxu0
      %v1976 = vadd.f32 0.0, %v1975
      %v1977 = vpop.f32.mrb[0].mxu0
      %v1978 = vpop.f32.mrb[0].mxu0
      %v1979 = vadd.f32 0.0, %v1978
      %v1980 = vpop.f32.mrb[0].mxu0
      %1981 = vmatprep.mubr.bf16.mxu0 0
      %1982 = vmatmul.mubr.bf16.gmra.mrb[0].mxu0 %v1878
      %v1983 = vpop.f32.mrb[0].mxu0
      %v1984 = vadd.f32 0.0, %v1983
      %v1985 = vpop.f32.mrb[0].mxu0
      %v1986 = vpop.f32.mrb[0].mxu0
      %v1987 = vadd.f32 0.0, %v1986
      %v1988 = vpop.f32.mrb[0].mxu0
      %1989 = vmatprep.mubr.bf16.mxu0 0
      %1990 = vmatmul.mubr.bf16.gmra.mrb[0].mxu0 %v1881
      %v1991 = vpop.f32.mrb[0].mxu0
      %v1992 = vadd.f32 0.0, %v1991
      %v1993 = vpop.f32.mrb[0].mxu0
      %v1994 = vpop.f32.mrb[0].mxu0
      %v1995 = vadd.f32 0.0, %v1994
      %v1996 = vpop.f32.mrb[0].mxu0
      %1997 = vmatprep.mubr.bf16.mxu0 0
      %1998 = vmatmul.mubr.bf16.gmra.mrb[0].mxu0 %v1884
      %v1999 = vpop.f32.mrb[0].mxu0
      %v2000 = vadd.f32 0.0, %v1999
      %v2001 = vpop.f32.mrb[0].mxu0
      %v2002 = vpop.f32.mrb[0].mxu0
      %v2003 = vadd.f32 0.0, %v2002
      %v2004 = vpop.f32.mrb[0].mxu0
      %2005 = vmatprep.mubr.bf16.mxu0 0
      %2006 = vmatmul.mubr.bf16.gmra.mrb[0].mxu0 %v1887
      %v2007 = vpop.f32.mrb[0].mxu0
      %v2008 = vadd.f32 0.0, %v2007
      %v2009 = vpop.f32.mrb[0].mxu0
      %v2010 = vpop.f32.mrb[0].mxu0
      %v2011 = vadd.f32 0.0, %v2010
      %v2012 = vpop.f32.mrb[0].mxu0
      %2013 = vmatprep.mubr.bf16.mxu0 0
      %2014 = vmatmul.mubr.bf16.gmra.mrb[0].mxu0 %v1890
      %v2015 = vpop.f32.mrb[0].mxu0
      %v2016 = vadd.f32 0.0, %v2015
      %v2017 = vpop.f32.mrb[0].mxu0
      %v2018 = vpop.f32.mrb[0].mxu0
      %v2019 = vadd.f32 0.0, %v2018
      %v2020 = vpop.f32.mrb[0].mxu0
      %2021 = vmatprep.mubr.bf16.mxu0 0
      %2022 = vmatmul.mubr.bf16.gmra.mrb[0].mxu0 %v1893
      %v2023 = vpop.f32.mrb[0].mxu0
      %v2024 = vadd.f32 0.0, %v2023
      %v2025 = vpop.f32.mrb[0].mxu0
      %v2026 = vpop.f32.mrb[0].mxu0
      %v2027 = vadd.f32 0.0, %v2026
      %v2028 = vpop.f32.mrb[0].mxu0
      %2029 = vmatprep.mubr.bf16.mxu0 0
      %2030 = vmatmul.mubr.bf16.gmra.mrb[0].mxu0 %v1896
      %v2031 = vpop.f32.mrb[0].mxu0
      %v2032 = vadd.f32 0.0, %v2031
      %v2033 = vpop.f32.mrb[0].mxu0
      %v2034 = vpop.f32.mrb[0].mxu0
      %v2035 = vadd.f32 0.0, %v2034
      %v2036 = vpop.f32.mrb[0].mxu0
      %2037 = vmatprep.mubr.bf16.mxu0 0
      %2038 = vmatmul.mubr.bf16.gmra.mrb[0].mxu0 %v1899
      %v2039 = vpop.f32.mrb[0].mxu0
      %v2040 = vadd.f32 0.0, %v2039
      %v2041 = vpop.f32.mrb[0].mxu0
      %v2042 = vpop.f32.mrb[0].mxu0
      %v2043 = vadd.f32 0.0, %v2042
      %v2044 = vpop.f32.mrb[0].mxu0
      %2045 = vmatprep.mubr.bf16.mxu0 0
      %2046 = vmatmul.mubr.bf16.gmra.mrb[0].mxu0 %v1902
      %v2047 = vpop.f32.mrb[0].mxu0
      %v2048 = vadd.f32 0.0, %v2047
      %v2049 = vpop.f32.mrb[0].mxu0
      %v2050 = vpop.f32.mrb[0].mxu0
      %v2051 = vadd.f32 0.0, %v2050
      %v2052 = vpop.f32.mrb[0].mxu0
      %2053 = vmatprep.mubr.bf16.mxu0 0
      %2054 = vmatmul.mubr.bf16.gmra.mrb[0].mxu0 %v1905
      %v2055 = vpop.f32.mrb[0].mxu0
      %v2056 = vadd.f32 0.0, %v2055
      %v2057 = vpop.f32.mrb[0].mxu0
      %v2058 = vpop.f32.mrb[0].mxu0
      %v2059 = vadd.f32 0.0, %v2058
      %v2060 = vpop.f32.mrb[0].mxu0
      %2061 = vmatprep.mubr.bf16.mxu0 0
      %2062 = vmatmul.mubr.bf16.gmra.mrb[0].mxu0 %v1908
      %v2063 = vpop.f32.mrb[0].mxu0
      %v2064 = vadd.f32 0.0, %v2063
      %v2065 = vpop.f32.mrb[0].mxu0
      %v2066 = vpop.f32.mrb[0].mxu0
      %v2067 = vadd.f32 0.0, %v2066
      %v2068 = vpop.f32.mrb[0].mxu0
      %2069 = vmatprep.mubr.bf16.mxu0 0
      %2070 = vmatmul.mubr.bf16.gmra.mrb[0].mxu0 %v1911
      %v2071 = vpop.f32.mrb[0].mxu0
      %v2072 = vadd.f32 0.0, %v2071
      %v2073 = vpop.f32.mrb[0].mxu0
      %v2074 = vpop.f32.mrb[0].mxu0
      %v2075 = vadd.f32 0.0, %v2074
      %v2076 = vpop.f32.mrb[0].mxu0
      %2077 = vmatprep.mubr.bf16.mxu0 0
      %2078 = vmatmul.mubr.bf16.gmra.mrb[0].mxu0 %v1914
      %v2079 = vpop.f32.mrb[0].mxu0
      %v2080 = vadd.f32 0.0, %v2079
      %v2081 = vpop.f32.mrb[0].mxu0
      %v2082 = vpop.f32.mrb[0].mxu0
      %v2083 = vadd.f32 0.0, %v2082
      %v2084 = vpop.f32.mrb[0].mxu0
      %2085 = vmatprep.mubr.bf16.mxu0 0
      %2086 = vmatmul.mubr.bf16.gmra.mrb[0].mxu0 %v1917
      %v2087 = vpop.f32.mrb[0].mxu0
      %v2088 = vadd.f32 0.0, %v2087
      %v2089 = vpop.f32.mrb[0].mxu0
      %v2090 = vpop.f32.mrb[0].mxu0
      %v2091 = vadd.f32 0.0, %v2090
      %v2092 = vpop.f32.mrb[0].mxu0
      %2093 = vmatprep.mubr.bf16.mxu0 0
      %2094 = vmatmul.mubr.bf16.gmra.mrb[0].mxu0 %v1920
      %v2095 = vpop.f32.mrb[0].mxu0
      %v2096 = vadd.f32 0.0, %v2095
      %v2097 = vpop.f32.mrb[0].mxu0
      %v2098 = vpop.f32.mrb[0].mxu0
      %v2099 = vadd.f32 0.0, %v2098
      %v2100 = vpop.f32.mrb[0].mxu0
      %2101 = vdwg.mxu0
      %v2102 = vadd.f32 %v1776, %v1960
      %v2103 = vadd.f32 %v1777, %v1963
      %v2104 = vadd.f32 %v1778, %v1968
      %v2105 = vadd.f32 %v1779, %v1971
      %v2106 = vadd.f32 %v1780, %v1976
      %v2107 = vadd.f32 %v1781, %v1979
      %v2108 = vadd.f32 %v1782, %v1984
      %v2109 = vadd.f32 %v1783, %v1987
      %v2110 = vadd.f32 %v1784, %v1992
      %v2111 = vadd.f32 %v1785, %v1995
      %v2112 = vadd.f32 %v1786, %v2000
      %v2113 = vadd.f32 %v1787, %v2003
      %v2114 = vadd.f32 %v1788, %v2008
      %v2115 = vadd.f32 %v1789, %v2011
      %v2116 = vadd.f32 %v1790, %v2016
      %v2117 = vadd.f32 %v1791, %v2019
      %v2118 = vadd.f32 %v1792, %v2024
      %v2119 = vadd.f32 %v1793, %v2027
      %v2120 = vadd.f32 %v1794, %v2032
      %v2121 = vadd.f32 %v1795, %v2035
      %v2122 = vadd.f32 %v1796, %v2040
      %v2123 = vadd.f32 %v1797, %v2043
      %v2124 = vadd.f32 %v1798, %v2048
      %v2125 = vadd.f32 %v1799, %v2051
      %v2126 = vadd.f32 %v1800, %v2056
      %v2127 = vadd.f32 %v1801, %v2059
      %v2128 = vadd.f32 %v1802, %v2064
      %v2129 = vadd.f32 %v1803, %v2067
      %v2130 = vadd.f32 %v1804, %v2072
      %v2131 = vadd.f32 %v1805, %v2075
      %v2132 = vadd.f32 %v1806, %v2080
      %v2133 = vadd.f32 %v1807, %v2083
      %v2134 = vadd.f32 %v1808, %v2088
      %v2135 = vadd.f32 %v1809, %v2091
      %v2136 = vadd.f32 %v1810, %v2096
      %v2137 = vadd.f32 %v1811, %v2099
      %v2138 = vld [vmem:[%s246 + $0x24] sm:$0xff]
      %v2139 = vld [vmem:[%s246 + $0x2c] sm:$0xff]
      %v2140 = vld [vmem:[%s246 + $0x34] sm:$0xff]
      %v2141 = vld [vmem:[%s246 + $0x3c] sm:$0xff]
      %v2142 = vld [vmem:[%s246 + $0x44] sm:$0xff]
      %v2143 = vld [vmem:[%s246 + $0x4c] sm:$0xff]
      %v2144 = vld [vmem:[%s246 + $0x54] sm:$0xff]
      %v2145 = vld [vmem:[%s246 + $0x5c] sm:$0xff]
      %v2146 = vld [vmem:[%s246 + $0x64] sm:$0xff]
      %v2147 = vld [vmem:[%s246 + $0x6c] sm:$0xff]
      %v2148 = vld [vmem:[%s246 + $0x74] sm:$0xff]
      %v2149 = vld [vmem:[%s246 + $0x7c] sm:$0xff]
      %v2150 = vld [vmem:[%s246 + $0x84] sm:$0xff]
      %v2151 = vld [vmem:[%s246 + $0x8c] sm:$0xff]
      %v2152 = vld [vmem:[%s246 + $0x94] sm:$0xff]
      %v2153 = vld [vmem:[%s246 + $0x9c] sm:$0xff]
      %v2154 = vld [vmem:[%s246 + $0xa4] sm:$0xff]
      %v2155 = vld [vmem:[%s246 + $0xac] sm:$0xff]
      %v2156 = vld [vmem:[%s246 + $0xb4] sm:$0xff]
      %v2157 = vld [vmem:[%s246 + $0xbc] sm:$0xff]
      %v2158 = vld [vmem:[%s246 + $0xc4] sm:$0xff]
      %v2159 = vld [vmem:[%s246 + $0xcc] sm:$0xff]
      %v2160 = vld [vmem:[%s246 + $0xd4] sm:$0xff]
      %v2161 = vld [vmem:[%s246 + $0xdc] sm:$0xff]
      %v2162 = vld [vmem:[%s246 + $0xe4] sm:$0xff]
      %v2163 = vld [vmem:[%s246 + $0xec] sm:$0xff]
      %v2164 = vld [vmem:[%s246 + $0xf4] sm:$0xff]
      %v2165 = vld [vmem:[%s246 + $0xfc] sm:$0xff]
      %v2166 = vld [vmem:[%s246 + $0x104] sm:$0xff]
      %v2167 = vld [vmem:[%s246 + $0x10c] sm:$0xff]
      %v2168 = vld [vmem:[%s246 + $0x114] sm:$0xff]
      %v2169 = vld [vmem:[%s246 + $0x11c] sm:$0xff]
      %v2170 = vld [vmem:[%s246 + $0x124] sm:$0xff]
      %v2171 = vld [vmem:[%s246 + $0x12c] sm:$0xff]
      %v2172 = vld [vmem:[%s246 + $0x134] sm:$0xff]
      %v2173 = vld [vmem:[%s246 + $0x13c] sm:$0xff]
      %v2174 = vpack.c.bf16 %v2139, %v2138
      %v2175 = vpack.c.bf16 %v2141, %v2140
      %v2176 = vpack.c.bf16 %v2143, %v2142
      %v2177 = vpack.c.bf16 %v2145, %v2144
      %v2178 = vpack.c.bf16 %v2147, %v2146
      %v2179 = vpack.c.bf16 %v2149, %v2148
      %v2180 = vpack.c.bf16 %v2151, %v2150
      %v2181 = vpack.c.bf16 %v2153, %v2152
      %v2182 = vpack.c.bf16 %v2155, %v2154
      %v2183 = vpack.c.bf16 %v2157, %v2156
      %v2184 = vpack.c.bf16 %v2159, %v2158
      %v2185 = vpack.c.bf16 %v2161, %v2160
      %v2186 = vpack.c.bf16 %v2163, %v2162
      %v2187 = vpack.c.bf16 %v2165, %v2164
      %v2188 = vpack.c.bf16 %v2167, %v2166
      %v2189 = vpack.c.bf16 %v2169, %v2168
      %v2190 = vpack.c.bf16 %v2171, %v2170
      %v2191 = vpack.c.bf16 %v2173, %v2172
      %s2192 = scalar_lea.vmem %s1, 12
      %v2193 = vld [vmem:[%s2192] sm:$0x3]
      %v2195 = vsel %vm364, %v2174, 0
      %v2198 = vsel %vm364, %v2175, 0
      %v2201 = vsel %vm364, %v2176, 0
      %v2204 = vsel %vm364, %v2177, 0
      %v2207 = vsel %vm364, %v2178, 0
      %v2210 = vsel %vm364, %v2179, 0
      %v2213 = vsel %vm364, %v2180, 0
      %v2216 = vsel %vm364, %v2181, 0
      %v2219 = vsel %vm364, %v2182, 0
      %v2222 = vsel %vm364, %v2183, 0
      %v2225 = vsel %vm364, %v2184, 0
      %v2228 = vsel %vm364, %v2185, 0
      %v2231 = vsel %vm364, %v2186, 0
      %v2234 = vsel %vm364, %v2187, 0
      %v2237 = vsel %vm364, %v2188, 0
      %v2240 = vsel %vm364, %v2189, 0
      %v2243 = vsel %vm364, %v2190, 0
      %v2246 = vsel %vm364, %v2191, 0
      %v2249 = vsel %vm419, %v2193, 0
      %2251 = vmatprep.subr.bf16.mxu0 0
      %2252 = vmatpush1.bf16.msra.mxu0 %v2249
      %2253 = vmatprep.subr.bf16.mxu0 0
      %2254 = vmatpush1.bf16.msra.mxu0 0
      %2255 = vmatprep.subr.bf16.mxu0 0
      %2256 = vmatpush1.bf16.msra.mxu0 0
      %2257 = vmatprep.subr.bf16.mxu0 0
      %2258 = vmatpush1.bf16.msra.mxu0 0
      %2259 = vmatprep.subr.bf16.mxu0 0
      %2260 = vmatpush1.bf16.msra.mxu0 0
      %2261 = vmatprep.subr.bf16.mxu0 0
      %2262 = vmatpush1.bf16.msra.mxu0 0
      %2263 = vmatprep.subr.bf16.mxu0 0
      %2264 = vmatpush1.bf16.msra.mxu0 0
      %2265 = vmatprep.subr.bf16.mxu0 0
      %2266 = vmatpush1.bf16.msra.mxu0 0
      %2267 = vmatprep.subr.bf16.mxu0 0
      %2268 = vmatpush1.bf16.msra.mxu0 0
      %2269 = vmatprep.subr.bf16.mxu0 0
      %2270 = vmatpush1.bf16.msra.mxu0 0
      %2271 = vmatprep.subr.bf16.mxu0 0
      %2272 = vmatpush1.bf16.msra.mxu0 0
      %2273 = vmatprep.subr.bf16.mxu0 0
      %2274 = vmatpush1.bf16.msra.mxu0 0
      %2275 = vmatprep.subr.bf16.mxu0 0
      %2276 = vmatpush1.bf16.msra.mxu0 0
      %2277 = vmatprep.subr.bf16.mxu0 0
      %2278 = vmatpush1.bf16.msra.mxu0 0
      %2279 = vmatprep.subr.bf16.mxu0 0
      %2280 = vmatpush1.bf16.msra.mxu0 0
      %2281 = vmatprep.subr.bf16.mxu0 0
      %2282 = vmatpush1.bf16.msra.mxu0 0
      %2283 = vmatprep.mubr.bf16.mxu0 0
      %2284 = vmatmul.mubr.bf16.gmra.mrb[0].mxu0 %v2195
      %v2285 = vpop.f32.mrb[0].mxu0
      %v2286 = vadd.f32 0.0, %v2285
      %v2287 = vpop.f32.mrb[0].mxu0
      %v2288 = vpop.f32.mrb[0].mxu0
      %v2289 = vadd.f32 0.0, %v2288
      %v2290 = vpop.f32.mrb[0].mxu0
      %2291 = vmatprep.mubr.bf16.mxu0 0
      %2292 = vmatmul.mubr.bf16.gmra.mrb[0].mxu0 %v2198
      %v2293 = vpop.f32.mrb[0].mxu0
      %v2294 = vadd.f32 0.0, %v2293
      %v2295 = vpop.f32.mrb[0].mxu0
      %v2296 = vpop.f32.mrb[0].mxu0
      %v2297 = vadd.f32 0.0, %v2296
      %v2298 = vpop.f32.mrb[0].mxu0
      %2299 = vmatprep.mubr.bf16.mxu0 0
      %2300 = vmatmul.mubr.bf16.gmra.mrb[0].mxu0 %v2201
      %v2301 = vpop.f32.mrb[0].mxu0
      %v2302 = vadd.f32 0.0, %v2301
      %v2303 = vpop.f32.mrb[0].mxu0
      %v2304 = vpop.f32.mrb[0].mxu0
      %v2305 = vadd.f32 0.0, %v2304
      %v2306 = vpop.f32.mrb[0].mxu0
      %2307 = vmatprep.mubr.bf16.mxu0 0
      %2308 = vmatmul.mubr.bf16.gmra.mrb[0].mxu0 %v2204
      %v2309 = vpop.f32.mrb[0].mxu0
      %v2310 = vadd.f32 0.0, %v2309
      %v2311 = vpop.f32.mrb[0].mxu0
      %v2312 = vpop.f32.mrb[0].mxu0
      %v2313 = vadd.f32 0.0, %v2312
      %v2314 = vpop.f32.mrb[0].mxu0
      %2315 = vmatprep.mubr.bf16.mxu0 0
      %2316 = vmatmul.mubr.bf16.gmra.mrb[0].mxu0 %v2207
      %v2317 = vpop.f32.mrb[0].mxu0
      %v2318 = vadd.f32 0.0, %v2317
      %v2319 = vpop.f32.mrb[0].mxu0
      %v2320 = vpop.f32.mrb[0].mxu0
      %v2321 = vadd.f32 0.0, %v2320
      %v2322 = vpop.f32.mrb[0].mxu0
      %2323 = vmatprep.mubr.bf16.mxu0 0
      %2324 = vmatmul.mubr.bf16.gmra.mrb[0].mxu0 %v2210
      %v2325 = vpop.f32.mrb[0].mxu0
      %v2326 = vadd.f32 0.0, %v2325
      %v2327 = vpop.f32.mrb[0].mxu0
      %v2328 = vpop.f32.mrb[0].mxu0
      %v2329 = vadd.f32 0.0, %v2328
      %v2330 = vpop.f32.mrb[0].mxu0
      %2331 = vmatprep.mubr.bf16.mxu0 0
      %2332 = vmatmul.mubr.bf16.gmra.mrb[0].mxu0 %v2213
      %v2333 = vpop.f32.mrb[0].mxu0
      %v2334 = vadd.f32 0.0, %v2333
      %v2335 = vpop.f32.mrb[0].mxu0
      %v2336 = vpop.f32.mrb[0].mxu0
      %v2337 = vadd.f32 0.0, %v2336
      %v2338 = vpop.f32.mrb[0].mxu0
      %2339 = vmatprep.mubr.bf16.mxu0 0
      %2340 = vmatmul.mubr.bf16.gmra.mrb[0].mxu0 %v2216
      %v2341 = vpop.f32.mrb[0].mxu0
      %v2342 = vadd.f32 0.0, %v2341
      %v2343 = vpop.f32.mrb[0].mxu0
      %v2344 = vpop.f32.mrb[0].mxu0
      %v2345 = vadd.f32 0.0, %v2344
      %v2346 = vpop.f32.mrb[0].mxu0
      %2347 = vmatprep.mubr.bf16.mxu0 0
      %2348 = vmatmul.mubr.bf16.gmra.mrb[0].mxu0 %v2219
      %v2349 = vpop.f32.mrb[0].mxu0
      %v2350 = vadd.f32 0.0, %v2349
      %v2351 = vpop.f32.mrb[0].mxu0
      %v2352 = vpop.f32.mrb[0].mxu0
      %v2353 = vadd.f32 0.0, %v2352
      %v2354 = vpop.f32.mrb[0].mxu0
      %2355 = vmatprep.mubr.bf16.mxu0 0
      %2356 = vmatmul.mubr.bf16.gmra.mrb[0].mxu0 %v2222
      %v2357 = vpop.f32.mrb[0].mxu0
      %v2358 = vadd.f32 0.0, %v2357
      %v2359 = vpop.f32.mrb[0].mxu0
      %v2360 = vpop.f32.mrb[0].mxu0
      %v2361 = vadd.f32 0.0, %v2360
      %v2362 = vpop.f32.mrb[0].mxu0
      %2363 = vmatprep.mubr.bf16.mxu0 0
      %2364 = vmatmul.mubr.bf16.gmra.mrb[0].mxu0 %v2225
      %v2365 = vpop.f32.mrb[0].mxu0
      %v2366 = vadd.f32 0.0, %v2365
      %v2367 = vpop.f32.mrb[0].mxu0
      %v2368 = vpop.f32.mrb[0].mxu0
      %v2369 = vadd.f32 0.0, %v2368
      %v2370 = vpop.f32.mrb[0].mxu0
      %2371 = vmatprep.mubr.bf16.mxu0 0
      %2372 = vmatmul.mubr.bf16.gmra.mrb[0].mxu0 %v2228
      %v2373 = vpop.f32.mrb[0].mxu0
      %v2374 = vadd.f32 0.0, %v2373
      %v2375 = vpop.f32.mrb[0].mxu0
      %v2376 = vpop.f32.mrb[0].mxu0
      %v2377 = vadd.f32 0.0, %v2376
      %v2378 = vpop.f32.mrb[0].mxu0
      %2379 = vmatprep.mubr.bf16.mxu0 0
      %2380 = vmatmul.mubr.bf16.gmra.mrb[0].mxu0 %v2231
      %v2381 = vpop.f32.mrb[0].mxu0
      %v2382 = vadd.f32 0.0, %v2381
      %v2383 = vpop.f32.mrb[0].mxu0
      %v2384 = vpop.f32.mrb[0].mxu0
      %v2385 = vadd.f32 0.0, %v2384
      %v2386 = vpop.f32.mrb[0].mxu0
      %2387 = vmatprep.mubr.bf16.mxu0 0
      %2388 = vmatmul.mubr.bf16.gmra.mrb[0].mxu0 %v2234
      %v2389 = vpop.f32.mrb[0].mxu0
      %v2390 = vadd.f32 0.0, %v2389
      %v2391 = vpop.f32.mrb[0].mxu0
      %v2392 = vpop.f32.mrb[0].mxu0
      %v2393 = vadd.f32 0.0, %v2392
      %v2394 = vpop.f32.mrb[0].mxu0
      %2395 = vmatprep.mubr.bf16.mxu0 0
      %2396 = vmatmul.mubr.bf16.gmra.mrb[0].mxu0 %v2237
      %v2397 = vpop.f32.mrb[0].mxu0
      %v2398 = vadd.f32 0.0, %v2397
      %v2399 = vpop.f32.mrb[0].mxu0
      %v2400 = vpop.f32.mrb[0].mxu0
      %v2401 = vadd.f32 0.0, %v2400
      %v2402 = vpop.f32.mrb[0].mxu0
      %2403 = vmatprep.mubr.bf16.mxu0 0
      %2404 = vmatmul.mubr.bf16.gmra.mrb[0].mxu0 %v2240
      %v2405 = vpop.f32.mrb[0].mxu0
      %v2406 = vadd.f32 0.0, %v2405
      %v2407 = vpop.f32.mrb[0].mxu0
      %v2408 = vpop.f32.mrb[0].mxu0
      %v2409 = vadd.f32 0.0, %v2408
      %v2410 = vpop.f32.mrb[0].mxu0
      %2411 = vmatprep.mubr.bf16.mxu0 0
      %2412 = vmatmul.mubr.bf16.gmra.mrb[0].mxu0 %v2243
      %v2413 = vpop.f32.mrb[0].mxu0
      %v2414 = vadd.f32 0.0, %v2413
      %v2415 = vpop.f32.mrb[0].mxu0
      %v2416 = vpop.f32.mrb[0].mxu0
      %v2417 = vadd.f32 0.0, %v2416
      %v2418 = vpop.f32.mrb[0].mxu0
      %2419 = vmatprep.mubr.bf16.mxu0 0
      %2420 = vmatmul.mubr.bf16.gmra.mrb[0].mxu0 %v2246
      %v2421 = vpop.f32.mrb[0].mxu0
      %v2422 = vadd.f32 0.0, %v2421
      %v2423 = vpop.f32.mrb[0].mxu0
      %v2424 = vpop.f32.mrb[0].mxu0
      %v2425 = vadd.f32 0.0, %v2424
      %v2426 = vpop.f32.mrb[0].mxu0
      %2427 = vdwg.mxu0
      %v2428 = vadd.f32 %v2102, %v2286
      %v2429 = vadd.f32 %v2103, %v2289
      %v2430 = vadd.f32 %v2104, %v2294
      %v2431 = vadd.f32 %v2105, %v2297
      %v2432 = vadd.f32 %v2106, %v2302
      %v2433 = vadd.f32 %v2107, %v2305
      %v2434 = vadd.f32 %v2108, %v2310
      %v2435 = vadd.f32 %v2109, %v2313
      %v2436 = vadd.f32 %v2110, %v2318
      %v2437 = vadd.f32 %v2111, %v2321
      %v2438 = vadd.f32 %v2112, %v2326
      %v2439 = vadd.f32 %v2113, %v2329
      %v2440 = vadd.f32 %v2114, %v2334
      %v2441 = vadd.f32 %v2115, %v2337
      %v2442 = vadd.f32 %v2116, %v2342
      %v2443 = vadd.f32 %v2117, %v2345
      %v2444 = vadd.f32 %v2118, %v2350
      %v2445 = vadd.f32 %v2119, %v2353
      %v2446 = vadd.f32 %v2120, %v2358
      %v2447 = vadd.f32 %v2121, %v2361
      %v2448 = vadd.f32 %v2122, %v2366
      %v2449 = vadd.f32 %v2123, %v2369
      %v2450 = vadd.f32 %v2124, %v2374
      %v2451 = vadd.f32 %v2125, %v2377
      %v2452 = vadd.f32 %v2126, %v2382
      %v2453 = vadd.f32 %v2127, %v2385
      %v2454 = vadd.f32 %v2128, %v2390
      %v2455 = vadd.f32 %v2129, %v2393
      %v2456 = vadd.f32 %v2130, %v2398
      %v2457 = vadd.f32 %v2131, %v2401
      %v2458 = vadd.f32 %v2132, %v2406
      %v2459 = vadd.f32 %v2133, %v2409
      %v2460 = vadd.f32 %v2134, %v2414
      %v2461 = vadd.f32 %v2135, %v2417
      %v2462 = vadd.f32 %v2136, %v2422
      %v2463 = vadd.f32 %v2137, %v2425
      %v2464 = vld [vmem:[%s246 + $0x25] sm:$0xff]
      %v2465 = vld [vmem:[%s246 + $0x2d] sm:$0xff]
      %v2466 = vld [vmem:[%s246 + $0x35] sm:$0xff]
      %v2467 = vld [vmem:[%s246 + $0x3d] sm:$0xff]
      %v2468 = vld [vmem:[%s246 + $0x45] sm:$0xff]
      %v2469 = vld [vmem:[%s246 + $0x4d] sm:$0xff]
      %v2470 = vld [vmem:[%s246 + $0x55] sm:$0xff]
      %v2471 = vld [vmem:[%s246 + $0x5d] sm:$0xff]
      %v2472 = vld [vmem:[%s246 + $0x65] sm:$0xff]
      %v2473 = vld [vmem:[%s246 + $0x6d] sm:$0xff]
      %v2474 = vld [vmem:[%s246 + $0x75] sm:$0xff]
      %v2475 = vld [vmem:[%s246 + $0x7d] sm:$0xff]
      %v2476 = vld [vmem:[%s246 + $0x85] sm:$0xff]
      %v2477 = vld [vmem:[%s246 + $0x8d] sm:$0xff]
      %v2478 = vld [vmem:[%s246 + $0x95] sm:$0xff]
      %v2479 = vld [vmem:[%s246 + $0x9d] sm:$0xff]
      %v2480 = vld [vmem:[%s246 + $0xa5] sm:$0xff]
      %v2481 = vld [vmem:[%s246 + $0xad] sm:$0xff]
      %v2482 = vld [vmem:[%s246 + $0xb5] sm:$0xff]
      %v2483 = vld [vmem:[%s246 + $0xbd] sm:$0xff]
      %v2484 = vld [vmem:[%s246 + $0xc5] sm:$0xff]
      %v2485 = vld [vmem:[%s246 + $0xcd] sm:$0xff]
      %v2486 = vld [vmem:[%s246 + $0xd5] sm:$0xff]
      %v2487 = vld [vmem:[%s246 + $0xdd] sm:$0xff]
      %v2488 = vld [vmem:[%s246 + $0xe5] sm:$0xff]
      %v2489 = vld [vmem:[%s246 + $0xed] sm:$0xff]
      %v2490 = vld [vmem:[%s246 + $0xf5] sm:$0xff]
      %v2491 = vld [vmem:[%s246 + $0xfd] sm:$0xff]
      %v2492 = vld [vmem:[%s246 + $0x105] sm:$0xff]
      %v2493 = vld [vmem:[%s246 + $0x10d] sm:$0xff]
      %v2494 = vld [vmem:[%s246 + $0x115] sm:$0xff]
      %v2495 = vld [vmem:[%s246 + $0x11d] sm:$0xff]
      %v2496 = vld [vmem:[%s246 + $0x125] sm:$0xff]
      %v2497 = vld [vmem:[%s246 + $0x12d] sm:$0xff]
      %v2498 = vld [vmem:[%s246 + $0x135] sm:$0xff]
      %v2499 = vld [vmem:[%s246 + $0x13d] sm:$0xff]
      %v2500 = vpack.c.bf16 %v2465, %v2464
      %v2501 = vpack.c.bf16 %v2467, %v2466
      %v2502 = vpack.c.bf16 %v2469, %v2468
      %v2503 = vpack.c.bf16 %v2471, %v2470
      %v2504 = vpack.c.bf16 %v2473, %v2472
      %v2505 = vpack.c.bf16 %v2475, %v2474
      %v2506 = vpack.c.bf16 %v2477, %v2476
      %v2507 = vpack.c.bf16 %v2479, %v2478
      %v2508 = vpack.c.bf16 %v2481, %v2480
      %v2509 = vpack.c.bf16 %v2483, %v2482
      %v2510 = vpack.c.bf16 %v2485, %v2484
      %v2511 = vpack.c.bf16 %v2487, %v2486
      %v2512 = vpack.c.bf16 %v2489, %v2488
      %v2513 = vpack.c.bf16 %v2491, %v2490
      %v2514 = vpack.c.bf16 %v2493, %v2492
      %v2515 = vpack.c.bf16 %v2495, %v2494
      %v2516 = vpack.c.bf16 %v2497, %v2496
      %v2517 = vpack.c.bf16 %v2499, %v2498
      %s2518 = scalar_lea.vmem %s1, 14
      %v2519 = vld [vmem:[%s2518] sm:$0x3]
      %v2521 = vsel %vm364, %v2500, 0
      %v2524 = vsel %vm364, %v2501, 0
      %v2527 = vsel %vm364, %v2502, 0
      %v2530 = vsel %vm364, %v2503, 0
      %v2533 = vsel %vm364, %v2504, 0
      %v2536 = vsel %vm364, %v2505, 0
      %v2539 = vsel %vm364, %v2506, 0
      %v2542 = vsel %vm364, %v2507, 0
      %v2545 = vsel %vm364, %v2508, 0
      %v2548 = vsel %vm364, %v2509, 0
      %v2551 = vsel %vm364, %v2510, 0
      %v2554 = vsel %vm364, %v2511, 0
      %v2557 = vsel %vm364, %v2512, 0
      %v2560 = vsel %vm364, %v2513, 0
      %v2563 = vsel %vm364, %v2514, 0
      %v2566 = vsel %vm364, %v2515, 0
      %v2569 = vsel %vm364, %v2516, 0
      %v2572 = vsel %vm364, %v2517, 0
      %v2575 = vsel %vm419, %v2519, 0
      %2577 = vmatprep.subr.bf16.mxu0 0
      %2578 = vmatpush1.bf16.msra.mxu0 %v2575
      %2579 = vmatprep.subr.bf16.mxu0 0
      %2580 = vmatpush1.bf16.msra.mxu0 0
      %2581 = vmatprep.subr.bf16.mxu0 0
      %2582 = vmatpush1.bf16.msra.mxu0 0
      %2583 = vmatprep.subr.bf16.mxu0 0
      %2584 = vmatpush1.bf16.msra.mxu0 0
      %2585 = vmatprep.subr.bf16.mxu0 0
      %2586 = vmatpush1.bf16.msra.mxu0 0
      %2587 = vmatprep.subr.bf16.mxu0 0
      %2588 = vmatpush1.bf16.msra.mxu0 0
      %2589 = vmatprep.subr.bf16.mxu0 0
      %2590 = vmatpush1.bf16.msra.mxu0 0
      %2591 = vmatprep.subr.bf16.mxu0 0
      %2592 = vmatpush1.bf16.msra.mxu0 0
      %2593 = vmatprep.subr.bf16.mxu0 0
      %2594 = vmatpush1.bf16.msra.mxu0 0
      %2595 = vmatprep.subr.bf16.mxu0 0
      %2596 = vmatpush1.bf16.msra.mxu0 0
      %2597 = vmatprep.subr.bf16.mxu0 0
      %2598 = vmatpush1.bf16.msra.mxu0 0
      %2599 = vmatprep.subr.bf16.mxu0 0
      %2600 = vmatpush1.bf16.msra.mxu0 0
      %2601 = vmatprep.subr.bf16.mxu0 0
      %2602 = vmatpush1.bf16.msra.mxu0 0
      %2603 = vmatprep.subr.bf16.mxu0 0
      %2604 = vmatpush1.bf16.msra.mxu0 0
      %2605 = vmatprep.subr.bf16.mxu0 0
      %2606 = vmatpush1.bf16.msra.mxu0 0
      %2607 = vmatprep.subr.bf16.mxu0 0
      %2608 = vmatpush1.bf16.msra.mxu0 0
      %2609 = vmatprep.mubr.bf16.mxu0 0
      %2610 = vmatmul.mubr.bf16.gmra.mrb[0].mxu0 %v2521
      %v2611 = vpop.f32.mrb[0].mxu0
      %v2612 = vadd.f32 0.0, %v2611
      %v2613 = vpop.f32.mrb[0].mxu0
      %v2614 = vpop.f32.mrb[0].mxu0
      %v2615 = vadd.f32 0.0, %v2614
      %v2616 = vpop.f32.mrb[0].mxu0
      %2617 = vmatprep.mubr.bf16.mxu0 0
      %2618 = vmatmul.mubr.bf16.gmra.mrb[0].mxu0 %v2524
      %v2619 = vpop.f32.mrb[0].mxu0
      %v2620 = vadd.f32 0.0, %v2619
      %v2621 = vpop.f32.mrb[0].mxu0
      %v2622 = vpop.f32.mrb[0].mxu0
      %v2623 = vadd.f32 0.0, %v2622
      %v2624 = vpop.f32.mrb[0].mxu0
      %2625 = vmatprep.mubr.bf16.mxu0 0
      %2626 = vmatmul.mubr.bf16.gmra.mrb[0].mxu0 %v2527
      %v2627 = vpop.f32.mrb[0].mxu0
      %v2628 = vadd.f32 0.0, %v2627
      %v2629 = vpop.f32.mrb[0].mxu0
      %v2630 = vpop.f32.mrb[0].mxu0
      %v2631 = vadd.f32 0.0, %v2630
      %v2632 = vpop.f32.mrb[0].mxu0
      %2633 = vmatprep.mubr.bf16.mxu0 0
      %2634 = vmatmul.mubr.bf16.gmra.mrb[0].mxu0 %v2530
      %v2635 = vpop.f32.mrb[0].mxu0
      %v2636 = vadd.f32 0.0, %v2635
      %v2637 = vpop.f32.mrb[0].mxu0
      %v2638 = vpop.f32.mrb[0].mxu0
      %v2639 = vadd.f32 0.0, %v2638
      %v2640 = vpop.f32.mrb[0].mxu0
      %2641 = vmatprep.mubr.bf16.mxu0 0
      %2642 = vmatmul.mubr.bf16.gmra.mrb[0].mxu0 %v2533
      %v2643 = vpop.f32.mrb[0].mxu0
      %v2644 = vadd.f32 0.0, %v2643
      %v2645 = vpop.f32.mrb[0].mxu0
      %v2646 = vpop.f32.mrb[0].mxu0
      %v2647 = vadd.f32 0.0, %v2646
      %v2648 = vpop.f32.mrb[0].mxu0
      %2649 = vmatprep.mubr.bf16.mxu0 0
      %2650 = vmatmul.mubr.bf16.gmra.mrb[0].mxu0 %v2536
      %v2651 = vpop.f32.mrb[0].mxu0
      %v2652 = vadd.f32 0.0, %v2651
      %v2653 = vpop.f32.mrb[0].mxu0
      %v2654 = vpop.f32.mrb[0].mxu0
      %v2655 = vadd.f32 0.0, %v2654
      %v2656 = vpop.f32.mrb[0].mxu0
      %2657 = vmatprep.mubr.bf16.mxu0 0
      %2658 = vmatmul.mubr.bf16.gmra.mrb[0].mxu0 %v2539
      %v2659 = vpop.f32.mrb[0].mxu0
      %v2660 = vadd.f32 0.0, %v2659
      %v2661 = vpop.f32.mrb[0].mxu0
      %v2662 = vpop.f32.mrb[0].mxu0
      %v2663 = vadd.f32 0.0, %v2662
      %v2664 = vpop.f32.mrb[0].mxu0
      %2665 = vmatprep.mubr.bf16.mxu0 0
      %2666 = vmatmul.mubr.bf16.gmra.mrb[0].mxu0 %v2542
      %v2667 = vpop.f32.mrb[0].mxu0
      %v2668 = vadd.f32 0.0, %v2667
      %v2669 = vpop.f32.mrb[0].mxu0
      %v2670 = vpop.f32.mrb[0].mxu0
      %v2671 = vadd.f32 0.0, %v2670
      %v2672 = vpop.f32.mrb[0].mxu0
      %2673 = vmatprep.mubr.bf16.mxu0 0
      %2674 = vmatmul.mubr.bf16.gmra.mrb[0].mxu0 %v2545
      %v2675 = vpop.f32.mrb[0].mxu0
      %v2676 = vadd.f32 0.0, %v2675
      %v2677 = vpop.f32.mrb[0].mxu0
      %v2678 = vpop.f32.mrb[0].mxu0
      %v2679 = vadd.f32 0.0, %v2678
      %v2680 = vpop.f32.mrb[0].mxu0
      %2681 = vmatprep.mubr.bf16.mxu0 0
      %2682 = vmatmul.mubr.bf16.gmra.mrb[0].mxu0 %v2548
      %v2683 = vpop.f32.mrb[0].mxu0
      %v2684 = vadd.f32 0.0, %v2683
      %v2685 = vpop.f32.mrb[0].mxu0
      %v2686 = vpop.f32.mrb[0].mxu0
      %v2687 = vadd.f32 0.0, %v2686
      %v2688 = vpop.f32.mrb[0].mxu0
      %2689 = vmatprep.mubr.bf16.mxu0 0
      %2690 = vmatmul.mubr.bf16.gmra.mrb[0].mxu0 %v2551
      %v2691 = vpop.f32.mrb[0].mxu0
      %v2692 = vadd.f32 0.0, %v2691
      %v2693 = vpop.f32.mrb[0].mxu0
      %v2694 = vpop.f32.mrb[0].mxu0
      %v2695 = vadd.f32 0.0, %v2694
      %v2696 = vpop.f32.mrb[0].mxu0
      %2697 = vmatprep.mubr.bf16.mxu0 0
      %2698 = vmatmul.mubr.bf16.gmra.mrb[0].mxu0 %v2554
      %v2699 = vpop.f32.mrb[0].mxu0
      %v2700 = vadd.f32 0.0, %v2699
      %v2701 = vpop.f32.mrb[0].mxu0
      %v2702 = vpop.f32.mrb[0].mxu0
      %v2703 = vadd.f32 0.0, %v2702
      %v2704 = vpop.f32.mrb[0].mxu0
      %2705 = vmatprep.mubr.bf16.mxu0 0
      %2706 = vmatmul.mubr.bf16.gmra.mrb[0].mxu0 %v2557
      %v2707 = vpop.f32.mrb[0].mxu0
      %v2708 = vadd.f32 0.0, %v2707
      %v2709 = vpop.f32.mrb[0].mxu0
      %v2710 = vpop.f32.mrb[0].mxu0
      %v2711 = vadd.f32 0.0, %v2710
      %v2712 = vpop.f32.mrb[0].mxu0
      %2713 = vmatprep.mubr.bf16.mxu0 0
      %2714 = vmatmul.mubr.bf16.gmra.mrb[0].mxu0 %v2560
      %v2715 = vpop.f32.mrb[0].mxu0
      %v2716 = vadd.f32 0.0, %v2715
      %v2717 = vpop.f32.mrb[0].mxu0
      %v2718 = vpop.f32.mrb[0].mxu0
      %v2719 = vadd.f32 0.0, %v2718
      %v2720 = vpop.f32.mrb[0].mxu0
      %2721 = vmatprep.mubr.bf16.mxu0 0
      %2722 = vmatmul.mubr.bf16.gmra.mrb[0].mxu0 %v2563
      %v2723 = vpop.f32.mrb[0].mxu0
      %v2724 = vadd.f32 0.0, %v2723
      %v2725 = vpop.f32.mrb[0].mxu0
      %v2726 = vpop.f32.mrb[0].mxu0
      %v2727 = vadd.f32 0.0, %v2726
      %v2728 = vpop.f32.mrb[0].mxu0
      %2729 = vmatprep.mubr.bf16.mxu0 0
      %2730 = vmatmul.mubr.bf16.gmra.mrb[0].mxu0 %v2566
      %v2731 = vpop.f32.mrb[0].mxu0
      %v2732 = vadd.f32 0.0, %v2731
      %v2733 = vpop.f32.mrb[0].mxu0
      %v2734 = vpop.f32.mrb[0].mxu0
      %v2735 = vadd.f32 0.0, %v2734
      %v2736 = vpop.f32.mrb[0].mxu0
      %2737 = vmatprep.mubr.bf16.mxu0 0
      %2738 = vmatmul.mubr.bf16.gmra.mrb[0].mxu0 %v2569
      %v2739 = vpop.f32.mrb[0].mxu0
      %v2740 = vadd.f32 0.0, %v2739
      %v2741 = vpop.f32.mrb[0].mxu0
      %v2742 = vpop.f32.mrb[0].mxu0
      %v2743 = vadd.f32 0.0, %v2742
      %v2744 = vpop.f32.mrb[0].mxu0
      %2745 = vmatprep.mubr.bf16.mxu0 0
      %2746 = vmatmul.mubr.bf16.gmra.mrb[0].mxu0 %v2572
      %v2747 = vpop.f32.mrb[0].mxu0
      %v2748 = vadd.f32 0.0, %v2747
      %v2749 = vpop.f32.mrb[0].mxu0
      %v2750 = vpop.f32.mrb[0].mxu0
      %v2751 = vadd.f32 0.0, %v2750
      %v2752 = vpop.f32.mrb[0].mxu0
      %2753 = vdwg.mxu0
      %v2754 = vadd.f32 %v2428, %v2612
      %v2755 = vadd.f32 %v2429, %v2615
      %v2756 = vadd.f32 %v2430, %v2620
      %v2757 = vadd.f32 %v2431, %v2623
      %v2758 = vadd.f32 %v2432, %v2628
      %v2759 = vadd.f32 %v2433, %v2631
      %v2760 = vadd.f32 %v2434, %v2636
      %v2761 = vadd.f32 %v2435, %v2639
      %v2762 = vadd.f32 %v2436, %v2644
      %v2763 = vadd.f32 %v2437, %v2647
      %v2764 = vadd.f32 %v2438, %v2652
      %v2765 = vadd.f32 %v2439, %v2655
      %v2766 = vadd.f32 %v2440, %v2660
      %v2767 = vadd.f32 %v2441, %v2663
      %v2768 = vadd.f32 %v2442, %v2668
      %v2769 = vadd.f32 %v2443, %v2671
      %v2770 = vadd.f32 %v2444, %v2676
      %v2771 = vadd.f32 %v2445, %v2679
      %v2772 = vadd.f32 %v2446, %v2684
      %v2773 = vadd.f32 %v2447, %v2687
      %v2774 = vadd.f32 %v2448, %v2692
      %v2775 = vadd.f32 %v2449, %v2695
      %v2776 = vadd.f32 %v2450, %v2700
      %v2777 = vadd.f32 %v2451, %v2703
      %v2778 = vadd.f32 %v2452, %v2708
      %v2779 = vadd.f32 %v2453, %v2711
      %v2780 = vadd.f32 %v2454, %v2716
      %v2781 = vadd.f32 %v2455, %v2719
      %v2782 = vadd.f32 %v2456, %v2724
      %v2783 = vadd.f32 %v2457, %v2727
      %v2784 = vadd.f32 %v2458, %v2732
      %v2785 = vadd.f32 %v2459, %v2735
      %v2786 = vadd.f32 %v2460, %v2740
      %v2787 = vadd.f32 %v2461, %v2743
      %v2788 = vadd.f32 %v2462, %v2748
      %v2789 = vadd.f32 %v2463, %v2751
      %v2790 = vld [vmem:[%s246 + $0x26] sm:$0xff]
      %v2791 = vld [vmem:[%s246 + $0x2e] sm:$0xff]
      %v2792 = vld [vmem:[%s246 + $0x36] sm:$0xff]
      %v2793 = vld [vmem:[%s246 + $0x3e] sm:$0xff]
      %v2794 = vld [vmem:[%s246 + $0x46] sm:$0xff]
      %v2795 = vld [vmem:[%s246 + $0x4e] sm:$0xff]
      %v2796 = vld [vmem:[%s246 + $0x56] sm:$0xff]
      %v2797 = vld [vmem:[%s246 + $0x5e] sm:$0xff]
      %v2798 = vld [vmem:[%s246 + $0x66] sm:$0xff]
      %v2799 = vld [vmem:[%s246 + $0x6e] sm:$0xff]
      %v2800 = vld [vmem:[%s246 + $0x76] sm:$0xff]
      %v2801 = vld [vmem:[%s246 + $0x7e] sm:$0xff]
      %v2802 = vld [vmem:[%s246 + $0x86] sm:$0xff]
      %v2803 = vld [vmem:[%s246 + $0x8e] sm:$0xff]
      %v2804 = vld [vmem:[%s246 + $0x96] sm:$0xff]
      %v2805 = vld [vmem:[%s246 + $0x9e] sm:$0xff]
      %v2806 = vld [vmem:[%s246 + $0xa6] sm:$0xff]
      %v2807 = vld [vmem:[%s246 + $0xae] sm:$0xff]
      %v2808 = vld [vmem:[%s246 + $0xb6] sm:$0xff]
      %v2809 = vld [vmem:[%s246 + $0xbe] sm:$0xff]
      %v2810 = vld [vmem:[%s246 + $0xc6] sm:$0xff]
      %v2811 = vld [vmem:[%s246 + $0xce] sm:$0xff]
      %v2812 = vld [vmem:[%s246 + $0xd6] sm:$0xff]
      %v2813 = vld [vmem:[%s246 + $0xde] sm:$0xff]
      %v2814 = vld [vmem:[%s246 + $0xe6] sm:$0xff]
      %v2815 = vld [vmem:[%s246 + $0xee] sm:$0xff]
      %v2816 = vld [vmem:[%s246 + $0xf6] sm:$0xff]
      %v2817 = vld [vmem:[%s246 + $0xfe] sm:$0xff]
      %v2818 = vld [vmem:[%s246 + $0x106] sm:$0xff]
      %v2819 = vld [vmem:[%s246 + $0x10e] sm:$0xff]
      %v2820 = vld [vmem:[%s246 + $0x116] sm:$0xff]
      %v2821 = vld [vmem:[%s246 + $0x11e] sm:$0xff]
      %v2822 = vld [vmem:[%s246 + $0x126] sm:$0xff]
      %v2823 = vld [vmem:[%s246 + $0x12e] sm:$0xff]
      %v2824 = vld [vmem:[%s246 + $0x136] sm:$0xff]
      %v2825 = vld [vmem:[%s246 + $0x13e] sm:$0xff]
      %v2826 = vpack.c.bf16 %v2791, %v2790
      %v2827 = vpack.c.bf16 %v2793, %v2792
      %v2828 = vpack.c.bf16 %v2795, %v2794
      %v2829 = vpack.c.bf16 %v2797, %v2796
      %v2830 = vpack.c.bf16 %v2799, %v2798
      %v2831 = vpack.c.bf16 %v2801, %v2800
      %v2832 = vpack.c.bf16 %v2803, %v2802
      %v2833 = vpack.c.bf16 %v2805, %v2804
      %v2834 = vpack.c.bf16 %v2807, %v2806
      %v2835 = vpack.c.bf16 %v2809, %v2808
      %v2836 = vpack.c.bf16 %v2811, %v2810
      %v2837 = vpack.c.bf16 %v2813, %v2812
      %v2838 = vpack.c.bf16 %v2815, %v2814
      %v2839 = vpack.c.bf16 %v2817, %v2816
      %v2840 = vpack.c.bf16 %v2819, %v2818
      %v2841 = vpack.c.bf16 %v2821, %v2820
      %v2842 = vpack.c.bf16 %v2823, %v2822
      %v2843 = vpack.c.bf16 %v2825, %v2824
      %s2844 = scalar_lea.vmem %s1, 16
      %v2845 = vld [vmem:[%s2844] sm:$0x3]
      %v2847 = vsel %vm364, %v2826, 0
      %v2850 = vsel %vm364, %v2827, 0
      %v2853 = vsel %vm364, %v2828, 0
      %v2856 = vsel %vm364, %v2829, 0
      %v2859 = vsel %vm364, %v2830, 0
      %v2862 = vsel %vm364, %v2831, 0
      %v2865 = vsel %vm364, %v2832, 0
      %v2868 = vsel %vm364, %v2833, 0
      %v2871 = vsel %vm364, %v2834, 0
      %v2874 = vsel %vm364, %v2835, 0
      %v2877 = vsel %vm364, %v2836, 0
      %v2880 = vsel %vm364, %v2837, 0
      %v2883 = vsel %vm364, %v2838, 0
      %v2886 = vsel %vm364, %v2839, 0
      %v2889 = vsel %vm364, %v2840, 0
      %v2892 = vsel %vm364, %v2841, 0
      %v2895 = vsel %vm364, %v2842, 0
      %v2898 = vsel %vm364, %v2843, 0
      %v2901 = vsel %vm419, %v2845, 0
      %2903 = vmatprep.subr.bf16.mxu0 0
      %2904 = vmatpush1.bf16.msra.mxu0 %v2901
      %2905 = vmatprep.subr.bf16.mxu0 0
      %2906 = vmatpush1.bf16.msra.mxu0 0
      %2907 = vmatprep.subr.bf16.mxu0 0
      %2908 = vmatpush1.bf16.msra.mxu0 0
      %2909 = vmatprep.subr.bf16.mxu0 0
      %2910 = vmatpush1.bf16.msra.mxu0 0
      %2911 = vmatprep.subr.bf16.mxu0 0
      %2912 = vmatpush1.bf16.msra.mxu0 0
      %2913 = vmatprep.subr.bf16.mxu0 0
      %2914 = vmatpush1.bf16.msra.mxu0 0
      %2915 = vmatprep.subr.bf16.mxu0 0
      %2916 = vmatpush1.bf16.msra.mxu0 0
      %2917 = vmatprep.subr.bf16.mxu0 0
      %2918 = vmatpush1.bf16.msra.mxu0 0
      %2919 = vmatprep.subr.bf16.mxu0 0
      %2920 = vmatpush1.bf16.msra.mxu0 0
      %2921 = vmatprep.subr.bf16.mxu0 0
      %2922 = vmatpush1.bf16.msra.mxu0 0
      %2923 = vmatprep.subr.bf16.mxu0 0
      %2924 = vmatpush1.bf16.msra.mxu0 0
      %2925 = vmatprep.subr.bf16.mxu0 0
      %2926 = vmatpush1.bf16.msra.mxu0 0
      %2927 = vmatprep.subr.bf16.mxu0 0
      %2928 = vmatpush1.bf16.msra.mxu0 0
      %2929 = vmatprep.subr.bf16.mxu0 0
      %2930 = vmatpush1.bf16.msra.mxu0 0
      %2931 = vmatprep.subr.bf16.mxu0 0
      %2932 = vmatpush1.bf16.msra.mxu0 0
      %2933 = vmatprep.subr.bf16.mxu0 0
      %2934 = vmatpush1.bf16.msra.mxu0 0
      %2935 = vmatprep.mubr.bf16.mxu0 0
      %2936 = vmatmul.mubr.bf16.gmra.mrb[0].mxu0 %v2847
      %v2937 = vpop.f32.mrb[0].mxu0
      %v2938 = vadd.f32 0.0, %v2937
      %v2939 = vpop.f32.mrb[0].mxu0
      %v2940 = vpop.f32.mrb[0].mxu0
      %v2941 = vadd.f32 0.0, %v2940
      %v2942 = vpop.f32.mrb[0].mxu0
      %2943 = vmatprep.mubr.bf16.mxu0 0
      %2944 = vmatmul.mubr.bf16.gmra.mrb[0].mxu0 %v2850
      %v2945 = vpop.f32.mrb[0].mxu0
      %v2946 = vadd.f32 0.0, %v2945
      %v2947 = vpop.f32.mrb[0].mxu0
      %v2948 = vpop.f32.mrb[0].mxu0
      %v2949 = vadd.f32 0.0, %v2948
      %v2950 = vpop.f32.mrb[0].mxu0
      %2951 = vmatprep.mubr.bf16.mxu0 0
      %2952 = vmatmul.mubr.bf16.gmra.mrb[0].mxu0 %v2853
      %v2953 = vpop.f32.mrb[0].mxu0
      %v2954 = vadd.f32 0.0, %v2953
      %v2955 = vpop.f32.mrb[0].mxu0
      %v2956 = vpop.f32.mrb[0].mxu0
      %v2957 = vadd.f32 0.0, %v2956
      %v2958 = vpop.f32.mrb[0].mxu0
      %2959 = vmatprep.mubr.bf16.mxu0 0
      %2960 = vmatmul.mubr.bf16.gmra.mrb[0].mxu0 %v2856
      %v2961 = vpop.f32.mrb[0].mxu0
      %v2962 = vadd.f32 0.0, %v2961
      %v2963 = vpop.f32.mrb[0].mxu0
      %v2964 = vpop.f32.mrb[0].mxu0
      %v2965 = vadd.f32 0.0, %v2964
      %v2966 = vpop.f32.mrb[0].mxu0
      %2967 = vmatprep.mubr.bf16.mxu0 0
      %2968 = vmatmul.mubr.bf16.gmra.mrb[0].mxu0 %v2859
      %v2969 = vpop.f32.mrb[0].mxu0
      %v2970 = vadd.f32 0.0, %v2969
      %v2971 = vpop.f32.mrb[0].mxu0
      %v2972 = vpop.f32.mrb[0].mxu0
      %v2973 = vadd.f32 0.0, %v2972
      %v2974 = vpop.f32.mrb[0].mxu0
      %2975 = vmatprep.mubr.bf16.mxu0 0
      %2976 = vmatmul.mubr.bf16.gmra.mrb[0].mxu0 %v2862
      %v2977 = vpop.f32.mrb[0].mxu0
      %v2978 = vadd.f32 0.0, %v2977
      %v2979 = vpop.f32.mrb[0].mxu0
      %v2980 = vpop.f32.mrb[0].mxu0
      %v2981 = vadd.f32 0.0, %v2980
      %v2982 = vpop.f32.mrb[0].mxu0
      %2983 = vmatprep.mubr.bf16.mxu0 0
      %2984 = vmatmul.mubr.bf16.gmra.mrb[0].mxu0 %v2865
      %v2985 = vpop.f32.mrb[0].mxu0
      %v2986 = vadd.f32 0.0, %v2985
      %v2987 = vpop.f32.mrb[0].mxu0
      %v2988 = vpop.f32.mrb[0].mxu0
      %v2989 = vadd.f32 0.0, %v2988
      %v2990 = vpop.f32.mrb[0].mxu0
      %2991 = vmatprep.mubr.bf16.mxu0 0
      %2992 = vmatmul.mubr.bf16.gmra.mrb[0].mxu0 %v2868
      %v2993 = vpop.f32.mrb[0].mxu0
      %v2994 = vadd.f32 0.0, %v2993
      %v2995 = vpop.f32.mrb[0].mxu0
      %v2996 = vpop.f32.mrb[0].mxu0
      %v2997 = vadd.f32 0.0, %v2996
      %v2998 = vpop.f32.mrb[0].mxu0
      %2999 = vmatprep.mubr.bf16.mxu0 0
      %3000 = vmatmul.mubr.bf16.gmra.mrb[0].mxu0 %v2871
      %v3001 = vpop.f32.mrb[0].mxu0
      %v3002 = vadd.f32 0.0, %v3001
      %v3003 = vpop.f32.mrb[0].mxu0
      %v3004 = vpop.f32.mrb[0].mxu0
      %v3005 = vadd.f32 0.0, %v3004
      %v3006 = vpop.f32.mrb[0].mxu0
      %3007 = vmatprep.mubr.bf16.mxu0 0
      %3008 = vmatmul.mubr.bf16.gmra.mrb[0].mxu0 %v2874
      %v3009 = vpop.f32.mrb[0].mxu0
      %v3010 = vadd.f32 0.0, %v3009
      %v3011 = vpop.f32.mrb[0].mxu0
      %v3012 = vpop.f32.mrb[0].mxu0
      %v3013 = vadd.f32 0.0, %v3012
      %v3014 = vpop.f32.mrb[0].mxu0
      %3015 = vmatprep.mubr.bf16.mxu0 0
      %3016 = vmatmul.mubr.bf16.gmra.mrb[0].mxu0 %v2877
      %v3017 = vpop.f32.mrb[0].mxu0
      %v3018 = vadd.f32 0.0, %v3017
      %v3019 = vpop.f32.mrb[0].mxu0
      %v3020 = vpop.f32.mrb[0].mxu0
      %v3021 = vadd.f32 0.0, %v3020
      %v3022 = vpop.f32.mrb[0].mxu0
      %3023 = vmatprep.mubr.bf16.mxu0 0
      %3024 = vmatmul.mubr.bf16.gmra.mrb[0].mxu0 %v2880
      %v3025 = vpop.f32.mrb[0].mxu0
      %v3026 = vadd.f32 0.0, %v3025
      %v3027 = vpop.f32.mrb[0].mxu0
      %v3028 = vpop.f32.mrb[0].mxu0
      %v3029 = vadd.f32 0.0, %v3028
      %v3030 = vpop.f32.mrb[0].mxu0
      %3031 = vmatprep.mubr.bf16.mxu0 0
      %3032 = vmatmul.mubr.bf16.gmra.mrb[0].mxu0 %v2883
      %v3033 = vpop.f32.mrb[0].mxu0
      %v3034 = vadd.f32 0.0, %v3033
      %v3035 = vpop.f32.mrb[0].mxu0
      %v3036 = vpop.f32.mrb[0].mxu0
      %v3037 = vadd.f32 0.0, %v3036
      %v3038 = vpop.f32.mrb[0].mxu0
      %3039 = vmatprep.mubr.bf16.mxu0 0
      %3040 = vmatmul.mubr.bf16.gmra.mrb[0].mxu0 %v2886
      %v3041 = vpop.f32.mrb[0].mxu0
      %v3042 = vadd.f32 0.0, %v3041
      %v3043 = vpop.f32.mrb[0].mxu0
      %v3044 = vpop.f32.mrb[0].mxu0
      %v3045 = vadd.f32 0.0, %v3044
      %v3046 = vpop.f32.mrb[0].mxu0
      %3047 = vmatprep.mubr.bf16.mxu0 0
      %3048 = vmatmul.mubr.bf16.gmra.mrb[0].mxu0 %v2889
      %v3049 = vpop.f32.mrb[0].mxu0
      %v3050 = vadd.f32 0.0, %v3049
      %v3051 = vpop.f32.mrb[0].mxu0
      %v3052 = vpop.f32.mrb[0].mxu0
      %v3053 = vadd.f32 0.0, %v3052
      %v3054 = vpop.f32.mrb[0].mxu0
      %3055 = vmatprep.mubr.bf16.mxu0 0
      %3056 = vmatmul.mubr.bf16.gmra.mrb[0].mxu0 %v2892
      %v3057 = vpop.f32.mrb[0].mxu0
      %v3058 = vadd.f32 0.0, %v3057
      %v3059 = vpop.f32.mrb[0].mxu0
      %v3060 = vpop.f32.mrb[0].mxu0
      %v3061 = vadd.f32 0.0, %v3060
      %v3062 = vpop.f32.mrb[0].mxu0
      %3063 = vmatprep.mubr.bf16.mxu0 0
      %3064 = vmatmul.mubr.bf16.gmra.mrb[0].mxu0 %v2895
      %v3065 = vpop.f32.mrb[0].mxu0
      %v3066 = vadd.f32 0.0, %v3065
      %v3067 = vpop.f32.mrb[0].mxu0
      %v3068 = vpop.f32.mrb[0].mxu0
      %v3069 = vadd.f32 0.0, %v3068
      %v3070 = vpop.f32.mrb[0].mxu0
      %3071 = vmatprep.mubr.bf16.mxu0 0
      %3072 = vmatmul.mubr.bf16.gmra.mrb[0].mxu0 %v2898
      %v3073 = vpop.f32.mrb[0].mxu0
      %v3074 = vadd.f32 0.0, %v3073
      %v3075 = vpop.f32.mrb[0].mxu0
      %v3076 = vpop.f32.mrb[0].mxu0
      %v3077 = vadd.f32 0.0, %v3076
      %v3078 = vpop.f32.mrb[0].mxu0
      %3079 = vdwg.mxu0
      %v3080 = vadd.f32 %v2754, %v2938
      %v3081 = vadd.f32 %v2755, %v2941
      %v3082 = vadd.f32 %v2756, %v2946
      %v3083 = vadd.f32 %v2757, %v2949
      %v3084 = vadd.f32 %v2758, %v2954
      %v3085 = vadd.f32 %v2759, %v2957
      %v3086 = vadd.f32 %v2760, %v2962
      %v3087 = vadd.f32 %v2761, %v2965
      %v3088 = vadd.f32 %v2762, %v2970
      %v3089 = vadd.f32 %v2763, %v2973
      %v3090 = vadd.f32 %v2764, %v2978
      %v3091 = vadd.f32 %v2765, %v2981
      %v3092 = vadd.f32 %v2766, %v2986
      %v3093 = vadd.f32 %v2767, %v2989
      %v3094 = vadd.f32 %v2768, %v2994
      %v3095 = vadd.f32 %v2769, %v2997
      %v3096 = vadd.f32 %v2770, %v3002
      %v3097 = vadd.f32 %v2771, %v3005
      %v3098 = vadd.f32 %v2772, %v3010
      %v3099 = vadd.f32 %v2773, %v3013
      %v3100 = vadd.f32 %v2774, %v3018
      %v3101 = vadd.f32 %v2775, %v3021
      %v3102 = vadd.f32 %v2776, %v3026
      %v3103 = vadd.f32 %v2777, %v3029
      %v3104 = vadd.f32 %v2778, %v3034
      %v3105 = vadd.f32 %v2779, %v3037
      %v3106 = vadd.f32 %v2780, %v3042
      %v3107 = vadd.f32 %v2781, %v3045
      %v3108 = vadd.f32 %v2782, %v3050
      %v3109 = vadd.f32 %v2783, %v3053
      %v3110 = vadd.f32 %v2784, %v3058
      %v3111 = vadd.f32 %v2785, %v3061
      %v3112 = vadd.f32 %v2786, %v3066
      %v3113 = vadd.f32 %v2787, %v3069
      %v3114 = vadd.f32 %v2788, %v3074
      %v3115 = vadd.f32 %v2789, %v3077
      %v3116 = vld [vmem:[%s3] sm:$0x1]
      %v3118 = vlaneseq
      %v3119 = vshrl.u32 %v3118, 7
      %v3120 = vsub.s32 0, %v3119
      %v3121 = vrot.slane %v3116, %v3120
      %v3123 = vadd.f32 %v3080, %v3121
      %v3124 = vadd.f32 %v3081, %v3121
      %v3125 = vadd.f32 %v3082, %v3121
      %v3126 = vadd.f32 %v3083, %v3121
      %v3127 = vadd.f32 %v3084, %v3121
      %v3128 = vadd.f32 %v3085, %v3121
      %v3129 = vadd.f32 %v3086, %v3121
      %v3130 = vadd.f32 %v3087, %v3121
      %v3131 = vadd.f32 %v3088, %v3121
      %v3132 = vadd.f32 %v3089, %v3121
      %v3133 = vadd.f32 %v3090, %v3121
      %v3134 = vadd.f32 %v3091, %v3121
      %v3135 = vadd.f32 %v3092, %v3121
      %v3136 = vadd.f32 %v3093, %v3121
      %v3137 = vadd.f32 %v3094, %v3121
      %v3138 = vadd.f32 %v3095, %v3121
      %v3139 = vadd.f32 %v3096, %v3121
      %v3140 = vadd.f32 %v3097, %v3121
      %v3141 = vadd.f32 %v3098, %v3121
      %v3142 = vadd.f32 %v3099, %v3121
      %v3143 = vadd.f32 %v3100, %v3121
      %v3144 = vadd.f32 %v3101, %v3121
      %v3145 = vadd.f32 %v3102, %v3121
      %v3146 = vadd.f32 %v3103, %v3121
      %v3147 = vadd.f32 %v3104, %v3121
      %v3148 = vadd.f32 %v3105, %v3121
      %v3149 = vadd.f32 %v3106, %v3121
      %v3150 = vadd.f32 %v3107, %v3121
      %v3151 = vadd.f32 %v3108, %v3121
      %v3152 = vadd.f32 %v3109, %v3121
      %v3153 = vadd.f32 %v3110, %v3121
      %v3154 = vadd.f32 %v3111, %v3121
      %v3155 = vadd.f32 %v3112, %v3121
      %v3156 = vadd.f32 %v3113, %v3121
      %v3157 = vadd.f32 %v3114, %v3121
      %v3158 = vadd.f32 %v3115, %v3121
      %v3159 = vmax.f32 %v3123, 0.0
      %v3160 = vmax.f32 %v3124, 0.0
      %v3161 = vmax.f32 %v3125, 0.0
      %v3162 = vmax.f32 %v3126, 0.0
      %v3163 = vmax.f32 %v3127, 0.0
      %v3164 = vmax.f32 %v3128, 0.0
      %v3165 = vmax.f32 %v3129, 0.0
      %v3166 = vmax.f32 %v3130, 0.0
      %v3167 = vmax.f32 %v3131, 0.0
      %v3168 = vmax.f32 %v3132, 0.0
      %v3169 = vmax.f32 %v3133, 0.0
      %v3170 = vmax.f32 %v3134, 0.0
      %v3171 = vmax.f32 %v3135, 0.0
      %v3172 = vmax.f32 %v3136, 0.0
      %v3173 = vmax.f32 %v3137, 0.0
      %v3174 = vmax.f32 %v3138, 0.0
      %v3175 = vmax.f32 %v3139, 0.0
      %v3176 = vmax.f32 %v3140, 0.0
      %v3177 = vmax.f32 %v3141, 0.0
      %v3178 = vmax.f32 %v3142, 0.0
      %v3179 = vmax.f32 %v3143, 0.0
      %v3180 = vmax.f32 %v3144, 0.0
      %v3181 = vmax.f32 %v3145, 0.0
      %v3182 = vmax.f32 %v3146, 0.0
      %v3183 = vmax.f32 %v3147, 0.0
      %v3184 = vmax.f32 %v3148, 0.0
      %v3185 = vmax.f32 %v3149, 0.0
      %v3186 = vmax.f32 %v3150, 0.0
      %v3187 = vmax.f32 %v3151, 0.0
      %v3188 = vmax.f32 %v3152, 0.0
      %v3189 = vmax.f32 %v3153, 0.0
      %v3190 = vmax.f32 %v3154, 0.0
      %v3191 = vmax.f32 %v3155, 0.0
      %v3192 = vmax.f32 %v3156, 0.0
      %v3193 = vmax.f32 %v3157, 0.0
      %v3194 = vmax.f32 %v3158, 0.0
      %v3195 = vld [vmem:[%s5] sm:$0xff]
      %v3196 = vld [vmem:[%s5 + $0x8] sm:$0xff]
      %v3197 = vld [vmem:[%s5 + $0x10] sm:$0xff]
      %v3198 = vld [vmem:[%s5 + $0x18] sm:$0xff]
      %v3199 = vld [vmem:[%s5 + $0x20] sm:$0xff]
      %v3200 = vld [vmem:[%s5 + $0x28] sm:$0xff]
      %v3201 = vld [vmem:[%s5 + $0x30] sm:$0xff]
      %v3202 = vld [vmem:[%s5 + $0x38] sm:$0xff]
      %v3203 = vld [vmem:[%s5 + $0x40] sm:$0xff]
      %v3204 = vld [vmem:[%s5 + $0x48] sm:$0xff]
      %v3205 = vld [vmem:[%s5 + $0x50] sm:$0xff]
      %v3206 = vld [vmem:[%s5 + $0x58] sm:$0xff]
      %v3207 = vld [vmem:[%s5 + $0x60] sm:$0xff]
      %v3208 = vld [vmem:[%s5 + $0x68] sm:$0xff]
      %v3209 = vld [vmem:[%s5 + $0x70] sm:$0xff]
      %v3210 = vld [vmem:[%s5 + $0x78] sm:$0xff]
      %v3211 = vld [vmem:[%s5 + $0x80] sm:$0xff]
      %v3212 = vld [vmem:[%s5 + $0x88] sm:$0xff]
      %v3213 = vld [vmem:[%s5 + $0x90] sm:$0xff]
      %v3214 = vld [vmem:[%s5 + $0x98] sm:$0xff]
      %v3215 = vld [vmem:[%s5 + $0xa0] sm:$0xff]
      %v3216 = vld [vmem:[%s5 + $0xa8] sm:$0xff]
      %v3217 = vld [vmem:[%s5 + $0xb0] sm:$0xff]
      %v3218 = vld [vmem:[%s5 + $0xb8] sm:$0xff]
      %v3219 = vld [vmem:[%s5 + $0xc0] sm:$0xff]
      %v3220 = vld [vmem:[%s5 + $0xc8] sm:$0xff]
      %v3221 = vld [vmem:[%s5 + $0xd0] sm:$0xff]
      %v3222 = vld [vmem:[%s5 + $0xd8] sm:$0xff]
      %v3223 = vld [vmem:[%s5 + $0xe0] sm:$0xff]
      %v3224 = vld [vmem:[%s5 + $0xe8] sm:$0xff]
      %v3225 = vld [vmem:[%s5 + $0xf0] sm:$0xff]
      %v3226 = vld [vmem:[%s5 + $0xf8] sm:$0xff]
      %v3227 = vld [vmem:[%s5 + $0x100] sm:$0xff]
      %v3228 = vld [vmem:[%s5 + $0x108] sm:$0xff]
      %v3229 = vld [vmem:[%s5 + $0x110] sm:$0xff]
      %v3230 = vld [vmem:[%s5 + $0x118] sm:$0xff]
      %3232 = vset.pattern.permute.xlu0 0
      %3233 = vperm.xlu0 %3232, %v3195
      %v3234 = vpop.permute.xlu0 %3233
      %3237 = vset.pattern.permute.xlu0 0
      %3238 = vperm.xlu0 %3237, %v3196
      %v3239 = vpop.permute.xlu0 %3238
      %3242 = vset.pattern.permute.xlu0 0
      %3243 = vperm.xlu0 %3242, %v3197
      %v3244 = vpop.permute.xlu0 %3243
      %3247 = vset.pattern.permute.xlu0 0
      %3248 = vperm.xlu0 %3247, %v3198
      %v3249 = vpop.permute.xlu0 %3248
      %3252 = vset.pattern.permute.xlu0 0
      %3253 = vperm.xlu0 %3252, %v3199
      %v3254 = vpop.permute.xlu0 %3253
      %3257 = vset.pattern.permute.xlu0 0
      %3258 = vperm.xlu0 %3257, %v3200
      %v3259 = vpop.permute.xlu0 %3258
      %3262 = vset.pattern.permute.xlu0 0
      %3263 = vperm.xlu0 %3262, %v3201
      %v3264 = vpop.permute.xlu0 %3263
      %3267 = vset.pattern.permute.xlu0 0
      %3268 = vperm.xlu0 %3267, %v3202
      %v3269 = vpop.permute.xlu0 %3268
      %3272 = vset.pattern.permute.xlu0 0
      %3273 = vperm.xlu0 %3272, %v3203
      %v3274 = vpop.permute.xlu0 %3273
      %3277 = vset.pattern.permute.xlu0 0
      %3278 = vperm.xlu0 %3277, %v3204
      %v3279 = vpop.permute.xlu0 %3278
      %3282 = vset.pattern.permute.xlu0 0
      %3283 = vperm.xlu0 %3282, %v3205
      %v3284 = vpop.permute.xlu0 %3283
      %3287 = vset.pattern.permute.xlu0 0
      %3288 = vperm.xlu0 %3287, %v3206
      %v3289 = vpop.permute.xlu0 %3288
      %3292 = vset.pattern.permute.xlu0 0
      %3293 = vperm.xlu0 %3292, %v3207
      %v3294 = vpop.permute.xlu0 %3293
      %3297 = vset.pattern.permute.xlu0 0
      %3298 = vperm.xlu0 %3297, %v3208
      %v3299 = vpop.permute.xlu0 %3298
      %3302 = vset.pattern.permute.xlu0 0
      %3303 = vperm.xlu0 %3302, %v3209
      %v3304 = vpop.permute.xlu0 %3303
      %3307 = vset.pattern.permute.xlu0 0
      %3308 = vperm.xlu0 %3307, %v3210
      %v3309 = vpop.permute.xlu0 %3308
      %3312 = vset.pattern.permute.xlu0 0
      %3313 = vperm.xlu0 %3312, %v3211
      %v3314 = vpop.permute.xlu0 %3313
      %3317 = vset.pattern.permute.xlu0 0
      %3318 = vperm.xlu0 %3317, %v3212
      %v3319 = vpop.permute.xlu0 %3318
      %3322 = vset.pattern.permute.xlu0 0
      %3323 = vperm.xlu0 %3322, %v3213
      %v3324 = vpop.permute.xlu0 %3323
      %3327 = vset.pattern.permute.xlu0 0
      %3328 = vperm.xlu0 %3327, %v3214
      %v3329 = vpop.permute.xlu0 %3328
      %3332 = vset.pattern.permute.xlu0 0
      %3333 = vperm.xlu0 %3332, %v3215
      %v3334 = vpop.permute.xlu0 %3333
      %3337 = vset.pattern.permute.xlu0 0
      %3338 = vperm.xlu0 %3337, %v3216
      %v3339 = vpop.permute.xlu0 %3338
      %3342 = vset.pattern.permute.xlu0 0
      %3343 = vperm.xlu0 %3342, %v3217
      %v3344 = vpop.permute.xlu0 %3343
      %3347 = vset.pattern.permute.xlu0 0
      %3348 = vperm.xlu0 %3347, %v3218
      %v3349 = vpop.permute.xlu0 %3348
      %3352 = vset.pattern.permute.xlu0 0
      %3353 = vperm.xlu0 %3352, %v3219
      %v3354 = vpop.permute.xlu0 %3353
      %3357 = vset.pattern.permute.xlu0 0
      %3358 = vperm.xlu0 %3357, %v3220
      %v3359 = vpop.permute.xlu0 %3358
      %3362 = vset.pattern.permute.xlu0 0
      %3363 = vperm.xlu0 %3362, %v3221
      %v3364 = vpop.permute.xlu0 %3363
      %3367 = vset.pattern.permute.xlu0 0
      %3368 = vperm.xlu0 %3367, %v3222
      %v3369 = vpop.permute.xlu0 %3368
      %3372 = vset.pattern.permute.xlu0 0
      %3373 = vperm.xlu0 %3372, %v3223
      %v3374 = vpop.permute.xlu0 %3373
      %3377 = vset.pattern.permute.xlu0 0
      %3378 = vperm.xlu0 %3377, %v3224
      %v3379 = vpop.permute.xlu0 %3378
      %3382 = vset.pattern.permute.xlu0 0
      %3383 = vperm.xlu0 %3382, %v3225
      %v3384 = vpop.permute.xlu0 %3383
      %3387 = vset.pattern.permute.xlu0 0
      %3388 = vperm.xlu0 %3387, %v3226
      %v3389 = vpop.permute.xlu0 %3388
      %3392 = vset.pattern.permute.xlu0 0
      %3393 = vperm.xlu0 %3392, %v3227
      %v3394 = vpop.permute.xlu0 %3393
      %3397 = vset.pattern.permute.xlu0 0
      %3398 = vperm.xlu0 %3397, %v3228
      %v3399 = vpop.permute.xlu0 %3398
      %3402 = vset.pattern.permute.xlu0 0
      %3403 = vperm.xlu0 %3402, %v3229
      %v3404 = vpop.permute.xlu0 %3403
      %3407 = vset.pattern.permute.xlu0 0
      %3408 = vperm.xlu0 %3407, %v3230
      %v3409 = vpop.permute.xlu0 %3408
      %v3411 = vmul.f32 %v3159, %v3234
      %v3412 = vmul.f32 %v3160, %v3239
      %v3413 = vmul.f32 %v3161, %v3244
      %v3414 = vmul.f32 %v3162, %v3249
      %v3415 = vmul.f32 %v3163, %v3254
      %v3416 = vmul.f32 %v3164, %v3259
      %v3417 = vmul.f32 %v3165, %v3264
      %v3418 = vmul.f32 %v3166, %v3269
      %v3419 = vmul.f32 %v3167, %v3274
      %v3420 = vmul.f32 %v3168, %v3279
      %v3421 = vmul.f32 %v3169, %v3284
      %v3422 = vmul.f32 %v3170, %v3289
      %v3423 = vmul.f32 %v3171, %v3294
      %v3424 = vmul.f32 %v3172, %v3299
      %v3425 = vmul.f32 %v3173, %v3304
      %v3426 = vmul.f32 %v3174, %v3309
      %v3427 = vmul.f32 %v3175, %v3314
      %v3428 = vmul.f32 %v3176, %v3319
      %v3429 = vmul.f32 %v3177, %v3324
      %v3430 = vmul.f32 %v3178, %v3329
      %v3431 = vmul.f32 %v3179, %v3334
      %v3432 = vmul.f32 %v3180, %v3339
      %v3433 = vmul.f32 %v3181, %v3344
      %v3434 = vmul.f32 %v3182, %v3349
      %v3435 = vmul.f32 %v3183, %v3354
      %v3436 = vmul.f32 %v3184, %v3359
      %v3437 = vmul.f32 %v3185, %v3364
      %v3438 = vmul.f32 %v3186, %v3369
      %v3439 = vmul.f32 %v3187, %v3374
      %v3440 = vmul.f32 %v3188, %v3379
      %v3441 = vmul.f32 %v3189, %v3384
      %v3442 = vmul.f32 %v3190, %v3389
      %v3443 = vmul.f32 %v3191, %v3394
      %v3444 = vmul.f32 %v3192, %v3399
      %v3445 = vmul.f32 %v3193, %v3404
      %v3446 = vmul.f32 %v3194, %v3409
      %3447 = vst [vmem:[#allocation2] sm:$0xff] 0.0
      %3448 = vst [vmem:[#allocation2 + $0x8] sm:$0xff] 0.0
      %3449 = vst [vmem:[#allocation2 + $0x10] sm:$0xff] 0.0
      %3450 = vst [vmem:[#allocation2 + $0x18] sm:$0xff] 0.0
      %3451 = vst [vmem:[#allocation2 + $0x20] sm:$0xff] 0.0
      %3452 = vst [vmem:[#allocation2 + $0x28] sm:$0xff] 0.0
      %3453 = vst [vmem:[#allocation2 + $0x30] sm:$0xff] 0.0
      %3454 = vst [vmem:[#allocation2 + $0x38] sm:$0xff] 0.0
      %3455 = vst [vmem:[#allocation2 + $0x40] sm:$0xff] 0.0
      %3456 = vst [vmem:[#allocation2 + $0x48] sm:$0xff] 0.0
      %3457 = vst [vmem:[#allocation2 + $0x50] sm:$0xff] 0.0
      %3458 = vst [vmem:[#allocation2 + $0x58] sm:$0xff] 0.0
      %3459 = vst [vmem:[#allocation2 + $0x60] sm:$0xff] 0.0
      %3460 = vst [vmem:[#allocation2 + $0x68] sm:$0xff] 0.0
      %3461 = vst [vmem:[#allocation2 + $0x70] sm:$0xff] 0.0
      %3462 = vst [vmem:[#allocation2 + $0x78] sm:$0xff] 0.0
      %3463 = vst [vmem:[#allocation2 + $0x80] sm:$0xff] 0.0
      %3464 = vst [vmem:[#allocation2 + $0x88] sm:$0xff] 0.0
      %3465 = vst [vmem:[#allocation2 + $0x90] sm:$0xff] 0.0
      %3466 = vst [vmem:[#allocation2 + $0x98] sm:$0xff] 0.0
      %3467 = vst [vmem:[#allocation2 + $0xa0] sm:$0xff] 0.0
      %3468 = vst [vmem:[#allocation2 + $0xa8] sm:$0xff] 0.0
      %3469 = vst [vmem:[#allocation2 + $0xb0] sm:$0xff] 0.0
      %3470 = vst [vmem:[#allocation2 + $0xb8] sm:$0xff] 0.0
      %3471 = vst [vmem:[#allocation2 + $0xc0] sm:$0xff] 0.0
      %3472 = vst [vmem:[#allocation2 + $0xc8] sm:$0xff] 0.0
      %3473 = vst [vmem:[#allocation2 + $0xd0] sm:$0xff] 0.0
      %3474 = vst [vmem:[#allocation2 + $0xd8] sm:$0xff] 0.0
      %3475 = vst [vmem:[#allocation2 + $0xe0] sm:$0xff] 0.0
      %3476 = vst [vmem:[#allocation2 + $0xe8] sm:$0xff] 0.0
      %3477 = vst [vmem:[#allocation2 + $0xf0] sm:$0xff] 0.0
      %3478 = vst [vmem:[#allocation2 + $0xf8] sm:$0xff] 0.0
      %3479 = vst [vmem:[#allocation2 + $0x100] sm:$0xff] 0.0
      %3480 = vst [vmem:[#allocation2 + $0x108] sm:$0xff] 0.0
      %3481 = vst [vmem:[#allocation2 + $0x110] sm:$0xff] 0.0
      %3482 = vst [vmem:[#allocation2 + $0x118] sm:$0xff] 0.0
      %3483 = vst [vmem:[#allocation2 + $0x120] sm:$0xff] 0.0
      %3484 = vst [vmem:[#allocation2 + $0x128] sm:$0xff] 0.0
      %3485 = vst [vmem:[#allocation2 + $0x130] sm:$0xff] 0.0
      %3486 = vst [vmem:[#allocation2 + $0x138] sm:$0xff] 0.0
      %3487 = vst [vmem:[#allocation2 + $0x140] sm:$0xff] 0.0
      %3488 = vst [vmem:[#allocation2 + $0x148] sm:$0xff] 0.0
      %3489 = vst [vmem:[#allocation2 + $0x150] sm:$0x3f] 0.0
      %3490 = vst [vmem:[#allocation2 + $0x13] sm:$0xff] %v3411
      %3491 = vst [vmem:[#allocation2 + $0x1b] sm:$0xff] %v3412
      %3492 = vst [vmem:[#allocation2 + $0x23] sm:$0xff] %v3413
      %3493 = vst [vmem:[#allocation2 + $0x2b] sm:$0xff] %v3414
      %3494 = vst [vmem:[#allocation2 + $0x33] sm:$0xff] %v3415
      %3495 = vst [vmem:[#allocation2 + $0x3b] sm:$0xff] %v3416
      %3496 = vst [vmem:[#allocation2 + $0x43] sm:$0xff] %v3417
      %3497 = vst [vmem:[#allocation2 + $0x4b] sm:$0xff] %v3418
      %3498 = vst [vmem:[#allocation2 + $0x53] sm:$0xff] %v3419
      %3499 = vst [vmem:[#allocation2 + $0x5b] sm:$0xff] %v3420
      %3500 = vst [vmem:[#allocation2 + $0x63] sm:$0xff] %v3421
      %3501 = vst [vmem:[#allocation2 + $0x6b] sm:$0xff] %v3422
      %3502 = vst [vmem:[#allocation2 + $0x73] sm:$0xff] %v3423
      %3503 = vst [vmem:[#allocation2 + $0x7b] sm:$0xff] %v3424
      %3504 = vst [vmem:[#allocation2 + $0x83] sm:$0xff] %v3425
      %3505 = vst [vmem:[#allocation2 + $0x8b] sm:$0xff] %v3426
      %3506 = vst [vmem:[#allocation2 + $0x93] sm:$0xff] %v3427
      %3507 = vst [vmem:[#allocation2 + $0x9b] sm:$0xff] %v3428
      %3508 = vst [vmem:[#allocation2 + $0xa3] sm:$0xff] %v3429
      %3509 = vst [vmem:[#allocation2 + $0xab] sm:$0xff] %v3430
      %3510 = vst [vmem:[#allocation2 + $0xb3] sm:$0xff] %v3431
      %3511 = vst [vmem:[#allocation2 + $0xbb] sm:$0xff] %v3432
      %3512 = vst [vmem:[#allocation2 + $0xc3] sm:$0xff] %v3433
      %3513 = vst [vmem:[#allocation2 + $0xcb] sm:$0xff] %v3434
      %3514 = vst [vmem:[#allocation2 + $0xd3] sm:$0xff] %v3435
      %3515 = vst [vmem:[#allocation2 + $0xdb] sm:$0xff] %v3436
      %3516 = vst [vmem:[#allocation2 + $0xe3] sm:$0xff] %v3437
      %3517 = vst [vmem:[#allocation2 + $0xeb] sm:$0xff] %v3438
      %3518 = vst [vmem:[#allocation2 + $0xf3] sm:$0xff] %v3439
      %3519 = vst [vmem:[#allocation2 + $0xfb] sm:$0xff] %v3440
      %3520 = vst [vmem:[#allocation2 + $0x103] sm:$0xff] %v3441
      %3521 = vst [vmem:[#allocation2 + $0x10b] sm:$0xff] %v3442
      %3522 = vst [vmem:[#allocation2 + $0x113] sm:$0xff] %v3443
      %3523 = vst [vmem:[#allocation2 + $0x11b] sm:$0xff] %v3444
      %3524 = vst [vmem:[#allocation2 + $0x123] sm:$0xff] %v3445
      %3525 = vst [vmem:[#allocation2 + $0x12b] sm:$0xff] %v3446
      %v3526 = vld [vmem:[#allocation2] sm:$0xff]
      %v3527 = vld [vmem:[#allocation2 + $0x8] sm:$0xff]
      %v3528 = vld [vmem:[#allocation2 + $0x10] sm:$0xff]
      %v3529 = vld [vmem:[#allocation2 + $0x18] sm:$0xff]
      %v3530 = vld [vmem:[#allocation2 + $0x20] sm:$0xff]
      %v3531 = vld [vmem:[#allocation2 + $0x28] sm:$0xff]
      %v3532 = vld [vmem:[#allocation2 + $0x30] sm:$0xff]
      %v3533 = vld [vmem:[#allocation2 + $0x38] sm:$0xff]
      %v3534 = vld [vmem:[#allocation2 + $0x40] sm:$0xff]
      %v3535 = vld [vmem:[#allocation2 + $0x48] sm:$0xff]
      %v3536 = vld [vmem:[#allocation2 + $0x50] sm:$0xff]
      %v3537 = vld [vmem:[#allocation2 + $0x58] sm:$0xff]
      %v3538 = vld [vmem:[#allocation2 + $0x60] sm:$0xff]
      %v3539 = vld [vmem:[#allocation2 + $0x68] sm:$0xff]
      %v3540 = vld [vmem:[#allocation2 + $0x70] sm:$0xff]
      %v3541 = vld [vmem:[#allocation2 + $0x78] sm:$0xff]
      %v3542 = vld [vmem:[#allocation2 + $0x80] sm:$0xff]
      %v3543 = vld [vmem:[#allocation2 + $0x88] sm:$0xff]
      %v3544 = vld [vmem:[#allocation2 + $0x90] sm:$0xff]
      %v3545 = vld [vmem:[#allocation2 + $0x98] sm:$0xff]
      %v3546 = vld [vmem:[#allocation2 + $0xa0] sm:$0xff]
      %v3547 = vld [vmem:[#allocation2 + $0xa8] sm:$0xff]
      %v3548 = vld [vmem:[#allocation2 + $0xb0] sm:$0xff]
      %v3549 = vld [vmem:[#allocation2 + $0xb8] sm:$0xff]
      %v3550 = vld [vmem:[#allocation2 + $0xc0] sm:$0xff]
      %v3551 = vld [vmem:[#allocation2 + $0xc8] sm:$0xff]
      %v3552 = vld [vmem:[#allocation2 + $0xd0] sm:$0xff]
      %v3553 = vld [vmem:[#allocation2 + $0xd8] sm:$0xff]
      %v3554 = vld [vmem:[#allocation2 + $0xe0] sm:$0xff]
      %v3555 = vld [vmem:[#allocation2 + $0xe8] sm:$0xff]
      %v3556 = vld [vmem:[#allocation2 + $0xf0] sm:$0xff]
      %v3557 = vld [vmem:[#allocation2 + $0xf8] sm:$0xff]
      %v3558 = vld [vmem:[#allocation2 + $0x100] sm:$0xff]
      %v3559 = vld [vmem:[#allocation2 + $0x108] sm:$0xff]
      %v3560 = vld [vmem:[#allocation2 + $0x110] sm:$0xff]
      %v3561 = vld [vmem:[#allocation2 + $0x118] sm:$0xff]
      %v3562 = vpack.c.bf16 %v3527, %v3526
      %v3563 = vpack.c.bf16 %v3529, %v3528
      %v3564 = vpack.c.bf16 %v3531, %v3530
      %v3565 = vpack.c.bf16 %v3533, %v3532
      %v3566 = vpack.c.bf16 %v3535, %v3534
      %v3567 = vpack.c.bf16 %v3537, %v3536
      %v3568 = vpack.c.bf16 %v3539, %v3538
      %v3569 = vpack.c.bf16 %v3541, %v3540
      %v3570 = vpack.c.bf16 %v3543, %v3542
      %v3571 = vpack.c.bf16 %v3545, %v3544
      %v3572 = vpack.c.bf16 %v3547, %v3546
      %v3573 = vpack.c.bf16 %v3549, %v3548
      %v3574 = vpack.c.bf16 %v3551, %v3550
      %v3575 = vpack.c.bf16 %v3553, %v3552
      %v3576 = vpack.c.bf16 %v3555, %v3554
      %v3577 = vpack.c.bf16 %v3557, %v3556
      %v3578 = vpack.c.bf16 %v3559, %v3558
      %v3579 = vpack.c.bf16 %v3561, %v3560
      %v3580 = vld [vmem:[%s2] sm:$0xf]
      %v3581 = vld [vmem:[%s2 + $0x4] sm:$0xf]
      %v3582 = vld [vmem:[%s2 + $0x8] sm:$0xf]
      %v3583 = vld [vmem:[%s2 + $0xc] sm:$0xf]
      %v3584 = vld [vmem:[%s2 + $0x10] sm:$0xf]
      %v3585 = vld [vmem:[%s2 + $0x14] sm:$0xf]
      %v3586 = vld [vmem:[%s2 + $0x18] sm:$0xf]
      %v3587 = vld [vmem:[%s2 + $0x1c] sm:$0xf]
      %v3588 = vld [vmem:[%s2 + $0x20] sm:$0xf]
      %v3589 = vld [vmem:[%s2 + $0x24] sm:$0xf]
      %v3590 = vld [vmem:[%s2 + $0x28] sm:$0xf]
      %v3591 = vld [vmem:[%s2 + $0x2c] sm:$0xf]
      %v3592 = vld [vmem:[%s2 + $0x30] sm:$0xf]
      %v3593 = vld [vmem:[%s2 + $0x34] sm:$0xf]
      %v3594 = vld [vmem:[%s2 + $0x38] sm:$0xf]
      %v3595 = vld [vmem:[%s2 + $0x3c] sm:$0xf]
      %v3596 = vld [vmem:[#allocation2 + $0x1] sm:$0xff]
      %v3597 = vld [vmem:[#allocation2 + $0x9] sm:$0xff]
      %v3598 = vld [vmem:[#allocation2 + $0x11] sm:$0xff]
      %v3599 = vld [vmem:[#allocation2 + $0x19] sm:$0xff]
      %v3600 = vld [vmem:[#allocation2 + $0x21] sm:$0xff]
      %v3601 = vld [vmem:[#allocation2 + $0x29] sm:$0xff]
      %v3602 = vld [vmem:[#allocation2 + $0x31] sm:$0xff]
      %v3603 = vld [vmem:[#allocation2 + $0x39] sm:$0xff]
      %v3604 = vld [vmem:[#allocation2 + $0x41] sm:$0xff]
      %v3605 = vld [vmem:[#allocation2 + $0x49] sm:$0xff]
      %v3606 = vld [vmem:[#allocation2 + $0x51] sm:$0xff]
      %v3607 = vld [vmem:[#allocation2 + $0x59] sm:$0xff]
      %v3608 = vld [vmem:[#allocation2 + $0x61] sm:$0xff]
      %v3609 = vld [vmem:[#allocation2 + $0x69] sm:$0xff]
      %v3610 = vld [vmem:[#allocation2 + $0x71] sm:$0xff]
      %v3611 = vld [vmem:[#allocation2 + $0x79] sm:$0xff]
      %v3612 = vld [vmem:[#allocation2 + $0x81] sm:$0xff]
      %v3613 = vld [vmem:[#allocation2 + $0x89] sm:$0xff]
      %v3614 = vld [vmem:[#allocation2 + $0x91] sm:$0xff]
      %v3615 = vld [vmem:[#allocation2 + $0x99] sm:$0xff]
      %v3616 = vld [vmem:[#allocation2 + $0xa1] sm:$0xff]
      %v3617 = vld [vmem:[#allocation2 + $0xa9] sm:$0xff]
      %v3618 = vld [vmem:[#allocation2 + $0xb1] sm:$0xff]
      %v3619 = vld [vmem:[#allocation2 + $0xb9] sm:$0xff]
      %v3620 = vld [vmem:[#allocation2 + $0xc1] sm:$0xff]
      %v3621 = vld [vmem:[#allocation2 + $0xc9] sm:$0xff]
      %v3622 = vld [vmem:[#allocation2 + $0xd1] sm:$0xff]
      %v3623 = vld [vmem:[#allocation2 + $0xd9] sm:$0xff]
      %v3624 = vld [vmem:[#allocation2 + $0xe1] sm:$0xff]
      %v3625 = vld [vmem:[#allocation2 + $0xe9] sm:$0xff]
      %v3626 = vld [vmem:[#allocation2 + $0xf1] sm:$0xff]
      %v3627 = vld [vmem:[#allocation2 + $0xf9] sm:$0xff]
      %v3628 = vld [vmem:[#allocation2 + $0x101] sm:$0xff]
      %v3629 = vld [vmem:[#allocation2 + $0x109] sm:$0xff]
      %v3630 = vld [vmem:[#allocation2 + $0x111] sm:$0xff]
      %v3631 = vld [vmem:[#allocation2 + $0x119] sm:$0xff]
      %v3632 = vpack.c.bf16 %v3597, %v3596
      %v3633 = vpack.c.bf16 %v3599, %v3598
      %v3634 = vpack.c.bf16 %v3601, %v3600
      %v3635 = vpack.c.bf16 %v3603, %v3602
      %v3636 = vpack.c.bf16 %v3605, %v3604
      %v3637 = vpack.c.bf16 %v3607, %v3606
      %v3638 = vpack.c.bf16 %v3609, %v3608
      %v3639 = vpack.c.bf16 %v3611, %v3610
      %v3640 = vpack.c.bf16 %v3613, %v3612
      %v3641 = vpack.c.bf16 %v3615, %v3614
      %v3642 = vpack.c.bf16 %v3617, %v3616
      %v3643 = vpack.c.bf16 %v3619, %v3618
      %v3644 = vpack.c.bf16 %v3621, %v3620
      %v3645 = vpack.c.bf16 %v3623, %v3622
      %v3646 = vpack.c.bf16 %v3625, %v3624
      %v3647 = vpack.c.bf16 %v3627, %v3626
      %v3648 = vpack.c.bf16 %v3629, %v3628
      %v3649 = vpack.c.bf16 %v3631, %v3630
      %s3650 = scalar_lea.vmem %s2, 64
      %v3651 = vld [vmem:[%s3650] sm:$0xf]
      %v3652 = vld [vmem:[%s3650 + $0x4] sm:$0xf]
      %v3653 = vld [vmem:[%s3650 + $0x8] sm:$0xf]
      %v3654 = vld [vmem:[%s3650 + $0xc] sm:$0xf]
      %v3655 = vld [vmem:[%s3650 + $0x10] sm:$0xf]
      %v3656 = vld [vmem:[%s3650 + $0x14] sm:$0xf]
      %v3657 = vld [vmem:[%s3650 + $0x18] sm:$0xf]
      %v3658 = vld [vmem:[%s3650 + $0x1c] sm:$0xf]
      %v3659 = vld [vmem:[%s3650 + $0x20] sm:$0xf]
      %v3660 = vld [vmem:[%s3650 + $0x24] sm:$0xf]
      %v3661 = vld [vmem:[%s3650 + $0x28] sm:$0xf]
      %v3662 = vld [vmem:[%s3650 + $0x2c] sm:$0xf]
      %v3663 = vld [vmem:[%s3650 + $0x30] sm:$0xf]
      %v3664 = vld [vmem:[%s3650 + $0x34] sm:$0xf]
      %v3665 = vld [vmem:[%s3650 + $0x38] sm:$0xf]
      %v3666 = vld [vmem:[%s3650 + $0x3c] sm:$0xf]
      %v3683 = vunpack.c.l.b16 %v3651
      %v3684 = vunpack.c.l.b16 %v3652
      %v3685 = vunpack.c.l.b16 %v3653
      %v3686 = vunpack.c.l.b16 %v3654
      %v3687 = vunpack.c.l.b16 %v3655
      %v3688 = vunpack.c.l.b16 %v3656
      %v3689 = vunpack.c.l.b16 %v3657
      %v3690 = vunpack.c.l.b16 %v3658
      %v3691 = vunpack.c.l.b16 %v3659
      %v3692 = vunpack.c.l.b16 %v3660
      %v3693 = vunpack.c.l.b16 %v3661
      %v3694 = vunpack.c.l.b16 %v3662
      %v3695 = vunpack.c.l.b16 %v3663
      %v3696 = vunpack.c.l.b16 %v3664
      %v3697 = vunpack.c.l.b16 %v3665
      %v3698 = vunpack.c.l.b16 %v3666
      %v3699 = vpack.c.b16 %v3684, %v3683
      %v3700 = vpack.c.b16 %v3686, %v3685
      %v3701 = vpack.c.b16 %v3688, %v3687
      %v3702 = vpack.c.b16 %v3690, %v3689
      %v3703 = vpack.c.b16 %v3692, %v3691
      %v3704 = vpack.c.b16 %v3694, %v3693
      %v3705 = vpack.c.b16 %v3696, %v3695
      %v3706 = vpack.c.b16 %v3698, %v3697
      %3715 = vmatprep.subr.bf16.mxu0 0
      %3716 = vmatpush1.bf16.msra.mxu0 %v3699
      %3717 = vmatprep.subr.bf16.mxu0 0
      %3718 = vmatpush1.bf16.msra.mxu0 %v3700
      %3719 = vmatprep.subr.bf16.mxu0 0
      %3720 = vmatpush1.bf16.msra.mxu0 %v3701
      %3721 = vmatprep.subr.bf16.mxu0 0
      %3722 = vmatpush1.bf16.msra.mxu0 %v3702
      %3723 = vmatprep.subr.bf16.mxu0 0
      %3724 = vmatpush1.bf16.msra.mxu0 %v3703
      %3725 = vmatprep.subr.bf16.mxu0 0
      %3726 = vmatpush1.bf16.msra.mxu0 %v3704
      %3727 = vmatprep.subr.bf16.mxu0 0
      %3728 = vmatpush1.bf16.msra.mxu0 %v3705
      %3729 = vmatprep.subr.bf16.mxu0 0
      %3730 = vmatpush1.bf16.msra.mxu0 %v3706
      %3731 = vmatprep.subr.bf16.mxu0 0
      %3732 = vmatpush1.bf16.msra.mxu0 0
      %3733 = vmatprep.subr.bf16.mxu0 0
      %3734 = vmatpush1.bf16.msra.mxu0 0
      %3735 = vmatprep.subr.bf16.mxu0 0
      %3736 = vmatpush1.bf16.msra.mxu0 0
      %3737 = vmatprep.subr.bf16.mxu0 0
      %3738 = vmatpush1.bf16.msra.mxu0 0
      %3739 = vmatprep.subr.bf16.mxu0 0
      %3740 = vmatpush1.bf16.msra.mxu0 0
      %3741 = vmatprep.subr.bf16.mxu0 0
      %3742 = vmatpush1.bf16.msra.mxu0 0
      %3743 = vmatprep.subr.bf16.mxu0 0
      %3744 = vmatpush1.bf16.msra.mxu0 0
      %3745 = vmatprep.subr.bf16.mxu0 0
      %3746 = vmatpush1.bf16.msra.mxu0 0
      %3747 = vmatprep.mubr.bf16.mxu0 0
      %3748 = vmatmul.mubr.bf16.gmra.mrb[0].mxu0 %v3632
      %v3749 = vpop.f32.mrb[0].mxu0
      %v3750 = vadd.f32 0.0, %v3749
      %v3751 = vpop.f32.mrb[0].mxu0
      %v3752 = vpop.f32.mrb[0].mxu0
      %v3753 = vadd.f32 0.0, %v3752
      %v3754 = vpop.f32.mrb[0].mxu0
      %3755 = vmatprep.mubr.bf16.mxu0 0
      %3756 = vmatmul.mubr.bf16.gmra.mrb[0].mxu0 %v3633
      %v3757 = vpop.f32.mrb[0].mxu0
      %v3758 = vadd.f32 0.0, %v3757
      %v3759 = vpop.f32.mrb[0].mxu0
      %v3760 = vpop.f32.mrb[0].mxu0
      %v3761 = vadd.f32 0.0, %v3760
      %v3762 = vpop.f32.mrb[0].mxu0
      %3763 = vmatprep.mubr.bf16.mxu0 0
      %3764 = vmatmul.mubr.bf16.gmra.mrb[0].mxu0 %v3634
      %v3765 = vpop.f32.mrb[0].mxu0
      %v3766 = vadd.f32 0.0, %v3765
      %v3767 = vpop.f32.mrb[0].mxu0
      %v3768 = vpop.f32.mrb[0].mxu0
      %v3769 = vadd.f32 0.0, %v3768
      %v3770 = vpop.f32.mrb[0].mxu0
      %3771 = vmatprep.mubr.bf16.mxu0 0
      %3772 = vmatmul.mubr.bf16.gmra.mrb[0].mxu0 %v3635
      %v3773 = vpop.f32.mrb[0].mxu0
      %v3774 = vadd.f32 0.0, %v3773
      %v3775 = vpop.f32.mrb[0].mxu0
      %v3776 = vpop.f32.mrb[0].mxu0
      %v3777 = vadd.f32 0.0, %v3776
      %v3778 = vpop.f32.mrb[0].mxu0
      %3779 = vmatprep.mubr.bf16.mxu0 0
      %3780 = vmatmul.mubr.bf16.gmra.mrb[0].mxu0 %v3636
      %v3781 = vpop.f32.mrb[0].mxu0
      %v3782 = vadd.f32 0.0, %v3781
      %v3783 = vpop.f32.mrb[0].mxu0
      %v3784 = vpop.f32.mrb[0].mxu0
      %v3785 = vadd.f32 0.0, %v3784
      %v3786 = vpop.f32.mrb[0].mxu0
      %3787 = vmatprep.mubr.bf16.mxu0 0
      %3788 = vmatmul.mubr.bf16.gmra.mrb[0].mxu0 %v3637
      %v3789 = vpop.f32.mrb[0].mxu0
      %v3790 = vadd.f32 0.0, %v3789
      %v3791 = vpop.f32.mrb[0].mxu0
      %v3792 = vpop.f32.mrb[0].mxu0
      %v3793 = vadd.f32 0.0, %v3792
      %v3794 = vpop.f32.mrb[0].mxu0
      %3795 = vmatprep.mubr.bf16.mxu0 0
      %3796 = vmatmul.mubr.bf16.gmra.mrb[0].mxu0 %v3638
      %v3797 = vpop.f32.mrb[0].mxu0
      %v3798 = vadd.f32 0.0, %v3797
      %v3799 = vpop.f32.mrb[0].mxu0
      %v3800 = vpop.f32.mrb[0].mxu0
      %v3801 = vadd.f32 0.0, %v3800
      %v3802 = vpop.f32.mrb[0].mxu0
      %3803 = vmatprep.mubr.bf16.mxu0 0
      %3804 = vmatmul.mubr.bf16.gmra.mrb[0].mxu0 %v3639
      %v3805 = vpop.f32.mrb[0].mxu0
      %v3806 = vadd.f32 0.0, %v3805
      %v3807 = vpop.f32.mrb[0].mxu0
      %v3808 = vpop.f32.mrb[0].mxu0
      %v3809 = vadd.f32 0.0, %v3808
      %v3810 = vpop.f32.mrb[0].mxu0
      %3811 = vmatprep.mubr.bf16.mxu0 0
      %3812 = vmatmul.mubr.bf16.gmra.mrb[0].mxu0 %v3640
      %v3813 = vpop.f32.mrb[0].mxu0
      %v3814 = vadd.f32 0.0, %v3813
      %v3815 = vpop.f32.mrb[0].mxu0
      %v3816 = vpop.f32.mrb[0].mxu0
      %v3817 = vadd.f32 0.0, %v3816
      %v3818 = vpop.f32.mrb[0].mxu0
      %3819 = vmatprep.mubr.bf16.mxu0 0
      %3820 = vmatmul.mubr.bf16.gmra.mrb[0].mxu0 %v3641
      %v3821 = vpop.f32.mrb[0].mxu0
      %v3822 = vadd.f32 0.0, %v3821
      %v3823 = vpop.f32.mrb[0].mxu0
      %v3824 = vpop.f32.mrb[0].mxu0
      %v3825 = vadd.f32 0.0, %v3824
      %v3826 = vpop.f32.mrb[0].mxu0
      %3827 = vmatprep.mubr.bf16.mxu0 0
      %3828 = vmatmul.mubr.bf16.gmra.mrb[0].mxu0 %v3642
      %v3829 = vpop.f32.mrb[0].mxu0
      %v3830 = vadd.f32 0.0, %v3829
      %v3831 = vpop.f32.mrb[0].mxu0
      %v3832 = vpop.f32.mrb[0].mxu0
      %v3833 = vadd.f32 0.0, %v3832
      %v3834 = vpop.f32.mrb[0].mxu0
      %3835 = vmatprep.mubr.bf16.mxu0 0
      %3836 = vmatmul.mubr.bf16.gmra.mrb[0].mxu0 %v3643
      %v3837 = vpop.f32.mrb[0].mxu0
      %v3838 = vadd.f32 0.0, %v3837
      %v3839 = vpop.f32.mrb[0].mxu0
      %v3840 = vpop.f32.mrb[0].mxu0
      %v3841 = vadd.f32 0.0, %v3840
      %v3842 = vpop.f32.mrb[0].mxu0
      %3843 = vmatprep.mubr.bf16.mxu0 0
      %3844 = vmatmul.mubr.bf16.gmra.mrb[0].mxu0 %v3644
      %v3845 = vpop.f32.mrb[0].mxu0
      %v3846 = vadd.f32 0.0, %v3845
      %v3847 = vpop.f32.mrb[0].mxu0
      %v3848 = vpop.f32.mrb[0].mxu0
      %v3849 = vadd.f32 0.0, %v3848
      %v3850 = vpop.f32.mrb[0].mxu0
      %3851 = vmatprep.mubr.bf16.mxu0 0
      %3852 = vmatmul.mubr.bf16.gmra.mrb[0].mxu0 %v3645
      %v3853 = vpop.f32.mrb[0].mxu0
      %v3854 = vadd.f32 0.0, %v3853
      %v3855 = vpop.f32.mrb[0].mxu0
      %v3856 = vpop.f32.mrb[0].mxu0
      %v3857 = vadd.f32 0.0, %v3856
      %v3858 = vpop.f32.mrb[0].mxu0
      %3859 = vmatprep.mubr.bf16.mxu0 0
      %3860 = vmatmul.mubr.bf16.gmra.mrb[0].mxu0 %v3646
      %v3861 = vpop.f32.mrb[0].mxu0
      %v3862 = vadd.f32 0.0, %v3861
      %v3863 = vpop.f32.mrb[0].mxu0
      %v3864 = vpop.f32.mrb[0].mxu0
      %v3865 = vadd.f32 0.0, %v3864
      %v3866 = vpop.f32.mrb[0].mxu0
      %3867 = vmatprep.mubr.bf16.mxu0 0
      %3868 = vmatmul.mubr.bf16.gmra.mrb[0].mxu0 %v3647
      %v3869 = vpop.f32.mrb[0].mxu0
      %v3870 = vadd.f32 0.0, %v3869
      %v3871 = vpop.f32.mrb[0].mxu0
      %v3872 = vpop.f32.mrb[0].mxu0
      %v3873 = vadd.f32 0.0, %v3872
      %v3874 = vpop.f32.mrb[0].mxu0
      %3875 = vmatprep.mubr.bf16.mxu0 0
      %3876 = vmatmul.mubr.bf16.gmra.mrb[0].mxu0 %v3648
      %v3877 = vpop.f32.mrb[0].mxu0
      %v3878 = vadd.f32 0.0, %v3877
      %v3879 = vpop.f32.mrb[0].mxu0
      %v3880 = vpop.f32.mrb[0].mxu0
      %v3881 = vadd.f32 0.0, %v3880
      %v3882 = vpop.f32.mrb[0].mxu0
      %3883 = vmatprep.mubr.bf16.mxu0 0
      %3884 = vmatmul.mubr.bf16.gmra.mrb[0].mxu0 %v3649
      %v3885 = vpop.f32.mrb[0].mxu0
      %v3886 = vadd.f32 0.0, %v3885
      %v3887 = vpop.f32.mrb[0].mxu0
      %v3888 = vpop.f32.mrb[0].mxu0
      %v3889 = vadd.f32 0.0, %v3888
      %v3890 = vpop.f32.mrb[0].mxu0
      %3891 = vdwg.mxu0
      %v3908 = vunpack.c.l.b16 %v3580
      %v3909 = vunpack.c.l.b16 %v3581
      %v3910 = vunpack.c.l.b16 %v3582
      %v3911 = vunpack.c.l.b16 %v3583
      %v3912 = vunpack.c.l.b16 %v3584
      %v3913 = vunpack.c.l.b16 %v3585
      %v3914 = vunpack.c.l.b16 %v3586
      %v3915 = vunpack.c.l.b16 %v3587
      %v3916 = vunpack.c.l.b16 %v3588
      %v3917 = vunpack.c.l.b16 %v3589
      %v3918 = vunpack.c.l.b16 %v3590
      %v3919 = vunpack.c.l.b16 %v3591
      %v3920 = vunpack.c.l.b16 %v3592
      %v3921 = vunpack.c.l.b16 %v3593
      %v3922 = vunpack.c.l.b16 %v3594
      %v3923 = vunpack.c.l.b16 %v3595
      %v3924 = vpack.c.b16 %v3909, %v3908
      %v3925 = vpack.c.b16 %v3911, %v3910
      %v3926 = vpack.c.b16 %v3913, %v3912
      %v3927 = vpack.c.b16 %v3915, %v3914
      %v3928 = vpack.c.b16 %v3917, %v3916
      %v3929 = vpack.c.b16 %v3919, %v3918
      %v3930 = vpack.c.b16 %v3921, %v3920
      %v3931 = vpack.c.b16 %v3923, %v3922
      %3940 = vmatprep.subr.bf16.mxu0 0
      %3941 = vmatpush1.bf16.msra.mxu0 %v3924
      %3942 = vmatprep.subr.bf16.mxu0 0
      %3943 = vmatpush1.bf16.msra.mxu0 %v3925
      %3944 = vmatprep.subr.bf16.mxu0 0
      %3945 = vmatpush1.bf16.msra.mxu0 %v3926
      %3946 = vmatprep.subr.bf16.mxu0 0
      %3947 = vmatpush1.bf16.msra.mxu0 %v3927
      %3948 = vmatprep.subr.bf16.mxu0 0
      %3949 = vmatpush1.bf16.msra.mxu0 %v3928
      %3950 = vmatprep.subr.bf16.mxu0 0
      %3951 = vmatpush1.bf16.msra.mxu0 %v3929
      %3952 = vmatprep.subr.bf16.mxu0 0
      %3953 = vmatpush1.bf16.msra.mxu0 %v3930
      %3954 = vmatprep.subr.bf16.mxu0 0
      %3955 = vmatpush1.bf16.msra.mxu0 %v3931
      %3956 = vmatprep.subr.bf16.mxu0 0
      %3957 = vmatpush1.bf16.msra.mxu0 0
      %3958 = vmatprep.subr.bf16.mxu0 0
      %3959 = vmatpush1.bf16.msra.mxu0 0
      %3960 = vmatprep.subr.bf16.mxu0 0
      %3961 = vmatpush1.bf16.msra.mxu0 0
      %3962 = vmatprep.subr.bf16.mxu0 0
      %3963 = vmatpush1.bf16.msra.mxu0 0
      %3964 = vmatprep.subr.bf16.mxu0 0
      %3965 = vmatpush1.bf16.msra.mxu0 0
      %3966 = vmatprep.subr.bf16.mxu0 0
      %3967 = vmatpush1.bf16.msra.mxu0 0
      %3968 = vmatprep.subr.bf16.mxu0 0
      %3969 = vmatpush1.bf16.msra.mxu0 0
      %3970 = vmatprep.subr.bf16.mxu0 0
      %3971 = vmatpush1.bf16.msra.mxu0 0
      %3972 = vmatprep.mubr.bf16.mxu0 0
      %3973 = vmatmul.mubr.bf16.gmra.mrb[0].mxu0 %v3562
      %v3974 = vpop.f32.mrb[0].mxu0
      %v3975 = vadd.f32 %v3750, %v3974
      %v3976 = vpop.f32.mrb[0].mxu0
      %v3977 = vpop.f32.mrb[0].mxu0
      %v3978 = vadd.f32 %v3753, %v3977
      %v3979 = vpop.f32.mrb[0].mxu0
      %3980 = vmatprep.mubr.bf16.mxu0 0
      %3981 = vmatmul.mubr.bf16.gmra.mrb[0].mxu0 %v3563
      %v3982 = vpop.f32.mrb[0].mxu0
      %v3983 = vadd.f32 %v3758, %v3982
      %v3984 = vpop.f32.mrb[0].mxu0
      %v3985 = vpop.f32.mrb[0].mxu0
      %v3986 = vadd.f32 %v3761, %v3985
      %v3987 = vpop.f32.mrb[0].mxu0
      %3988 = vmatprep.mubr.bf16.mxu0 0
      %3989 = vmatmul.mubr.bf16.gmra.mrb[0].mxu0 %v3564
      %v3990 = vpop.f32.mrb[0].mxu0
      %v3991 = vadd.f32 %v3766, %v3990
      %v3992 = vpop.f32.mrb[0].mxu0
      %v3993 = vpop.f32.mrb[0].mxu0
      %v3994 = vadd.f32 %v3769, %v3993
      %v3995 = vpop.f32.mrb[0].mxu0
      %3996 = vmatprep.mubr.bf16.mxu0 0
      %3997 = vmatmul.mubr.bf16.gmra.mrb[0].mxu0 %v3565
      %v3998 = vpop.f32.mrb[0].mxu0
      %v3999 = vadd.f32 %v3774, %v3998
      %v4000 = vpop.f32.mrb[0].mxu0
      %v4001 = vpop.f32.mrb[0].mxu0
      %v4002 = vadd.f32 %v3777, %v4001
      %v4003 = vpop.f32.mrb[0].mxu0
      %4004 = vmatprep.mubr.bf16.mxu0 0
      %4005 = vmatmul.mubr.bf16.gmra.mrb[0].mxu0 %v3566
      %v4006 = vpop.f32.mrb[0].mxu0
      %v4007 = vadd.f32 %v3782, %v4006
      %v4008 = vpop.f32.mrb[0].mxu0
      %v4009 = vpop.f32.mrb[0].mxu0
      %v4010 = vadd.f32 %v3785, %v4009
      %v4011 = vpop.f32.mrb[0].mxu0
      %4012 = vmatprep.mubr.bf16.mxu0 0
      %4013 = vmatmul.mubr.bf16.gmra.mrb[0].mxu0 %v3567
      %v4014 = vpop.f32.mrb[0].mxu0
      %v4015 = vadd.f32 %v3790, %v4014
      %v4016 = vpop.f32.mrb[0].mxu0
      %v4017 = vpop.f32.mrb[0].mxu0
      %v4018 = vadd.f32 %v3793, %v4017
      %v4019 = vpop.f32.mrb[0].mxu0
      %4020 = vmatprep.mubr.bf16.mxu0 0
      %4021 = vmatmul.mubr.bf16.gmra.mrb[0].mxu0 %v3568
      %v4022 = vpop.f32.mrb[0].mxu0
      %v4023 = vadd.f32 %v3798, %v4022
      %v4024 = vpop.f32.mrb[0].mxu0
      %v4025 = vpop.f32.mrb[0].mxu0
      %v4026 = vadd.f32 %v3801, %v4025
      %v4027 = vpop.f32.mrb[0].mxu0
      %4028 = vmatprep.mubr.bf16.mxu0 0
      %4029 = vmatmul.mubr.bf16.gmra.mrb[0].mxu0 %v3569
      %v4030 = vpop.f32.mrb[0].mxu0
      %v4031 = vadd.f32 %v3806, %v4030
      %v4032 = vpop.f32.mrb[0].mxu0
      %v4033 = vpop.f32.mrb[0].mxu0
      %v4034 = vadd.f32 %v3809, %v4033
      %v4035 = vpop.f32.mrb[0].mxu0
      %4036 = vmatprep.mubr.bf16.mxu0 0
      %4037 = vmatmul.mubr.bf16.gmra.mrb[0].mxu0 %v3570
      %v4038 = vpop.f32.mrb[0].mxu0
      %v4039 = vadd.f32 %v3814, %v4038
      %v4040 = vpop.f32.mrb[0].mxu0
      %v4041 = vpop.f32.mrb[0].mxu0
      %v4042 = vadd.f32 %v3817, %v4041
      %v4043 = vpop.f32.mrb[0].mxu0
      %4044 = vmatprep.mubr.bf16.mxu0 0
      %4045 = vmatmul.mubr.bf16.gmra.mrb[0].mxu0 %v3571
      %v4046 = vpop.f32.mrb[0].mxu0
      %v4047 = vadd.f32 %v3822, %v4046
      %v4048 = vpop.f32.mrb[0].mxu0
      %v4049 = vpop.f32.mrb[0].mxu0
      %v4050 = vadd.f32 %v3825, %v4049
      %v4051 = vpop.f32.mrb[0].mxu0
      %4052 = vmatprep.mubr.bf16.mxu0 0
      %4053 = vmatmul.mubr.bf16.gmra.mrb[0].mxu0 %v3572
      %v4054 = vpop.f32.mrb[0].mxu0
      %v4055 = vadd.f32 %v3830, %v4054
      %v4056 = vpop.f32.mrb[0].mxu0
      %v4057 = vpop.f32.mrb[0].mxu0
      %v4058 = vadd.f32 %v3833, %v4057
      %v4059 = vpop.f32.mrb[0].mxu0
      %4060 = vmatprep.mubr.bf16.mxu0 0
      %4061 = vmatmul.mubr.bf16.gmra.mrb[0].mxu0 %v3573
      %v4062 = vpop.f32.mrb[0].mxu0
      %v4063 = vadd.f32 %v3838, %v4062
      %v4064 = vpop.f32.mrb[0].mxu0
      %v4065 = vpop.f32.mrb[0].mxu0
      %v4066 = vadd.f32 %v3841, %v4065
      %v4067 = vpop.f32.mrb[0].mxu0
      %4068 = vmatprep.mubr.bf16.mxu0 0
      %4069 = vmatmul.mubr.bf16.gmra.mrb[0].mxu0 %v3574
      %v4070 = vpop.f32.mrb[0].mxu0
      %v4071 = vadd.f32 %v3846, %v4070
      %v4072 = vpop.f32.mrb[0].mxu0
      %v4073 = vpop.f32.mrb[0].mxu0
      %v4074 = vadd.f32 %v3849, %v4073
      %v4075 = vpop.f32.mrb[0].mxu0
      %4076 = vmatprep.mubr.bf16.mxu0 0
      %4077 = vmatmul.mubr.bf16.gmra.mrb[0].mxu0 %v3575
      %v4078 = vpop.f32.mrb[0].mxu0
      %v4079 = vadd.f32 %v3854, %v4078
      %v4080 = vpop.f32.mrb[0].mxu0
      %v4081 = vpop.f32.mrb[0].mxu0
      %v4082 = vadd.f32 %v3857, %v4081
      %v4083 = vpop.f32.mrb[0].mxu0
      %4084 = vmatprep.mubr.bf16.mxu0 0
      %4085 = vmatmul.mubr.bf16.gmra.mrb[0].mxu0 %v3576
      %v4086 = vpop.f32.mrb[0].mxu0
      %v4087 = vadd.f32 %v3862, %v4086
      %v4088 = vpop.f32.mrb[0].mxu0
      %v4089 = vpop.f32.mrb[0].mxu0
      %v4090 = vadd.f32 %v3865, %v4089
      %v4091 = vpop.f32.mrb[0].mxu0
      %4092 = vmatprep.mubr.bf16.mxu0 0
      %4093 = vmatmul.mubr.bf16.gmra.mrb[0].mxu0 %v3577
      %v4094 = vpop.f32.mrb[0].mxu0
      %v4095 = vadd.f32 %v3870, %v4094
      %v4096 = vpop.f32.mrb[0].mxu0
      %v4097 = vpop.f32.mrb[0].mxu0
      %v4098 = vadd.f32 %v3873, %v4097
      %v4099 = vpop.f32.mrb[0].mxu0
      %4100 = vmatprep.mubr.bf16.mxu0 0
      %4101 = vmatmul.mubr.bf16.gmra.mrb[0].mxu0 %v3578
      %v4102 = vpop.f32.mrb[0].mxu0
      %v4103 = vadd.f32 %v3878, %v4102
      %v4104 = vpop.f32.mrb[0].mxu0
      %v4105 = vpop.f32.mrb[0].mxu0
      %v4106 = vadd.f32 %v3881, %v4105
      %v4107 = vpop.f32.mrb[0].mxu0
      %4108 = vmatprep.mubr.bf16.mxu0 0
      %4109 = vmatmul.mubr.bf16.gmra.mrb[0].mxu0 %v3579
      %v4110 = vpop.f32.mrb[0].mxu0
      %v4111 = vadd.f32 %v3886, %v4110
      %v4112 = vpop.f32.mrb[0].mxu0
      %v4113 = vpop.f32.mrb[0].mxu0
      %v4114 = vadd.f32 %v3889, %v4113
      %v4115 = vpop.f32.mrb[0].mxu0
      %4116 = vdwg.mxu0
      %v4117 = vld [vmem:[#allocation2 + $0x2] sm:$0xff]
      %v4118 = vld [vmem:[#allocation2 + $0xa] sm:$0xff]
      %v4119 = vld [vmem:[#allocation2 + $0x12] sm:$0xff]
      %v4120 = vld [vmem:[#allocation2 + $0x1a] sm:$0xff]
      %v4121 = vld [vmem:[#allocation2 + $0x22] sm:$0xff]
      %v4122 = vld [vmem:[#allocation2 + $0x2a] sm:$0xff]
      %v4123 = vld [vmem:[#allocation2 + $0x32] sm:$0xff]
      %v4124 = vld [vmem:[#allocation2 + $0x3a] sm:$0xff]
      %v4125 = vld [vmem:[#allocation2 + $0x42] sm:$0xff]
      %v4126 = vld [vmem:[#allocation2 + $0x4a] sm:$0xff]
      %v4127 = vld [vmem:[#allocation2 + $0x52] sm:$0xff]
      %v4128 = vld [vmem:[#allocation2 + $0x5a] sm:$0xff]
      %v4129 = vld [vmem:[#allocation2 + $0x62] sm:$0xff]
      %v4130 = vld [vmem:[#allocation2 + $0x6a] sm:$0xff]
      %v4131 = vld [vmem:[#allocation2 + $0x72] sm:$0xff]
      %v4132 = vld [vmem:[#allocation2 + $0x7a] sm:$0xff]
      %v4133 = vld [vmem:[#allocation2 + $0x82] sm:$0xff]
      %v4134 = vld [vmem:[#allocation2 + $0x8a] sm:$0xff]
      %v4135 = vld [vmem:[#allocation2 + $0x92] sm:$0xff]
      %v4136 = vld [vmem:[#allocation2 + $0x9a] sm:$0xff]
      %v4137 = vld [vmem:[#allocation2 + $0xa2] sm:$0xff]
      %v4138 = vld [vmem:[#allocation2 + $0xaa] sm:$0xff]
      %v4139 = vld [vmem:[#allocation2 + $0xb2] sm:$0xff]
      %v4140 = vld [vmem:[#allocation2 + $0xba] sm:$0xff]
      %v4141 = vld [vmem:[#allocation2 + $0xc2] sm:$0xff]
      %v4142 = vld [vmem:[#allocation2 + $0xca] sm:$0xff]
      %v4143 = vld [vmem:[#allocation2 + $0xd2] sm:$0xff]
      %v4144 = vld [vmem:[#allocation2 + $0xda] sm:$0xff]
      %v4145 = vld [vmem:[#allocation2 + $0xe2] sm:$0xff]
      %v4146 = vld [vmem:[#allocation2 + $0xea] sm:$0xff]
      %v4147 = vld [vmem:[#allocation2 + $0xf2] sm:$0xff]
      %v4148 = vld [vmem:[#allocation2 + $0xfa] sm:$0xff]
      %v4149 = vld [vmem:[#allocation2 + $0x102] sm:$0xff]
      %v4150 = vld [vmem:[#allocation2 + $0x10a] sm:$0xff]
      %v4151 = vld [vmem:[#allocation2 + $0x112] sm:$0xff]
      %v4152 = vld [vmem:[#allocation2 + $0x11a] sm:$0xff]
      %v4153 = vpack.c.bf16 %v4118, %v4117
      %v4154 = vpack.c.bf16 %v4120, %v4119
      %v4155 = vpack.c.bf16 %v4122, %v4121
      %v4156 = vpack.c.bf16 %v4124, %v4123
      %v4157 = vpack.c.bf16 %v4126, %v4125
      %v4158 = vpack.c.bf16 %v4128, %v4127
      %v4159 = vpack.c.bf16 %v4130, %v4129
      %v4160 = vpack.c.bf16 %v4132, %v4131
      %v4161 = vpack.c.bf16 %v4134, %v4133
      %v4162 = vpack.c.bf16 %v4136, %v4135
      %v4163 = vpack.c.bf16 %v4138, %v4137
      %v4164 = vpack.c.bf16 %v4140, %v4139
      %v4165 = vpack.c.bf16 %v4142, %v4141
      %v4166 = vpack.c.bf16 %v4144, %v4143
      %v4167 = vpack.c.bf16 %v4146, %v4145
      %v4168 = vpack.c.bf16 %v4148, %v4147
      %v4169 = vpack.c.bf16 %v4150, %v4149
      %v4170 = vpack.c.bf16 %v4152, %v4151
      %s4171 = scalar_lea.vmem %s2, 128
      %v4172 = vld [vmem:[%s4171] sm:$0xf]
      %v4173 = vld [vmem:[%s4171 + $0x4] sm:$0xf]
      %v4174 = vld [vmem:[%s4171 + $0x8] sm:$0xf]
      %v4175 = vld [vmem:[%s4171 + $0xc] sm:$0xf]
      %v4176 = vld [vmem:[%s4171 + $0x10] sm:$0xf]
      %v4177 = vld [vmem:[%s4171 + $0x14] sm:$0xf]
      %v4178 = vld [vmem:[%s4171 + $0x18] sm:$0xf]
      %v4179 = vld [vmem:[%s4171 + $0x1c] sm:$0xf]
      %v4180 = vld [vmem:[%s4171 + $0x20] sm:$0xf]
      %v4181 = vld [vmem:[%s4171 + $0x24] sm:$0xf]
      %v4182 = vld [vmem:[%s4171 + $0x28] sm:$0xf]
      %v4183 = vld [vmem:[%s4171 + $0x2c] sm:$0xf]
      %v4184 = vld [vmem:[%s4171 + $0x30] sm:$0xf]
      %v4185 = vld [vmem:[%s4171 + $0x34] sm:$0xf]
      %v4186 = vld [vmem:[%s4171 + $0x38] sm:$0xf]
      %v4187 = vld [vmem:[%s4171 + $0x3c] sm:$0xf]
      %v4204 = vunpack.c.l.b16 %v4172
      %v4205 = vunpack.c.l.b16 %v4173
      %v4206 = vunpack.c.l.b16 %v4174
      %v4207 = vunpack.c.l.b16 %v4175
      %v4208 = vunpack.c.l.b16 %v4176
      %v4209 = vunpack.c.l.b16 %v4177
      %v4210 = vunpack.c.l.b16 %v4178
      %v4211 = vunpack.c.l.b16 %v4179
      %v4212 = vunpack.c.l.b16 %v4180
      %v4213 = vunpack.c.l.b16 %v4181
      %v4214 = vunpack.c.l.b16 %v4182
      %v4215 = vunpack.c.l.b16 %v4183
      %v4216 = vunpack.c.l.b16 %v4184
      %v4217 = vunpack.c.l.b16 %v4185
      %v4218 = vunpack.c.l.b16 %v4186
      %v4219 = vunpack.c.l.b16 %v4187
      %v4220 = vpack.c.b16 %v4205, %v4204
      %v4221 = vpack.c.b16 %v4207, %v4206
      %v4222 = vpack.c.b16 %v4209, %v4208
      %v4223 = vpack.c.b16 %v4211, %v4210
      %v4224 = vpack.c.b16 %v4213, %v4212
      %v4225 = vpack.c.b16 %v4215, %v4214
      %v4226 = vpack.c.b16 %v4217, %v4216
      %v4227 = vpack.c.b16 %v4219, %v4218
      %4236 = vmatprep.subr.bf16.mxu0 0
      %4237 = vmatpush1.bf16.msra.mxu0 %v4220
      %4238 = vmatprep.subr.bf16.mxu0 0
      %4239 = vmatpush1.bf16.msra.mxu0 %v4221
      %4240 = vmatprep.subr.bf16.mxu0 0
      %4241 = vmatpush1.bf16.msra.mxu0 %v4222
      %4242 = vmatprep.subr.bf16.mxu0 0
      %4243 = vmatpush1.bf16.msra.mxu0 %v4223
      %4244 = vmatprep.subr.bf16.mxu0 0
      %4245 = vmatpush1.bf16.msra.mxu0 %v4224
      %4246 = vmatprep.subr.bf16.mxu0 0
      %4247 = vmatpush1.bf16.msra.mxu0 %v4225
      %4248 = vmatprep.subr.bf16.mxu0 0
      %4249 = vmatpush1.bf16.msra.mxu0 %v4226
      %4250 = vmatprep.subr.bf16.mxu0 0
      %4251 = vmatpush1.bf16.msra.mxu0 %v4227
      %4252 = vmatprep.subr.bf16.mxu0 0
      %4253 = vmatpush1.bf16.msra.mxu0 0
      %4254 = vmatprep.subr.bf16.mxu0 0
      %4255 = vmatpush1.bf16.msra.mxu0 0
      %4256 = vmatprep.subr.bf16.mxu0 0
      %4257 = vmatpush1.bf16.msra.mxu0 0
      %4258 = vmatprep.subr.bf16.mxu0 0
      %4259 = vmatpush1.bf16.msra.mxu0 0
      %4260 = vmatprep.subr.bf16.mxu0 0
      %4261 = vmatpush1.bf16.msra.mxu0 0
      %4262 = vmatprep.subr.bf16.mxu0 0
      %4263 = vmatpush1.bf16.msra.mxu0 0
      %4264 = vmatprep.subr.bf16.mxu0 0
      %4265 = vmatpush1.bf16.msra.mxu0 0
      %4266 = vmatprep.subr.bf16.mxu0 0
      %4267 = vmatpush1.bf16.msra.mxu0 0
      %4268 = vmatprep.mubr.bf16.mxu0 0
      %4269 = vmatmul.mubr.bf16.gmra.mrb[0].mxu0 %v4153
      %v4270 = vpop.f32.mrb[0].mxu0
      %v4271 = vadd.f32 0.0, %v4270
      %v4272 = vpop.f32.mrb[0].mxu0
      %v4273 = vpop.f32.mrb[0].mxu0
      %v4274 = vadd.f32 0.0, %v4273
      %v4275 = vpop.f32.mrb[0].mxu0
      %4276 = vmatprep.mubr.bf16.mxu0 0
      %4277 = vmatmul.mubr.bf16.gmra.mrb[0].mxu0 %v4154
      %v4278 = vpop.f32.mrb[0].mxu0
      %v4279 = vadd.f32 0.0, %v4278
      %v4280 = vpop.f32.mrb[0].mxu0
      %v4281 = vpop.f32.mrb[0].mxu0
      %v4282 = vadd.f32 0.0, %v4281
      %v4283 = vpop.f32.mrb[0].mxu0
      %4284 = vmatprep.mubr.bf16.mxu0 0
      %4285 = vmatmul.mubr.bf16.gmra.mrb[0].mxu0 %v4155
      %v4286 = vpop.f32.mrb[0].mxu0
      %v4287 = vadd.f32 0.0, %v4286
      %v4288 = vpop.f32.mrb[0].mxu0
      %v4289 = vpop.f32.mrb[0].mxu0
      %v4290 = vadd.f32 0.0, %v4289
      %v4291 = vpop.f32.mrb[0].mxu0
      %4292 = vmatprep.mubr.bf16.mxu0 0
      %4293 = vmatmul.mubr.bf16.gmra.mrb[0].mxu0 %v4156
      %v4294 = vpop.f32.mrb[0].mxu0
      %v4295 = vadd.f32 0.0, %v4294
      %v4296 = vpop.f32.mrb[0].mxu0
      %v4297 = vpop.f32.mrb[0].mxu0
      %v4298 = vadd.f32 0.0, %v4297
      %v4299 = vpop.f32.mrb[0].mxu0
      %4300 = vmatprep.mubr.bf16.mxu0 0
      %4301 = vmatmul.mubr.bf16.gmra.mrb[0].mxu0 %v4157
      %v4302 = vpop.f32.mrb[0].mxu0
      %v4303 = vadd.f32 0.0, %v4302
      %v4304 = vpop.f32.mrb[0].mxu0
      %v4305 = vpop.f32.mrb[0].mxu0
      %v4306 = vadd.f32 0.0, %v4305
      %v4307 = vpop.f32.mrb[0].mxu0
      %4308 = vmatprep.mubr.bf16.mxu0 0
      %4309 = vmatmul.mubr.bf16.gmra.mrb[0].mxu0 %v4158
      %v4310 = vpop.f32.mrb[0].mxu0
      %v4311 = vadd.f32 0.0, %v4310
      %v4312 = vpop.f32.mrb[0].mxu0
      %v4313 = vpop.f32.mrb[0].mxu0
      %v4314 = vadd.f32 0.0, %v4313
      %v4315 = vpop.f32.mrb[0].mxu0
      %4316 = vmatprep.mubr.bf16.mxu0 0
      %4317 = vmatmul.mubr.bf16.gmra.mrb[0].mxu0 %v4159
      %v4318 = vpop.f32.mrb[0].mxu0
      %v4319 = vadd.f32 0.0, %v4318
      %v4320 = vpop.f32.mrb[0].mxu0
      %v4321 = vpop.f32.mrb[0].mxu0
      %v4322 = vadd.f32 0.0, %v4321
      %v4323 = vpop.f32.mrb[0].mxu0
      %4324 = vmatprep.mubr.bf16.mxu0 0
      %4325 = vmatmul.mubr.bf16.gmra.mrb[0].mxu0 %v4160
      %v4326 = vpop.f32.mrb[0].mxu0
      %v4327 = vadd.f32 0.0, %v4326
      %v4328 = vpop.f32.mrb[0].mxu0
      %v4329 = vpop.f32.mrb[0].mxu0
      %v4330 = vadd.f32 0.0, %v4329
      %v4331 = vpop.f32.mrb[0].mxu0
      %4332 = vmatprep.mubr.bf16.mxu0 0
      %4333 = vmatmul.mubr.bf16.gmra.mrb[0].mxu0 %v4161
      %v4334 = vpop.f32.mrb[0].mxu0
      %v4335 = vadd.f32 0.0, %v4334
      %v4336 = vpop.f32.mrb[0].mxu0
      %v4337 = vpop.f32.mrb[0].mxu0
      %v4338 = vadd.f32 0.0, %v4337
      %v4339 = vpop.f32.mrb[0].mxu0
      %4340 = vmatprep.mubr.bf16.mxu0 0
      %4341 = vmatmul.mubr.bf16.gmra.mrb[0].mxu0 %v4162
      %v4342 = vpop.f32.mrb[0].mxu0
      %v4343 = vadd.f32 0.0, %v4342
      %v4344 = vpop.f32.mrb[0].mxu0
      %v4345 = vpop.f32.mrb[0].mxu0
      %v4346 = vadd.f32 0.0, %v4345
      %v4347 = vpop.f32.mrb[0].mxu0
      %4348 = vmatprep.mubr.bf16.mxu0 0
      %4349 = vmatmul.mubr.bf16.gmra.mrb[0].mxu0 %v4163
      %v4350 = vpop.f32.mrb[0].mxu0
      %v4351 = vadd.f32 0.0, %v4350
      %v4352 = vpop.f32.mrb[0].mxu0
      %v4353 = vpop.f32.mrb[0].mxu0
      %v4354 = vadd.f32 0.0, %v4353
      %v4355 = vpop.f32.mrb[0].mxu0
      %4356 = vmatprep.mubr.bf16.mxu0 0
      %4357 = vmatmul.mubr.bf16.gmra.mrb[0].mxu0 %v4164
      %v4358 = vpop.f32.mrb[0].mxu0
      %v4359 = vadd.f32 0.0, %v4358
      %v4360 = vpop.f32.mrb[0].mxu0
      %v4361 = vpop.f32.mrb[0].mxu0
      %v4362 = vadd.f32 0.0, %v4361
      %v4363 = vpop.f32.mrb[0].mxu0
      %4364 = vmatprep.mubr.bf16.mxu0 0
      %4365 = vmatmul.mubr.bf16.gmra.mrb[0].mxu0 %v4165
      %v4366 = vpop.f32.mrb[0].mxu0
      %v4367 = vadd.f32 0.0, %v4366
      %v4368 = vpop.f32.mrb[0].mxu0
      %v4369 = vpop.f32.mrb[0].mxu0
      %v4370 = vadd.f32 0.0, %v4369
      %v4371 = vpop.f32.mrb[0].mxu0
      %4372 = vmatprep.mubr.bf16.mxu0 0
      %4373 = vmatmul.mubr.bf16.gmra.mrb[0].mxu0 %v4166
      %v4374 = vpop.f32.mrb[0].mxu0
      %v4375 = vadd.f32 0.0, %v4374
      %v4376 = vpop.f32.mrb[0].mxu0
      %v4377 = vpop.f32.mrb[0].mxu0
      %v4378 = vadd.f32 0.0, %v4377
      %v4379 = vpop.f32.mrb[0].mxu0
      %4380 = vmatprep.mubr.bf16.mxu0 0
      %4381 = vmatmul.mubr.bf16.gmra.mrb[0].mxu0 %v4167
      %v4382 = vpop.f32.mrb[0].mxu0
      %v4383 = vadd.f32 0.0, %v4382
      %v4384 = vpop.f32.mrb[0].mxu0
      %v4385 = vpop.f32.mrb[0].mxu0
      %v4386 = vadd.f32 0.0, %v4385
      %v4387 = vpop.f32.mrb[0].mxu0
      %4388 = vmatprep.mubr.bf16.mxu0 0
      %4389 = vmatmul.mubr.bf16.gmra.mrb[0].mxu0 %v4168
      %v4390 = vpop.f32.mrb[0].mxu0
      %v4391 = vadd.f32 0.0, %v4390
      %v4392 = vpop.f32.mrb[0].mxu0
      %v4393 = vpop.f32.mrb[0].mxu0
      %v4394 = vadd.f32 0.0, %v4393
      %v4395 = vpop.f32.mrb[0].mxu0
      %4396 = vmatprep.mubr.bf16.mxu0 0
      %4397 = vmatmul.mubr.bf16.gmra.mrb[0].mxu0 %v4169
      %v4398 = vpop.f32.mrb[0].mxu0
      %v4399 = vadd.f32 0.0, %v4398
      %v4400 = vpop.f32.mrb[0].mxu0
      %v4401 = vpop.f32.mrb[0].mxu0
      %v4402 = vadd.f32 0.0, %v4401
      %v4403 = vpop.f32.mrb[0].mxu0
      %4404 = vmatprep.mubr.bf16.mxu0 0
      %4405 = vmatmul.mubr.bf16.gmra.mrb[0].mxu0 %v4170
      %v4406 = vpop.f32.mrb[0].mxu0
      %v4407 = vadd.f32 0.0, %v4406
      %v4408 = vpop.f32.mrb[0].mxu0
      %v4409 = vpop.f32.mrb[0].mxu0
      %v4410 = vadd.f32 0.0, %v4409
      %v4411 = vpop.f32.mrb[0].mxu0
      %4412 = vdwg.mxu0
      %v4413 = vadd.f32 %v3975, %v4271
      %v4414 = vadd.f32 %v3978, %v4274
      %v4415 = vadd.f32 %v3983, %v4279
      %v4416 = vadd.f32 %v3986, %v4282
      %v4417 = vadd.f32 %v3991, %v4287
      %v4418 = vadd.f32 %v3994, %v4290
      %v4419 = vadd.f32 %v3999, %v4295
      %v4420 = vadd.f32 %v4002, %v4298
      %v4421 = vadd.f32 %v4007, %v4303
      %v4422 = vadd.f32 %v4010, %v4306
      %v4423 = vadd.f32 %v4015, %v4311
      %v4424 = vadd.f32 %v4018, %v4314
      %v4425 = vadd.f32 %v4023, %v4319
      %v4426 = vadd.f32 %v4026, %v4322
      %v4427 = vadd.f32 %v4031, %v4327
      %v4428 = vadd.f32 %v4034, %v4330
      %v4429 = vadd.f32 %v4039, %v4335
      %v4430 = vadd.f32 %v4042, %v4338
      %v4431 = vadd.f32 %v4047, %v4343
      %v4432 = vadd.f32 %v4050, %v4346
      %v4433 = vadd.f32 %v4055, %v4351
      %v4434 = vadd.f32 %v4058, %v4354
      %v4435 = vadd.f32 %v4063, %v4359
      %v4436 = vadd.f32 %v4066, %v4362
      %v4437 = vadd.f32 %v4071, %v4367
      %v4438 = vadd.f32 %v4074, %v4370
      %v4439 = vadd.f32 %v4079, %v4375
      %v4440 = vadd.f32 %v4082, %v4378
      %v4441 = vadd.f32 %v4087, %v4383
      %v4442 = vadd.f32 %v4090, %v4386
      %v4443 = vadd.f32 %v4095, %v4391
      %v4444 = vadd.f32 %v4098, %v4394
      %v4445 = vadd.f32 %v4103, %v4399
      %v4446 = vadd.f32 %v4106, %v4402
      %v4447 = vadd.f32 %v4111, %v4407
      %v4448 = vadd.f32 %v4114, %v4410
      %v4449 = vld [vmem:[#allocation2 + $0x12] sm:$0xff]
      %v4450 = vld [vmem:[#allocation2 + $0x1a] sm:$0xff]
      %v4451 = vld [vmem:[#allocation2 + $0x22] sm:$0xff]
      %v4452 = vld [vmem:[#allocation2 + $0x2a] sm:$0xff]
      %v4453 = vld [vmem:[#allocation2 + $0x32] sm:$0xff]
      %v4454 = vld [vmem:[#allocation2 + $0x3a] sm:$0xff]
      %v4455 = vld [vmem:[#allocation2 + $0x42] sm:$0xff]
      %v4456 = vld [vmem:[#allocation2 + $0x4a] sm:$0xff]
      %v4457 = vld [vmem:[#allocation2 + $0x52] sm:$0xff]
      %v4458 = vld [vmem:[#allocation2 + $0x5a] sm:$0xff]
      %v4459 = vld [vmem:[#allocation2 + $0x62] sm:$0xff]
      %v4460 = vld [vmem:[#allocation2 + $0x6a] sm:$0xff]
      %v4461 = vld [vmem:[#allocation2 + $0x72] sm:$0xff]
      %v4462 = vld [vmem:[#allocation2 + $0x7a] sm:$0xff]
      %v4463 = vld [vmem:[#allocation2 + $0x82] sm:$0xff]
      %v4464 = vld [vmem:[#allocation2 + $0x8a] sm:$0xff]
      %v4465 = vld [vmem:[#allocation2 + $0x92] sm:$0xff]
      %v4466 = vld [vmem:[#allocation2 + $0x9a] sm:$0xff]
      %v4467 = vld [vmem:[#allocation2 + $0xa2] sm:$0xff]
      %v4468 = vld [vmem:[#allocation2 + $0xaa] sm:$0xff]
      %v4469 = vld [vmem:[#allocation2 + $0xb2] sm:$0xff]
      %v4470 = vld [vmem:[#allocation2 + $0xba] sm:$0xff]
      %v4471 = vld [vmem:[#allocation2 + $0xc2] sm:$0xff]
      %v4472 = vld [vmem:[#allocation2 + $0xca] sm:$0xff]
      %v4473 = vld [vmem:[#allocation2 + $0xd2] sm:$0xff]
      %v4474 = vld [vmem:[#allocation2 + $0xda] sm:$0xff]
      %v4475 = vld [vmem:[#allocation2 + $0xe2] sm:$0xff]
      %v4476 = vld [vmem:[#allocation2 + $0xea] sm:$0xff]
      %v4477 = vld [vmem:[#allocation2 + $0xf2] sm:$0xff]
      %v4478 = vld [vmem:[#allocation2 + $0xfa] sm:$0xff]
      %v4479 = vld [vmem:[#allocation2 + $0x102] sm:$0xff]
      %v4480 = vld [vmem:[#allocation2 + $0x10a] sm:$0xff]
      %v4481 = vld [vmem:[#allocation2 + $0x112] sm:$0xff]
      %v4482 = vld [vmem:[#allocation2 + $0x11a] sm:$0xff]
      %v4483 = vld [vmem:[#allocation2 + $0x122] sm:$0xff]
      %v4484 = vld [vmem:[#allocation2 + $0x12a] sm:$0xff]
      %v4485 = vpack.c.bf16 %v4450, %v4449
      %v4486 = vpack.c.bf16 %v4452, %v4451
      %v4487 = vpack.c.bf16 %v4454, %v4453
      %v4488 = vpack.c.bf16 %v4456, %v4455
      %v4489 = vpack.c.bf16 %v4458, %v4457
      %v4490 = vpack.c.bf16 %v4460, %v4459
      %v4491 = vpack.c.bf16 %v4462, %v4461
      %v4492 = vpack.c.bf16 %v4464, %v4463
      %v4493 = vpack.c.bf16 %v4466, %v4465
      %v4494 = vpack.c.bf16 %v4468, %v4467
      %v4495 = vpack.c.bf16 %v4470, %v4469
      %v4496 = vpack.c.bf16 %v4472, %v4471
      %v4497 = vpack.c.bf16 %v4474, %v4473
      %v4498 = vpack.c.bf16 %v4476, %v4475
      %v4499 = vpack.c.bf16 %v4478, %v4477
      %v4500 = vpack.c.bf16 %v4480, %v4479
      %v4501 = vpack.c.bf16 %v4482, %v4481
      %v4502 = vpack.c.bf16 %v4484, %v4483
      %s4503 = scalar_lea.vmem %s2, 192
      %v4504 = vld [vmem:[%s4503] sm:$0xf]
      %v4505 = vld [vmem:[%s4503 + $0x4] sm:$0xf]
      %v4506 = vld [vmem:[%s4503 + $0x8] sm:$0xf]
      %v4507 = vld [vmem:[%s4503 + $0xc] sm:$0xf]
      %v4508 = vld [vmem:[%s4503 + $0x10] sm:$0xf]
      %v4509 = vld [vmem:[%s4503 + $0x14] sm:$0xf]
      %v4510 = vld [vmem:[%s4503 + $0x18] sm:$0xf]
      %v4511 = vld [vmem:[%s4503 + $0x1c] sm:$0xf]
      %v4512 = vld [vmem:[%s4503 + $0x20] sm:$0xf]
      %v4513 = vld [vmem:[%s4503 + $0x24] sm:$0xf]
      %v4514 = vld [vmem:[%s4503 + $0x28] sm:$0xf]
      %v4515 = vld [vmem:[%s4503 + $0x2c] sm:$0xf]
      %v4516 = vld [vmem:[%s4503 + $0x30] sm:$0xf]
      %v4517 = vld [vmem:[%s4503 + $0x34] sm:$0xf]
      %v4518 = vld [vmem:[%s4503 + $0x38] sm:$0xf]
      %v4519 = vld [vmem:[%s4503 + $0x3c] sm:$0xf]
      %v4536 = vunpack.c.l.b16 %v4504
      %v4537 = vunpack.c.l.b16 %v4505
      %v4538 = vunpack.c.l.b16 %v4506
      %v4539 = vunpack.c.l.b16 %v4507
      %v4540 = vunpack.c.l.b16 %v4508
      %v4541 = vunpack.c.l.b16 %v4509
      %v4542 = vunpack.c.l.b16 %v4510
      %v4543 = vunpack.c.l.b16 %v4511
      %v4544 = vunpack.c.l.b16 %v4512
      %v4545 = vunpack.c.l.b16 %v4513
      %v4546 = vunpack.c.l.b16 %v4514
      %v4547 = vunpack.c.l.b16 %v4515
      %v4548 = vunpack.c.l.b16 %v4516
      %v4549 = vunpack.c.l.b16 %v4517
      %v4550 = vunpack.c.l.b16 %v4518
      %v4551 = vunpack.c.l.b16 %v4519
      %v4552 = vpack.c.b16 %v4537, %v4536
      %v4553 = vpack.c.b16 %v4539, %v4538
      %v4554 = vpack.c.b16 %v4541, %v4540
      %v4555 = vpack.c.b16 %v4543, %v4542
      %v4556 = vpack.c.b16 %v4545, %v4544
      %v4557 = vpack.c.b16 %v4547, %v4546
      %v4558 = vpack.c.b16 %v4549, %v4548
      %v4559 = vpack.c.b16 %v4551, %v4550
      %4568 = vmatprep.subr.bf16.mxu0 0
      %4569 = vmatpush1.bf16.msra.mxu0 %v4552
      %4570 = vmatprep.subr.bf16.mxu0 0
      %4571 = vmatpush1.bf16.msra.mxu0 %v4553
      %4572 = vmatprep.subr.bf16.mxu0 0
      %4573 = vmatpush1.bf16.msra.mxu0 %v4554
      %4574 = vmatprep.subr.bf16.mxu0 0
      %4575 = vmatpush1.bf16.msra.mxu0 %v4555
      %4576 = vmatprep.subr.bf16.mxu0 0
      %4577 = vmatpush1.bf16.msra.mxu0 %v4556
      %4578 = vmatprep.subr.bf16.mxu0 0
      %4579 = vmatpush1.bf16.msra.mxu0 %v4557
      %4580 = vmatprep.subr.bf16.mxu0 0
      %4581 = vmatpush1.bf16.msra.mxu0 %v4558
      %4582 = vmatprep.subr.bf16.mxu0 0
      %4583 = vmatpush1.bf16.msra.mxu0 %v4559
      %4584 = vmatprep.subr.bf16.mxu0 0
      %4585 = vmatpush1.bf16.msra.mxu0 0
      %4586 = vmatprep.subr.bf16.mxu0 0
      %4587 = vmatpush1.bf16.msra.mxu0 0
      %4588 = vmatprep.subr.bf16.mxu0 0
      %4589 = vmatpush1.bf16.msra.mxu0 0
      %4590 = vmatprep.subr.bf16.mxu0 0
      %4591 = vmatpush1.bf16.msra.mxu0 0
      %4592 = vmatprep.subr.bf16.mxu0 0
      %4593 = vmatpush1.bf16.msra.mxu0 0
      %4594 = vmatprep.subr.bf16.mxu0 0
      %4595 = vmatpush1.bf16.msra.mxu0 0
      %4596 = vmatprep.subr.bf16.mxu0 0
      %4597 = vmatpush1.bf16.msra.mxu0 0
      %4598 = vmatprep.subr.bf16.mxu0 0
      %4599 = vmatpush1.bf16.msra.mxu0 0
      %4600 = vmatprep.mubr.bf16.mxu0 0
      %4601 = vmatmul.mubr.bf16.gmra.mrb[0].mxu0 %v4485
      %v4602 = vpop.f32.mrb[0].mxu0
      %v4603 = vadd.f32 0.0, %v4602
      %v4604 = vpop.f32.mrb[0].mxu0
      %v4605 = vpop.f32.mrb[0].mxu0
      %v4606 = vadd.f32 0.0, %v4605
      %v4607 = vpop.f32.mrb[0].mxu0
      %4608 = vmatprep.mubr.bf16.mxu0 0
      %4609 = vmatmul.mubr.bf16.gmra.mrb[0].mxu0 %v4486
      %v4610 = vpop.f32.mrb[0].mxu0
      %v4611 = vadd.f32 0.0, %v4610
      %v4612 = vpop.f32.mrb[0].mxu0
      %v4613 = vpop.f32.mrb[0].mxu0
      %v4614 = vadd.f32 0.0, %v4613
      %v4615 = vpop.f32.mrb[0].mxu0
      %4616 = vmatprep.mubr.bf16.mxu0 0
      %4617 = vmatmul.mubr.bf16.gmra.mrb[0].mxu0 %v4487
      %v4618 = vpop.f32.mrb[0].mxu0
      %v4619 = vadd.f32 0.0, %v4618
      %v4620 = vpop.f32.mrb[0].mxu0
      %v4621 = vpop.f32.mrb[0].mxu0
      %v4622 = vadd.f32 0.0, %v4621
      %v4623 = vpop.f32.mrb[0].mxu0
      %4624 = vmatprep.mubr.bf16.mxu0 0
      %4625 = vmatmul.mubr.bf16.gmra.mrb[0].mxu0 %v4488
      %v4626 = vpop.f32.mrb[0].mxu0
      %v4627 = vadd.f32 0.0, %v4626
      %v4628 = vpop.f32.mrb[0].mxu0
      %v4629 = vpop.f32.mrb[0].mxu0
      %v4630 = vadd.f32 0.0, %v4629
      %v4631 = vpop.f32.mrb[0].mxu0
      %4632 = vmatprep.mubr.bf16.mxu0 0
      %4633 = vmatmul.mubr.bf16.gmra.mrb[0].mxu0 %v4489
      %v4634 = vpop.f32.mrb[0].mxu0
      %v4635 = vadd.f32 0.0, %v4634
      %v4636 = vpop.f32.mrb[0].mxu0
      %v4637 = vpop.f32.mrb[0].mxu0
      %v4638 = vadd.f32 0.0, %v4637
      %v4639 = vpop.f32.mrb[0].mxu0
      %4640 = vmatprep.mubr.bf16.mxu0 0
      %4641 = vmatmul.mubr.bf16.gmra.mrb[0].mxu0 %v4490
      %v4642 = vpop.f32.mrb[0].mxu0
      %v4643 = vadd.f32 0.0, %v4642
      %v4644 = vpop.f32.mrb[0].mxu0
      %v4645 = vpop.f32.mrb[0].mxu0
      %v4646 = vadd.f32 0.0, %v4645
      %v4647 = vpop.f32.mrb[0].mxu0
      %4648 = vmatprep.mubr.bf16.mxu0 0
      %4649 = vmatmul.mubr.bf16.gmra.mrb[0].mxu0 %v4491
      %v4650 = vpop.f32.mrb[0].mxu0
      %v4651 = vadd.f32 0.0, %v4650
      %v4652 = vpop.f32.mrb[0].mxu0
      %v4653 = vpop.f32.mrb[0].mxu0
      %v4654 = vadd.f32 0.0, %v4653
      %v4655 = vpop.f32.mrb[0].mxu0
      %4656 = vmatprep.mubr.bf16.mxu0 0
      %4657 = vmatmul.mubr.bf16.gmra.mrb[0].mxu0 %v4492
      %v4658 = vpop.f32.mrb[0].mxu0
      %v4659 = vadd.f32 0.0, %v4658
      %v4660 = vpop.f32.mrb[0].mxu0
      %v4661 = vpop.f32.mrb[0].mxu0
      %v4662 = vadd.f32 0.0, %v4661
      %v4663 = vpop.f32.mrb[0].mxu0
      %4664 = vmatprep.mubr.bf16.mxu0 0
      %4665 = vmatmul.mubr.bf16.gmra.mrb[0].mxu0 %v4493
      %v4666 = vpop.f32.mrb[0].mxu0
      %v4667 = vadd.f32 0.0, %v4666
      %v4668 = vpop.f32.mrb[0].mxu0
      %v4669 = vpop.f32.mrb[0].mxu0
      %v4670 = vadd.f32 0.0, %v4669
      %v4671 = vpop.f32.mrb[0].mxu0
      %4672 = vmatprep.mubr.bf16.mxu0 0
      %4673 = vmatmul.mubr.bf16.gmra.mrb[0].mxu0 %v4494
      %v4674 = vpop.f32.mrb[0].mxu0
      %v4675 = vadd.f32 0.0, %v4674
      %v4676 = vpop.f32.mrb[0].mxu0
      %v4677 = vpop.f32.mrb[0].mxu0
      %v4678 = vadd.f32 0.0, %v4677
      %v4679 = vpop.f32.mrb[0].mxu0
      %4680 = vmatprep.mubr.bf16.mxu0 0
      %4681 = vmatmul.mubr.bf16.gmra.mrb[0].mxu0 %v4495
      %v4682 = vpop.f32.mrb[0].mxu0
      %v4683 = vadd.f32 0.0, %v4682
      %v4684 = vpop.f32.mrb[0].mxu0
      %v4685 = vpop.f32.mrb[0].mxu0
      %v4686 = vadd.f32 0.0, %v4685
      %v4687 = vpop.f32.mrb[0].mxu0
      %4688 = vmatprep.mubr.bf16.mxu0 0
      %4689 = vmatmul.mubr.bf16.gmra.mrb[0].mxu0 %v4496
      %v4690 = vpop.f32.mrb[0].mxu0
      %v4691 = vadd.f32 0.0, %v4690
      %v4692 = vpop.f32.mrb[0].mxu0
      %v4693 = vpop.f32.mrb[0].mxu0
      %v4694 = vadd.f32 0.0, %v4693
      %v4695 = vpop.f32.mrb[0].mxu0
      %4696 = vmatprep.mubr.bf16.mxu0 0
      %4697 = vmatmul.mubr.bf16.gmra.mrb[0].mxu0 %v4497
      %v4698 = vpop.f32.mrb[0].mxu0
      %v4699 = vadd.f32 0.0, %v4698
      %v4700 = vpop.f32.mrb[0].mxu0
      %v4701 = vpop.f32.mrb[0].mxu0
      %v4702 = vadd.f32 0.0, %v4701
      %v4703 = vpop.f32.mrb[0].mxu0
      %4704 = vmatprep.mubr.bf16.mxu0 0
      %4705 = vmatmul.mubr.bf16.gmra.mrb[0].mxu0 %v4498
      %v4706 = vpop.f32.mrb[0].mxu0
      %v4707 = vadd.f32 0.0, %v4706
      %v4708 = vpop.f32.mrb[0].mxu0
      %v4709 = vpop.f32.mrb[0].mxu0
      %v4710 = vadd.f32 0.0, %v4709
      %v4711 = vpop.f32.mrb[0].mxu0
      %4712 = vmatprep.mubr.bf16.mxu0 0
      %4713 = vmatmul.mubr.bf16.gmra.mrb[0].mxu0 %v4499
      %v4714 = vpop.f32.mrb[0].mxu0
      %v4715 = vadd.f32 0.0, %v4714
      %v4716 = vpop.f32.mrb[0].mxu0
      %v4717 = vpop.f32.mrb[0].mxu0
      %v4718 = vadd.f32 0.0, %v4717
      %v4719 = vpop.f32.mrb[0].mxu0
      %4720 = vmatprep.mubr.bf16.mxu0 0
      %4721 = vmatmul.mubr.bf16.gmra.mrb[0].mxu0 %v4500
      %v4722 = vpop.f32.mrb[0].mxu0
      %v4723 = vadd.f32 0.0, %v4722
      %v4724 = vpop.f32.mrb[0].mxu0
      %v4725 = vpop.f32.mrb[0].mxu0
      %v4726 = vadd.f32 0.0, %v4725
      %v4727 = vpop.f32.mrb[0].mxu0
      %4728 = vmatprep.mubr.bf16.mxu0 0
      %4729 = vmatmul.mubr.bf16.gmra.mrb[0].mxu0 %v4501
      %v4730 = vpop.f32.mrb[0].mxu0
      %v4731 = vadd.f32 0.0, %v4730
      %v4732 = vpop.f32.mrb[0].mxu0
      %v4733 = vpop.f32.mrb[0].mxu0
      %v4734 = vadd.f32 0.0, %v4733
      %v4735 = vpop.f32.mrb[0].mxu0
      %4736 = vmatprep.mubr.bf16.mxu0 0
      %4737 = vmatmul.mubr.bf16.gmra.mrb[0].mxu0 %v4502
      %v4738 = vpop.f32.mrb[0].mxu0
      %v4739 = vadd.f32 0.0, %v4738
      %v4740 = vpop.f32.mrb[0].mxu0
      %v4741 = vpop.f32.mrb[0].mxu0
      %v4742 = vadd.f32 0.0, %v4741
      %v4743 = vpop.f32.mrb[0].mxu0
      %4744 = vdwg.mxu0
      %v4745 = vadd.f32 %v4413, %v4603
      %v4746 = vadd.f32 %v4414, %v4606
      %v4747 = vadd.f32 %v4415, %v4611
      %v4748 = vadd.f32 %v4416, %v4614
      %v4749 = vadd.f32 %v4417, %v4619
      %v4750 = vadd.f32 %v4418, %v4622
      %v4751 = vadd.f32 %v4419, %v4627
      %v4752 = vadd.f32 %v4420, %v4630
      %v4753 = vadd.f32 %v4421, %v4635
      %v4754 = vadd.f32 %v4422, %v4638
      %v4755 = vadd.f32 %v4423, %v4643
      %v4756 = vadd.f32 %v4424, %v4646
      %v4757 = vadd.f32 %v4425, %v4651
      %v4758 = vadd.f32 %v4426, %v4654
      %v4759 = vadd.f32 %v4427, %v4659
      %v4760 = vadd.f32 %v4428, %v4662
      %v4761 = vadd.f32 %v4429, %v4667
      %v4762 = vadd.f32 %v4430, %v4670
      %v4763 = vadd.f32 %v4431, %v4675
      %v4764 = vadd.f32 %v4432, %v4678
      %v4765 = vadd.f32 %v4433, %v4683
      %v4766 = vadd.f32 %v4434, %v4686
      %v4767 = vadd.f32 %v4435, %v4691
      %v4768 = vadd.f32 %v4436, %v4694
      %v4769 = vadd.f32 %v4437, %v4699
      %v4770 = vadd.f32 %v4438, %v4702
      %v4771 = vadd.f32 %v4439, %v4707
      %v4772 = vadd.f32 %v4440, %v4710
      %v4773 = vadd.f32 %v4441, %v4715
      %v4774 = vadd.f32 %v4442, %v4718
      %v4775 = vadd.f32 %v4443, %v4723
      %v4776 = vadd.f32 %v4444, %v4726
      %v4777 = vadd.f32 %v4445, %v4731
      %v4778 = vadd.f32 %v4446, %v4734
      %v4779 = vadd.f32 %v4447, %v4739
      %v4780 = vadd.f32 %v4448, %v4742
      %v4781 = vld [vmem:[#allocation2 + $0x13] sm:$0xff]
      %v4782 = vld [vmem:[#allocation2 + $0x1b] sm:$0xff]
      %v4783 = vld [vmem:[#allocation2 + $0x23] sm:$0xff]
      %v4784 = vld [vmem:[#allocation2 + $0x2b] sm:$0xff]
      %v4785 = vld [vmem:[#allocation2 + $0x33] sm:$0xff]
      %v4786 = vld [vmem:[#allocation2 + $0x3b] sm:$0xff]
      %v4787 = vld [vmem:[#allocation2 + $0x43] sm:$0xff]
      %v4788 = vld [vmem:[#allocation2 + $0x4b] sm:$0xff]
      %v4789 = vld [vmem:[#allocation2 + $0x53] sm:$0xff]
      %v4790 = vld [vmem:[#allocation2 + $0x5b] sm:$0xff]
      %v4791 = vld [vmem:[#allocation2 + $0x63] sm:$0xff]
      %v4792 = vld [vmem:[#allocation2 + $0x6b] sm:$0xff]
      %v4793 = vld [vmem:[#allocation2 + $0x73] sm:$0xff]
      %v4794 = vld [vmem:[#allocation2 + $0x7b] sm:$0xff]
      %v4795 = vld [vmem:[#allocation2 + $0x83] sm:$0xff]
      %v4796 = vld [vmem:[#allocation2 + $0x8b] sm:$0xff]
      %v4797 = vld [vmem:[#allocation2 + $0x93] sm:$0xff]
      %v4798 = vld [vmem:[#allocation2 + $0x9b] sm:$0xff]
      %v4799 = vld [vmem:[#allocation2 + $0xa3] sm:$0xff]
      %v4800 = vld [vmem:[#allocation2 + $0xab] sm:$0xff]
      %v4801 = vld [vmem:[#allocation2 + $0xb3] sm:$0xff]
      %v4802 = vld [vmem:[#allocation2 + $0xbb] sm:$0xff]
      %v4803 = vld [vmem:[#allocation2 + $0xc3] sm:$0xff]
      %v4804 = vld [vmem:[#allocation2 + $0xcb] sm:$0xff]
      %v4805 = vld [vmem:[#allocation2 + $0xd3] sm:$0xff]
      %v4806 = vld [vmem:[#allocation2 + $0xdb] sm:$0xff]
      %v4807 = vld [vmem:[#allocation2 + $0xe3] sm:$0xff]
      %v4808 = vld [vmem:[#allocation2 + $0xeb] sm:$0xff]
      %v4809 = vld [vmem:[#allocation2 + $0xf3] sm:$0xff]
      %v4810 = vld [vmem:[#allocation2 + $0xfb] sm:$0xff]
      %v4811 = vld [vmem:[#allocation2 + $0x103] sm:$0xff]
      %v4812 = vld [vmem:[#allocation2 + $0x10b] sm:$0xff]
      %v4813 = vld [vmem:[#allocation2 + $0x113] sm:$0xff]
      %v4814 = vld [vmem:[#allocation2 + $0x11b] sm:$0xff]
      %v4815 = vld [vmem:[#allocation2 + $0x123] sm:$0xff]
      %v4816 = vld [vmem:[#allocation2 + $0x12b] sm:$0xff]
      %v4817 = vpack.c.bf16 %v4782, %v4781
      %v4818 = vpack.c.bf16 %v4784, %v4783
      %v4819 = vpack.c.bf16 %v4786, %v4785
      %v4820 = vpack.c.bf16 %v4788, %v4787
      %v4821 = vpack.c.bf16 %v4790, %v4789
      %v4822 = vpack.c.bf16 %v4792, %v4791
      %v4823 = vpack.c.bf16 %v4794, %v4793
      %v4824 = vpack.c.bf16 %v4796, %v4795
      %v4825 = vpack.c.bf16 %v4798, %v4797
      %v4826 = vpack.c.bf16 %v4800, %v4799
      %v4827 = vpack.c.bf16 %v4802, %v4801
      %v4828 = vpack.c.bf16 %v4804, %v4803
      %v4829 = vpack.c.bf16 %v4806, %v4805
      %v4830 = vpack.c.bf16 %v4808, %v4807
      %v4831 = vpack.c.bf16 %v4810, %v4809
      %v4832 = vpack.c.bf16 %v4812, %v4811
      %v4833 = vpack.c.bf16 %v4814, %v4813
      %v4834 = vpack.c.bf16 %v4816, %v4815
      %s4835 = scalar_lea.vmem %s2, 256
      %v4836 = vld [vmem:[%s4835] sm:$0xf]
      %v4837 = vld [vmem:[%s4835 + $0x4] sm:$0xf]
      %v4838 = vld [vmem:[%s4835 + $0x8] sm:$0xf]
      %v4839 = vld [vmem:[%s4835 + $0xc] sm:$0xf]
      %v4840 = vld [vmem:[%s4835 + $0x10] sm:$0xf]
      %v4841 = vld [vmem:[%s4835 + $0x14] sm:$0xf]
      %v4842 = vld [vmem:[%s4835 + $0x18] sm:$0xf]
      %v4843 = vld [vmem:[%s4835 + $0x1c] sm:$0xf]
      %v4844 = vld [vmem:[%s4835 + $0x20] sm:$0xf]
      %v4845 = vld [vmem:[%s4835 + $0x24] sm:$0xf]
      %v4846 = vld [vmem:[%s4835 + $0x28] sm:$0xf]
      %v4847 = vld [vmem:[%s4835 + $0x2c] sm:$0xf]
      %v4848 = vld [vmem:[%s4835 + $0x30] sm:$0xf]
      %v4849 = vld [vmem:[%s4835 + $0x34] sm:$0xf]
      %v4850 = vld [vmem:[%s4835 + $0x38] sm:$0xf]
      %v4851 = vld [vmem:[%s4835 + $0x3c] sm:$0xf]
      %v4868 = vunpack.c.l.b16 %v4836
      %v4869 = vunpack.c.l.b16 %v4837
      %v4870 = vunpack.c.l.b16 %v4838
      %v4871 = vunpack.c.l.b16 %v4839
      %v4872 = vunpack.c.l.b16 %v4840
      %v4873 = vunpack.c.l.b16 %v4841
      %v4874 = vunpack.c.l.b16 %v4842
      %v4875 = vunpack.c.l.b16 %v4843
      %v4876 = vunpack.c.l.b16 %v4844
      %v4877 = vunpack.c.l.b16 %v4845
      %v4878 = vunpack.c.l.b16 %v4846
      %v4879 = vunpack.c.l.b16 %v4847
      %v4880 = vunpack.c.l.b16 %v4848
      %v4881 = vunpack.c.l.b16 %v4849
      %v4882 = vunpack.c.l.b16 %v4850
      %v4883 = vunpack.c.l.b16 %v4851
      %v4884 = vpack.c.b16 %v4869, %v4868
      %v4885 = vpack.c.b16 %v4871, %v4870
      %v4886 = vpack.c.b16 %v4873, %v4872
      %v4887 = vpack.c.b16 %v4875, %v4874
      %v4888 = vpack.c.b16 %v4877, %v4876
      %v4889 = vpack.c.b16 %v4879, %v4878
      %v4890 = vpack.c.b16 %v4881, %v4880
      %v4891 = vpack.c.b16 %v4883, %v4882
      %4900 = vmatprep.subr.bf16.mxu0 0
      %4901 = vmatpush1.bf16.msra.mxu0 %v4884
      %4902 = vmatprep.subr.bf16.mxu0 0
      %4903 = vmatpush1.bf16.msra.mxu0 %v4885
      %4904 = vmatprep.subr.bf16.mxu0 0
      %4905 = vmatpush1.bf16.msra.mxu0 %v4886
      %4906 = vmatprep.subr.bf16.mxu0 0
      %4907 = vmatpush1.bf16.msra.mxu0 %v4887
      %4908 = vmatprep.subr.bf16.mxu0 0
      %4909 = vmatpush1.bf16.msra.mxu0 %v4888
      %4910 = vmatprep.subr.bf16.mxu0 0
      %4911 = vmatpush1.bf16.msra.mxu0 %v4889
      %4912 = vmatprep.subr.bf16.mxu0 0
      %4913 = vmatpush1.bf16.msra.mxu0 %v4890
      %4914 = vmatprep.subr.bf16.mxu0 0
      %4915 = vmatpush1.bf16.msra.mxu0 %v4891
      %4916 = vmatprep.subr.bf16.mxu0 0
      %4917 = vmatpush1.bf16.msra.mxu0 0
      %4918 = vmatprep.subr.bf16.mxu0 0
      %4919 = vmatpush1.bf16.msra.mxu0 0
      %4920 = vmatprep.subr.bf16.mxu0 0
      %4921 = vmatpush1.bf16.msra.mxu0 0
      %4922 = vmatprep.subr.bf16.mxu0 0
      %4923 = vmatpush1.bf16.msra.mxu0 0
      %4924 = vmatprep.subr.bf16.mxu0 0
      %4925 = vmatpush1.bf16.msra.mxu0 0
      %4926 = vmatprep.subr.bf16.mxu0 0
      %4927 = vmatpush1.bf16.msra.mxu0 0
      %4928 = vmatprep.subr.bf16.mxu0 0
      %4929 = vmatpush1.bf16.msra.mxu0 0
      %4930 = vmatprep.subr.bf16.mxu0 0
      %4931 = vmatpush1.bf16.msra.mxu0 0
      %4932 = vmatprep.mubr.bf16.mxu0 0
      %4933 = vmatmul.mubr.bf16.gmra.mrb[0].mxu0 %v4817
      %v4934 = vpop.f32.mrb[0].mxu0
      %v4935 = vadd.f32 0.0, %v4934
      %v4936 = vpop.f32.mrb[0].mxu0
      %v4937 = vpop.f32.mrb[0].mxu0
      %v4938 = vadd.f32 0.0, %v4937
      %v4939 = vpop.f32.mrb[0].mxu0
      %4940 = vmatprep.mubr.bf16.mxu0 0
      %4941 = vmatmul.mubr.bf16.gmra.mrb[0].mxu0 %v4818
      %v4942 = vpop.f32.mrb[0].mxu0
      %v4943 = vadd.f32 0.0, %v4942
      %v4944 = vpop.f32.mrb[0].mxu0
      %v4945 = vpop.f32.mrb[0].mxu0
      %v4946 = vadd.f32 0.0, %v4945
      %v4947 = vpop.f32.mrb[0].mxu0
      %4948 = vmatprep.mubr.bf16.mxu0 0
      %4949 = vmatmul.mubr.bf16.gmra.mrb[0].mxu0 %v4819
      %v4950 = vpop.f32.mrb[0].mxu0
      %v4951 = vadd.f32 0.0, %v4950
      %v4952 = vpop.f32.mrb[0].mxu0
      %v4953 = vpop.f32.mrb[0].mxu0
      %v4954 = vadd.f32 0.0, %v4953
      %v4955 = vpop.f32.mrb[0].mxu0
      %4956 = vmatprep.mubr.bf16.mxu0 0
      %4957 = vmatmul.mubr.bf16.gmra.mrb[0].mxu0 %v4820
      %v4958 = vpop.f32.mrb[0].mxu0
      %v4959 = vadd.f32 0.0, %v4958
      %v4960 = vpop.f32.mrb[0].mxu0
      %v4961 = vpop.f32.mrb[0].mxu0
      %v4962 = vadd.f32 0.0, %v4961
      %v4963 = vpop.f32.mrb[0].mxu0
      %4964 = vmatprep.mubr.bf16.mxu0 0
      %4965 = vmatmul.mubr.bf16.gmra.mrb[0].mxu0 %v4821
      %v4966 = vpop.f32.mrb[0].mxu0
      %v4967 = vadd.f32 0.0, %v4966
      %v4968 = vpop.f32.mrb[0].mxu0
      %v4969 = vpop.f32.mrb[0].mxu0
      %v4970 = vadd.f32 0.0, %v4969
      %v4971 = vpop.f32.mrb[0].mxu0
      %4972 = vmatprep.mubr.bf16.mxu0 0
      %4973 = vmatmul.mubr.bf16.gmra.mrb[0].mxu0 %v4822
      %v4974 = vpop.f32.mrb[0].mxu0
      %v4975 = vadd.f32 0.0, %v4974
      %v4976 = vpop.f32.mrb[0].mxu0
      %v4977 = vpop.f32.mrb[0].mxu0
      %v4978 = vadd.f32 0.0, %v4977
      %v4979 = vpop.f32.mrb[0].mxu0
      %4980 = vmatprep.mubr.bf16.mxu0 0
      %4981 = vmatmul.mubr.bf16.gmra.mrb[0].mxu0 %v4823
      %v4982 = vpop.f32.mrb[0].mxu0
      %v4983 = vadd.f32 0.0, %v4982
      %v4984 = vpop.f32.mrb[0].mxu0
      %v4985 = vpop.f32.mrb[0].mxu0
      %v4986 = vadd.f32 0.0, %v4985
      %v4987 = vpop.f32.mrb[0].mxu0
      %4988 = vmatprep.mubr.bf16.mxu0 0
      %4989 = vmatmul.mubr.bf16.gmra.mrb[0].mxu0 %v4824
      %v4990 = vpop.f32.mrb[0].mxu0
      %v4991 = vadd.f32 0.0, %v4990
      %v4992 = vpop.f32.mrb[0].mxu0
      %v4993 = vpop.f32.mrb[0].mxu0
      %v4994 = vadd.f32 0.0, %v4993
      %v4995 = vpop.f32.mrb[0].mxu0
      %4996 = vmatprep.mubr.bf16.mxu0 0
      %4997 = vmatmul.mubr.bf16.gmra.mrb[0].mxu0 %v4825
      %v4998 = vpop.f32.mrb[0].mxu0
      %v4999 = vadd.f32 0.0, %v4998
      %v5000 = vpop.f32.mrb[0].mxu0
      %v5001 = vpop.f32.mrb[0].mxu0
      %v5002 = vadd.f32 0.0, %v5001
      %v5003 = vpop.f32.mrb[0].mxu0
      %5004 = vmatprep.mubr.bf16.mxu0 0
      %5005 = vmatmul.mubr.bf16.gmra.mrb[0].mxu0 %v4826
      %v5006 = vpop.f32.mrb[0].mxu0
      %v5007 = vadd.f32 0.0, %v5006
      %v5008 = vpop.f32.mrb[0].mxu0
      %v5009 = vpop.f32.mrb[0].mxu0
      %v5010 = vadd.f32 0.0, %v5009
      %v5011 = vpop.f32.mrb[0].mxu0
      %5012 = vmatprep.mubr.bf16.mxu0 0
      %5013 = vmatmul.mubr.bf16.gmra.mrb[0].mxu0 %v4827
      %v5014 = vpop.f32.mrb[0].mxu0
      %v5015 = vadd.f32 0.0, %v5014
      %v5016 = vpop.f32.mrb[0].mxu0
      %v5017 = vpop.f32.mrb[0].mxu0
      %v5018 = vadd.f32 0.0, %v5017
      %v5019 = vpop.f32.mrb[0].mxu0
      %5020 = vmatprep.mubr.bf16.mxu0 0
      %5021 = vmatmul.mubr.bf16.gmra.mrb[0].mxu0 %v4828
      %v5022 = vpop.f32.mrb[0].mxu0
      %v5023 = vadd.f32 0.0, %v5022
      %v5024 = vpop.f32.mrb[0].mxu0
      %v5025 = vpop.f32.mrb[0].mxu0
      %v5026 = vadd.f32 0.0, %v5025
      %v5027 = vpop.f32.mrb[0].mxu0
      %5028 = vmatprep.mubr.bf16.mxu0 0
      %5029 = vmatmul.mubr.bf16.gmra.mrb[0].mxu0 %v4829
      %v5030 = vpop.f32.mrb[0].mxu0
      %v5031 = vadd.f32 0.0, %v5030
      %v5032 = vpop.f32.mrb[0].mxu0
      %v5033 = vpop.f32.mrb[0].mxu0
      %v5034 = vadd.f32 0.0, %v5033
      %v5035 = vpop.f32.mrb[0].mxu0
      %5036 = vmatprep.mubr.bf16.mxu0 0
      %5037 = vmatmul.mubr.bf16.gmra.mrb[0].mxu0 %v4830
      %v5038 = vpop.f32.mrb[0].mxu0
      %v5039 = vadd.f32 0.0, %v5038
      %v5040 = vpop.f32.mrb[0].mxu0
      %v5041 = vpop.f32.mrb[0].mxu0
      %v5042 = vadd.f32 0.0, %v5041
      %v5043 = vpop.f32.mrb[0].mxu0
      %5044 = vmatprep.mubr.bf16.mxu0 0
      %5045 = vmatmul.mubr.bf16.gmra.mrb[0].mxu0 %v4831
      %v5046 = vpop.f32.mrb[0].mxu0
      %v5047 = vadd.f32 0.0, %v5046
      %v5048 = vpop.f32.mrb[0].mxu0
      %v5049 = vpop.f32.mrb[0].mxu0
      %v5050 = vadd.f32 0.0, %v5049
      %v5051 = vpop.f32.mrb[0].mxu0
      %5052 = vmatprep.mubr.bf16.mxu0 0
      %5053 = vmatmul.mubr.bf16.gmra.mrb[0].mxu0 %v4832
      %v5054 = vpop.f32.mrb[0].mxu0
      %v5055 = vadd.f32 0.0, %v5054
      %v5056 = vpop.f32.mrb[0].mxu0
      %v5057 = vpop.f32.mrb[0].mxu0
      %v5058 = vadd.f32 0.0, %v5057
      %v5059 = vpop.f32.mrb[0].mxu0
      %5060 = vmatprep.mubr.bf16.mxu0 0
      %5061 = vmatmul.mubr.bf16.gmra.mrb[0].mxu0 %v4833
      %v5062 = vpop.f32.mrb[0].mxu0
      %v5063 = vadd.f32 0.0, %v5062
      %v5064 = vpop.f32.mrb[0].mxu0
      %v5065 = vpop.f32.mrb[0].mxu0
      %v5066 = vadd.f32 0.0, %v5065
      %v5067 = vpop.f32.mrb[0].mxu0
      %5068 = vmatprep.mubr.bf16.mxu0 0
      %5069 = vmatmul.mubr.bf16.gmra.mrb[0].mxu0 %v4834
      %v5070 = vpop.f32.mrb[0].mxu0
      %v5071 = vadd.f32 0.0, %v5070
      %v5072 = vpop.f32.mrb[0].mxu0
      %v5073 = vpop.f32.mrb[0].mxu0
      %v5074 = vadd.f32 0.0, %v5073
      %v5075 = vpop.f32.mrb[0].mxu0
      %5076 = vdwg.mxu0
      %v5077 = vadd.f32 %v4745, %v4935
      %v5078 = vadd.f32 %v4746, %v4938
      %v5079 = vadd.f32 %v4747, %v4943
      %v5080 = vadd.f32 %v4748, %v4946
      %v5081 = vadd.f32 %v4749, %v4951
      %v5082 = vadd.f32 %v4750, %v4954
      %v5083 = vadd.f32 %v4751, %v4959
      %v5084 = vadd.f32 %v4752, %v4962
      %v5085 = vadd.f32 %v4753, %v4967
      %v5086 = vadd.f32 %v4754, %v4970
      %v5087 = vadd.f32 %v4755, %v4975
      %v5088 = vadd.f32 %v4756, %v4978
      %v5089 = vadd.f32 %v4757, %v4983
      %v5090 = vadd.f32 %v4758, %v4986
      %v5091 = vadd.f32 %v4759, %v4991
      %v5092 = vadd.f32 %v4760, %v4994
      %v5093 = vadd.f32 %v4761, %v4999
      %v5094 = vadd.f32 %v4762, %v5002
      %v5095 = vadd.f32 %v4763, %v5007
      %v5096 = vadd.f32 %v4764, %v5010
      %v5097 = vadd.f32 %v4765, %v5015
      %v5098 = vadd.f32 %v4766, %v5018
      %v5099 = vadd.f32 %v4767, %v5023
      %v5100 = vadd.f32 %v4768, %v5026
      %v5101 = vadd.f32 %v4769, %v5031
      %v5102 = vadd.f32 %v4770, %v5034
      %v5103 = vadd.f32 %v4771, %v5039
      %v5104 = vadd.f32 %v4772, %v5042
      %v5105 = vadd.f32 %v4773, %v5047
      %v5106 = vadd.f32 %v4774, %v5050
      %v5107 = vadd.f32 %v4775, %v5055
      %v5108 = vadd.f32 %v4776, %v5058
      %v5109 = vadd.f32 %v4777, %v5063
      %v5110 = vadd.f32 %v4778, %v5066
      %v5111 = vadd.f32 %v4779, %v5071
      %v5112 = vadd.f32 %v4780, %v5074
      %v5113 = vld [vmem:[#allocation2 + $0x14] sm:$0xff]
      %v5114 = vld [vmem:[#allocation2 + $0x1c] sm:$0xff]
      %v5115 = vld [vmem:[#allocation2 + $0x24] sm:$0xff]
      %v5116 = vld [vmem:[#allocation2 + $0x2c] sm:$0xff]
      %v5117 = vld [vmem:[#allocation2 + $0x34] sm:$0xff]
      %v5118 = vld [vmem:[#allocation2 + $0x3c] sm:$0xff]
      %v5119 = vld [vmem:[#allocation2 + $0x44] sm:$0xff]
      %v5120 = vld [vmem:[#allocation2 + $0x4c] sm:$0xff]
      %v5121 = vld [vmem:[#allocation2 + $0x54] sm:$0xff]
      %v5122 = vld [vmem:[#allocation2 + $0x5c] sm:$0xff]
      %v5123 = vld [vmem:[#allocation2 + $0x64] sm:$0xff]
      %v5124 = vld [vmem:[#allocation2 + $0x6c] sm:$0xff]
      %v5125 = vld [vmem:[#allocation2 + $0x74] sm:$0xff]
      %v5126 = vld [vmem:[#allocation2 + $0x7c] sm:$0xff]
      %v5127 = vld [vmem:[#allocation2 + $0x84] sm:$0xff]
      %v5128 = vld [vmem:[#allocation2 + $0x8c] sm:$0xff]
      %v5129 = vld [vmem:[#allocation2 + $0x94] sm:$0xff]
      %v5130 = vld [vmem:[#allocation2 + $0x9c] sm:$0xff]
      %v5131 = vld [vmem:[#allocation2 + $0xa4] sm:$0xff]
      %v5132 = vld [vmem:[#allocation2 + $0xac] sm:$0xff]
      %v5133 = vld [vmem:[#allocation2 + $0xb4] sm:$0xff]
      %v5134 = vld [vmem:[#allocation2 + $0xbc] sm:$0xff]
      %v5135 = vld [vmem:[#allocation2 + $0xc4] sm:$0xff]
      %v5136 = vld [vmem:[#allocation2 + $0xcc] sm:$0xff]
      %v5137 = vld [vmem:[#allocation2 + $0xd4] sm:$0xff]
      %v5138 = vld [vmem:[#allocation2 + $0xdc] sm:$0xff]
      %v5139 = vld [vmem:[#allocation2 + $0xe4] sm:$0xff]
      %v5140 = vld [vmem:[#allocation2 + $0xec] sm:$0xff]
      %v5141 = vld [vmem:[#allocation2 + $0xf4] sm:$0xff]
      %v5142 = vld [vmem:[#allocation2 + $0xfc] sm:$0xff]
      %v5143 = vld [vmem:[#allocation2 + $0x104] sm:$0xff]
      %v5144 = vld [vmem:[#allocation2 + $0x10c] sm:$0xff]
      %v5145 = vld [vmem:[#allocation2 + $0x114] sm:$0xff]
      %v5146 = vld [vmem:[#allocation2 + $0x11c] sm:$0xff]
      %v5147 = vld [vmem:[#allocation2 + $0x124] sm:$0xff]
      %v5148 = vld [vmem:[#allocation2 + $0x12c] sm:$0xff]
      %v5149 = vpack.c.bf16 %v5114, %v5113
      %v5150 = vpack.c.bf16 %v5116, %v5115
      %v5151 = vpack.c.bf16 %v5118, %v5117
      %v5152 = vpack.c.bf16 %v5120, %v5119
      %v5153 = vpack.c.bf16 %v5122, %v5121
      %v5154 = vpack.c.bf16 %v5124, %v5123
      %v5155 = vpack.c.bf16 %v5126, %v5125
      %v5156 = vpack.c.bf16 %v5128, %v5127
      %v5157 = vpack.c.bf16 %v5130, %v5129
      %v5158 = vpack.c.bf16 %v5132, %v5131
      %v5159 = vpack.c.bf16 %v5134, %v5133
      %v5160 = vpack.c.bf16 %v5136, %v5135
      %v5161 = vpack.c.bf16 %v5138, %v5137
      %v5162 = vpack.c.bf16 %v5140, %v5139
      %v5163 = vpack.c.bf16 %v5142, %v5141
      %v5164 = vpack.c.bf16 %v5144, %v5143
      %v5165 = vpack.c.bf16 %v5146, %v5145
      %v5166 = vpack.c.bf16 %v5148, %v5147
      %s5167 = scalar_lea.vmem %s2, 320
      %v5168 = vld [vmem:[%s5167] sm:$0xf]
      %v5169 = vld [vmem:[%s5167 + $0x4] sm:$0xf]
      %v5170 = vld [vmem:[%s5167 + $0x8] sm:$0xf]
      %v5171 = vld [vmem:[%s5167 + $0xc] sm:$0xf]
      %v5172 = vld [vmem:[%s5167 + $0x10] sm:$0xf]
      %v5173 = vld [vmem:[%s5167 + $0x14] sm:$0xf]
      %v5174 = vld [vmem:[%s5167 + $0x18] sm:$0xf]
      %v5175 = vld [vmem:[%s5167 + $0x1c] sm:$0xf]
      %v5176 = vld [vmem:[%s5167 + $0x20] sm:$0xf]
      %v5177 = vld [vmem:[%s5167 + $0x24] sm:$0xf]
      %v5178 = vld [vmem:[%s5167 + $0x28] sm:$0xf]
      %v5179 = vld [vmem:[%s5167 + $0x2c] sm:$0xf]
      %v5180 = vld [vmem:[%s5167 + $0x30] sm:$0xf]
      %v5181 = vld [vmem:[%s5167 + $0x34] sm:$0xf]
      %v5182 = vld [vmem:[%s5167 + $0x38] sm:$0xf]
      %v5183 = vld [vmem:[%s5167 + $0x3c] sm:$0xf]
      %v5200 = vunpack.c.l.b16 %v5168
      %v5201 = vunpack.c.l.b16 %v5169
      %v5202 = vunpack.c.l.b16 %v5170
      %v5203 = vunpack.c.l.b16 %v5171
      %v5204 = vunpack.c.l.b16 %v5172
      %v5205 = vunpack.c.l.b16 %v5173
      %v5206 = vunpack.c.l.b16 %v5174
      %v5207 = vunpack.c.l.b16 %v5175
      %v5208 = vunpack.c.l.b16 %v5176
      %v5209 = vunpack.c.l.b16 %v5177
      %v5210 = vunpack.c.l.b16 %v5178
      %v5211 = vunpack.c.l.b16 %v5179
      %v5212 = vunpack.c.l.b16 %v5180
      %v5213 = vunpack.c.l.b16 %v5181
      %v5214 = vunpack.c.l.b16 %v5182
      %v5215 = vunpack.c.l.b16 %v5183
      %v5216 = vpack.c.b16 %v5201, %v5200
      %v5217 = vpack.c.b16 %v5203, %v5202
      %v5218 = vpack.c.b16 %v5205, %v5204
      %v5219 = vpack.c.b16 %v5207, %v5206
      %v5220 = vpack.c.b16 %v5209, %v5208
      %v5221 = vpack.c.b16 %v5211, %v5210
      %v5222 = vpack.c.b16 %v5213, %v5212
      %v5223 = vpack.c.b16 %v5215, %v5214
      %5232 = vmatprep.subr.bf16.mxu0 0
      %5233 = vmatpush1.bf16.msra.mxu0 %v5216
      %5234 = vmatprep.subr.bf16.mxu0 0
      %5235 = vmatpush1.bf16.msra.mxu0 %v5217
      %5236 = vmatprep.subr.bf16.mxu0 0
      %5237 = vmatpush1.bf16.msra.mxu0 %v5218
      %5238 = vmatprep.subr.bf16.mxu0 0
      %5239 = vmatpush1.bf16.msra.mxu0 %v5219
      %5240 = vmatprep.subr.bf16.mxu0 0
      %5241 = vmatpush1.bf16.msra.mxu0 %v5220
      %5242 = vmatprep.subr.bf16.mxu0 0
      %5243 = vmatpush1.bf16.msra.mxu0 %v5221
      %5244 = vmatprep.subr.bf16.mxu0 0
      %5245 = vmatpush1.bf16.msra.mxu0 %v5222
      %5246 = vmatprep.subr.bf16.mxu0 0
      %5247 = vmatpush1.bf16.msra.mxu0 %v5223
      %5248 = vmatprep.subr.bf16.mxu0 0
      %5249 = vmatpush1.bf16.msra.mxu0 0
      %5250 = vmatprep.subr.bf16.mxu0 0
      %5251 = vmatpush1.bf16.msra.mxu0 0
      %5252 = vmatprep.subr.bf16.mxu0 0
      %5253 = vmatpush1.bf16.msra.mxu0 0
      %5254 = vmatprep.subr.bf16.mxu0 0
      %5255 = vmatpush1.bf16.msra.mxu0 0
      %5256 = vmatprep.subr.bf16.mxu0 0
      %5257 = vmatpush1.bf16.msra.mxu0 0
      %5258 = vmatprep.subr.bf16.mxu0 0
      %5259 = vmatpush1.bf16.msra.mxu0 0
      %5260 = vmatprep.subr.bf16.mxu0 0
      %5261 = vmatpush1.bf16.msra.mxu0 0
      %5262 = vmatprep.subr.bf16.mxu0 0
      %5263 = vmatpush1.bf16.msra.mxu0 0
      %5264 = vmatprep.mubr.bf16.mxu0 0
      %5265 = vmatmul.mubr.bf16.gmra.mrb[0].mxu0 %v5149
      %v5266 = vpop.f32.mrb[0].mxu0
      %v5267 = vadd.f32 0.0, %v5266
      %v5268 = vpop.f32.mrb[0].mxu0
      %v5269 = vpop.f32.mrb[0].mxu0
      %v5270 = vadd.f32 0.0, %v5269
      %v5271 = vpop.f32.mrb[0].mxu0
      %5272 = vmatprep.mubr.bf16.mxu0 0
      %5273 = vmatmul.mubr.bf16.gmra.mrb[0].mxu0 %v5150
      %v5274 = vpop.f32.mrb[0].mxu0
      %v5275 = vadd.f32 0.0, %v5274
      %v5276 = vpop.f32.mrb[0].mxu0
      %v5277 = vpop.f32.mrb[0].mxu0
      %v5278 = vadd.f32 0.0, %v5277
      %v5279 = vpop.f32.mrb[0].mxu0
      %5280 = vmatprep.mubr.bf16.mxu0 0
      %5281 = vmatmul.mubr.bf16.gmra.mrb[0].mxu0 %v5151
      %v5282 = vpop.f32.mrb[0].mxu0
      %v5283 = vadd.f32 0.0, %v5282
      %v5284 = vpop.f32.mrb[0].mxu0
      %v5285 = vpop.f32.mrb[0].mxu0
      %v5286 = vadd.f32 0.0, %v5285
      %v5287 = vpop.f32.mrb[0].mxu0
      %5288 = vmatprep.mubr.bf16.mxu0 0
      %5289 = vmatmul.mubr.bf16.gmra.mrb[0].mxu0 %v5152
      %v5290 = vpop.f32.mrb[0].mxu0
      %v5291 = vadd.f32 0.0, %v5290
      %v5292 = vpop.f32.mrb[0].mxu0
      %v5293 = vpop.f32.mrb[0].mxu0
      %v5294 = vadd.f32 0.0, %v5293
      %v5295 = vpop.f32.mrb[0].mxu0
      %5296 = vmatprep.mubr.bf16.mxu0 0
      %5297 = vmatmul.mubr.bf16.gmra.mrb[0].mxu0 %v5153
      %v5298 = vpop.f32.mrb[0].mxu0
      %v5299 = vadd.f32 0.0, %v5298
      %v5300 = vpop.f32.mrb[0].mxu0
      %v5301 = vpop.f32.mrb[0].mxu0
      %v5302 = vadd.f32 0.0, %v5301
      %v5303 = vpop.f32.mrb[0].mxu0
      %5304 = vmatprep.mubr.bf16.mxu0 0
      %5305 = vmatmul.mubr.bf16.gmra.mrb[0].mxu0 %v5154
      %v5306 = vpop.f32.mrb[0].mxu0
      %v5307 = vadd.f32 0.0, %v5306
      %v5308 = vpop.f32.mrb[0].mxu0
      %v5309 = vpop.f32.mrb[0].mxu0
      %v5310 = vadd.f32 0.0, %v5309
      %v5311 = vpop.f32.mrb[0].mxu0
      %5312 = vmatprep.mubr.bf16.mxu0 0
      %5313 = vmatmul.mubr.bf16.gmra.mrb[0].mxu0 %v5155
      %v5314 = vpop.f32.mrb[0].mxu0
      %v5315 = vadd.f32 0.0, %v5314
      %v5316 = vpop.f32.mrb[0].mxu0
      %v5317 = vpop.f32.mrb[0].mxu0
      %v5318 = vadd.f32 0.0, %v5317
      %v5319 = vpop.f32.mrb[0].mxu0
      %5320 = vmatprep.mubr.bf16.mxu0 0
      %5321 = vmatmul.mubr.bf16.gmra.mrb[0].mxu0 %v5156
      %v5322 = vpop.f32.mrb[0].mxu0
      %v5323 = vadd.f32 0.0, %v5322
      %v5324 = vpop.f32.mrb[0].mxu0
      %v5325 = vpop.f32.mrb[0].mxu0
      %v5326 = vadd.f32 0.0, %v5325
      %v5327 = vpop.f32.mrb[0].mxu0
      %5328 = vmatprep.mubr.bf16.mxu0 0
      %5329 = vmatmul.mubr.bf16.gmra.mrb[0].mxu0 %v5157
      %v5330 = vpop.f32.mrb[0].mxu0
      %v5331 = vadd.f32 0.0, %v5330
      %v5332 = vpop.f32.mrb[0].mxu0
      %v5333 = vpop.f32.mrb[0].mxu0
      %v5334 = vadd.f32 0.0, %v5333
      %v5335 = vpop.f32.mrb[0].mxu0
      %5336 = vmatprep.mubr.bf16.mxu0 0
      %5337 = vmatmul.mubr.bf16.gmra.mrb[0].mxu0 %v5158
      %v5338 = vpop.f32.mrb[0].mxu0
      %v5339 = vadd.f32 0.0, %v5338
      %v5340 = vpop.f32.mrb[0].mxu0
      %v5341 = vpop.f32.mrb[0].mxu0
      %v5342 = vadd.f32 0.0, %v5341
      %v5343 = vpop.f32.mrb[0].mxu0
      %5344 = vmatprep.mubr.bf16.mxu0 0
      %5345 = vmatmul.mubr.bf16.gmra.mrb[0].mxu0 %v5159
      %v5346 = vpop.f32.mrb[0].mxu0
      %v5347 = vadd.f32 0.0, %v5346
      %v5348 = vpop.f32.mrb[0].mxu0
      %v5349 = vpop.f32.mrb[0].mxu0
      %v5350 = vadd.f32 0.0, %v5349
      %v5351 = vpop.f32.mrb[0].mxu0
      %5352 = vmatprep.mubr.bf16.mxu0 0
      %5353 = vmatmul.mubr.bf16.gmra.mrb[0].mxu0 %v5160
      %v5354 = vpop.f32.mrb[0].mxu0
      %v5355 = vadd.f32 0.0, %v5354
      %v5356 = vpop.f32.mrb[0].mxu0
      %v5357 = vpop.f32.mrb[0].mxu0
      %v5358 = vadd.f32 0.0, %v5357
      %v5359 = vpop.f32.mrb[0].mxu0
      %5360 = vmatprep.mubr.bf16.mxu0 0
      %5361 = vmatmul.mubr.bf16.gmra.mrb[0].mxu0 %v5161
      %v5362 = vpop.f32.mrb[0].mxu0
      %v5363 = vadd.f32 0.0, %v5362
      %v5364 = vpop.f32.mrb[0].mxu0
      %v5365 = vpop.f32.mrb[0].mxu0
      %v5366 = vadd.f32 0.0, %v5365
      %v5367 = vpop.f32.mrb[0].mxu0
      %5368 = vmatprep.mubr.bf16.mxu0 0
      %5369 = vmatmul.mubr.bf16.gmra.mrb[0].mxu0 %v5162
      %v5370 = vpop.f32.mrb[0].mxu0
      %v5371 = vadd.f32 0.0, %v5370
      %v5372 = vpop.f32.mrb[0].mxu0
      %v5373 = vpop.f32.mrb[0].mxu0
      %v5374 = vadd.f32 0.0, %v5373
      %v5375 = vpop.f32.mrb[0].mxu0
      %5376 = vmatprep.mubr.bf16.mxu0 0
      %5377 = vmatmul.mubr.bf16.gmra.mrb[0].mxu0 %v5163
      %v5378 = vpop.f32.mrb[0].mxu0
      %v5379 = vadd.f32 0.0, %v5378
      %v5380 = vpop.f32.mrb[0].mxu0
      %v5381 = vpop.f32.mrb[0].mxu0
      %v5382 = vadd.f32 0.0, %v5381
      %v5383 = vpop.f32.mrb[0].mxu0
      %5384 = vmatprep.mubr.bf16.mxu0 0
      %5385 = vmatmul.mubr.bf16.gmra.mrb[0].mxu0 %v5164
      %v5386 = vpop.f32.mrb[0].mxu0
      %v5387 = vadd.f32 0.0, %v5386
      %v5388 = vpop.f32.mrb[0].mxu0
      %v5389 = vpop.f32.mrb[0].mxu0
      %v5390 = vadd.f32 0.0, %v5389
      %v5391 = vpop.f32.mrb[0].mxu0
      %5392 = vmatprep.mubr.bf16.mxu0 0
      %5393 = vmatmul.mubr.bf16.gmra.mrb[0].mxu0 %v5165
      %v5394 = vpop.f32.mrb[0].mxu0
      %v5395 = vadd.f32 0.0, %v5394
      %v5396 = vpop.f32.mrb[0].mxu0
      %v5397 = vpop.f32.mrb[0].mxu0
      %v5398 = vadd.f32 0.0, %v5397
      %v5399 = vpop.f32.mrb[0].mxu0
      %5400 = vmatprep.mubr.bf16.mxu0 0
      %5401 = vmatmul.mubr.bf16.gmra.mrb[0].mxu0 %v5166
      %v5402 = vpop.f32.mrb[0].mxu0
      %v5403 = vadd.f32 0.0, %v5402
      %v5404 = vpop.f32.mrb[0].mxu0
      %v5405 = vpop.f32.mrb[0].mxu0
      %v5406 = vadd.f32 0.0, %v5405
      %v5407 = vpop.f32.mrb[0].mxu0
      %5408 = vdwg.mxu0
      %v5409 = vadd.f32 %v5077, %v5267
      %v5410 = vadd.f32 %v5078, %v5270
      %v5411 = vadd.f32 %v5079, %v5275
      %v5412 = vadd.f32 %v5080, %v5278
      %v5413 = vadd.f32 %v5081, %v5283
      %v5414 = vadd.f32 %v5082, %v5286
      %v5415 = vadd.f32 %v5083, %v5291
      %v5416 = vadd.f32 %v5084, %v5294
      %v5417 = vadd.f32 %v5085, %v5299
      %v5418 = vadd.f32 %v5086, %v5302
      %v5419 = vadd.f32 %v5087, %v5307
      %v5420 = vadd.f32 %v5088, %v5310
      %v5421 = vadd.f32 %v5089, %v5315
      %v5422 = vadd.f32 %v5090, %v5318
      %v5423 = vadd.f32 %v5091, %v5323
      %v5424 = vadd.f32 %v5092, %v5326
      %v5425 = vadd.f32 %v5093, %v5331
      %v5426 = vadd.f32 %v5094, %v5334
      %v5427 = vadd.f32 %v5095, %v5339
      %v5428 = vadd.f32 %v5096, %v5342
      %v5429 = vadd.f32 %v5097, %v5347
      %v5430 = vadd.f32 %v5098, %v5350
      %v5431 = vadd.f32 %v5099, %v5355
      %v5432 = vadd.f32 %v5100, %v5358
      %v5433 = vadd.f32 %v5101, %v5363
      %v5434 = vadd.f32 %v5102, %v5366
      %v5435 = vadd.f32 %v5103, %v5371
      %v5436 = vadd.f32 %v5104, %v5374
      %v5437 = vadd.f32 %v5105, %v5379
      %v5438 = vadd.f32 %v5106, %v5382
      %v5439 = vadd.f32 %v5107, %v5387
      %v5440 = vadd.f32 %v5108, %v5390
      %v5441 = vadd.f32 %v5109, %v5395
      %v5442 = vadd.f32 %v5110, %v5398
      %v5443 = vadd.f32 %v5111, %v5403
      %v5444 = vadd.f32 %v5112, %v5406
      %v5445 = vld [vmem:[#allocation2 + $0x24] sm:$0xff]
      %v5446 = vld [vmem:[#allocation2 + $0x2c] sm:$0xff]
      %v5447 = vld [vmem:[#allocation2 + $0x34] sm:$0xff]
      %v5448 = vld [vmem:[#allocation2 + $0x3c] sm:$0xff]
      %v5449 = vld [vmem:[#allocation2 + $0x44] sm:$0xff]
      %v5450 = vld [vmem:[#allocation2 + $0x4c] sm:$0xff]
      %v5451 = vld [vmem:[#allocation2 + $0x54] sm:$0xff]
      %v5452 = vld [vmem:[#allocation2 + $0x5c] sm:$0xff]
      %v5453 = vld [vmem:[#allocation2 + $0x64] sm:$0xff]
      %v5454 = vld [vmem:[#allocation2 + $0x6c] sm:$0xff]
      %v5455 = vld [vmem:[#allocation2 + $0x74] sm:$0xff]
      %v5456 = vld [vmem:[#allocation2 + $0x7c] sm:$0xff]
      %v5457 = vld [vmem:[#allocation2 + $0x84] sm:$0xff]
      %v5458 = vld [vmem:[#allocation2 + $0x8c] sm:$0xff]
      %v5459 = vld [vmem:[#allocation2 + $0x94] sm:$0xff]
      %v5460 = vld [vmem:[#allocation2 + $0x9c] sm:$0xff]
      %v5461 = vld [vmem:[#allocation2 + $0xa4] sm:$0xff]
      %v5462 = vld [vmem:[#allocation2 + $0xac] sm:$0xff]
      %v5463 = vld [vmem:[#allocation2 + $0xb4] sm:$0xff]
      %v5464 = vld [vmem:[#allocation2 + $0xbc] sm:$0xff]
      %v5465 = vld [vmem:[#allocation2 + $0xc4] sm:$0xff]
      %v5466 = vld [vmem:[#allocation2 + $0xcc] sm:$0xff]
      %v5467 = vld [vmem:[#allocation2 + $0xd4] sm:$0xff]
      %v5468 = vld [vmem:[#allocation2 + $0xdc] sm:$0xff]
      %v5469 = vld [vmem:[#allocation2 + $0xe4] sm:$0xff]
      %v5470 = vld [vmem:[#allocation2 + $0xec] sm:$0xff]
      %v5471 = vld [vmem:[#allocation2 + $0xf4] sm:$0xff]
      %v5472 = vld [vmem:[#allocation2 + $0xfc] sm:$0xff]
      %v5473 = vld [vmem:[#allocation2 + $0x104] sm:$0xff]
      %v5474 = vld [vmem:[#allocation2 + $0x10c] sm:$0xff]
      %v5475 = vld [vmem:[#allocation2 + $0x114] sm:$0xff]
      %v5476 = vld [vmem:[#allocation2 + $0x11c] sm:$0xff]
      %v5477 = vld [vmem:[#allocation2 + $0x124] sm:$0xff]
      %v5478 = vld [vmem:[#allocation2 + $0x12c] sm:$0xff]
      %v5479 = vld [vmem:[#allocation2 + $0x134] sm:$0xff]
      %v5480 = vld [vmem:[#allocation2 + $0x13c] sm:$0xff]
      %v5481 = vpack.c.bf16 %v5446, %v5445
      %v5482 = vpack.c.bf16 %v5448, %v5447
      %v5483 = vpack.c.bf16 %v5450, %v5449
      %v5484 = vpack.c.bf16 %v5452, %v5451
      %v5485 = vpack.c.bf16 %v5454, %v5453
      %v5486 = vpack.c.bf16 %v5456, %v5455
      %v5487 = vpack.c.bf16 %v5458, %v5457
      %v5488 = vpack.c.bf16 %v5460, %v5459
      %v5489 = vpack.c.bf16 %v5462, %v5461
      %v5490 = vpack.c.bf16 %v5464, %v5463
      %v5491 = vpack.c.bf16 %v5466, %v5465
      %v5492 = vpack.c.bf16 %v5468, %v5467
      %v5493 = vpack.c.bf16 %v5470, %v5469
      %v5494 = vpack.c.bf16 %v5472, %v5471
      %v5495 = vpack.c.bf16 %v5474, %v5473
      %v5496 = vpack.c.bf16 %v5476, %v5475
      %v5497 = vpack.c.bf16 %v5478, %v5477
      %v5498 = vpack.c.bf16 %v5480, %v5479
      %s5499 = scalar_lea.vmem %s2, 384
      %v5500 = vld [vmem:[%s5499] sm:$0xf]
      %v5501 = vld [vmem:[%s5499 + $0x4] sm:$0xf]
      %v5502 = vld [vmem:[%s5499 + $0x8] sm:$0xf]
      %v5503 = vld [vmem:[%s5499 + $0xc] sm:$0xf]
      %v5504 = vld [vmem:[%s5499 + $0x10] sm:$0xf]
      %v5505 = vld [vmem:[%s5499 + $0x14] sm:$0xf]
      %v5506 = vld [vmem:[%s5499 + $0x18] sm:$0xf]
      %v5507 = vld [vmem:[%s5499 + $0x1c] sm:$0xf]
      %v5508 = vld [vmem:[%s5499 + $0x20] sm:$0xf]
      %v5509 = vld [vmem:[%s5499 + $0x24] sm:$0xf]
      %v5510 = vld [vmem:[%s5499 + $0x28] sm:$0xf]
      %v5511 = vld [vmem:[%s5499 + $0x2c] sm:$0xf]
      %v5512 = vld [vmem:[%s5499 + $0x30] sm:$0xf]
      %v5513 = vld [vmem:[%s5499 + $0x34] sm:$0xf]
      %v5514 = vld [vmem:[%s5499 + $0x38] sm:$0xf]
      %v5515 = vld [vmem:[%s5499 + $0x3c] sm:$0xf]
      %v5532 = vunpack.c.l.b16 %v5500
      %v5533 = vunpack.c.l.b16 %v5501
      %v5534 = vunpack.c.l.b16 %v5502
      %v5535 = vunpack.c.l.b16 %v5503
      %v5536 = vunpack.c.l.b16 %v5504
      %v5537 = vunpack.c.l.b16 %v5505
      %v5538 = vunpack.c.l.b16 %v5506
      %v5539 = vunpack.c.l.b16 %v5507
      %v5540 = vunpack.c.l.b16 %v5508
      %v5541 = vunpack.c.l.b16 %v5509
      %v5542 = vunpack.c.l.b16 %v5510
      %v5543 = vunpack.c.l.b16 %v5511
      %v5544 = vunpack.c.l.b16 %v5512
      %v5545 = vunpack.c.l.b16 %v5513
      %v5546 = vunpack.c.l.b16 %v5514
      %v5547 = vunpack.c.l.b16 %v5515
      %v5548 = vpack.c.b16 %v5533, %v5532
      %v5549 = vpack.c.b16 %v5535, %v5534
      %v5550 = vpack.c.b16 %v5537, %v5536
      %v5551 = vpack.c.b16 %v5539, %v5538
      %v5552 = vpack.c.b16 %v5541, %v5540
      %v5553 = vpack.c.b16 %v5543, %v5542
      %v5554 = vpack.c.b16 %v5545, %v5544
      %v5555 = vpack.c.b16 %v5547, %v5546
      %5564 = vmatprep.subr.bf16.mxu0 0
      %5565 = vmatpush1.bf16.msra.mxu0 %v5548
      %5566 = vmatprep.subr.bf16.mxu0 0
      %5567 = vmatpush1.bf16.msra.mxu0 %v5549
      %5568 = vmatprep.subr.bf16.mxu0 0
      %5569 = vmatpush1.bf16.msra.mxu0 %v5550
      %5570 = vmatprep.subr.bf16.mxu0 0
      %5571 = vmatpush1.bf16.msra.mxu0 %v5551
      %5572 = vmatprep.subr.bf16.mxu0 0
      %5573 = vmatpush1.bf16.msra.mxu0 %v5552
      %5574 = vmatprep.subr.bf16.mxu0 0
      %5575 = vmatpush1.bf16.msra.mxu0 %v5553
      %5576 = vmatprep.subr.bf16.mxu0 0
      %5577 = vmatpush1.bf16.msra.mxu0 %v5554
      %5578 = vmatprep.subr.bf16.mxu0 0
      %5579 = vmatpush1.bf16.msra.mxu0 %v5555
      %5580 = vmatprep.subr.bf16.mxu0 0
      %5581 = vmatpush1.bf16.msra.mxu0 0
      %5582 = vmatprep.subr.bf16.mxu0 0
      %5583 = vmatpush1.bf16.msra.mxu0 0
      %5584 = vmatprep.subr.bf16.mxu0 0
      %5585 = vmatpush1.bf16.msra.mxu0 0
      %5586 = vmatprep.subr.bf16.mxu0 0
      %5587 = vmatpush1.bf16.msra.mxu0 0
      %5588 = vmatprep.subr.bf16.mxu0 0
      %5589 = vmatpush1.bf16.msra.mxu0 0
      %5590 = vmatprep.subr.bf16.mxu0 0
      %5591 = vmatpush1.bf16.msra.mxu0 0
      %5592 = vmatprep.subr.bf16.mxu0 0
      %5593 = vmatpush1.bf16.msra.mxu0 0
      %5594 = vmatprep.subr.bf16.mxu0 0
      %5595 = vmatpush1.bf16.msra.mxu0 0
      %5596 = vmatprep.mubr.bf16.mxu0 0
      %5597 = vmatmul.mubr.bf16.gmra.mrb[0].mxu0 %v5481
      %v5598 = vpop.f32.mrb[0].mxu0
      %v5599 = vadd.f32 0.0, %v5598
      %v5600 = vpop.f32.mrb[0].mxu0
      %v5601 = vpop.f32.mrb[0].mxu0
      %v5602 = vadd.f32 0.0, %v5601
      %v5603 = vpop.f32.mrb[0].mxu0
      %5604 = vmatprep.mubr.bf16.mxu0 0
      %5605 = vmatmul.mubr.bf16.gmra.mrb[0].mxu0 %v5482
      %v5606 = vpop.f32.mrb[0].mxu0
      %v5607 = vadd.f32 0.0, %v5606
      %v5608 = vpop.f32.mrb[0].mxu0
      %v5609 = vpop.f32.mrb[0].mxu0
      %v5610 = vadd.f32 0.0, %v5609
      %v5611 = vpop.f32.mrb[0].mxu0
      %5612 = vmatprep.mubr.bf16.mxu0 0
      %5613 = vmatmul.mubr.bf16.gmra.mrb[0].mxu0 %v5483
      %v5614 = vpop.f32.mrb[0].mxu0
      %v5615 = vadd.f32 0.0, %v5614
      %v5616 = vpop.f32.mrb[0].mxu0
      %v5617 = vpop.f32.mrb[0].mxu0
      %v5618 = vadd.f32 0.0, %v5617
      %v5619 = vpop.f32.mrb[0].mxu0
      %5620 = vmatprep.mubr.bf16.mxu0 0
      %5621 = vmatmul.mubr.bf16.gmra.mrb[0].mxu0 %v5484
      %v5622 = vpop.f32.mrb[0].mxu0
      %v5623 = vadd.f32 0.0, %v5622
      %v5624 = vpop.f32.mrb[0].mxu0
      %v5625 = vpop.f32.mrb[0].mxu0
      %v5626 = vadd.f32 0.0, %v5625
      %v5627 = vpop.f32.mrb[0].mxu0
      %5628 = vmatprep.mubr.bf16.mxu0 0
      %5629 = vmatmul.mubr.bf16.gmra.mrb[0].mxu0 %v5485
      %v5630 = vpop.f32.mrb[0].mxu0
      %v5631 = vadd.f32 0.0, %v5630
      %v5632 = vpop.f32.mrb[0].mxu0
      %v5633 = vpop.f32.mrb[0].mxu0
      %v5634 = vadd.f32 0.0, %v5633
      %v5635 = vpop.f32.mrb[0].mxu0
      %5636 = vmatprep.mubr.bf16.mxu0 0
      %5637 = vmatmul.mubr.bf16.gmra.mrb[0].mxu0 %v5486
      %v5638 = vpop.f32.mrb[0].mxu0
      %v5639 = vadd.f32 0.0, %v5638
      %v5640 = vpop.f32.mrb[0].mxu0
      %v5641 = vpop.f32.mrb[0].mxu0
      %v5642 = vadd.f32 0.0, %v5641
      %v5643 = vpop.f32.mrb[0].mxu0
      %5644 = vmatprep.mubr.bf16.mxu0 0
      %5645 = vmatmul.mubr.bf16.gmra.mrb[0].mxu0 %v5487
      %v5646 = vpop.f32.mrb[0].mxu0
      %v5647 = vadd.f32 0.0, %v5646
      %v5648 = vpop.f32.mrb[0].mxu0
      %v5649 = vpop.f32.mrb[0].mxu0
      %v5650 = vadd.f32 0.0, %v5649
      %v5651 = vpop.f32.mrb[0].mxu0
      %5652 = vmatprep.mubr.bf16.mxu0 0
      %5653 = vmatmul.mubr.bf16.gmra.mrb[0].mxu0 %v5488
      %v5654 = vpop.f32.mrb[0].mxu0
      %v5655 = vadd.f32 0.0, %v5654
      %v5656 = vpop.f32.mrb[0].mxu0
      %v5657 = vpop.f32.mrb[0].mxu0
      %v5658 = vadd.f32 0.0, %v5657
      %v5659 = vpop.f32.mrb[0].mxu0
      %5660 = vmatprep.mubr.bf16.mxu0 0
      %5661 = vmatmul.mubr.bf16.gmra.mrb[0].mxu0 %v5489
      %v5662 = vpop.f32.mrb[0].mxu0
      %v5663 = vadd.f32 0.0, %v5662
      %v5664 = vpop.f32.mrb[0].mxu0
      %v5665 = vpop.f32.mrb[0].mxu0
      %v5666 = vadd.f32 0.0, %v5665
      %v5667 = vpop.f32.mrb[0].mxu0
      %5668 = vmatprep.mubr.bf16.mxu0 0
      %5669 = vmatmul.mubr.bf16.gmra.mrb[0].mxu0 %v5490
      %v5670 = vpop.f32.mrb[0].mxu0
      %v5671 = vadd.f32 0.0, %v5670
      %v5672 = vpop.f32.mrb[0].mxu0
      %v5673 = vpop.f32.mrb[0].mxu0
      %v5674 = vadd.f32 0.0, %v5673
      %v5675 = vpop.f32.mrb[0].mxu0
      %5676 = vmatprep.mubr.bf16.mxu0 0
      %5677 = vmatmul.mubr.bf16.gmra.mrb[0].mxu0 %v5491
      %v5678 = vpop.f32.mrb[0].mxu0
      %v5679 = vadd.f32 0.0, %v5678
      %v5680 = vpop.f32.mrb[0].mxu0
      %v5681 = vpop.f32.mrb[0].mxu0
      %v5682 = vadd.f32 0.0, %v5681
      %v5683 = vpop.f32.mrb[0].mxu0
      %5684 = vmatprep.mubr.bf16.mxu0 0
      %5685 = vmatmul.mubr.bf16.gmra.mrb[0].mxu0 %v5492
      %v5686 = vpop.f32.mrb[0].mxu0
      %v5687 = vadd.f32 0.0, %v5686
      %v5688 = vpop.f32.mrb[0].mxu0
      %v5689 = vpop.f32.mrb[0].mxu0
      %v5690 = vadd.f32 0.0, %v5689
      %v5691 = vpop.f32.mrb[0].mxu0
      %5692 = vmatprep.mubr.bf16.mxu0 0
      %5693 = vmatmul.mubr.bf16.gmra.mrb[0].mxu0 %v5493
      %v5694 = vpop.f32.mrb[0].mxu0
      %v5695 = vadd.f32 0.0, %v5694
      %v5696 = vpop.f32.mrb[0].mxu0
      %v5697 = vpop.f32.mrb[0].mxu0
      %v5698 = vadd.f32 0.0, %v5697
      %v5699 = vpop.f32.mrb[0].mxu0
      %5700 = vmatprep.mubr.bf16.mxu0 0
      %5701 = vmatmul.mubr.bf16.gmra.mrb[0].mxu0 %v5494
      %v5702 = vpop.f32.mrb[0].mxu0
      %v5703 = vadd.f32 0.0, %v5702
      %v5704 = vpop.f32.mrb[0].mxu0
      %v5705 = vpop.f32.mrb[0].mxu0
      %v5706 = vadd.f32 0.0, %v5705
      %v5707 = vpop.f32.mrb[0].mxu0
      %5708 = vmatprep.mubr.bf16.mxu0 0
      %5709 = vmatmul.mubr.bf16.gmra.mrb[0].mxu0 %v5495
      %v5710 = vpop.f32.mrb[0].mxu0
      %v5711 = vadd.f32 0.0, %v5710
      %v5712 = vpop.f32.mrb[0].mxu0
      %v5713 = vpop.f32.mrb[0].mxu0
      %v5714 = vadd.f32 0.0, %v5713
      %v5715 = vpop.f32.mrb[0].mxu0
      %5716 = vmatprep.mubr.bf16.mxu0 0
      %5717 = vmatmul.mubr.bf16.gmra.mrb[0].mxu0 %v5496
      %v5718 = vpop.f32.mrb[0].mxu0
      %v5719 = vadd.f32 0.0, %v5718
      %v5720 = vpop.f32.mrb[0].mxu0
      %v5721 = vpop.f32.mrb[0].mxu0
      %v5722 = vadd.f32 0.0, %v5721
      %v5723 = vpop.f32.mrb[0].mxu0
      %5724 = vmatprep.mubr.bf16.mxu0 0
      %5725 = vmatmul.mubr.bf16.gmra.mrb[0].mxu0 %v5497
      %v5726 = vpop.f32.mrb[0].mxu0
      %v5727 = vadd.f32 0.0, %v5726
      %v5728 = vpop.f32.mrb[0].mxu0
      %v5729 = vpop.f32.mrb[0].mxu0
      %v5730 = vadd.f32 0.0, %v5729
      %v5731 = vpop.f32.mrb[0].mxu0
      %5732 = vmatprep.mubr.bf16.mxu0 0
      %5733 = vmatmul.mubr.bf16.gmra.mrb[0].mxu0 %v5498
      %v5734 = vpop.f32.mrb[0].mxu0
      %v5735 = vadd.f32 0.0, %v5734
      %v5736 = vpop.f32.mrb[0].mxu0
      %v5737 = vpop.f32.mrb[0].mxu0
      %v5738 = vadd.f32 0.0, %v5737
      %v5739 = vpop.f32.mrb[0].mxu0
      %5740 = vdwg.mxu0
      %v5741 = vadd.f32 %v5409, %v5599
      %v5742 = vadd.f32 %v5410, %v5602
      %v5743 = vadd.f32 %v5411, %v5607
      %v5744 = vadd.f32 %v5412, %v5610
      %v5745 = vadd.f32 %v5413, %v5615
      %v5746 = vadd.f32 %v5414, %v5618
      %v5747 = vadd.f32 %v5415, %v5623
      %v5748 = vadd.f32 %v5416, %v5626
      %v5749 = vadd.f32 %v5417, %v5631
      %v5750 = vadd.f32 %v5418, %v5634
      %v5751 = vadd.f32 %v5419, %v5639
      %v5752 = vadd.f32 %v5420, %v5642
      %v5753 = vadd.f32 %v5421, %v5647
      %v5754 = vadd.f32 %v5422, %v5650
      %v5755 = vadd.f32 %v5423, %v5655
      %v5756 = vadd.f32 %v5424, %v5658
      %v5757 = vadd.f32 %v5425, %v5663
      %v5758 = vadd.f32 %v5426, %v5666
      %v5759 = vadd.f32 %v5427, %v5671
      %v5760 = vadd.f32 %v5428, %v5674
      %v5761 = vadd.f32 %v5429, %v5679
      %v5762 = vadd.f32 %v5430, %v5682
      %v5763 = vadd.f32 %v5431, %v5687
      %v5764 = vadd.f32 %v5432, %v5690
      %v5765 = vadd.f32 %v5433, %v5695
      %v5766 = vadd.f32 %v5434, %v5698
      %v5767 = vadd.f32 %v5435, %v5703
      %v5768 = vadd.f32 %v5436, %v5706
      %v5769 = vadd.f32 %v5437, %v5711
      %v5770 = vadd.f32 %v5438, %v5714
      %v5771 = vadd.f32 %v5439, %v5719
      %v5772 = vadd.f32 %v5440, %v5722
      %v5773 = vadd.f32 %v5441, %v5727
      %v5774 = vadd.f32 %v5442, %v5730
      %v5775 = vadd.f32 %v5443, %v5735
      %v5776 = vadd.f32 %v5444, %v5738
      %v5777 = vld [vmem:[#allocation2 + $0x25] sm:$0xff]
      %v5778 = vld [vmem:[#allocation2 + $0x2d] sm:$0xff]
      %v5779 = vld [vmem:[#allocation2 + $0x35] sm:$0xff]
      %v5780 = vld [vmem:[#allocation2 + $0x3d] sm:$0xff]
      %v5781 = vld [vmem:[#allocation2 + $0x45] sm:$0xff]
      %v5782 = vld [vmem:[#allocation2 + $0x4d] sm:$0xff]
      %v5783 = vld [vmem:[#allocation2 + $0x55] sm:$0xff]
      %v5784 = vld [vmem:[#allocation2 + $0x5d] sm:$0xff]
      %v5785 = vld [vmem:[#allocation2 + $0x65] sm:$0xff]
      %v5786 = vld [vmem:[#allocation2 + $0x6d] sm:$0xff]
      %v5787 = vld [vmem:[#allocation2 + $0x75] sm:$0xff]
      %v5788 = vld [vmem:[#allocation2 + $0x7d] sm:$0xff]
      %v5789 = vld [vmem:[#allocation2 + $0x85] sm:$0xff]
      %v5790 = vld [vmem:[#allocation2 + $0x8d] sm:$0xff]
      %v5791 = vld [vmem:[#allocation2 + $0x95] sm:$0xff]
      %v5792 = vld [vmem:[#allocation2 + $0x9d] sm:$0xff]
      %v5793 = vld [vmem:[#allocation2 + $0xa5] sm:$0xff]
      %v5794 = vld [vmem:[#allocation2 + $0xad] sm:$0xff]
      %v5795 = vld [vmem:[#allocation2 + $0xb5] sm:$0xff]
      %v5796 = vld [vmem:[#allocation2 + $0xbd] sm:$0xff]
      %v5797 = vld [vmem:[#allocation2 + $0xc5] sm:$0xff]
      %v5798 = vld [vmem:[#allocation2 + $0xcd] sm:$0xff]
      %v5799 = vld [vmem:[#allocation2 + $0xd5] sm:$0xff]
      %v5800 = vld [vmem:[#allocation2 + $0xdd] sm:$0xff]
      %v5801 = vld [vmem:[#allocation2 + $0xe5] sm:$0xff]
      %v5802 = vld [vmem:[#allocation2 + $0xed] sm:$0xff]
      %v5803 = vld [vmem:[#allocation2 + $0xf5] sm:$0xff]
      %v5804 = vld [vmem:[#allocation2 + $0xfd] sm:$0xff]
      %v5805 = vld [vmem:[#allocation2 + $0x105] sm:$0xff]
      %v5806 = vld [vmem:[#allocation2 + $0x10d] sm:$0xff]
      %v5807 = vld [vmem:[#allocation2 + $0x115] sm:$0xff]
      %v5808 = vld [vmem:[#allocation2 + $0x11d] sm:$0xff]
      %v5809 = vld [vmem:[#allocation2 + $0x125] sm:$0xff]
      %v5810 = vld [vmem:[#allocation2 + $0x12d] sm:$0xff]
      %v5811 = vld [vmem:[#allocation2 + $0x135] sm:$0xff]
      %v5812 = vld [vmem:[#allocation2 + $0x13d] sm:$0xff]
      %v5813 = vpack.c.bf16 %v5778, %v5777
      %v5814 = vpack.c.bf16 %v5780, %v5779
      %v5815 = vpack.c.bf16 %v5782, %v5781
      %v5816 = vpack.c.bf16 %v5784, %v5783
      %v5817 = vpack.c.bf16 %v5786, %v5785
      %v5818 = vpack.c.bf16 %v5788, %v5787
      %v5819 = vpack.c.bf16 %v5790, %v5789
      %v5820 = vpack.c.bf16 %v5792, %v5791
      %v5821 = vpack.c.bf16 %v5794, %v5793
      %v5822 = vpack.c.bf16 %v5796, %v5795
      %v5823 = vpack.c.bf16 %v5798, %v5797
      %v5824 = vpack.c.bf16 %v5800, %v5799
      %v5825 = vpack.c.bf16 %v5802, %v5801
      %v5826 = vpack.c.bf16 %v5804, %v5803
      %v5827 = vpack.c.bf16 %v5806, %v5805
      %v5828 = vpack.c.bf16 %v5808, %v5807
      %v5829 = vpack.c.bf16 %v5810, %v5809
      %v5830 = vpack.c.bf16 %v5812, %v5811
      %s5831 = scalar_lea.vmem %s2, 448
      %v5832 = vld [vmem:[%s5831] sm:$0xf]
      %v5833 = vld [vmem:[%s5831 + $0x4] sm:$0xf]
      %v5834 = vld [vmem:[%s5831 + $0x8] sm:$0xf]
      %v5835 = vld [vmem:[%s5831 + $0xc] sm:$0xf]
      %v5836 = vld [vmem:[%s5831 + $0x10] sm:$0xf]
      %v5837 = vld [vmem:[%s5831 + $0x14] sm:$0xf]
      %v5838 = vld [vmem:[%s5831 + $0x18] sm:$0xf]
      %v5839 = vld [vmem:[%s5831 + $0x1c] sm:$0xf]
      %v5840 = vld [vmem:[%s5831 + $0x20] sm:$0xf]
      %v5841 = vld [vmem:[%s5831 + $0x24] sm:$0xf]
      %v5842 = vld [vmem:[%s5831 + $0x28] sm:$0xf]
      %v5843 = vld [vmem:[%s5831 + $0x2c] sm:$0xf]
      %v5844 = vld [vmem:[%s5831 + $0x30] sm:$0xf]
      %v5845 = vld [vmem:[%s5831 + $0x34] sm:$0xf]
      %v5846 = vld [vmem:[%s5831 + $0x38] sm:$0xf]
      %v5847 = vld [vmem:[%s5831 + $0x3c] sm:$0xf]
      %v5864 = vunpack.c.l.b16 %v5832
      %v5865 = vunpack.c.l.b16 %v5833
      %v5866 = vunpack.c.l.b16 %v5834
      %v5867 = vunpack.c.l.b16 %v5835
      %v5868 = vunpack.c.l.b16 %v5836
      %v5869 = vunpack.c.l.b16 %v5837
      %v5870 = vunpack.c.l.b16 %v5838
      %v5871 = vunpack.c.l.b16 %v5839
      %v5872 = vunpack.c.l.b16 %v5840
      %v5873 = vunpack.c.l.b16 %v5841
      %v5874 = vunpack.c.l.b16 %v5842
      %v5875 = vunpack.c.l.b16 %v5843
      %v5876 = vunpack.c.l.b16 %v5844
      %v5877 = vunpack.c.l.b16 %v5845
      %v5878 = vunpack.c.l.b16 %v5846
      %v5879 = vunpack.c.l.b16 %v5847
      %v5880 = vpack.c.b16 %v5865, %v5864
      %v5881 = vpack.c.b16 %v5867, %v5866
      %v5882 = vpack.c.b16 %v5869, %v5868
      %v5883 = vpack.c.b16 %v5871, %v5870
      %v5884 = vpack.c.b16 %v5873, %v5872
      %v5885 = vpack.c.b16 %v5875, %v5874
      %v5886 = vpack.c.b16 %v5877, %v5876
      %v5887 = vpack.c.b16 %v5879, %v5878
      %5896 = vmatprep.subr.bf16.mxu0 0
      %5897 = vmatpush1.bf16.msra.mxu0 %v5880
      %5898 = vmatprep.subr.bf16.mxu0 0
      %5899 = vmatpush1.bf16.msra.mxu0 %v5881
      %5900 = vmatprep.subr.bf16.mxu0 0
      %5901 = vmatpush1.bf16.msra.mxu0 %v5882
      %5902 = vmatprep.subr.bf16.mxu0 0
      %5903 = vmatpush1.bf16.msra.mxu0 %v5883
      %5904 = vmatprep.subr.bf16.mxu0 0
      %5905 = vmatpush1.bf16.msra.mxu0 %v5884
      %5906 = vmatprep.subr.bf16.mxu0 0
      %5907 = vmatpush1.bf16.msra.mxu0 %v5885
      %5908 = vmatprep.subr.bf16.mxu0 0
      %5909 = vmatpush1.bf16.msra.mxu0 %v5886
      %5910 = vmatprep.subr.bf16.mxu0 0
      %5911 = vmatpush1.bf16.msra.mxu0 %v5887
      %5912 = vmatprep.subr.bf16.mxu0 0
      %5913 = vmatpush1.bf16.msra.mxu0 0
      %5914 = vmatprep.subr.bf16.mxu0 0
      %5915 = vmatpush1.bf16.msra.mxu0 0
      %5916 = vmatprep.subr.bf16.mxu0 0
      %5917 = vmatpush1.bf16.msra.mxu0 0
      %5918 = vmatprep.subr.bf16.mxu0 0
      %5919 = vmatpush1.bf16.msra.mxu0 0
      %5920 = vmatprep.subr.bf16.mxu0 0
      %5921 = vmatpush1.bf16.msra.mxu0 0
      %5922 = vmatprep.subr.bf16.mxu0 0
      %5923 = vmatpush1.bf16.msra.mxu0 0
      %5924 = vmatprep.subr.bf16.mxu0 0
      %5925 = vmatpush1.bf16.msra.mxu0 0
      %5926 = vmatprep.subr.bf16.mxu0 0
      %5927 = vmatpush1.bf16.msra.mxu0 0
      %5928 = vmatprep.mubr.bf16.mxu0 0
      %5929 = vmatmul.mubr.bf16.gmra.mrb[0].mxu0 %v5813
      %v5930 = vpop.f32.mrb[0].mxu0
      %v5931 = vadd.f32 0.0, %v5930
      %v5932 = vpop.f32.mrb[0].mxu0
      %v5933 = vpop.f32.mrb[0].mxu0
      %v5934 = vadd.f32 0.0, %v5933
      %v5935 = vpop.f32.mrb[0].mxu0
      %5936 = vmatprep.mubr.bf16.mxu0 0
      %5937 = vmatmul.mubr.bf16.gmra.mrb[0].mxu0 %v5814
      %v5938 = vpop.f32.mrb[0].mxu0
      %v5939 = vadd.f32 0.0, %v5938
      %v5940 = vpop.f32.mrb[0].mxu0
      %v5941 = vpop.f32.mrb[0].mxu0
      %v5942 = vadd.f32 0.0, %v5941
      %v5943 = vpop.f32.mrb[0].mxu0
      %5944 = vmatprep.mubr.bf16.mxu0 0
      %5945 = vmatmul.mubr.bf16.gmra.mrb[0].mxu0 %v5815
      %v5946 = vpop.f32.mrb[0].mxu0
      %v5947 = vadd.f32 0.0, %v5946
      %v5948 = vpop.f32.mrb[0].mxu0
      %v5949 = vpop.f32.mrb[0].mxu0
      %v5950 = vadd.f32 0.0, %v5949
      %v5951 = vpop.f32.mrb[0].mxu0
      %5952 = vmatprep.mubr.bf16.mxu0 0
      %5953 = vmatmul.mubr.bf16.gmra.mrb[0].mxu0 %v5816
      %v5954 = vpop.f32.mrb[0].mxu0
      %v5955 = vadd.f32 0.0, %v5954
      %v5956 = vpop.f32.mrb[0].mxu0
      %v5957 = vpop.f32.mrb[0].mxu0
      %v5958 = vadd.f32 0.0, %v5957
      %v5959 = vpop.f32.mrb[0].mxu0
      %5960 = vmatprep.mubr.bf16.mxu0 0
      %5961 = vmatmul.mubr.bf16.gmra.mrb[0].mxu0 %v5817
      %v5962 = vpop.f32.mrb[0].mxu0
      %v5963 = vadd.f32 0.0, %v5962
      %v5964 = vpop.f32.mrb[0].mxu0
      %v5965 = vpop.f32.mrb[0].mxu0
      %v5966 = vadd.f32 0.0, %v5965
      %v5967 = vpop.f32.mrb[0].mxu0
      %5968 = vmatprep.mubr.bf16.mxu0 0
      %5969 = vmatmul.mubr.bf16.gmra.mrb[0].mxu0 %v5818
      %v5970 = vpop.f32.mrb[0].mxu0
      %v5971 = vadd.f32 0.0, %v5970
      %v5972 = vpop.f32.mrb[0].mxu0
      %v5973 = vpop.f32.mrb[0].mxu0
      %v5974 = vadd.f32 0.0, %v5973
      %v5975 = vpop.f32.mrb[0].mxu0
      %5976 = vmatprep.mubr.bf16.mxu0 0
      %5977 = vmatmul.mubr.bf16.gmra.mrb[0].mxu0 %v5819
      %v5978 = vpop.f32.mrb[0].mxu0
      %v5979 = vadd.f32 0.0, %v5978
      %v5980 = vpop.f32.mrb[0].mxu0
      %v5981 = vpop.f32.mrb[0].mxu0
      %v5982 = vadd.f32 0.0, %v5981
      %v5983 = vpop.f32.mrb[0].mxu0
      %5984 = vmatprep.mubr.bf16.mxu0 0
      %5985 = vmatmul.mubr.bf16.gmra.mrb[0].mxu0 %v5820
      %v5986 = vpop.f32.mrb[0].mxu0
      %v5987 = vadd.f32 0.0, %v5986
      %v5988 = vpop.f32.mrb[0].mxu0
      %v5989 = vpop.f32.mrb[0].mxu0
      %v5990 = vadd.f32 0.0, %v5989
      %v5991 = vpop.f32.mrb[0].mxu0
      %5992 = vmatprep.mubr.bf16.mxu0 0
      %5993 = vmatmul.mubr.bf16.gmra.mrb[0].mxu0 %v5821
      %v5994 = vpop.f32.mrb[0].mxu0
      %v5995 = vadd.f32 0.0, %v5994
      %v5996 = vpop.f32.mrb[0].mxu0
      %v5997 = vpop.f32.mrb[0].mxu0
      %v5998 = vadd.f32 0.0, %v5997
      %v5999 = vpop.f32.mrb[0].mxu0
      %6000 = vmatprep.mubr.bf16.mxu0 0
      %6001 = vmatmul.mubr.bf16.gmra.mrb[0].mxu0 %v5822
      %v6002 = vpop.f32.mrb[0].mxu0
      %v6003 = vadd.f32 0.0, %v6002
      %v6004 = vpop.f32.mrb[0].mxu0
      %v6005 = vpop.f32.mrb[0].mxu0
      %v6006 = vadd.f32 0.0, %v6005
      %v6007 = vpop.f32.mrb[0].mxu0
      %6008 = vmatprep.mubr.bf16.mxu0 0
      %6009 = vmatmul.mubr.bf16.gmra.mrb[0].mxu0 %v5823
      %v6010 = vpop.f32.mrb[0].mxu0
      %v6011 = vadd.f32 0.0, %v6010
      %v6012 = vpop.f32.mrb[0].mxu0
      %v6013 = vpop.f32.mrb[0].mxu0
      %v6014 = vadd.f32 0.0, %v6013
      %v6015 = vpop.f32.mrb[0].mxu0
      %6016 = vmatprep.mubr.bf16.mxu0 0
      %6017 = vmatmul.mubr.bf16.gmra.mrb[0].mxu0 %v5824
      %v6018 = vpop.f32.mrb[0].mxu0
      %v6019 = vadd.f32 0.0, %v6018
      %v6020 = vpop.f32.mrb[0].mxu0
      %v6021 = vpop.f32.mrb[0].mxu0
      %v6022 = vadd.f32 0.0, %v6021
      %v6023 = vpop.f32.mrb[0].mxu0
      %6024 = vmatprep.mubr.bf16.mxu0 0
      %6025 = vmatmul.mubr.bf16.gmra.mrb[0].mxu0 %v5825
      %v6026 = vpop.f32.mrb[0].mxu0
      %v6027 = vadd.f32 0.0, %v6026
      %v6028 = vpop.f32.mrb[0].mxu0
      %v6029 = vpop.f32.mrb[0].mxu0
      %v6030 = vadd.f32 0.0, %v6029
      %v6031 = vpop.f32.mrb[0].mxu0
      %6032 = vmatprep.mubr.bf16.mxu0 0
      %6033 = vmatmul.mubr.bf16.gmra.mrb[0].mxu0 %v5826
      %v6034 = vpop.f32.mrb[0].mxu0
      %v6035 = vadd.f32 0.0, %v6034
      %v6036 = vpop.f32.mrb[0].mxu0
      %v6037 = vpop.f32.mrb[0].mxu0
      %v6038 = vadd.f32 0.0, %v6037
      %v6039 = vpop.f32.mrb[0].mxu0
      %6040 = vmatprep.mubr.bf16.mxu0 0
      %6041 = vmatmul.mubr.bf16.gmra.mrb[0].mxu0 %v5827
      %v6042 = vpop.f32.mrb[0].mxu0
      %v6043 = vadd.f32 0.0, %v6042
      %v6044 = vpop.f32.mrb[0].mxu0
      %v6045 = vpop.f32.mrb[0].mxu0
      %v6046 = vadd.f32 0.0, %v6045
      %v6047 = vpop.f32.mrb[0].mxu0
      %6048 = vmatprep.mubr.bf16.mxu0 0
      %6049 = vmatmul.mubr.bf16.gmra.mrb[0].mxu0 %v5828
      %v6050 = vpop.f32.mrb[0].mxu0
      %v6051 = vadd.f32 0.0, %v6050
      %v6052 = vpop.f32.mrb[0].mxu0
      %v6053 = vpop.f32.mrb[0].mxu0
      %v6054 = vadd.f32 0.0, %v6053
      %v6055 = vpop.f32.mrb[0].mxu0
      %6056 = vmatprep.mubr.bf16.mxu0 0
      %6057 = vmatmul.mubr.bf16.gmra.mrb[0].mxu0 %v5829
      %v6058 = vpop.f32.mrb[0].mxu0
      %v6059 = vadd.f32 0.0, %v6058
      %v6060 = vpop.f32.mrb[0].mxu0
      %v6061 = vpop.f32.mrb[0].mxu0
      %v6062 = vadd.f32 0.0, %v6061
      %v6063 = vpop.f32.mrb[0].mxu0
      %6064 = vmatprep.mubr.bf16.mxu0 0
      %6065 = vmatmul.mubr.bf16.gmra.mrb[0].mxu0 %v5830
      %v6066 = vpop.f32.mrb[0].mxu0
      %v6067 = vadd.f32 0.0, %v6066
      %v6068 = vpop.f32.mrb[0].mxu0
      %v6069 = vpop.f32.mrb[0].mxu0
      %v6070 = vadd.f32 0.0, %v6069
      %v6071 = vpop.f32.mrb[0].mxu0
      %6072 = vdwg.mxu0
      %v6073 = vadd.f32 %v5741, %v5931
      %v6074 = vadd.f32 %v5742, %v5934
      %v6075 = vadd.f32 %v5743, %v5939
      %v6076 = vadd.f32 %v5744, %v5942
      %v6077 = vadd.f32 %v5745, %v5947
      %v6078 = vadd.f32 %v5746, %v5950
      %v6079 = vadd.f32 %v5747, %v5955
      %v6080 = vadd.f32 %v5748, %v5958
      %v6081 = vadd.f32 %v5749, %v5963
      %v6082 = vadd.f32 %v5750, %v5966
      %v6083 = vadd.f32 %v5751, %v5971
      %v6084 = vadd.f32 %v5752, %v5974
      %v6085 = vadd.f32 %v5753, %v5979
      %v6086 = vadd.f32 %v5754, %v5982
      %v6087 = vadd.f32 %v5755, %v5987
      %v6088 = vadd.f32 %v5756, %v5990
      %v6089 = vadd.f32 %v5757, %v5995
      %v6090 = vadd.f32 %v5758, %v5998
      %v6091 = vadd.f32 %v5759, %v6003
      %v6092 = vadd.f32 %v5760, %v6006
      %v6093 = vadd.f32 %v5761, %v6011
      %v6094 = vadd.f32 %v5762, %v6014
      %v6095 = vadd.f32 %v5763, %v6019
      %v6096 = vadd.f32 %v5764, %v6022
      %v6097 = vadd.f32 %v5765, %v6027
      %v6098 = vadd.f32 %v5766, %v6030
      %v6099 = vadd.f32 %v5767, %v6035
      %v6100 = vadd.f32 %v5768, %v6038
      %v6101 = vadd.f32 %v5769, %v6043
      %v6102 = vadd.f32 %v5770, %v6046
      %v6103 = vadd.f32 %v5771, %v6051
      %v6104 = vadd.f32 %v5772, %v6054
      %v6105 = vadd.f32 %v5773, %v6059
      %v6106 = vadd.f32 %v5774, %v6062
      %v6107 = vadd.f32 %v5775, %v6067
      %v6108 = vadd.f32 %v5776, %v6070
      %v6109 = vld [vmem:[#allocation2 + $0x26] sm:$0xff]
      %v6110 = vld [vmem:[#allocation2 + $0x2e] sm:$0xff]
      %v6111 = vld [vmem:[#allocation2 + $0x36] sm:$0xff]
      %v6112 = vld [vmem:[#allocation2 + $0x3e] sm:$0xff]
      %v6113 = vld [vmem:[#allocation2 + $0x46] sm:$0xff]
      %v6114 = vld [vmem:[#allocation2 + $0x4e] sm:$0xff]
      %v6115 = vld [vmem:[#allocation2 + $0x56] sm:$0xff]
      %v6116 = vld [vmem:[#allocation2 + $0x5e] sm:$0xff]
      %v6117 = vld [vmem:[#allocation2 + $0x66] sm:$0xff]
      %v6118 = vld [vmem:[#allocation2 + $0x6e] sm:$0xff]
      %v6119 = vld [vmem:[#allocation2 + $0x76] sm:$0xff]
      %v6120 = vld [vmem:[#allocation2 + $0x7e] sm:$0xff]
      %v6121 = vld [vmem:[#allocation2 + $0x86] sm:$0xff]
      %v6122 = vld [vmem:[#allocation2 + $0x8e] sm:$0xff]
      %v6123 = vld [vmem:[#allocation2 + $0x96] sm:$0xff]
      %v6124 = vld [vmem:[#allocation2 + $0x9e] sm:$0xff]
      %v6125 = vld [vmem:[#allocation2 + $0xa6] sm:$0xff]
      %v6126 = vld [vmem:[#allocation2 + $0xae] sm:$0xff]
      %v6127 = vld [vmem:[#allocation2 + $0xb6] sm:$0xff]
      %v6128 = vld [vmem:[#allocation2 + $0xbe] sm:$0xff]
      %v6129 = vld [vmem:[#allocation2 + $0xc6] sm:$0xff]
      %v6130 = vld [vmem:[#allocation2 + $0xce] sm:$0xff]
      %v6131 = vld [vmem:[#allocation2 + $0xd6] sm:$0xff]
      %v6132 = vld [vmem:[#allocation2 + $0xde] sm:$0xff]
      %v6133 = vld [vmem:[#allocation2 + $0xe6] sm:$0xff]
      %v6134 = vld [vmem:[#allocation2 + $0xee] sm:$0xff]
      %v6135 = vld [vmem:[#allocation2 + $0xf6] sm:$0xff]
      %v6136 = vld [vmem:[#allocation2 + $0xfe] sm:$0xff]
      %v6137 = vld [vmem:[#allocation2 + $0x106] sm:$0xff]
      %v6138 = vld [vmem:[#allocation2 + $0x10e] sm:$0xff]
      %v6139 = vld [vmem:[#allocation2 + $0x116] sm:$0xff]
      %v6140 = vld [vmem:[#allocation2 + $0x11e] sm:$0xff]
      %v6141 = vld [vmem:[#allocation2 + $0x126] sm:$0xff]
      %v6142 = vld [vmem:[#allocation2 + $0x12e] sm:$0xff]
      %v6143 = vld [vmem:[#allocation2 + $0x136] sm:$0xff]
      %v6144 = vld [vmem:[#allocation2 + $0x13e] sm:$0xff]
      %v6145 = vpack.c.bf16 %v6110, %v6109
      %v6146 = vpack.c.bf16 %v6112, %v6111
      %v6147 = vpack.c.bf16 %v6114, %v6113
      %v6148 = vpack.c.bf16 %v6116, %v6115
      %v6149 = vpack.c.bf16 %v6118, %v6117
      %v6150 = vpack.c.bf16 %v6120, %v6119
      %v6151 = vpack.c.bf16 %v6122, %v6121
      %v6152 = vpack.c.bf16 %v6124, %v6123
      %v6153 = vpack.c.bf16 %v6126, %v6125
      %v6154 = vpack.c.bf16 %v6128, %v6127
      %v6155 = vpack.c.bf16 %v6130, %v6129
      %v6156 = vpack.c.bf16 %v6132, %v6131
      %v6157 = vpack.c.bf16 %v6134, %v6133
      %v6158 = vpack.c.bf16 %v6136, %v6135
      %v6159 = vpack.c.bf16 %v6138, %v6137
      %v6160 = vpack.c.bf16 %v6140, %v6139
      %v6161 = vpack.c.bf16 %v6142, %v6141
      %v6162 = vpack.c.bf16 %v6144, %v6143
      %s6163 = scalar_lea.vmem %s2, 512
      %v6164 = vld [vmem:[%s6163] sm:$0xf]
      %v6165 = vld [vmem:[%s6163 + $0x4] sm:$0xf]
      %v6166 = vld [vmem:[%s6163 + $0x8] sm:$0xf]
      %v6167 = vld [vmem:[%s6163 + $0xc] sm:$0xf]
      %v6168 = vld [vmem:[%s6163 + $0x10] sm:$0xf]
      %v6169 = vld [vmem:[%s6163 + $0x14] sm:$0xf]
      %v6170 = vld [vmem:[%s6163 + $0x18] sm:$0xf]
      %v6171 = vld [vmem:[%s6163 + $0x1c] sm:$0xf]
      %v6172 = vld [vmem:[%s6163 + $0x20] sm:$0xf]
      %v6173 = vld [vmem:[%s6163 + $0x24] sm:$0xf]
      %v6174 = vld [vmem:[%s6163 + $0x28] sm:$0xf]
      %v6175 = vld [vmem:[%s6163 + $0x2c] sm:$0xf]
      %v6176 = vld [vmem:[%s6163 + $0x30] sm:$0xf]
      %v6177 = vld [vmem:[%s6163 + $0x34] sm:$0xf]
      %v6178 = vld [vmem:[%s6163 + $0x38] sm:$0xf]
      %v6179 = vld [vmem:[%s6163 + $0x3c] sm:$0xf]
      %v6196 = vunpack.c.l.b16 %v6164
      %v6197 = vunpack.c.l.b16 %v6165
      %v6198 = vunpack.c.l.b16 %v6166
      %v6199 = vunpack.c.l.b16 %v6167
      %v6200 = vunpack.c.l.b16 %v6168
      %v6201 = vunpack.c.l.b16 %v6169
      %v6202 = vunpack.c.l.b16 %v6170
      %v6203 = vunpack.c.l.b16 %v6171
      %v6204 = vunpack.c.l.b16 %v6172
      %v6205 = vunpack.c.l.b16 %v6173
      %v6206 = vunpack.c.l.b16 %v6174
      %v6207 = vunpack.c.l.b16 %v6175
      %v6208 = vunpack.c.l.b16 %v6176
      %v6209 = vunpack.c.l.b16 %v6177
      %v6210 = vunpack.c.l.b16 %v6178
      %v6211 = vunpack.c.l.b16 %v6179
      %v6212 = vpack.c.b16 %v6197, %v6196
      %v6213 = vpack.c.b16 %v6199, %v6198
      %v6214 = vpack.c.b16 %v6201, %v6200
      %v6215 = vpack.c.b16 %v6203, %v6202
      %v6216 = vpack.c.b16 %v6205, %v6204
      %v6217 = vpack.c.b16 %v6207, %v6206
      %v6218 = vpack.c.b16 %v6209, %v6208
      %v6219 = vpack.c.b16 %v6211, %v6210
      %6228 = vmatprep.subr.bf16.mxu0 0
      %6229 = vmatpush1.bf16.msra.mxu0 %v6212
      %6230 = vmatprep.subr.bf16.mxu0 0
      %6231 = vmatpush1.bf16.msra.mxu0 %v6213
      %6232 = vmatprep.subr.bf16.mxu0 0
      %6233 = vmatpush1.bf16.msra.mxu0 %v6214
      %6234 = vmatprep.subr.bf16.mxu0 0
      %6235 = vmatpush1.bf16.msra.mxu0 %v6215
      %6236 = vmatprep.subr.bf16.mxu0 0
      %6237 = vmatpush1.bf16.msra.mxu0 %v6216
      %6238 = vmatprep.subr.bf16.mxu0 0
      %6239 = vmatpush1.bf16.msra.mxu0 %v6217
      %6240 = vmatprep.subr.bf16.mxu0 0
      %6241 = vmatpush1.bf16.msra.mxu0 %v6218
      %6242 = vmatprep.subr.bf16.mxu0 0
      %6243 = vmatpush1.bf16.msra.mxu0 %v6219
      %6244 = vmatprep.subr.bf16.mxu0 0
      %6245 = vmatpush1.bf16.msra.mxu0 0
      %6246 = vmatprep.subr.bf16.mxu0 0
      %6247 = vmatpush1.bf16.msra.mxu0 0
      %6248 = vmatprep.subr.bf16.mxu0 0
      %6249 = vmatpush1.bf16.msra.mxu0 0
      %6250 = vmatprep.subr.bf16.mxu0 0
      %6251 = vmatpush1.bf16.msra.mxu0 0
      %6252 = vmatprep.subr.bf16.mxu0 0
      %6253 = vmatpush1.bf16.msra.mxu0 0
      %6254 = vmatprep.subr.bf16.mxu0 0
      %6255 = vmatpush1.bf16.msra.mxu0 0
      %6256 = vmatprep.subr.bf16.mxu0 0
      %6257 = vmatpush1.bf16.msra.mxu0 0
      %6258 = vmatprep.subr.bf16.mxu0 0
      %6259 = vmatpush1.bf16.msra.mxu0 0
      %6260 = vmatprep.mubr.bf16.mxu0 0
      %6261 = vmatmul.mubr.bf16.gmra.mrb[0].mxu0 %v6145
      %v6262 = vpop.f32.mrb[0].mxu0
      %v6263 = vadd.f32 0.0, %v6262
      %v6264 = vpop.f32.mrb[0].mxu0
      %v6265 = vpop.f32.mrb[0].mxu0
      %v6266 = vadd.f32 0.0, %v6265
      %v6267 = vpop.f32.mrb[0].mxu0
      %6268 = vmatprep.mubr.bf16.mxu0 0
      %6269 = vmatmul.mubr.bf16.gmra.mrb[0].mxu0 %v6146
      %v6270 = vpop.f32.mrb[0].mxu0
      %v6271 = vadd.f32 0.0, %v6270
      %v6272 = vpop.f32.mrb[0].mxu0
      %v6273 = vpop.f32.mrb[0].mxu0
      %v6274 = vadd.f32 0.0, %v6273
      %v6275 = vpop.f32.mrb[0].mxu0
      %6276 = vmatprep.mubr.bf16.mxu0 0
      %6277 = vmatmul.mubr.bf16.gmra.mrb[0].mxu0 %v6147
      %v6278 = vpop.f32.mrb[0].mxu0
      %v6279 = vadd.f32 0.0, %v6278
      %v6280 = vpop.f32.mrb[0].mxu0
      %v6281 = vpop.f32.mrb[0].mxu0
      %v6282 = vadd.f32 0.0, %v6281
      %v6283 = vpop.f32.mrb[0].mxu0
      %6284 = vmatprep.mubr.bf16.mxu0 0
      %6285 = vmatmul.mubr.bf16.gmra.mrb[0].mxu0 %v6148
      %v6286 = vpop.f32.mrb[0].mxu0
      %v6287 = vadd.f32 0.0, %v6286
      %v6288 = vpop.f32.mrb[0].mxu0
      %v6289 = vpop.f32.mrb[0].mxu0
      %v6290 = vadd.f32 0.0, %v6289
      %v6291 = vpop.f32.mrb[0].mxu0
      %6292 = vmatprep.mubr.bf16.mxu0 0
      %6293 = vmatmul.mubr.bf16.gmra.mrb[0].mxu0 %v6149
      %v6294 = vpop.f32.mrb[0].mxu0
      %v6295 = vadd.f32 0.0, %v6294
      %v6296 = vpop.f32.mrb[0].mxu0
      %v6297 = vpop.f32.mrb[0].mxu0
      %v6298 = vadd.f32 0.0, %v6297
      %v6299 = vpop.f32.mrb[0].mxu0
      %6300 = vmatprep.mubr.bf16.mxu0 0
      %6301 = vmatmul.mubr.bf16.gmra.mrb[0].mxu0 %v6150
      %v6302 = vpop.f32.mrb[0].mxu0
      %v6303 = vadd.f32 0.0, %v6302
      %v6304 = vpop.f32.mrb[0].mxu0
      %v6305 = vpop.f32.mrb[0].mxu0
      %v6306 = vadd.f32 0.0, %v6305
      %v6307 = vpop.f32.mrb[0].mxu0
      %6308 = vmatprep.mubr.bf16.mxu0 0
      %6309 = vmatmul.mubr.bf16.gmra.mrb[0].mxu0 %v6151
      %v6310 = vpop.f32.mrb[0].mxu0
      %v6311 = vadd.f32 0.0, %v6310
      %v6312 = vpop.f32.mrb[0].mxu0
      %v6313 = vpop.f32.mrb[0].mxu0
      %v6314 = vadd.f32 0.0, %v6313
      %v6315 = vpop.f32.mrb[0].mxu0
      %6316 = vmatprep.mubr.bf16.mxu0 0
      %6317 = vmatmul.mubr.bf16.gmra.mrb[0].mxu0 %v6152
      %v6318 = vpop.f32.mrb[0].mxu0
      %v6319 = vadd.f32 0.0, %v6318
      %v6320 = vpop.f32.mrb[0].mxu0
      %v6321 = vpop.f32.mrb[0].mxu0
      %v6322 = vadd.f32 0.0, %v6321
      %v6323 = vpop.f32.mrb[0].mxu0
      %6324 = vmatprep.mubr.bf16.mxu0 0
      %6325 = vmatmul.mubr.bf16.gmra.mrb[0].mxu0 %v6153
      %v6326 = vpop.f32.mrb[0].mxu0
      %v6327 = vadd.f32 0.0, %v6326
      %v6328 = vpop.f32.mrb[0].mxu0
      %v6329 = vpop.f32.mrb[0].mxu0
      %v6330 = vadd.f32 0.0, %v6329
      %v6331 = vpop.f32.mrb[0].mxu0
      %6332 = vmatprep.mubr.bf16.mxu0 0
      %6333 = vmatmul.mubr.bf16.gmra.mrb[0].mxu0 %v6154
      %v6334 = vpop.f32.mrb[0].mxu0
      %v6335 = vadd.f32 0.0, %v6334
      %v6336 = vpop.f32.mrb[0].mxu0
      %v6337 = vpop.f32.mrb[0].mxu0
      %v6338 = vadd.f32 0.0, %v6337
      %v6339 = vpop.f32.mrb[0].mxu0
      %6340 = vmatprep.mubr.bf16.mxu0 0
      %6341 = vmatmul.mubr.bf16.gmra.mrb[0].mxu0 %v6155
      %v6342 = vpop.f32.mrb[0].mxu0
      %v6343 = vadd.f32 0.0, %v6342
      %v6344 = vpop.f32.mrb[0].mxu0
      %v6345 = vpop.f32.mrb[0].mxu0
      %v6346 = vadd.f32 0.0, %v6345
      %v6347 = vpop.f32.mrb[0].mxu0
      %6348 = vmatprep.mubr.bf16.mxu0 0
      %6349 = vmatmul.mubr.bf16.gmra.mrb[0].mxu0 %v6156
      %v6350 = vpop.f32.mrb[0].mxu0
      %v6351 = vadd.f32 0.0, %v6350
      %v6352 = vpop.f32.mrb[0].mxu0
      %v6353 = vpop.f32.mrb[0].mxu0
      %v6354 = vadd.f32 0.0, %v6353
      %v6355 = vpop.f32.mrb[0].mxu0
      %6356 = vmatprep.mubr.bf16.mxu0 0
      %6357 = vmatmul.mubr.bf16.gmra.mrb[0].mxu0 %v6157
      %v6358 = vpop.f32.mrb[0].mxu0
      %v6359 = vadd.f32 0.0, %v6358
      %v6360 = vpop.f32.mrb[0].mxu0
      %v6361 = vpop.f32.mrb[0].mxu0
      %v6362 = vadd.f32 0.0, %v6361
      %v6363 = vpop.f32.mrb[0].mxu0
      %6364 = vmatprep.mubr.bf16.mxu0 0
      %6365 = vmatmul.mubr.bf16.gmra.mrb[0].mxu0 %v6158
      %v6366 = vpop.f32.mrb[0].mxu0
      %v6367 = vadd.f32 0.0, %v6366
      %v6368 = vpop.f32.mrb[0].mxu0
      %v6369 = vpop.f32.mrb[0].mxu0
      %v6370 = vadd.f32 0.0, %v6369
      %v6371 = vpop.f32.mrb[0].mxu0
      %6372 = vmatprep.mubr.bf16.mxu0 0
      %6373 = vmatmul.mubr.bf16.gmra.mrb[0].mxu0 %v6159
      %v6374 = vpop.f32.mrb[0].mxu0
      %v6375 = vadd.f32 0.0, %v6374
      %v6376 = vpop.f32.mrb[0].mxu0
      %v6377 = vpop.f32.mrb[0].mxu0
      %v6378 = vadd.f32 0.0, %v6377
      %v6379 = vpop.f32.mrb[0].mxu0
      %6380 = vmatprep.mubr.bf16.mxu0 0
      %6381 = vmatmul.mubr.bf16.gmra.mrb[0].mxu0 %v6160
      %v6382 = vpop.f32.mrb[0].mxu0
      %v6383 = vadd.f32 0.0, %v6382
      %v6384 = vpop.f32.mrb[0].mxu0
      %v6385 = vpop.f32.mrb[0].mxu0
      %v6386 = vadd.f32 0.0, %v6385
      %v6387 = vpop.f32.mrb[0].mxu0
      %6388 = vmatprep.mubr.bf16.mxu0 0
      %6389 = vmatmul.mubr.bf16.gmra.mrb[0].mxu0 %v6161
      %v6390 = vpop.f32.mrb[0].mxu0
      %v6391 = vadd.f32 0.0, %v6390
      %v6392 = vpop.f32.mrb[0].mxu0
      %v6393 = vpop.f32.mrb[0].mxu0
      %v6394 = vadd.f32 0.0, %v6393
      %v6395 = vpop.f32.mrb[0].mxu0
      %6396 = vmatprep.mubr.bf16.mxu0 0
      %6397 = vmatmul.mubr.bf16.gmra.mrb[0].mxu0 %v6162
      %v6398 = vpop.f32.mrb[0].mxu0
      %v6399 = vadd.f32 0.0, %v6398
      %v6400 = vpop.f32.mrb[0].mxu0
      %v6401 = vpop.f32.mrb[0].mxu0
      %v6402 = vadd.f32 0.0, %v6401
      %v6403 = vpop.f32.mrb[0].mxu0
      %6404 = vdwg.mxu0
      %v6405 = vadd.f32 %v6073, %v6263
      %v6406 = vadd.f32 %v6074, %v6266
      %v6407 = vadd.f32 %v6075, %v6271
      %v6408 = vadd.f32 %v6076, %v6274
      %v6409 = vadd.f32 %v6077, %v6279
      %v6410 = vadd.f32 %v6078, %v6282
      %v6411 = vadd.f32 %v6079, %v6287
      %v6412 = vadd.f32 %v6080, %v6290
      %v6413 = vadd.f32 %v6081, %v6295
      %v6414 = vadd.f32 %v6082, %v6298
      %v6415 = vadd.f32 %v6083, %v6303
      %v6416 = vadd.f32 %v6084, %v6306
      %v6417 = vadd.f32 %v6085, %v6311
      %v6418 = vadd.f32 %v6086, %v6314
      %v6419 = vadd.f32 %v6087, %v6319
      %v6420 = vadd.f32 %v6088, %v6322
      %v6421 = vadd.f32 %v6089, %v6327
      %v6422 = vadd.f32 %v6090, %v6330
      %v6423 = vadd.f32 %v6091, %v6335
      %v6424 = vadd.f32 %v6092, %v6338
      %v6425 = vadd.f32 %v6093, %v6343
      %v6426 = vadd.f32 %v6094, %v6346
      %v6427 = vadd.f32 %v6095, %v6351
      %v6428 = vadd.f32 %v6096, %v6354
      %v6429 = vadd.f32 %v6097, %v6359
      %v6430 = vadd.f32 %v6098, %v6362
      %v6431 = vadd.f32 %v6099, %v6367
      %v6432 = vadd.f32 %v6100, %v6370
      %v6433 = vadd.f32 %v6101, %v6375
      %v6434 = vadd.f32 %v6102, %v6378
      %v6435 = vadd.f32 %v6103, %v6383
      %v6436 = vadd.f32 %v6104, %v6386
      %v6437 = vadd.f32 %v6105, %v6391
      %v6438 = vadd.f32 %v6106, %v6394
      %v6439 = vadd.f32 %v6107, %v6399
      %v6440 = vadd.f32 %v6108, %v6402
      %v6441 = vld [vmem:[%s4] sm:$0x1]
      %v6443 = vlaneseq
      %v6444 = vshrl.u32 %v6443, 7
      %v6445 = vsub.s32 0, %v6444
      %v6446 = vrot.slane %v6441, %v6445
      %v6448 = vadd.f32 %v6405, %v6446
      %v6449 = vadd.f32 %v6406, %v6446
      %v6450 = vadd.f32 %v6407, %v6446
      %v6451 = vadd.f32 %v6408, %v6446
      %v6452 = vadd.f32 %v6409, %v6446
      %v6453 = vadd.f32 %v6410, %v6446
      %v6454 = vadd.f32 %v6411, %v6446
      %v6455 = vadd.f32 %v6412, %v6446
      %v6456 = vadd.f32 %v6413, %v6446
      %v6457 = vadd.f32 %v6414, %v6446
      %v6458 = vadd.f32 %v6415, %v6446
      %v6459 = vadd.f32 %v6416, %v6446
      %v6460 = vadd.f32 %v6417, %v6446
      %v6461 = vadd.f32 %v6418, %v6446
      %v6462 = vadd.f32 %v6419, %v6446
      %v6463 = vadd.f32 %v6420, %v6446
      %v6464 = vadd.f32 %v6421, %v6446
      %v6465 = vadd.f32 %v6422, %v6446
      %v6466 = vadd.f32 %v6423, %v6446
      %v6467 = vadd.f32 %v6424, %v6446
      %v6468 = vadd.f32 %v6425, %v6446
      %v6469 = vadd.f32 %v6426, %v6446
      %v6470 = vadd.f32 %v6427, %v6446
      %v6471 = vadd.f32 %v6428, %v6446
      %v6472 = vadd.f32 %v6429, %v6446
      %v6473 = vadd.f32 %v6430, %v6446
      %v6474 = vadd.f32 %v6431, %v6446
      %v6475 = vadd.f32 %v6432, %v6446
      %v6476 = vadd.f32 %v6433, %v6446
      %v6477 = vadd.f32 %v6434, %v6446
      %v6478 = vadd.f32 %v6435, %v6446
      %v6479 = vadd.f32 %v6436, %v6446
      %v6480 = vadd.f32 %v6437, %v6446
      %v6481 = vadd.f32 %v6438, %v6446
      %v6482 = vadd.f32 %v6439, %v6446
      %v6483 = vadd.f32 %v6440, %v6446
      %v6484 = vmax.f32 %v6448, 0.0
      %v6485 = vmax.f32 %v6449, 0.0
      %v6486 = vmax.f32 %v6450, 0.0
      %v6487 = vmax.f32 %v6451, 0.0
      %v6488 = vmax.f32 %v6452, 0.0
      %v6489 = vmax.f32 %v6453, 0.0
      %v6490 = vmax.f32 %v6454, 0.0
      %v6491 = vmax.f32 %v6455, 0.0
      %v6492 = vmax.f32 %v6456, 0.0
      %v6493 = vmax.f32 %v6457, 0.0
      %v6494 = vmax.f32 %v6458, 0.0
      %v6495 = vmax.f32 %v6459, 0.0
      %v6496 = vmax.f32 %v6460, 0.0
      %v6497 = vmax.f32 %v6461, 0.0
      %v6498 = vmax.f32 %v6462, 0.0
      %v6499 = vmax.f32 %v6463, 0.0
      %v6500 = vmax.f32 %v6464, 0.0
      %v6501 = vmax.f32 %v6465, 0.0
      %v6502 = vmax.f32 %v6466, 0.0
      %v6503 = vmax.f32 %v6467, 0.0
      %v6504 = vmax.f32 %v6468, 0.0
      %v6505 = vmax.f32 %v6469, 0.0
      %v6506 = vmax.f32 %v6470, 0.0
      %v6507 = vmax.f32 %v6471, 0.0
      %v6508 = vmax.f32 %v6472, 0.0
      %v6509 = vmax.f32 %v6473, 0.0
      %v6510 = vmax.f32 %v6474, 0.0
      %v6511 = vmax.f32 %v6475, 0.0
      %v6512 = vmax.f32 %v6476, 0.0
      %v6513 = vmax.f32 %v6477, 0.0
      %v6514 = vmax.f32 %v6478, 0.0
      %v6515 = vmax.f32 %v6479, 0.0
      %v6516 = vmax.f32 %v6480, 0.0
      %v6517 = vmax.f32 %v6481, 0.0
      %v6518 = vmax.f32 %v6482, 0.0
      %v6519 = vmax.f32 %v6483, 0.0
      %6520 = vst [vmem:[%s251] sm:$0xff] %v6484
      %6521 = vst [vmem:[%s251 + $0x8] sm:$0xff] %v6485
      %6522 = vst [vmem:[%s251 + $0x10] sm:$0xff] %v6486
      %6523 = vst [vmem:[%s251 + $0x18] sm:$0xff] %v6487
      %6524 = vst [vmem:[%s251 + $0x20] sm:$0xff] %v6488
      %6525 = vst [vmem:[%s251 + $0x28] sm:$0xff] %v6489
      %6526 = vst [vmem:[%s251 + $0x30] sm:$0xff] %v6490
      %6527 = vst [vmem:[%s251 + $0x38] sm:$0xff] %v6491
      %6528 = vst [vmem:[%s251 + $0x40] sm:$0xff] %v6492
      %6529 = vst [vmem:[%s251 + $0x48] sm:$0xff] %v6493
      %6530 = vst [vmem:[%s251 + $0x50] sm:$0xff] %v6494
      %6531 = vst [vmem:[%s251 + $0x58] sm:$0xff] %v6495
      %6532 = vst [vmem:[%s251 + $0x60] sm:$0xff] %v6496
      %6533 = vst [vmem:[%s251 + $0x68] sm:$0xff] %v6497
      %6534 = vst [vmem:[%s251 + $0x70] sm:$0xff] %v6498
      %6535 = vst [vmem:[%s251 + $0x78] sm:$0xff] %v6499
      %6536 = vst [vmem:[%s251 + $0x80] sm:$0xff] %v6500
      %6537 = vst [vmem:[%s251 + $0x88] sm:$0xff] %v6501
      %6538 = vst [vmem:[%s251 + $0x90] sm:$0xff] %v6502
      %6539 = vst [vmem:[%s251 + $0x98] sm:$0xff] %v6503
      %6540 = vst [vmem:[%s251 + $0xa0] sm:$0xff] %v6504
      %6541 = vst [vmem:[%s251 + $0xa8] sm:$0xff] %v6505
      %6542 = vst [vmem:[%s251 + $0xb0] sm:$0xff] %v6506
      %6543 = vst [vmem:[%s251 + $0xb8] sm:$0xff] %v6507
      %6544 = vst [vmem:[%s251 + $0xc0] sm:$0xff] %v6508
      %6545 = vst [vmem:[%s251 + $0xc8] sm:$0xff] %v6509
      %6546 = vst [vmem:[%s251 + $0xd0] sm:$0xff] %v6510
      %6547 = vst [vmem:[%s251 + $0xd8] sm:$0xff] %v6511
      %6548 = vst [vmem:[%s251 + $0xe0] sm:$0xff] %v6512
      %6549 = vst [vmem:[%s251 + $0xe8] sm:$0xff] %v6513
      %6550 = vst [vmem:[%s251 + $0xf0] sm:$0xff] %v6514
      %6551 = vst [vmem:[%s251 + $0xf8] sm:$0xff] %v6515
      %6552 = vst [vmem:[%s251 + $0x100] sm:$0xff] %v6516
      %6553 = vst [vmem:[%s251 + $0x108] sm:$0xff] %v6517
      %6554 = vst [vmem:[%s251 + $0x110] sm:$0xff] %v6518
      %6555 = vst [vmem:[%s251 + $0x118] sm:$0xff] %v6519
      %p6556 = scmp.lt.s32.totalorder %s17, 1
      %s6557 = scalar_select %p6556, %s17, 1
      %s6558 = smul.addr %s6557, 36
      %s6559 = smul.addr %s6558, 8
      %s6560 = scalar_lea.vmem %s6, %s6559
      // Predicated region
      $region45: #{conv_module_forward.1} parent=43 // pred_check
        %p6561 = pneg %p166
      $region46: #{conv_module_forward.1} parent=43 // pred_check_branch
        %6563 = sbr.rel (%p6561) target = $region48
      $region47: #{conv_module_forward.1} parent=43 // pred_region
        _
      $region48: #{conv_module_forward.1} parent=43 // pred_fallthru
        _
    $region44: #{conv_module_forward.1} parent=5 // pred_fallthru
      _
    %p6564 = scmp.le.s32.totalorder 2, %s12
    // Predicated region
    $region49: #{conv_module_forward.1} parent=5 // pred_check
      %p6565 = pneg %p6564
    $region50: #{conv_module_forward.1} parent=5 // pred_check_branch
      %6567 = sbr.rel (%p6565) target = $region52
    $region51: #{conv_module_forward.1} parent=5 // pred_region
      %s6568 = ssub.s32 %s12, 2
      // Predicated region
      $region53: #{conv_module_forward.1} parent=51 // pred_check
        %p6569 = pneg %p172
      $region54: #{conv_module_forward.1} parent=51 // pred_check_branch
        %6571 = sbr.rel (%p6569) target = $region56
      $region55: #{conv_module_forward.1} parent=51 // pred_region
        %p6572 = scmp.lt.s32.totalorder %s18, 1
        %s6573 = scalar_select %p6572, %s18, 1
        %s6574 = smul.addr %s6573, 36
        %s6575 = smul.addr %s6574, 8
        %s6576 = scalar_lea.vmem %s6, %s6575
      $region56: #{conv_module_forward.1} parent=51 // pred_fallthru
        _
    $region52: #{conv_module_forward.1} parent=5 // pred_fallthru
      _
  $region6: #{conv_module_forward.1} parent=0 // loop_footer
    %s16 = sadd.s32 1, %s12
  $region7: #{conv_module_forward.1} parent=0 // loop_footer_branch
    %11 = sbr.rel target = $region3
  $region8: #{conv_module_forward.1} parent=0 // loop_exit
    _

</llo_original>
